<compile_context>
chip_gen: v5e
topology: v5e:2x2
jax: 0.10.0
libtpu: 0.0.40
codegen_flags: <defaults>
</compile_context>

<pallas_src>
import functools
import math

import jax
import jax.numpy as jnp
from jax import lax
from jax.experimental import pallas as pl
from jax.experimental.pallas import tpu as pltpu


# ----------------------------------------------------------------------------
# In-kernel helpers (pure functions on values; traced inside the Pallas kernels)
# ----------------------------------------------------------------------------
def _layernorm(x, g, b, eps=1e-5):
    mean = jnp.mean(x, axis=-1, keepdims=True)
    var = jnp.mean((x - mean) ** 2, axis=-1, keepdims=True)
    return (x - mean) * lax.rsqrt(var + eps) * g + b


def _mha_heads(q, k, v, bias, wo, nhead):
    """Multi-head attention; returns (concat_h softmax(q_h k_h^T) v_h) @ wo.

    q: [Tq, D], k/v: [Tk, D], bias: [1, Tk] additive mask or None, wo: [D, D].
    The head concat is folded into wo:  out = sum_h o_h @ wo[h*hd:(h+1)*hd, :].
    """
    _, D = q.shape
    hd = D // nhead
    scale = 1.0 / math.sqrt(hd)
    acc = None
    for h in range(nhead):
        lo, hi = h * hd, (h + 1) * hd
        qh = q[:, lo:hi]
        kh = k[:, lo:hi]
        vh = v[:, lo:hi]
        s = lax.dot_general(qh, kh, (((1,), (1,)), ((), ())),
                            preferred_element_type=jnp.float32) * scale
        if bias is not None:
            s = s + bias
        s_max = jnp.max(s, axis=-1, keepdims=True)
        p = jnp.exp(s - s_max)
        denom = jnp.sum(p, axis=-1, keepdims=True)
        p = p * pl.reciprocal(denom, approx=True)
        oh = jnp.dot(p, vh, preferred_element_type=jnp.float32)           # [Tq, hd]
        contrib = jnp.dot(oh, wo[lo:hi, :], preferred_element_type=jnp.float32)
        acc = contrib if acc is None else acc + contrib
    return acc


def _encoder_layer(x, bias, wqkv, bqkv, wo, bo, g1, b1, g2, b2, w1, c1, w2, c2,
                   nhead):
    """nn.TransformerEncoderLayer (post-norm, relu, eval-mode dropout)."""
    D = x.shape[-1]
    qkv = jnp.dot(x, wqkv, preferred_element_type=jnp.float32) + bqkv     # [T, 3D]
    q, k, v = qkv[:, :D], qkv[:, D:2 * D], qkv[:, 2 * D:]
    attn = _mha_heads(q, k, v, bias, wo, nhead) + bo
    x = _layernorm(x + attn, g1, b1)
    h = jnp.maximum(jnp.dot(x, w1, preferred_element_type=jnp.float32) + c1, 0.0)
    ff = jnp.dot(h, w2, preferred_element_type=jnp.float32) + c2
    x = _layernorm(x + ff, g2, b2)
    return x


def _decoder_layer(x, mem, bias,
                   sa_wqkv, sa_bqkv, sa_wo, sa_bo,
                   ca_wq, ca_bq, ca_wkv, ca_bkv, ca_wo, ca_bo,
                   g1, b1, g2, b2, g3, b3, w1, c1, w2, c2, nhead):
    """nn.TransformerDecoderLayer (post-norm, relu, eval-mode dropout)."""
    D = x.shape[-1]
    # self attention (tgt key padding mask)
    qkv = jnp.dot(x, sa_wqkv, preferred_element_type=jnp.float32) + sa_bqkv
    q, k, v = qkv[:, :D], qkv[:, D:2 * D], qkv[:, 2 * D:]
    attn = _mha_heads(q, k, v, bias, sa_wo, nhead) + sa_bo
    x = _layernorm(x + attn, g1, b1)
    # cross attention (memory unmasked, as in the reference decode())
    q = jnp.dot(x, ca_wq, preferred_element_type=jnp.float32) + ca_bq
    kv = jnp.dot(mem, ca_wkv, preferred_element_type=jnp.float32) + ca_bkv
    k, v = kv[:, :D], kv[:, D:]
    attn = _mha_heads(q, k, v, None, ca_wo, nhead) + ca_bo
    x = _layernorm(x + attn, g2, b2)
    # FFN
    h = jnp.maximum(jnp.dot(x, w1, preferred_element_type=jnp.float32) + c1, 0.0)
    ff = jnp.dot(h, w2, preferred_element_type=jnp.float32) + c2
    x = _layernorm(x + ff, g3, b3)
    return x


# ----------------------------------------------------------------------------
# Fused Pallas kernels: one per transformer stack, grid over batch
# ----------------------------------------------------------------------------
def _encoder_stack_kernel(lens_ref, kf_ref, lat_ref, pe_ref, ipw_ref, ipb_ref,
                          qkv_w, qkv_b, ao_w, ao_b, ln1_w, ln1_b, ln2_w, ln2_b,
                          ff1_w, ff1_b, ff2_w, ff2_b, out_ref,
                          *, nhead, latent_size, num_layers):
    b = pl.program_id(0)
    kf_len = lens_ref[b]                       # scalar int32 from SMEM
    n_lat = 2 * latent_size

    # input_proj on keyframes padded to the full sequence (latent rows are zero)
    kf = kf_ref[0]                                                    # [Tf, d_in]
    proj = jnp.dot(kf, ipw_ref[...], preferred_element_type=jnp.float32) + ipb_ref[...]
    tfull = proj.shape[0]
    row_ids = lax.broadcasted_iota(jnp.int32, proj.shape, 0)
    # rows [0, 2Z): latent tokens, rows [2Z, Tf): projected keyframes; then + PE
    x = jnp.where(row_ids < n_lat, lat_ref[...], proj) + pe_ref[...]  # [Tf, D]

    # key padding bias: position p valid iff p < 2Z + kf_len
    key_pos = lax.broadcasted_iota(jnp.int32, (1, tfull), 1)
    bias = jnp.where(key_pos >= n_lat + kf_len,
                     jnp.float32(-1e9), jnp.float32(0.0))

    for l in range(num_layers):
        x = _encoder_layer(x, bias,
                           qkv_w[l], qkv_b[l], ao_w[l], ao_b[l],
                           ln1_w[l], ln1_b[l], ln2_w[l], ln2_b[l],
                           ff1_w[l], ff1_b[l], ff2_w[l], ff2_b[l], nhead)

    out_ref[0] = x[:n_lat, :]                  # only the latent tokens are needed


def _decoder_stack_kernel(lens_ref, z_ref, pe_ref,
                          sa_qkv_w, sa_qkv_b, sa_o_w, sa_o_b,
                          ca_q_w, ca_q_b, ca_kv_w, ca_kv_b, ca_o_w, ca_o_b,
                          ln1_w, ln1_b, ln2_w, ln2_b, ln3_w, ln3_b,
                          ff1_w, ff1_b, ff2_w, ff2_b,
                          opw_ref, opb_ref, out_ref, *, nhead, num_layers):
    b = pl.program_id(0)
    kf_len = lens_ref[b]
    mem = z_ref[0]                             # [Z, D]
    x = pe_ref[...]                            # query = zeros + PE -> just PE [Kf, D]
    kf = x.shape[0]

    key_pos = lax.broadcasted_iota(jnp.int32, (1, kf), 1)
    bias = jnp.where(key_pos >= kf_len, jnp.float32(-1e9), jnp.float32(0.0))

    for l in range(num_layers):
        x = _decoder_layer(x, mem, bias,
                           sa_qkv_w[l], sa_qkv_b[l], sa_o_w[l], sa_o_b[l],
                           ca_q_w[l], ca_q_b[l], ca_kv_w[l], ca_kv_b[l],
                           ca_o_w[l], ca_o_b[l],
                           ln1_w[l], ln1_b[l], ln2_w[l], ln2_b[l],
                           ln3_w[l], ln3_b[l],
                           ff1_w[l], ff1_b[l], ff2_w[l], ff2_b[l], nhead)

    out = jnp.dot(x, opw_ref[...], preferred_element_type=jnp.float32) + opb_ref[...]
    # output[kf_padding_mask] = 0
    row_ids = lax.broadcasted_iota(jnp.int32, out.shape, 0)
    out_ref[0] = jnp.where(row_ids >= kf_len, jnp.float32(0.0), out)


# ----------------------------------------------------------------------------
# pallas_call wrappers
# ----------------------------------------------------------------------------
def _full_spec(shape):
    """Whole-array block; constant block index -> weights stay resident in VMEM."""
    return pl.BlockSpec(shape, lambda b, lens: (0,) * len(shape))


_ENC_KEYS = ["qkv_w", "qkv_b", "ao_w", "ao_b", "ln1_w", "ln1_b", "ln2_w", "ln2_b",
             "ff1_w", "ff1_b", "ff2_w", "ff2_b"]
_DEC_KEYS = ["sa_qkv_w", "sa_qkv_b", "sa_o_w", "sa_o_b",
             "ca_q_w", "ca_q_b", "ca_kv_w", "ca_kv_b", "ca_o_w", "ca_o_b",
             "ln1_w", "ln1_b", "ln2_w", "ln2_b", "ln3_w", "ln3_b",
             "ff1_w", "ff1_b", "ff2_w", "ff2_b"]


def encoder_stack(kf_lengths, kf_padded, lat_padded, enc_pe, ipw, ipb, ep,
                  *, nhead, latent_size, num_layers):
    B, tfull, d_input = kf_padded.shape
    D = ipw.shape[1]
    n_lat = 2 * latent_size
    enc_args = [ep[k] for k in _ENC_KEYS]

    in_specs = ([pl.BlockSpec((1, tfull, d_input), lambda b, lens: (b, 0, 0)),
                 _full_spec(lat_padded.shape),
                 _full_spec(enc_pe.shape),
                 _full_spec(ipw.shape),
                 _full_spec(ipb.shape)]
                + [_full_spec(a.shape) for a in enc_args])

    grid_spec = pltpu.PrefetchScalarGridSpec(
        num_scalar_prefetch=1,
        grid=(B,),
        in_specs=in_specs,
        out_specs=pl.BlockSpec((1, n_lat, D), lambda b, lens: (b, 0, 0)),
    )
    return pl.pallas_call(
        functools.partial(_encoder_stack_kernel, nhead=nhead,
                          latent_size=latent_size, num_layers=num_layers),
        out_shape=jax.ShapeDtypeStruct((B, n_lat, D), jnp.float32),
        grid_spec=grid_spec,
        compiler_params=pltpu.CompilerParams(dimension_semantics=("parallel",)),
    )(kf_lengths, kf_padded, lat_padded, enc_pe, ipw, ipb, *enc_args)


def decoder_stack(kf_lengths, latent_z, dec_pe, dp, opw, opb, *, nhead, num_layers):
    B, Z, D = latent_z.shape
    kf = dec_pe.shape[0]
    d_input = opw.shape[1]
    dec_args = [dp[k] for k in _DEC_KEYS]

    in_specs = ([pl.BlockSpec((1, Z, D), lambda b, lens: (b, 0, 0)),
                 _full_spec(dec_pe.shape)]
                + [_full_spec(a.shape) for a in dec_args]
                + [_full_spec(opw.shape), _full_spec(opb.shape)])

    grid_spec = pltpu.PrefetchScalarGridSpec(
        num_scalar_prefetch=1,
        grid=(B,),
        in_specs=in_specs,
        out_specs=pl.BlockSpec((1, kf, d_input), lambda b, lens: (b, 0, 0)),
    )
    return pl.pallas_call(
        functools.partial(_decoder_stack_kernel, nhead=nhead, num_layers=num_layers),
        out_shape=jax.ShapeDtypeStruct((B, kf, d_input), jnp.float32),
        grid_spec=grid_spec,
        compiler_params=pltpu.CompilerParams(dimension_semantics=("parallel",)),
    )(kf_lengths, latent_z, dec_pe, *dec_args, opw, opb)


# ----------------------------------------------------------------------------
# Positional encoding table (sinusoidal)
# ----------------------------------------------------------------------------
def sinusoidal_pe(max_len, d_model):
    pos = jnp.arange(max_len, dtype=jnp.float32)[:, None]
    div = jnp.exp(jnp.arange(0, d_model, 2, dtype=jnp.float32) *
                  (-math.log(10000.0) / d_model))
    pe = jnp.zeros((max_len, d_model), dtype=jnp.float32)
    pe = pe.at[:, 0::2].set(jnp.sin(pos * div))
    pe = pe.at[:, 1::2].set(jnp.cos(pos * div))
    return pe


# ----------------------------------------------------------------------------
# KFUVAE forward (keyframe_only path, arch == 'enc_dec')
# ----------------------------------------------------------------------------
def kfuvae_forward(params, motions, lengths, eps_noise, cfg):
    kf_freq = cfg["keyframe_freq"]
    D = cfg["d_model"]
    nhead = cfg["nhead"]
    Z = cfg["latent_size"]
    kf_max = cfg["max_kf_len"]

    # --- get_keyframes / get_kf_padding_mask --------------------------------
    step = int(1.0 / kf_freq)
    keyframes = motions[:, ::step]                       # [B, K, d_input]
    B, K, _ = keyframes.shape
    assert K == int(motions.shape[1] * kf_freq + 1)
    # mask is built from max_kf_len; keep it consistent with the actual K
    assert K == kf_max, "keyframe count must equal max_kf_len for mask consistency"
    kf_lengths = (lengths.astype(jnp.float32) * kf_freq).astype(jnp.int32) + 1

    # --- encode: one fused Pallas kernel for the whole encoder stack --------
    n_lat = 2 * Z
    kf_padded = jnp.pad(keyframes, ((0, 0), (n_lat, 0), (0, 0)))   # [B, 2Z+K, d_in]
    lat_padded = jnp.concatenate(
        [params["latent_token"], jnp.zeros((K, D), jnp.float32)], axis=0)  # [2Z+K, D]
    enc_pe = params["encoder_pe"][: n_lat + K]

    mu_logvar = encoder_stack(kf_lengths, kf_padded, lat_padded, enc_pe,
                              params["input_proj_w"], params["input_proj_b"],
                              params["enc"], nhead=nhead, latent_size=Z,
                              num_layers=cfg["enclayer"])
    mu = mu_logvar[:, :Z, :]
    logvar = mu_logvar[:, Z:, :]

    # reparameterize (rsample): tiny op, plain JAX (XLA fuses it)
    latent_z = mu + jnp.exp(0.5 * logvar) * eps_noise

    # --- decode (arch == 'enc_dec'): one fused Pallas kernel ----------------
    dec_pe = params["decoder_pe"][:kf_max]
    output = decoder_stack(kf_lengths, latent_z, dec_pe, params["dec"],
                           params["out_proj_w"], params["out_proj_b"],
                           nhead=nhead, num_layers=cfg["declayer"])

    return output, keyframes, latent_z, mu, logvar


# ----------------------------------------------------------------------------
# Deterministic synthetic parameters (shapes follow the module __init__),
# stored pre-transposed in [in_features, out_features] layout and stacked per layer.
# ----------------------------------------------------------------------------
def init_params(key, cfg):
    D, d_input, F = cfg["d_model"], cfg["d_input"], cfg["d_ffn"]
    Z = cfg["latent_size"]
    Le, Ld = cfg["enclayer"], cfg["declayer"]
    counter = [0]

    def nxt():
        counter[0] += 1
        return jax.random.fold_in(key, counter[0])

    def w(shape, scale=0.05):
        return scale * jax.random.normal(nxt(), shape, dtype=jnp.float32)

    def ones(shape):
        return jnp.ones(shape, jnp.float32)

    def zeros(shape):
        return jnp.zeros(shape, jnp.float32)

    enc = {
        "qkv_w": w((Le, D, 3 * D)), "qkv_b": w((Le, 1, 3 * D)),
        "ao_w": w((Le, D, D)), "ao_b": w((Le, 1, D)),
        "ln1_w": ones((Le, 1, D)), "ln1_b": zeros((Le, 1, D)),
        "ln2_w": ones((Le, 1, D)), "ln2_b": zeros((Le, 1, D)),
        "ff1_w": w((Le, D, F)), "ff1_b": w((Le, 1, F)),
        "ff2_w": w((Le, F, D)), "ff2_b": w((Le, 1, D)),
    }
    dec = {
        "sa_qkv_w": w((Ld, D, 3 * D)), "sa_qkv_b": w((Ld, 1, 3 * D)),
        "sa_o_w": w((Ld, D, D)), "sa_o_b": w((Ld, 1, D)),
        "ca_q_w": w((Ld, D, D)), "ca_q_b": w((Ld, 1, D)),
        "ca_kv_w": w((Ld, D, 2 * D)), "ca_kv_b": w((Ld, 1, 2 * D)),
        "ca_o_w": w((Ld, D, D)), "ca_o_b": w((Ld, 1, D)),
        "ln1_w": ones((Ld, 1, D)), "ln1_b": zeros((Ld, 1, D)),
        "ln2_w": ones((Ld, 1, D)), "ln2_b": zeros((Ld, 1, D)),
        "ln3_w": ones((Ld, 1, D)), "ln3_b": zeros((Ld, 1, D)),
        "ff1_w": w((Ld, D, F)), "ff1_b": w((Ld, 1, F)),
        "ff2_w": w((Ld, F, D)), "ff2_b": w((Ld, 1, D)),
    }
    pe_len = cfg["max_kf_len"] + 2 * Z
    return {
        "input_proj_w": w((d_input, D)), "input_proj_b": w((1, D)),
        "out_proj_w": w((D, d_input)), "out_proj_b": w((1, d_input)),
        "latent_token": w((2 * Z, D), scale=1.0),
        "encoder_pe": sinusoidal_pe(pe_len, D),
        "decoder_pe": sinusoidal_pe(pe_len, D),
        "enc": enc,
        "dec": dec,
    }


# ----------------------------------------------------------------------------
if __name__ == "__main__":
    cfg = {
        "keyframe_freq": 0.25,
        "keyframe_only": True,
        "d_input": 16,
        "latent_size": 2,
        "max_motion_len": 16,
        "d_model": 32,
        "nhead": 4,
        "d_ffn": 64,
        "enclayer": 2,
        "declayer": 2,
        "arch": "enc_dec",
    }
    cfg["max_kf_len"] = int(cfg["max_motion_len"] * cfg["keyframe_freq"]) + 1  # 5

    B, L = 2, 17  # L chosen so keyframes (::4) count == max_kf_len == 5
    key = jax.random.PRNGKey(0)
    k_mot, k_eps = jax.random.split(key)
    motions = jax.random.normal(k_mot, (B, L, cfg["d_input"]), dtype=jnp.float32)
    lengths = jnp.array([16, 12], dtype=jnp.int32)
    eps_noise = jax.random.normal(k_eps, (B, cfg["latent_size"], cfg["d_model"]),
                                  dtype=jnp.float32)

    params = init_params(jax.random.PRNGKey(1), cfg)

    fwd = jax.jit(functools.partial(kfuvae_forward, cfg=cfg))
    keyframes_rec, keyframes, latent_z, mu, logvar = fwd(params, motions, lengths,
                                                         eps_noise)
    jax.block_until_ready((keyframes_rec, keyframes, latent_z, mu, logvar))

    assert keyframes_rec.shape == (B, cfg["max_kf_len"], cfg["d_input"])
    assert keyframes.shape == (B, cfg["max_kf_len"], cfg["d_input"])
    assert latent_z.shape == (B, cfg["latent_size"], cfg["d_model"])
    assert mu.shape == logvar.shape == latent_z.shape
    assert bool(jnp.all(jnp.isfinite(keyframes_rec)))
    assert bool(jnp.all(jnp.isfinite(latent_z)))
    print("KERNEL_OK")
</pallas_src>

<mosaic_0001>
module attributes {stable_mosaic.version = 11 : i64} {
  func.func @_encoder_stack_kernel(%arg0: i32, %arg1: memref<2xi32, #tpu.memory_space<smem>>, %arg2: memref<1x9x16xf32, #tpu.memory_space<vmem>>, %arg3: memref<9x32xf32, #tpu.memory_space<vmem>>, %arg4: memref<9x32xf32, #tpu.memory_space<vmem>>, %arg5: memref<16x32xf32, #tpu.memory_space<vmem>>, %arg6: memref<1x32xf32, #tpu.memory_space<vmem>>, %arg7: memref<2x32x96xf32, #tpu.memory_space<vmem>>, %arg8: memref<2x1x96xf32, #tpu.memory_space<vmem>>, %arg9: memref<2x32x32xf32, #tpu.memory_space<vmem>>, %arg10: memref<2x1x32xf32, #tpu.memory_space<vmem>>, %arg11: memref<2x1x32xf32, #tpu.memory_space<vmem>>, %arg12: memref<2x1x32xf32, #tpu.memory_space<vmem>>, %arg13: memref<2x1x32xf32, #tpu.memory_space<vmem>>, %arg14: memref<2x1x32xf32, #tpu.memory_space<vmem>>, %arg15: memref<2x32x64xf32, #tpu.memory_space<vmem>>, %arg16: memref<2x1x64xf32, #tpu.memory_space<vmem>>, %arg17: memref<2x64x32xf32, #tpu.memory_space<vmem>>, %arg18: memref<2x1x32xf32, #tpu.memory_space<vmem>>, %arg19: memref<1x4x32xf32, #tpu.memory_space<vmem>>) attributes {dimension_semantics = [#tpu.dimension_semantics<parallel>], iteration_bounds = array<i64: 2>, scalar_prefetch = 1 : i64, scratch_operands = 0 : i64, tpu.core_type = #tpu.core_type<tc>, window_params = [{transform_indices = @transform_0, window_bounds = array<i64: 1, 9, 16>}, {pipeline_mode = #tpu.pipeline_mode<synchronous>, transform_indices = @transform_1, window_bounds = array<i64: 9, 32>}, {pipeline_mode = #tpu.pipeline_mode<synchronous>, transform_indices = @transform_2, window_bounds = array<i64: 9, 32>}, {pipeline_mode = #tpu.pipeline_mode<synchronous>, transform_indices = @transform_3, window_bounds = array<i64: 16, 32>}, {pipeline_mode = #tpu.pipeline_mode<synchronous>, transform_indices = @transform_4, window_bounds = array<i64: 1, 32>}, {pipeline_mode = #tpu.pipeline_mode<synchronous>, transform_indices = @transform_5, window_bounds = array<i64: 2, 32, 96>}, {pipeline_mode = #tpu.pipeline_mode<synchronous>, transform_indices = @transform_6, window_bounds = array<i64: 2, 1, 96>}, {pipeline_mode = #tpu.pipeline_mode<synchronous>, transform_indices = @transform_7, window_bounds = array<i64: 2, 32, 32>}, {pipeline_mode = #tpu.pipeline_mode<synchronous>, transform_indices = @transform_8, window_bounds = array<i64: 2, 1, 32>}, {pipeline_mode = #tpu.pipeline_mode<synchronous>, transform_indices = @transform_9, window_bounds = array<i64: 2, 1, 32>}, {pipeline_mode = #tpu.pipeline_mode<synchronous>, transform_indices = @transform_10, window_bounds = array<i64: 2, 1, 32>}, {pipeline_mode = #tpu.pipeline_mode<synchronous>, transform_indices = @transform_11, window_bounds = array<i64: 2, 1, 32>}, {pipeline_mode = #tpu.pipeline_mode<synchronous>, transform_indices = @transform_12, window_bounds = array<i64: 2, 1, 32>}, {pipeline_mode = #tpu.pipeline_mode<synchronous>, transform_indices = @transform_13, window_bounds = array<i64: 2, 32, 64>}, {pipeline_mode = #tpu.pipeline_mode<synchronous>, transform_indices = @transform_14, window_bounds = array<i64: 2, 1, 64>}, {pipeline_mode = #tpu.pipeline_mode<synchronous>, transform_indices = @transform_15, window_bounds = array<i64: 2, 64, 32>}, {pipeline_mode = #tpu.pipeline_mode<synchronous>, transform_indices = @transform_16, window_bounds = array<i64: 2, 1, 32>}, {transform_indices = @transform_17, window_bounds = array<i64: 1, 4, 32>}]} {
    %0 = arith.index_cast %arg0 : i32 to index
    %1 = memref.load %arg1[%0] : memref<2xi32, #tpu.memory_space<smem>>
    %c0 = arith.constant 0 : index
    %c0_0 = arith.constant 0 : index
    %c0_1 = arith.constant 0 : index
    %2 = vector.load %arg2[%c0, %c0_0, %c0_1] : memref<1x9x16xf32, #tpu.memory_space<vmem>>, vector<1x9x16xf32>
    %3 = vector.shape_cast %2 : vector<1x9x16xf32> to vector<9x16xf32>
    %c0_2 = arith.constant 0 : index
    %c0_3 = arith.constant 0 : index
    %4 = vector.load %arg5[%c0_2, %c0_3] : memref<16x32xf32, #tpu.memory_space<vmem>>, vector<16x32xf32>
    %cst = arith.constant dense<0.000000e+00> : vector<9x32xf32>
    %5 = tpu.matmul %3, %4, %cst {dimension_numbers = #tpu.dot_dimension_numbers<[1], [0], [0], [1], [0, 0, 1, 1], [], []>} : vector<9x16xf32>, vector<16x32xf32>, vector<9x32xf32> -> vector<9x32xf32>
    %c0_4 = arith.constant 0 : index
    %c0_5 = arith.constant 0 : index
    %6 = vector.load %arg6[%c0_4, %c0_5] : memref<1x32xf32, #tpu.memory_space<vmem>>, vector<1x32xf32>
    %7 = vector.broadcast %6 : vector<1x32xf32> to vector<9x32xf32>
    %8 = arith.addf %5, %7 : vector<9x32xf32>
    %9 = tpu.iota {dimensions = array<i32: 0>} : vector<9x32xi32>
    %c4_i32 = arith.constant 4 : i32
    %10 = vector.broadcast %c4_i32 : i32 to vector<9x32xi32>
    %11 = arith.cmpi slt, %9, %10 : vector<9x32xi32>
    %c0_6 = arith.constant 0 : index
    %c0_7 = arith.constant 0 : index
    %12 = vector.load %arg3[%c0_6, %c0_7] : memref<9x32xf32, #tpu.memory_space<vmem>>, vector<9x32xf32>
    %13 = arith.select %11, %12, %8 : vector<9x32xi1>, vector<9x32xf32>
    %c0_8 = arith.constant 0 : index
    %c0_9 = arith.constant 0 : index
    %14 = vector.load %arg4[%c0_8, %c0_9] : memref<9x32xf32, #tpu.memory_space<vmem>>, vector<9x32xf32>
    %15 = arith.addf %13, %14 : vector<9x32xf32>
    %16 = tpu.iota {dimensions = array<i32: 1>} : vector<1x9xi32>
    %c4_i32_10 = arith.constant 4 : i32
    %17 = arith.addi %c4_i32_10, %1 : i32
    %18 = vector.broadcast %17 : i32 to vector<1x9xi32>
    %19 = arith.cmpi sge, %16, %18 : vector<1x9xi32>
    %cst_11 = arith.constant -1.000000e+09 : f32
    %cst_12 = arith.constant 0.000000e+00 : f32
    %20 = vector.broadcast %cst_11 : f32 to vector<1x9xf32>
    %21 = vector.broadcast %cst_12 : f32 to vector<1x9xf32>
    %22 = arith.select %19, %20, %21 : vector<1x9xi1>, vector<1x9xf32>
    %c0_13 = arith.constant 0 : index
    %c0_14 = arith.constant 0 : index
    %c0_15 = arith.constant 0 : index
    %23 = vector.load %arg7[%c0_13, %c0_14, %c0_15] : memref<2x32x96xf32, #tpu.memory_space<vmem>>, vector<1x32x96xf32>
    %24 = vector.shape_cast %23 : vector<1x32x96xf32> to vector<32x96xf32>
    %c0_16 = arith.constant 0 : index
    %c0_17 = arith.constant 0 : index
    %c0_18 = arith.constant 0 : index
    %25 = vector.load %arg8[%c0_16, %c0_17, %c0_18] : memref<2x1x96xf32, #tpu.memory_space<vmem>>, vector<1x1x96xf32>
    %26 = vector.shape_cast %25 : vector<1x1x96xf32> to vector<1x96xf32>
    %c0_19 = arith.constant 0 : index
    %c0_20 = arith.constant 0 : index
    %c0_21 = arith.constant 0 : index
    %27 = vector.load %arg9[%c0_19, %c0_20, %c0_21] : memref<2x32x32xf32, #tpu.memory_space<vmem>>, vector<1x32x32xf32>
    %28 = vector.shape_cast %27 : vector<1x32x32xf32> to vector<32x32xf32>
    %c0_22 = arith.constant 0 : index
    %c0_23 = arith.constant 0 : index
    %c0_24 = arith.constant 0 : index
    %29 = vector.load %arg10[%c0_22, %c0_23, %c0_24] : memref<2x1x32xf32, #tpu.memory_space<vmem>>, vector<1x1x32xf32>
    %30 = vector.shape_cast %29 : vector<1x1x32xf32> to vector<1x32xf32>
    %c0_25 = arith.constant 0 : index
    %c0_26 = arith.constant 0 : index
    %c0_27 = arith.constant 0 : index
    %31 = vector.load %arg11[%c0_25, %c0_26, %c0_27] : memref<2x1x32xf32, #tpu.memory_space<vmem>>, vector<1x1x32xf32>
    %32 = vector.shape_cast %31 : vector<1x1x32xf32> to vector<1x32xf32>
    %c0_28 = arith.constant 0 : index
    %c0_29 = arith.constant 0 : index
    %c0_30 = arith.constant 0 : index
    %33 = vector.load %arg12[%c0_28, %c0_29, %c0_30] : memref<2x1x32xf32, #tpu.memory_space<vmem>>, vector<1x1x32xf32>
    %34 = vector.shape_cast %33 : vector<1x1x32xf32> to vector<1x32xf32>
    %c0_31 = arith.constant 0 : index
    %c0_32 = arith.constant 0 : index
    %c0_33 = arith.constant 0 : index
    %35 = vector.load %arg13[%c0_31, %c0_32, %c0_33] : memref<2x1x32xf32, #tpu.memory_space<vmem>>, vector<1x1x32xf32>
    %36 = vector.shape_cast %35 : vector<1x1x32xf32> to vector<1x32xf32>
    %c0_34 = arith.constant 0 : index
    %c0_35 = arith.constant 0 : index
    %c0_36 = arith.constant 0 : index
    %37 = vector.load %arg14[%c0_34, %c0_35, %c0_36] : memref<2x1x32xf32, #tpu.memory_space<vmem>>, vector<1x1x32xf32>
    %38 = vector.shape_cast %37 : vector<1x1x32xf32> to vector<1x32xf32>
    %c0_37 = arith.constant 0 : index
    %c0_38 = arith.constant 0 : index
    %c0_39 = arith.constant 0 : index
    %39 = vector.load %arg15[%c0_37, %c0_38, %c0_39] : memref<2x32x64xf32, #tpu.memory_space<vmem>>, vector<1x32x64xf32>
    %40 = vector.shape_cast %39 : vector<1x32x64xf32> to vector<32x64xf32>
    %c0_40 = arith.constant 0 : index
    %c0_41 = arith.constant 0 : index
    %c0_42 = arith.constant 0 : index
    %41 = vector.load %arg16[%c0_40, %c0_41, %c0_42] : memref<2x1x64xf32, #tpu.memory_space<vmem>>, vector<1x1x64xf32>
    %42 = vector.shape_cast %41 : vector<1x1x64xf32> to vector<1x64xf32>
    %c0_43 = arith.constant 0 : index
    %c0_44 = arith.constant 0 : index
    %c0_45 = arith.constant 0 : index
    %43 = vector.load %arg17[%c0_43, %c0_44, %c0_45] : memref<2x64x32xf32, #tpu.memory_space<vmem>>, vector<1x64x32xf32>
    %44 = vector.shape_cast %43 : vector<1x64x32xf32> to vector<64x32xf32>
    %c0_46 = arith.constant 0 : index
    %c0_47 = arith.constant 0 : index
    %c0_48 = arith.constant 0 : index
    %45 = vector.load %arg18[%c0_46, %c0_47, %c0_48] : memref<2x1x32xf32, #tpu.memory_space<vmem>>, vector<1x1x32xf32>
    %46 = vector.shape_cast %45 : vector<1x1x32xf32> to vector<1x32xf32>
    %cst_49 = arith.constant dense<0.000000e+00> : vector<9x96xf32>
    %47 = tpu.matmul %15, %24, %cst_49 {dimension_numbers = #tpu.dot_dimension_numbers<[1], [0], [0], [1], [0, 0, 1, 1], [], []>} : vector<9x32xf32>, vector<32x96xf32>, vector<9x96xf32> -> vector<9x96xf32>
    %48 = vector.broadcast %26 : vector<1x96xf32> to vector<9x96xf32>
    %49 = arith.addf %47, %48 : vector<9x96xf32>
    %50 = vector.extract_strided_slice %49 {offsets = [0, 0], sizes = [9, 32], strides = [1, 1]} : vector<9x96xf32> to vector<9x32xf32>
    %51 = vector.extract_strided_slice %49 {offsets = [0, 32], sizes = [9, 32], strides = [1, 1]} : vector<9x96xf32> to vector<9x32xf32>
    %52 = vector.extract_strided_slice %49 {offsets = [0, 64], sizes = [9, 32], strides = [1, 1]} : vector<9x96xf32> to vector<9x32xf32>
    %53 = vector.extract_strided_slice %50 {offsets = [0, 0], sizes = [9, 8], strides = [1, 1]} : vector<9x32xf32> to vector<9x8xf32>
    %54 = vector.extract_strided_slice %51 {offsets = [0, 0], sizes = [9, 8], strides = [1, 1]} : vector<9x32xf32> to vector<9x8xf32>
    %55 = vector.extract_strided_slice %52 {offsets = [0, 0], sizes = [9, 8], strides = [1, 1]} : vector<9x32xf32> to vector<9x8xf32>
    %cst_50 = arith.constant dense<0.000000e+00> : vector<9x9xf32>
    %56 = tpu.matmul %53, %54, %cst_50 {dimension_numbers = #tpu.dot_dimension_numbers<[1], [1], [0], [0], [0, 0, 1, 0], [], []>} : vector<9x8xf32>, vector<9x8xf32>, vector<9x9xf32> -> vector<9x9xf32>
    %cst_51 = arith.constant 0.353553385 : f32
    %57 = vector.broadcast %cst_51 : f32 to vector<9x9xf32>
    %58 = arith.mulf %56, %57 : vector<9x9xf32>
    %59 = vector.broadcast %22 : vector<1x9xf32> to vector<9x9xf32>
    %60 = arith.addf %58, %59 : vector<9x9xf32>
    %cst_52 = arith.constant dense<0xFF800000> : vector<9xf32>
    %61 = vector.multi_reduction <maximumf>, %60, %cst_52 [1] : vector<9x9xf32> to vector<9xf32>
    %62 = vector.shape_cast %61 : vector<9xf32> to vector<9x1xf32>
    %63 = vector.broadcast %62 : vector<9x1xf32> to vector<9x9xf32>
    %64 = arith.subf %60, %63 : vector<9x9xf32>
    %65 = math.exp %64 : vector<9x9xf32>
    %cst_53 = arith.constant dense<0.000000e+00> : vector<9xf32>
    %66 = vector.multi_reduction <add>, %65, %cst_53 [1] : vector<9x9xf32> to vector<9xf32>
    %67 = vector.shape_cast %66 : vector<9xf32> to vector<9x1xf32>
    %68 = tpu.reciprocal %67 {approx = true} : vector<9x1xf32> -> vector<9x1xf32>
    %69 = vector.broadcast %68 : vector<9x1xf32> to vector<9x9xf32>
    %70 = arith.mulf %65, %69 : vector<9x9xf32>
    %cst_54 = arith.constant dense<0.000000e+00> : vector<9x8xf32>
    %71 = tpu.matmul %70, %55, %cst_54 {dimension_numbers = #tpu.dot_dimension_numbers<[1], [0], [0], [1], [0, 0, 1, 1], [], []>} : vector<9x9xf32>, vector<9x8xf32>, vector<9x8xf32> -> vector<9x8xf32>
    %72 = vector.extract_strided_slice %28 {offsets = [0, 0], sizes = [8, 32], strides = [1, 1]} : vector<32x32xf32> to vector<8x32xf32>
    %cst_55 = arith.constant dense<0.000000e+00> : vector<9x32xf32>
    %73 = tpu.matmul %71, %72, %cst_55 {dimension_numbers = #tpu.dot_dimension_numbers<[1], [0], [0], [1], [0, 0, 1, 1], [], []>} : vector<9x8xf32>, vector<8x32xf32>, vector<9x32xf32> -> vector<9x32xf32>
    %74 = vector.extract_strided_slice %50 {offsets = [0, 8], sizes = [9, 8], strides = [1, 1]} : vector<9x32xf32> to vector<9x8xf32>
    %75 = vector.extract_strided_slice %51 {offsets = [0, 8], sizes = [9, 8], strides = [1, 1]} : vector<9x32xf32> to vector<9x8xf32>
    %76 = vector.extract_strided_slice %52 {offsets = [0, 8], sizes = [9, 8], strides = [1, 1]} : vector<9x32xf32> to vector<9x8xf32>
    %cst_56 = arith.constant dense<0.000000e+00> : vector<9x9xf32>
    %77 = tpu.matmul %74, %75, %cst_56 {dimension_numbers = #tpu.dot_dimension_numbers<[1], [1], [0], [0], [0, 0, 1, 0], [], []>} : vector<9x8xf32>, vector<9x8xf32>, vector<9x9xf32> -> vector<9x9xf32>
    %cst_57 = arith.constant 0.353553385 : f32
    %78 = vector.broadcast %cst_57 : f32 to vector<9x9xf32>
    %79 = arith.mulf %77, %78 : vector<9x9xf32>
    %80 = vector.broadcast %22 : vector<1x9xf32> to vector<9x9xf32>
    %81 = arith.addf %79, %80 : vector<9x9xf32>
    %cst_58 = arith.constant dense<0xFF800000> : vector<9xf32>
    %82 = vector.multi_reduction <maximumf>, %81, %cst_58 [1] : vector<9x9xf32> to vector<9xf32>
    %83 = vector.shape_cast %82 : vector<9xf32> to vector<9x1xf32>
    %84 = vector.broadcast %83 : vector<9x1xf32> to vector<9x9xf32>
    %85 = arith.subf %81, %84 : vector<9x9xf32>
    %86 = math.exp %85 : vector<9x9xf32>
    %cst_59 = arith.constant dense<0.000000e+00> : vector<9xf32>
    %87 = vector.multi_reduction <add>, %86, %cst_59 [1] : vector<9x9xf32> to vector<9xf32>
    %88 = vector.shape_cast %87 : vector<9xf32> to vector<9x1xf32>
    %89 = tpu.reciprocal %88 {approx = true} : vector<9x1xf32> -> vector<9x1xf32>
    %90 = vector.broadcast %89 : vector<9x1xf32> to vector<9x9xf32>
    %91 = arith.mulf %86, %90 : vector<9x9xf32>
    %cst_60 = arith.constant dense<0.000000e+00> : vector<9x8xf32>
    %92 = tpu.matmul %91, %76, %cst_60 {dimension_numbers = #tpu.dot_dimension_numbers<[1], [0], [0], [1], [0, 0, 1, 1], [], []>} : vector<9x9xf32>, vector<9x8xf32>, vector<9x8xf32> -> vector<9x8xf32>
    %93 = vector.extract_strided_slice %28 {offsets = [8, 0], sizes = [8, 32], strides = [1, 1]} : vector<32x32xf32> to vector<8x32xf32>
    %cst_61 = arith.constant dense<0.000000e+00> : vector<9x32xf32>
    %94 = tpu.matmul %92, %93, %cst_61 {dimension_numbers = #tpu.dot_dimension_numbers<[1], [0], [0], [1], [0, 0, 1, 1], [], []>} : vector<9x8xf32>, vector<8x32xf32>, vector<9x32xf32> -> vector<9x32xf32>
    %95 = arith.addf %73, %94 : vector<9x32xf32>
    %96 = vector.extract_strided_slice %50 {offsets = [0, 16], sizes = [9, 8], strides = [1, 1]} : vector<9x32xf32> to vector<9x8xf32>
    %97 = vector.extract_strided_slice %51 {offsets = [0, 16], sizes = [9, 8], strides = [1, 1]} : vector<9x32xf32> to vector<9x8xf32>
    %98 = vector.extract_strided_slice %52 {offsets = [0, 16], sizes = [9, 8], strides = [1, 1]} : vector<9x32xf32> to vector<9x8xf32>
    %cst_62 = arith.constant dense<0.000000e+00> : vector<9x9xf32>
    %99 = tpu.matmul %96, %97, %cst_62 {dimension_numbers = #tpu.dot_dimension_numbers<[1], [1], [0], [0], [0, 0, 1, 0], [], []>} : vector<9x8xf32>, vector<9x8xf32>, vector<9x9xf32> -> vector<9x9xf32>
    %cst_63 = arith.constant 0.353553385 : f32
    %100 = vector.broadcast %cst_63 : f32 to vector<9x9xf32>
    %101 = arith.mulf %99, %100 : vector<9x9xf32>
    %102 = vector.broadcast %22 : vector<1x9xf32> to vector<9x9xf32>
    %103 = arith.addf %101, %102 : vector<9x9xf32>
    %cst_64 = arith.constant dense<0xFF800000> : vector<9xf32>
    %104 = vector.multi_reduction <maximumf>, %103, %cst_64 [1] : vector<9x9xf32> to vector<9xf32>
    %105 = vector.shape_cast %104 : vector<9xf32> to vector<9x1xf32>
    %106 = vector.broadcast %105 : vector<9x1xf32> to vector<9x9xf32>
    %107 = arith.subf %103, %106 : vector<9x9xf32>
    %108 = math.exp %107 : vector<9x9xf32>
    %cst_65 = arith.constant dense<0.000000e+00> : vector<9xf32>
    %109 = vector.multi_reduction <add>, %108, %cst_65 [1] : vector<9x9xf32> to vector<9xf32>
    %110 = vector.shape_cast %109 : vector<9xf32> to vector<9x1xf32>
    %111 = tpu.reciprocal %110 {approx = true} : vector<9x1xf32> -> vector<9x1xf32>
    %112 = vector.broadcast %111 : vector<9x1xf32> to vector<9x9xf32>
    %113 = arith.mulf %108, %112 : vector<9x9xf32>
    %cst_66 = arith.constant dense<0.000000e+00> : vector<9x8xf32>
    %114 = tpu.matmul %113, %98, %cst_66 {dimension_numbers = #tpu.dot_dimension_numbers<[1], [0], [0], [1], [0, 0, 1, 1], [], []>} : vector<9x9xf32>, vector<9x8xf32>, vector<9x8xf32> -> vector<9x8xf32>
    %115 = vector.extract_strided_slice %28 {offsets = [16, 0], sizes = [8, 32], strides = [1, 1]} : vector<32x32xf32> to vector<8x32xf32>
    %cst_67 = arith.constant dense<0.000000e+00> : vector<9x32xf32>
    %116 = tpu.matmul %114, %115, %cst_67 {dimension_numbers = #tpu.dot_dimension_numbers<[1], [0], [0], [1], [0, 0, 1, 1], [], []>} : vector<9x8xf32>, vector<8x32xf32>, vector<9x32xf32> -> vector<9x32xf32>
    %117 = arith.addf %95, %116 : vector<9x32xf32>
    %118 = vector.extract_strided_slice %50 {offsets = [0, 24], sizes = [9, 8], strides = [1, 1]} : vector<9x32xf32> to vector<9x8xf32>
    %119 = vector.extract_strided_slice %51 {offsets = [0, 24], sizes = [9, 8], strides = [1, 1]} : vector<9x32xf32> to vector<9x8xf32>
    %120 = vector.extract_strided_slice %52 {offsets = [0, 24], sizes = [9, 8], strides = [1, 1]} : vector<9x32xf32> to vector<9x8xf32>
    %cst_68 = arith.constant dense<0.000000e+00> : vector<9x9xf32>
    %121 = tpu.matmul %118, %119, %cst_68 {dimension_numbers = #tpu.dot_dimension_numbers<[1], [1], [0], [0], [0, 0, 1, 0], [], []>} : vector<9x8xf32>, vector<9x8xf32>, vector<9x9xf32> -> vector<9x9xf32>
    %cst_69 = arith.constant 0.353553385 : f32
    %122 = vector.broadcast %cst_69 : f32 to vector<9x9xf32>
    %123 = arith.mulf %121, %122 : vector<9x9xf32>
    %124 = vector.broadcast %22 : vector<1x9xf32> to vector<9x9xf32>
    %125 = arith.addf %123, %124 : vector<9x9xf32>
    %cst_70 = arith.constant dense<0xFF800000> : vector<9xf32>
    %126 = vector.multi_reduction <maximumf>, %125, %cst_70 [1] : vector<9x9xf32> to vector<9xf32>
    %127 = vector.shape_cast %126 : vector<9xf32> to vector<9x1xf32>
    %128 = vector.broadcast %127 : vector<9x1xf32> to vector<9x9xf32>
    %129 = arith.subf %125, %128 : vector<9x9xf32>
    %130 = math.exp %129 : vector<9x9xf32>
    %cst_71 = arith.constant dense<0.000000e+00> : vector<9xf32>
    %131 = vector.multi_reduction <add>, %130, %cst_71 [1] : vector<9x9xf32> to vector<9xf32>
    %132 = vector.shape_cast %131 : vector<9xf32> to vector<9x1xf32>
    %133 = tpu.reciprocal %132 {approx = true} : vector<9x1xf32> -> vector<9x1xf32>
    %134 = vector.broadcast %133 : vector<9x1xf32> to vector<9x9xf32>
    %135 = arith.mulf %130, %134 : vector<9x9xf32>
    %cst_72 = arith.constant dense<0.000000e+00> : vector<9x8xf32>
    %136 = tpu.matmul %135, %120, %cst_72 {dimension_numbers = #tpu.dot_dimension_numbers<[1], [0], [0], [1], [0, 0, 1, 1], [], []>} : vector<9x9xf32>, vector<9x8xf32>, vector<9x8xf32> -> vector<9x8xf32>
    %137 = vector.extract_strided_slice %28 {offsets = [24, 0], sizes = [8, 32], strides = [1, 1]} : vector<32x32xf32> to vector<8x32xf32>
    %cst_73 = arith.constant dense<0.000000e+00> : vector<9x32xf32>
    %138 = tpu.matmul %136, %137, %cst_73 {dimension_numbers = #tpu.dot_dimension_numbers<[1], [0], [0], [1], [0, 0, 1, 1], [], []>} : vector<9x8xf32>, vector<8x32xf32>, vector<9x32xf32> -> vector<9x32xf32>
    %139 = arith.addf %117, %138 : vector<9x32xf32>
    %140 = vector.broadcast %30 : vector<1x32xf32> to vector<9x32xf32>
    %141 = arith.addf %139, %140 : vector<9x32xf32>
    %142 = arith.addf %15, %141 : vector<9x32xf32>
    %cst_74 = arith.constant dense<0.000000e+00> : vector<9xf32>
    %143 = vector.multi_reduction <add>, %142, %cst_74 [1] : vector<9x32xf32> to vector<9xf32>
    %144 = vector.shape_cast %143 : vector<9xf32> to vector<9x1xf32>
    %cst_75 = arith.constant 3.200000e+01 : f32
    %145 = vector.broadcast %cst_75 : f32 to vector<9x1xf32>
    %146 = arith.divf %144, %145 : vector<9x1xf32>
    %147 = vector.broadcast %146 : vector<9x1xf32> to vector<9x32xf32>
    %148 = arith.subf %142, %147 : vector<9x32xf32>
    %149 = arith.mulf %148, %148 : vector<9x32xf32>
    %cst_76 = arith.constant dense<0.000000e+00> : vector<9xf32>
    %150 = vector.multi_reduction <add>, %149, %cst_76 [1] : vector<9x32xf32> to vector<9xf32>
    %151 = vector.shape_cast %150 : vector<9xf32> to vector<9x1xf32>
    %cst_77 = arith.constant 3.200000e+01 : f32
    %152 = vector.broadcast %cst_77 : f32 to vector<9x1xf32>
    %153 = arith.divf %151, %152 : vector<9x1xf32>
    %154 = vector.broadcast %146 : vector<9x1xf32> to vector<9x32xf32>
    %155 = arith.subf %142, %154 : vector<9x32xf32>
    %cst_78 = arith.constant 9.99999974E-6 : f32
    %156 = vector.broadcast %cst_78 : f32 to vector<9x1xf32>
    %157 = arith.addf %153, %156 : vector<9x1xf32>
    %158 = math.rsqrt %157 : vector<9x1xf32>
    %159 = vector.broadcast %158 : vector<9x1xf32> to vector<9x32xf32>
    %160 = arith.mulf %155, %159 : vector<9x32xf32>
    %161 = vector.broadcast %32 : vector<1x32xf32> to vector<9x32xf32>
    %162 = arith.mulf %160, %161 : vector<9x32xf32>
    %163 = vector.broadcast %34 : vector<1x32xf32> to vector<9x32xf32>
    %164 = arith.addf %162, %163 : vector<9x32xf32>
    %cst_79 = arith.constant dense<0.000000e+00> : vector<9x64xf32>
    %165 = tpu.matmul %164, %40, %cst_79 {dimension_numbers = #tpu.dot_dimension_numbers<[1], [0], [0], [1], [0, 0, 1, 1], [], []>} : vector<9x32xf32>, vector<32x64xf32>, vector<9x64xf32> -> vector<9x64xf32>
    %166 = vector.broadcast %42 : vector<1x64xf32> to vector<9x64xf32>
    %167 = arith.addf %165, %166 : vector<9x64xf32>
    %cst_80 = arith.constant 0.000000e+00 : f32
    %168 = vector.broadcast %cst_80 : f32 to vector<9x64xf32>
    %169 = arith.maximumf %167, %168 : vector<9x64xf32>
    %cst_81 = arith.constant dense<0.000000e+00> : vector<9x32xf32>
    %170 = tpu.matmul %169, %44, %cst_81 {dimension_numbers = #tpu.dot_dimension_numbers<[1], [0], [0], [1], [0, 0, 1, 1], [], []>} : vector<9x64xf32>, vector<64x32xf32>, vector<9x32xf32> -> vector<9x32xf32>
    %171 = vector.broadcast %46 : vector<1x32xf32> to vector<9x32xf32>
    %172 = arith.addf %170, %171 : vector<9x32xf32>
    %173 = arith.addf %164, %172 : vector<9x32xf32>
    %cst_82 = arith.constant dense<0.000000e+00> : vector<9xf32>
    %174 = vector.multi_reduction <add>, %173, %cst_82 [1] : vector<9x32xf32> to vector<9xf32>
    %175 = vector.shape_cast %174 : vector<9xf32> to vector<9x1xf32>
    %cst_83 = arith.constant 3.200000e+01 : f32
    %176 = vector.broadcast %cst_83 : f32 to vector<9x1xf32>
    %177 = arith.divf %175, %176 : vector<9x1xf32>
    %178 = vector.broadcast %177 : vector<9x1xf32> to vector<9x32xf32>
    %179 = arith.subf %173, %178 : vector<9x32xf32>
    %180 = arith.mulf %179, %179 : vector<9x32xf32>
    %cst_84 = arith.constant dense<0.000000e+00> : vector<9xf32>
    %181 = vector.multi_reduction <add>, %180, %cst_84 [1] : vector<9x32xf32> to vector<9xf32>
    %182 = vector.shape_cast %181 : vector<9xf32> to vector<9x1xf32>
    %cst_85 = arith.constant 3.200000e+01 : f32
    %183 = vector.broadcast %cst_85 : f32 to vector<9x1xf32>
    %184 = arith.divf %182, %183 : vector<9x1xf32>
    %185 = vector.broadcast %177 : vector<9x1xf32> to vector<9x32xf32>
    %186 = arith.subf %173, %185 : vector<9x32xf32>
    %cst_86 = arith.constant 9.99999974E-6 : f32
    %187 = vector.broadcast %cst_86 : f32 to vector<9x1xf32>
    %188 = arith.addf %184, %187 : vector<9x1xf32>
    %189 = math.rsqrt %188 : vector<9x1xf32>
    %190 = vector.broadcast %189 : vector<9x1xf32> to vector<9x32xf32>
    %191 = arith.mulf %186, %190 : vector<9x32xf32>
    %192 = vector.broadcast %36 : vector<1x32xf32> to vector<9x32xf32>
    %193 = arith.mulf %191, %192 : vector<9x32xf32>
    %194 = vector.broadcast %38 : vector<1x32xf32> to vector<9x32xf32>
    %195 = arith.addf %193, %194 : vector<9x32xf32>
    %c1 = arith.constant 1 : index
    %c0_87 = arith.constant 0 : index
    %c0_88 = arith.constant 0 : index
    %196 = vector.load %arg7[%c1, %c0_87, %c0_88] : memref<2x32x96xf32, #tpu.memory_space<vmem>>, vector<1x32x96xf32>
    %197 = vector.shape_cast %196 : vector<1x32x96xf32> to vector<32x96xf32>
    %c1_89 = arith.constant 1 : index
    %c0_90 = arith.constant 0 : index
    %c0_91 = arith.constant 0 : index
    %198 = vector.load %arg8[%c1_89, %c0_90, %c0_91] : memref<2x1x96xf32, #tpu.memory_space<vmem>>, vector<1x1x96xf32>
    %199 = vector.shape_cast %198 : vector<1x1x96xf32> to vector<1x96xf32>
    %c1_92 = arith.constant 1 : index
    %c0_93 = arith.constant 0 : index
    %c0_94 = arith.constant 0 : index
    %200 = vector.load %arg9[%c1_92, %c0_93, %c0_94] : memref<2x32x32xf32, #tpu.memory_space<vmem>>, vector<1x32x32xf32>
    %201 = vector.shape_cast %200 : vector<1x32x32xf32> to vector<32x32xf32>
    %c1_95 = arith.constant 1 : index
    %c0_96 = arith.constant 0 : index
    %c0_97 = arith.constant 0 : index
    %202 = vector.load %arg10[%c1_95, %c0_96, %c0_97] : memref<2x1x32xf32, #tpu.memory_space<vmem>>, vector<1x1x32xf32>
    %203 = vector.shape_cast %202 : vector<1x1x32xf32> to vector<1x32xf32>
    %c1_98 = arith.constant 1 : index
    %c0_99 = arith.constant 0 : index
    %c0_100 = arith.constant 0 : index
    %204 = vector.load %arg11[%c1_98, %c0_99, %c0_100] : memref<2x1x32xf32, #tpu.memory_space<vmem>>, vector<1x1x32xf32>
    %205 = vector.shape_cast %204 : vector<1x1x32xf32> to vector<1x32xf32>
    %c1_101 = arith.constant 1 : index
    %c0_102 = arith.constant 0 : index
    %c0_103 = arith.constant 0 : index
    %206 = vector.load %arg12[%c1_101, %c0_102, %c0_103] : memref<2x1x32xf32, #tpu.memory_space<vmem>>, vector<1x1x32xf32>
    %207 = vector.shape_cast %206 : vector<1x1x32xf32> to vector<1x32xf32>
    %c1_104 = arith.constant 1 : index
    %c0_105 = arith.constant 0 : index
    %c0_106 = arith.constant 0 : index
    %208 = vector.load %arg13[%c1_104, %c0_105, %c0_106] : memref<2x1x32xf32, #tpu.memory_space<vmem>>, vector<1x1x32xf32>
    %209 = vector.shape_cast %208 : vector<1x1x32xf32> to vector<1x32xf32>
    %c1_107 = arith.constant 1 : index
    %c0_108 = arith.constant 0 : index
    %c0_109 = arith.constant 0 : index
    %210 = vector.load %arg14[%c1_107, %c0_108, %c0_109] : memref<2x1x32xf32, #tpu.memory_space<vmem>>, vector<1x1x32xf32>
    %211 = vector.shape_cast %210 : vector<1x1x32xf32> to vector<1x32xf32>
    %c1_110 = arith.constant 1 : index
    %c0_111 = arith.constant 0 : index
    %c0_112 = arith.constant 0 : index
    %212 = vector.load %arg15[%c1_110, %c0_111, %c0_112] : memref<2x32x64xf32, #tpu.memory_space<vmem>>, vector<1x32x64xf32>
    %213 = vector.shape_cast %212 : vector<1x32x64xf32> to vector<32x64xf32>
    %c1_113 = arith.constant 1 : index
    %c0_114 = arith.constant 0 : index
    %c0_115 = arith.constant 0 : index
    %214 = vector.load %arg16[%c1_113, %c0_114, %c0_115] : memref<2x1x64xf32, #tpu.memory_space<vmem>>, vector<1x1x64xf32>
    %215 = vector.shape_cast %214 : vector<1x1x64xf32> to vector<1x64xf32>
    %c1_116 = arith.constant 1 : index
    %c0_117 = arith.constant 0 : index
    %c0_118 = arith.constant 0 : index
    %216 = vector.load %arg17[%c1_116, %c0_117, %c0_118] : memref<2x64x32xf32, #tpu.memory_space<vmem>>, vector<1x64x32xf32>
    %217 = vector.shape_cast %216 : vector<1x64x32xf32> to vector<64x32xf32>
    %c1_119 = arith.constant 1 : index
    %c0_120 = arith.constant 0 : index
    %c0_121 = arith.constant 0 : index
    %218 = vector.load %arg18[%c1_119, %c0_120, %c0_121] : memref<2x1x32xf32, #tpu.memory_space<vmem>>, vector<1x1x32xf32>
    %219 = vector.shape_cast %218 : vector<1x1x32xf32> to vector<1x32xf32>
    %cst_122 = arith.constant dense<0.000000e+00> : vector<9x96xf32>
    %220 = tpu.matmul %195, %197, %cst_122 {dimension_numbers = #tpu.dot_dimension_numbers<[1], [0], [0], [1], [0, 0, 1, 1], [], []>} : vector<9x32xf32>, vector<32x96xf32>, vector<9x96xf32> -> vector<9x96xf32>
    %221 = vector.broadcast %199 : vector<1x96xf32> to vector<9x96xf32>
    %222 = arith.addf %220, %221 : vector<9x96xf32>
    %223 = vector.extract_strided_slice %222 {offsets = [0, 0], sizes = [9, 32], strides = [1, 1]} : vector<9x96xf32> to vector<9x32xf32>
    %224 = vector.extract_strided_slice %222 {offsets = [0, 32], sizes = [9, 32], strides = [1, 1]} : vector<9x96xf32> to vector<9x32xf32>
    %225 = vector.extract_strided_slice %222 {offsets = [0, 64], sizes = [9, 32], strides = [1, 1]} : vector<9x96xf32> to vector<9x32xf32>
    %226 = vector.extract_strided_slice %223 {offsets = [0, 0], sizes = [9, 8], strides = [1, 1]} : vector<9x32xf32> to vector<9x8xf32>
    %227 = vector.extract_strided_slice %224 {offsets = [0, 0], sizes = [9, 8], strides = [1, 1]} : vector<9x32xf32> to vector<9x8xf32>
    %228 = vector.extract_strided_slice %225 {offsets = [0, 0], sizes = [9, 8], strides = [1, 1]} : vector<9x32xf32> to vector<9x8xf32>
    %cst_123 = arith.constant dense<0.000000e+00> : vector<9x9xf32>
    %229 = tpu.matmul %226, %227, %cst_123 {dimension_numbers = #tpu.dot_dimension_numbers<[1], [1], [0], [0], [0, 0, 1, 0], [], []>} : vector<9x8xf32>, vector<9x8xf32>, vector<9x9xf32> -> vector<9x9xf32>
    %cst_124 = arith.constant 0.353553385 : f32
    %230 = vector.broadcast %cst_124 : f32 to vector<9x9xf32>
    %231 = arith.mulf %229, %230 : vector<9x9xf32>
    %232 = vector.broadcast %22 : vector<1x9xf32> to vector<9x9xf32>
    %233 = arith.addf %231, %232 : vector<9x9xf32>
    %cst_125 = arith.constant dense<0xFF800000> : vector<9xf32>
    %234 = vector.multi_reduction <maximumf>, %233, %cst_125 [1] : vector<9x9xf32> to vector<9xf32>
    %235 = vector.shape_cast %234 : vector<9xf32> to vector<9x1xf32>
    %236 = vector.broadcast %235 : vector<9x1xf32> to vector<9x9xf32>
    %237 = arith.subf %233, %236 : vector<9x9xf32>
    %238 = math.exp %237 : vector<9x9xf32>
    %cst_126 = arith.constant dense<0.000000e+00> : vector<9xf32>
    %239 = vector.multi_reduction <add>, %238, %cst_126 [1] : vector<9x9xf32> to vector<9xf32>
    %240 = vector.shape_cast %239 : vector<9xf32> to vector<9x1xf32>
    %241 = tpu.reciprocal %240 {approx = true} : vector<9x1xf32> -> vector<9x1xf32>
    %242 = vector.broadcast %241 : vector<9x1xf32> to vector<9x9xf32>
    %243 = arith.mulf %238, %242 : vector<9x9xf32>
    %cst_127 = arith.constant dense<0.000000e+00> : vector<9x8xf32>
    %244 = tpu.matmul %243, %228, %cst_127 {dimension_numbers = #tpu.dot_dimension_numbers<[1], [0], [0], [1], [0, 0, 1, 1], [], []>} : vector<9x9xf32>, vector<9x8xf32>, vector<9x8xf32> -> vector<9x8xf32>
    %245 = vector.extract_strided_slice %201 {offsets = [0, 0], sizes = [8, 32], strides = [1, 1]} : vector<32x32xf32> to vector<8x32xf32>
    %cst_128 = arith.constant dense<0.000000e+00> : vector<9x32xf32>
    %246 = tpu.matmul %244, %245, %cst_128 {dimension_numbers = #tpu.dot_dimension_numbers<[1], [0], [0], [1], [0, 0, 1, 1], [], []>} : vector<9x8xf32>, vector<8x32xf32>, vector<9x32xf32> -> vector<9x32xf32>
    %247 = vector.extract_strided_slice %223 {offsets = [0, 8], sizes = [9, 8], strides = [1, 1]} : vector<9x32xf32> to vector<9x8xf32>
    %248 = vector.extract_strided_slice %224 {offsets = [0, 8], sizes = [9, 8], strides = [1, 1]} : vector<9x32xf32> to vector<9x8xf32>
    %249 = vector.extract_strided_slice %225 {offsets = [0, 8], sizes = [9, 8], strides = [1, 1]} : vector<9x32xf32> to vector<9x8xf32>
    %cst_129 = arith.constant dense<0.000000e+00> : vector<9x9xf32>
    %250 = tpu.matmul %247, %248, %cst_129 {dimension_numbers = #tpu.dot_dimension_numbers<[1], [1], [0], [0], [0, 0, 1, 0], [], []>} : vector<9x8xf32>, vector<9x8xf32>, vector<9x9xf32> -> vector<9x9xf32>
    %cst_130 = arith.constant 0.353553385 : f32
    %251 = vector.broadcast %cst_130 : f32 to vector<9x9xf32>
    %252 = arith.mulf %250, %251 : vector<9x9xf32>
    %253 = vector.broadcast %22 : vector<1x9xf32> to vector<9x9xf32>
    %254 = arith.addf %252, %253 : vector<9x9xf32>
    %cst_131 = arith.constant dense<0xFF800000> : vector<9xf32>
    %255 = vector.multi_reduction <maximumf>, %254, %cst_131 [1] : vector<9x9xf32> to vector<9xf32>
    %256 = vector.shape_cast %255 : vector<9xf32> to vector<9x1xf32>
    %257 = vector.broadcast %256 : vector<9x1xf32> to vector<9x9xf32>
    %258 = arith.subf %254, %257 : vector<9x9xf32>
    %259 = math.exp %258 : vector<9x9xf32>
    %cst_132 = arith.constant dense<0.000000e+00> : vector<9xf32>
    %260 = vector.multi_reduction <add>, %259, %cst_132 [1] : vector<9x9xf32> to vector<9xf32>
    %261 = vector.shape_cast %260 : vector<9xf32> to vector<9x1xf32>
    %262 = tpu.reciprocal %261 {approx = true} : vector<9x1xf32> -> vector<9x1xf32>
    %263 = vector.broadcast %262 : vector<9x1xf32> to vector<9x9xf32>
    %264 = arith.mulf %259, %263 : vector<9x9xf32>
    %cst_133 = arith.constant dense<0.000000e+00> : vector<9x8xf32>
    %265 = tpu.matmul %264, %249, %cst_133 {dimension_numbers = #tpu.dot_dimension_numbers<[1], [0], [0], [1], [0, 0, 1, 1], [], []>} : vector<9x9xf32>, vector<9x8xf32>, vector<9x8xf32> -> vector<9x8xf32>
    %266 = vector.extract_strided_slice %201 {offsets = [8, 0], sizes = [8, 32], strides = [1, 1]} : vector<32x32xf32> to vector<8x32xf32>
    %cst_134 = arith.constant dense<0.000000e+00> : vector<9x32xf32>
    %267 = tpu.matmul %265, %266, %cst_134 {dimension_numbers = #tpu.dot_dimension_numbers<[1], [0], [0], [1], [0, 0, 1, 1], [], []>} : vector<9x8xf32>, vector<8x32xf32>, vector<9x32xf32> -> vector<9x32xf32>
    %268 = arith.addf %246, %267 : vector<9x32xf32>
    %269 = vector.extract_strided_slice %223 {offsets = [0, 16], sizes = [9, 8], strides = [1, 1]} : vector<9x32xf32> to vector<9x8xf32>
    %270 = vector.extract_strided_slice %224 {offsets = [0, 16], sizes = [9, 8], strides = [1, 1]} : vector<9x32xf32> to vector<9x8xf32>
    %271 = vector.extract_strided_slice %225 {offsets = [0, 16], sizes = [9, 8], strides = [1, 1]} : vector<9x32xf32> to vector<9x8xf32>
    %cst_135 = arith.constant dense<0.000000e+00> : vector<9x9xf32>
    %272 = tpu.matmul %269, %270, %cst_135 {dimension_numbers = #tpu.dot_dimension_numbers<[1], [1], [0], [0], [0, 0, 1, 0], [], []>} : vector<9x8xf32>, vector<9x8xf32>, vector<9x9xf32> -> vector<9x9xf32>
    %cst_136 = arith.constant 0.353553385 : f32
    %273 = vector.broadcast %cst_136 : f32 to vector<9x9xf32>
    %274 = arith.mulf %272, %273 : vector<9x9xf32>
    %275 = vector.broadcast %22 : vector<1x9xf32> to vector<9x9xf32>
    %276 = arith.addf %274, %275 : vector<9x9xf32>
    %cst_137 = arith.constant dense<0xFF800000> : vector<9xf32>
    %277 = vector.multi_reduction <maximumf>, %276, %cst_137 [1] : vector<9x9xf32> to vector<9xf32>
    %278 = vector.shape_cast %277 : vector<9xf32> to vector<9x1xf32>
    %279 = vector.broadcast %278 : vector<9x1xf32> to vector<9x9xf32>
    %280 = arith.subf %276, %279 : vector<9x9xf32>
    %281 = math.exp %280 : vector<9x9xf32>
    %cst_138 = arith.constant dense<0.000000e+00> : vector<9xf32>
    %282 = vector.multi_reduction <add>, %281, %cst_138 [1] : vector<9x9xf32> to vector<9xf32>
    %283 = vector.shape_cast %282 : vector<9xf32> to vector<9x1xf32>
    %284 = tpu.reciprocal %283 {approx = true} : vector<9x1xf32> -> vector<9x1xf32>
    %285 = vector.broadcast %284 : vector<9x1xf32> to vector<9x9xf32>
    %286 = arith.mulf %281, %285 : vector<9x9xf32>
    %cst_139 = arith.constant dense<0.000000e+00> : vector<9x8xf32>
    %287 = tpu.matmul %286, %271, %cst_139 {dimension_numbers = #tpu.dot_dimension_numbers<[1], [0], [0], [1], [0, 0, 1, 1], [], []>} : vector<9x9xf32>, vector<9x8xf32>, vector<9x8xf32> -> vector<9x8xf32>
    %288 = vector.extract_strided_slice %201 {offsets = [16, 0], sizes = [8, 32], strides = [1, 1]} : vector<32x32xf32> to vector<8x32xf32>
    %cst_140 = arith.constant dense<0.000000e+00> : vector<9x32xf32>
    %289 = tpu.matmul %287, %288, %cst_140 {dimension_numbers = #tpu.dot_dimension_numbers<[1], [0], [0], [1], [0, 0, 1, 1], [], []>} : vector<9x8xf32>, vector<8x32xf32>, vector<9x32xf32> -> vector<9x32xf32>
    %290 = arith.addf %268, %289 : vector<9x32xf32>
    %291 = vector.extract_strided_slice %223 {offsets = [0, 24], sizes = [9, 8], strides = [1, 1]} : vector<9x32xf32> to vector<9x8xf32>
    %292 = vector.extract_strided_slice %224 {offsets = [0, 24], sizes = [9, 8], strides = [1, 1]} : vector<9x32xf32> to vector<9x8xf32>
    %293 = vector.extract_strided_slice %225 {offsets = [0, 24], sizes = [9, 8], strides = [1, 1]} : vector<9x32xf32> to vector<9x8xf32>
    %cst_141 = arith.constant dense<0.000000e+00> : vector<9x9xf32>
    %294 = tpu.matmul %291, %292, %cst_141 {dimension_numbers = #tpu.dot_dimension_numbers<[1], [1], [0], [0], [0, 0, 1, 0], [], []>} : vector<9x8xf32>, vector<9x8xf32>, vector<9x9xf32> -> vector<9x9xf32>
    %cst_142 = arith.constant 0.353553385 : f32
    %295 = vector.broadcast %cst_142 : f32 to vector<9x9xf32>
    %296 = arith.mulf %294, %295 : vector<9x9xf32>
    %297 = vector.broadcast %22 : vector<1x9xf32> to vector<9x9xf32>
    %298 = arith.addf %296, %297 : vector<9x9xf32>
    %cst_143 = arith.constant dense<0xFF800000> : vector<9xf32>
    %299 = vector.multi_reduction <maximumf>, %298, %cst_143 [1] : vector<9x9xf32> to vector<9xf32>
    %300 = vector.shape_cast %299 : vector<9xf32> to vector<9x1xf32>
    %301 = vector.broadcast %300 : vector<9x1xf32> to vector<9x9xf32>
    %302 = arith.subf %298, %301 : vector<9x9xf32>
    %303 = math.exp %302 : vector<9x9xf32>
    %cst_144 = arith.constant dense<0.000000e+00> : vector<9xf32>
    %304 = vector.multi_reduction <add>, %303, %cst_144 [1] : vector<9x9xf32> to vector<9xf32>
    %305 = vector.shape_cast %304 : vector<9xf32> to vector<9x1xf32>
    %306 = tpu.reciprocal %305 {approx = true} : vector<9x1xf32> -> vector<9x1xf32>
    %307 = vector.broadcast %306 : vector<9x1xf32> to vector<9x9xf32>
    %308 = arith.mulf %303, %307 : vector<9x9xf32>
    %cst_145 = arith.constant dense<0.000000e+00> : vector<9x8xf32>
    %309 = tpu.matmul %308, %293, %cst_145 {dimension_numbers = #tpu.dot_dimension_numbers<[1], [0], [0], [1], [0, 0, 1, 1], [], []>} : vector<9x9xf32>, vector<9x8xf32>, vector<9x8xf32> -> vector<9x8xf32>
    %310 = vector.extract_strided_slice %201 {offsets = [24, 0], sizes = [8, 32], strides = [1, 1]} : vector<32x32xf32> to vector<8x32xf32>
    %cst_146 = arith.constant dense<0.000000e+00> : vector<9x32xf32>
    %311 = tpu.matmul %309, %310, %cst_146 {dimension_numbers = #tpu.dot_dimension_numbers<[1], [0], [0], [1], [0, 0, 1, 1], [], []>} : vector<9x8xf32>, vector<8x32xf32>, vector<9x32xf32> -> vector<9x32xf32>
    %312 = arith.addf %290, %311 : vector<9x32xf32>
    %313 = vector.broadcast %203 : vector<1x32xf32> to vector<9x32xf32>
    %314 = arith.addf %312, %313 : vector<9x32xf32>
    %315 = arith.addf %195, %314 : vector<9x32xf32>
    %cst_147 = arith.constant dense<0.000000e+00> : vector<9xf32>
    %316 = vector.multi_reduction <add>, %315, %cst_147 [1] : vector<9x32xf32> to vector<9xf32>
    %317 = vector.shape_cast %316 : vector<9xf32> to vector<9x1xf32>
    %cst_148 = arith.constant 3.200000e+01 : f32
    %318 = vector.broadcast %cst_148 : f32 to vector<9x1xf32>
    %319 = arith.divf %317, %318 : vector<9x1xf32>
    %320 = vector.broadcast %319 : vector<9x1xf32> to vector<9x32xf32>
    %321 = arith.subf %315, %320 : vector<9x32xf32>
    %322 = arith.mulf %321, %321 : vector<9x32xf32>
    %cst_149 = arith.constant dense<0.000000e+00> : vector<9xf32>
    %323 = vector.multi_reduction <add>, %322, %cst_149 [1] : vector<9x32xf32> to vector<9xf32>
    %324 = vector.shape_cast %323 : vector<9xf32> to vector<9x1xf32>
    %cst_150 = arith.constant 3.200000e+01 : f32
    %325 = vector.broadcast %cst_150 : f32 to vector<9x1xf32>
    %326 = arith.divf %324, %325 : vector<9x1xf32>
    %327 = vector.broadcast %319 : vector<9x1xf32> to vector<9x32xf32>
    %328 = arith.subf %315, %327 : vector<9x32xf32>
    %cst_151 = arith.constant 9.99999974E-6 : f32
    %329 = vector.broadcast %cst_151 : f32 to vector<9x1xf32>
    %330 = arith.addf %326, %329 : vector<9x1xf32>
    %331 = math.rsqrt %330 : vector<9x1xf32>
    %332 = vector.broadcast %331 : vector<9x1xf32> to vector<9x32xf32>
    %333 = arith.mulf %328, %332 : vector<9x32xf32>
    %334 = vector.broadcast %205 : vector<1x32xf32> to vector<9x32xf32>
    %335 = arith.mulf %333, %334 : vector<9x32xf32>
    %336 = vector.broadcast %207 : vector<1x32xf32> to vector<9x32xf32>
    %337 = arith.addf %335, %336 : vector<9x32xf32>
    %cst_152 = arith.constant dense<0.000000e+00> : vector<9x64xf32>
    %338 = tpu.matmul %337, %213, %cst_152 {dimension_numbers = #tpu.dot_dimension_numbers<[1], [0], [0], [1], [0, 0, 1, 1], [], []>} : vector<9x32xf32>, vector<32x64xf32>, vector<9x64xf32> -> vector<9x64xf32>
    %339 = vector.broadcast %215 : vector<1x64xf32> to vector<9x64xf32>
    %340 = arith.addf %338, %339 : vector<9x64xf32>
    %cst_153 = arith.constant 0.000000e+00 : f32
    %341 = vector.broadcast %cst_153 : f32 to vector<9x64xf32>
    %342 = arith.maximumf %340, %341 : vector<9x64xf32>
    %cst_154 = arith.constant dense<0.000000e+00> : vector<9x32xf32>
    %343 = tpu.matmul %342, %217, %cst_154 {dimension_numbers = #tpu.dot_dimension_numbers<[1], [0], [0], [1], [0, 0, 1, 1], [], []>} : vector<9x64xf32>, vector<64x32xf32>, vector<9x32xf32> -> vector<9x32xf32>
    %344 = vector.broadcast %219 : vector<1x32xf32> to vector<9x32xf32>
    %345 = arith.addf %343, %344 : vector<9x32xf32>
    %346 = arith.addf %337, %345 : vector<9x32xf32>
    %cst_155 = arith.constant dense<0.000000e+00> : vector<9xf32>
    %347 = vector.multi_reduction <add>, %346, %cst_155 [1] : vector<9x32xf32> to vector<9xf32>
    %348 = vector.shape_cast %347 : vector<9xf32> to vector<9x1xf32>
    %cst_156 = arith.constant 3.200000e+01 : f32
    %349 = vector.broadcast %cst_156 : f32 to vector<9x1xf32>
    %350 = arith.divf %348, %349 : vector<9x1xf32>
    %351 = vector.broadcast %350 : vector<9x1xf32> to vector<9x32xf32>
    %352 = arith.subf %346, %351 : vector<9x32xf32>
    %353 = arith.mulf %352, %352 : vector<9x32xf32>
    %cst_157 = arith.constant dense<0.000000e+00> : vector<9xf32>
    %354 = vector.multi_reduction <add>, %353, %cst_157 [1] : vector<9x32xf32> to vector<9xf32>
    %355 = vector.shape_cast %354 : vector<9xf32> to vector<9x1xf32>
    %cst_158 = arith.constant 3.200000e+01 : f32
    %356 = vector.broadcast %cst_158 : f32 to vector<9x1xf32>
    %357 = arith.divf %355, %356 : vector<9x1xf32>
    %358 = vector.broadcast %350 : vector<9x1xf32> to vector<9x32xf32>
    %359 = arith.subf %346, %358 : vector<9x32xf32>
    %cst_159 = arith.constant 9.99999974E-6 : f32
    %360 = vector.broadcast %cst_159 : f32 to vector<9x1xf32>
    %361 = arith.addf %357, %360 : vector<9x1xf32>
    %362 = math.rsqrt %361 : vector<9x1xf32>
    %363 = vector.broadcast %362 : vector<9x1xf32> to vector<9x32xf32>
    %364 = arith.mulf %359, %363 : vector<9x32xf32>
    %365 = vector.broadcast %209 : vector<1x32xf32> to vector<9x32xf32>
    %366 = arith.mulf %364, %365 : vector<9x32xf32>
    %367 = vector.broadcast %211 : vector<1x32xf32> to vector<9x32xf32>
    %368 = arith.addf %366, %367 : vector<9x32xf32>
    %369 = vector.extract_strided_slice %368 {offsets = [0, 0], sizes = [4, 32], strides = [1, 1]} : vector<9x32xf32> to vector<4x32xf32>
    %c0_160 = arith.constant 0 : index
    %c0_161 = arith.constant 0 : index
    %c0_162 = arith.constant 0 : index
    %370 = vector.load %arg19[%c0_160, %c0_161, %c0_162] : memref<1x4x32xf32, #tpu.memory_space<vmem>>, vector<1x4x32xf32>
    %371 = vector.shape_cast %370 : vector<1x4x32xf32> to vector<4x32xf32>
    %372 = vector.shape_cast %369 : vector<4x32xf32> to vector<1x4x32xf32>
    tpu.vector_store %arg19[%c0_160, %c0_161, %c0_162], %372 {strides = array<i32>} : memref<1x4x32xf32, #tpu.memory_space<vmem>>, vector<1x4x32xf32>,
    return
  }
  func.func @transform_0(%arg0: i32, %arg1: memref<2xi32, #tpu.memory_space<smem>>) -> (i32, i32, i32) {
    %c0_i32 = arith.constant 0 : i32
    %c0_i32_0 = arith.constant 0 : i32
    %c0_i32_1 = arith.constant 0 : i32
    return %arg0, %c0_i32, %c0_i32_0 : i32, i32, i32
  }
  func.func @transform_1(%arg0: i32, %arg1: memref<2xi32, #tpu.memory_space<smem>>) -> (i32, i32) {
    %c0_i32 = arith.constant 0 : i32
    %c0_i32_0 = arith.constant 0 : i32
    %c0_i32_1 = arith.constant 0 : i32
    return %c0_i32, %c0_i32_0 : i32, i32
  }
  func.func @transform_2(%arg0: i32, %arg1: memref<2xi32, #tpu.memory_space<smem>>) -> (i32, i32) {
    %c0_i32 = arith.constant 0 : i32
    %c0_i32_0 = arith.constant 0 : i32
    %c0_i32_1 = arith.constant 0 : i32
    return %c0_i32, %c0_i32_0 : i32, i32
  }
  func.func @transform_3(%arg0: i32, %arg1: memref<2xi32, #tpu.memory_space<smem>>) -> (i32, i32) {
    %c0_i32 = arith.constant 0 : i32
    %c0_i32_0 = arith.constant 0 : i32
    %c0_i32_1 = arith.constant 0 : i32
    return %c0_i32, %c0_i32_0 : i32, i32
  }
  func.func @transform_4(%arg0: i32, %arg1: memref<2xi32, #tpu.memory_space<smem>>) -> (i32, i32) {
    %c0_i32 = arith.constant 0 : i32
    %c0_i32_0 = arith.constant 0 : i32
    %c0_i32_1 = arith.constant 0 : i32
    return %c0_i32, %c0_i32_0 : i32, i32
  }
  func.func @transform_5(%arg0: i32, %arg1: memref<2xi32, #tpu.memory_space<smem>>) -> (i32, i32, i32) {
    %c0_i32 = arith.constant 0 : i32
    %c0_i32_0 = arith.constant 0 : i32
    %c0_i32_1 = arith.constant 0 : i32
    %c0_i32_2 = arith.constant 0 : i32
    return %c0_i32, %c0_i32_0, %c0_i32_1 : i32, i32, i32
  }
  func.func @transform_6(%arg0: i32, %arg1: memref<2xi32, #tpu.memory_space<smem>>) -> (i32, i32, i32) {
    %c0_i32 = arith.constant 0 : i32
    %c0_i32_0 = arith.constant 0 : i32
    %c0_i32_1 = arith.constant 0 : i32
    %c0_i32_2 = arith.constant 0 : i32
    return %c0_i32, %c0_i32_0, %c0_i32_1 : i32, i32, i32
  }
  func.func @transform_7(%arg0: i32, %arg1: memref<2xi32, #tpu.memory_space<smem>>) -> (i32, i32, i32) {
    %c0_i32 = arith.constant 0 : i32
    %c0_i32_0 = arith.constant 0 : i32
    %c0_i32_1 = arith.constant 0 : i32
    %c0_i32_2 = arith.constant 0 : i32
    return %c0_i32, %c0_i32_0, %c0_i32_1 : i32, i32, i32
  }
  func.func @transform_8(%arg0: i32, %arg1: memref<2xi32, #tpu.memory_space<smem>>) -> (i32, i32, i32) {
    %c0_i32 = arith.constant 0 : i32
    %c0_i32_0 = arith.constant 0 : i32
    %c0_i32_1 = arith.constant 0 : i32
    %c0_i32_2 = arith.constant 0 : i32
    return %c0_i32, %c0_i32_0, %c0_i32_1 : i32, i32, i32
  }
  func.func @transform_9(%arg0: i32, %arg1: memref<2xi32, #tpu.memory_space<smem>>) -> (i32, i32, i32) {
    %c0_i32 = arith.constant 0 : i32
    %c0_i32_0 = arith.constant 0 : i32
    %c0_i32_1 = arith.constant 0 : i32
    %c0_i32_2 = arith.constant 0 : i32
    return %c0_i32, %c0_i32_0, %c0_i32_1 : i32, i32, i32
  }
  func.func @transform_10(%arg0: i32, %arg1: memref<2xi32, #tpu.memory_space<smem>>) -> (i32, i32, i32) {
    %c0_i32 = arith.constant 0 : i32
    %c0_i32_0 = arith.constant 0 : i32
    %c0_i32_1 = arith.constant 0 : i32
    %c0_i32_2 = arith.constant 0 : i32
    return %c0_i32, %c0_i32_0, %c0_i32_1 : i32, i32, i32
  }
  func.func @transform_11(%arg0: i32, %arg1: memref<2xi32, #tpu.memory_space<smem>>) -> (i32, i32, i32) {
    %c0_i32 = arith.constant 0 : i32
    %c0_i32_0 = arith.constant 0 : i32
    %c0_i32_1 = arith.constant 0 : i32
    %c0_i32_2 = arith.constant 0 : i32
    return %c0_i32, %c0_i32_0, %c0_i32_1 : i32, i32, i32
  }
  func.func @transform_12(%arg0: i32, %arg1: memref<2xi32, #tpu.memory_space<smem>>) -> (i32, i32, i32) {
    %c0_i32 = arith.constant 0 : i32
    %c0_i32_0 = arith.constant 0 : i32
    %c0_i32_1 = arith.constant 0 : i32
    %c0_i32_2 = arith.constant 0 : i32
    return %c0_i32, %c0_i32_0, %c0_i32_1 : i32, i32, i32
  }
  func.func @transform_13(%arg0: i32, %arg1: memref<2xi32, #tpu.memory_space<smem>>) -> (i32, i32, i32) {
    %c0_i32 = arith.constant 0 : i32
    %c0_i32_0 = arith.constant 0 : i32
    %c0_i32_1 = arith.constant 0 : i32
    %c0_i32_2 = arith.constant 0 : i32
    return %c0_i32, %c0_i32_0, %c0_i32_1 : i32, i32, i32
  }
  func.func @transform_14(%arg0: i32, %arg1: memref<2xi32, #tpu.memory_space<smem>>) -> (i32, i32, i32) {
    %c0_i32 = arith.constant 0 : i32
    %c0_i32_0 = arith.constant 0 : i32
    %c0_i32_1 = arith.constant 0 : i32
    %c0_i32_2 = arith.constant 0 : i32
    return %c0_i32, %c0_i32_0, %c0_i32_1 : i32, i32, i32
  }
  func.func @transform_15(%arg0: i32, %arg1: memref<2xi32, #tpu.memory_space<smem>>) -> (i32, i32, i32) {
    %c0_i32 = arith.constant 0 : i32
    %c0_i32_0 = arith.constant 0 : i32
    %c0_i32_1 = arith.constant 0 : i32
    %c0_i32_2 = arith.constant 0 : i32
    return %c0_i32, %c0_i32_0, %c0_i32_1 : i32, i32, i32
  }
  func.func @transform_16(%arg0: i32, %arg1: memref<2xi32, #tpu.memory_space<smem>>) -> (i32, i32, i32) {
    %c0_i32 = arith.constant 0 : i32
    %c0_i32_0 = arith.constant 0 : i32
    %c0_i32_1 = arith.constant 0 : i32
    %c0_i32_2 = arith.constant 0 : i32
    return %c0_i32, %c0_i32_0, %c0_i32_1 : i32, i32, i32
  }
  func.func @transform_17(%arg0: i32, %arg1: memref<2xi32, #tpu.memory_space<smem>>) -> (i32, i32, i32) {
    %c0_i32 = arith.constant 0 : i32
    %c0_i32_0 = arith.constant 0 : i32
    %c0_i32_1 = arith.constant 0 : i32
    return %arg0, %c0_i32, %c0_i32_0 : i32, i32, i32
  }
}

module attributes {stable_mosaic.version = 11 : i64} {
  func.func @_decoder_stack_kernel(%arg0: i32, %arg1: memref<2xi32, #tpu.memory_space<smem>>, %arg2: memref<1x2x32xf32, #tpu.memory_space<vmem>>, %arg3: memref<5x32xf32, #tpu.memory_space<vmem>>, %arg4: memref<2x32x96xf32, #tpu.memory_space<vmem>>, %arg5: memref<2x1x96xf32, #tpu.memory_space<vmem>>, %arg6: memref<2x32x32xf32, #tpu.memory_space<vmem>>, %arg7: memref<2x1x32xf32, #tpu.memory_space<vmem>>, %arg8: memref<2x32x32xf32, #tpu.memory_space<vmem>>, %arg9: memref<2x1x32xf32, #tpu.memory_space<vmem>>, %arg10: memref<2x32x64xf32, #tpu.memory_space<vmem>>, %arg11: memref<2x1x64xf32, #tpu.memory_space<vmem>>, %arg12: memref<2x32x32xf32, #tpu.memory_space<vmem>>, %arg13: memref<2x1x32xf32, #tpu.memory_space<vmem>>, %arg14: memref<2x1x32xf32, #tpu.memory_space<vmem>>, %arg15: memref<2x1x32xf32, #tpu.memory_space<vmem>>, %arg16: memref<2x1x32xf32, #tpu.memory_space<vmem>>, %arg17: memref<2x1x32xf32, #tpu.memory_space<vmem>>, %arg18: memref<2x1x32xf32, #tpu.memory_space<vmem>>, %arg19: memref<2x1x32xf32, #tpu.memory_space<vmem>>, %arg20: memref<2x32x64xf32, #tpu.memory_space<vmem>>, %arg21: memref<2x1x64xf32, #tpu.memory_space<vmem>>, %arg22: memref<2x64x32xf32, #tpu.memory_space<vmem>>, %arg23: memref<2x1x32xf32, #tpu.memory_space<vmem>>, %arg24: memref<32x16xf32, #tpu.memory_space<vmem>>, %arg25: memref<1x16xf32, #tpu.memory_space<vmem>>, %arg26: memref<1x5x16xf32, #tpu.memory_space<vmem>>) attributes {dimension_semantics = [#tpu.dimension_semantics<parallel>], iteration_bounds = array<i64: 2>, scalar_prefetch = 1 : i64, scratch_operands = 0 : i64, tpu.core_type = #tpu.core_type<tc>, window_params = [{transform_indices = @transform_0, window_bounds = array<i64: 1, 2, 32>}, {pipeline_mode = #tpu.pipeline_mode<synchronous>, transform_indices = @transform_1, window_bounds = array<i64: 5, 32>}, {pipeline_mode = #tpu.pipeline_mode<synchronous>, transform_indices = @transform_2, window_bounds = array<i64: 2, 32, 96>}, {pipeline_mode = #tpu.pipeline_mode<synchronous>, transform_indices = @transform_3, window_bounds = array<i64: 2, 1, 96>}, {pipeline_mode = #tpu.pipeline_mode<synchronous>, transform_indices = @transform_4, window_bounds = array<i64: 2, 32, 32>}, {pipeline_mode = #tpu.pipeline_mode<synchronous>, transform_indices = @transform_5, window_bounds = array<i64: 2, 1, 32>}, {pipeline_mode = #tpu.pipeline_mode<synchronous>, transform_indices = @transform_6, window_bounds = array<i64: 2, 32, 32>}, {pipeline_mode = #tpu.pipeline_mode<synchronous>, transform_indices = @transform_7, window_bounds = array<i64: 2, 1, 32>}, {pipeline_mode = #tpu.pipeline_mode<synchronous>, transform_indices = @transform_8, window_bounds = array<i64: 2, 32, 64>}, {pipeline_mode = #tpu.pipeline_mode<synchronous>, transform_indices = @transform_9, window_bounds = array<i64: 2, 1, 64>}, {pipeline_mode = #tpu.pipeline_mode<synchronous>, transform_indices = @transform_10, window_bounds = array<i64: 2, 32, 32>}, {pipeline_mode = #tpu.pipeline_mode<synchronous>, transform_indices = @transform_11, window_bounds = array<i64: 2, 1, 32>}, {pipeline_mode = #tpu.pipeline_mode<synchronous>, transform_indices = @transform_12, window_bounds = array<i64: 2, 1, 32>}, {pipeline_mode = #tpu.pipeline_mode<synchronous>, transform_indices = @transform_13, window_bounds = array<i64: 2, 1, 32>}, {pipeline_mode = #tpu.pipeline_mode<synchronous>, transform_indices = @transform_14, window_bounds = array<i64: 2, 1, 32>}, {pipeline_mode = #tpu.pipeline_mode<synchronous>, transform_indices = @transform_15, window_bounds = array<i64: 2, 1, 32>}, {pipeline_mode = #tpu.pipeline_mode<synchronous>, transform_indices = @transform_16, window_bounds = array<i64: 2, 1, 32>}, {pipeline_mode = #tpu.pipeline_mode<synchronous>, transform_indices = @transform_17, window_bounds = array<i64: 2, 1, 32>}, {pipeline_mode = #tpu.pipeline_mode<synchronous>, transform_indices = @transform_18, window_bounds = array<i64: 2, 32, 64>}, {pipeline_mode = #tpu.pipeline_mode<synchronous>, transform_indices = @transform_19, window_bounds = array<i64: 2, 1, 64>}, {pipeline_mode = #tpu.pipeline_mode<synchronous>, transform_indices = @transform_20, window_bounds = array<i64: 2, 64, 32>}, {pipeline_mode = #tpu.pipeline_mode<synchronous>, transform_indices = @transform_21, window_bounds = array<i64: 2, 1, 32>}, {pipeline_mode = #tpu.pipeline_mode<synchronous>, transform_indices = @transform_22, window_bounds = array<i64: 32, 16>}, {pipeline_mode = #tpu.pipeline_mode<synchronous>, transform_indices = @transform_23, window_bounds = array<i64: 1, 16>}, {transform_indices = @transform_24, window_bounds = array<i64: 1, 5, 16>}]} {
    %0 = arith.index_cast %arg0 : i32 to index
    %1 = memref.load %arg1[%0] : memref<2xi32, #tpu.memory_space<smem>>
    %c0 = arith.constant 0 : index
    %c0_0 = arith.constant 0 : index
    %c0_1 = arith.constant 0 : index
    %2 = vector.load %arg2[%c0, %c0_0, %c0_1] : memref<1x2x32xf32, #tpu.memory_space<vmem>>, vector<1x2x32xf32>
    %3 = vector.shape_cast %2 : vector<1x2x32xf32> to vector<2x32xf32>
    %c0_2 = arith.constant 0 : index
    %c0_3 = arith.constant 0 : index
    %4 = vector.load %arg3[%c0_2, %c0_3] : memref<5x32xf32, #tpu.memory_space<vmem>>, vector<5x32xf32>
    %5 = tpu.iota {dimensions = array<i32: 1>} : vector<1x5xi32>
    %6 = vector.broadcast %1 : i32 to vector<1x5xi32>
    %7 = arith.cmpi sge, %5, %6 : vector<1x5xi32>
    %cst = arith.constant -1.000000e+09 : f32
    %cst_4 = arith.constant 0.000000e+00 : f32
    %8 = vector.broadcast %cst : f32 to vector<1x5xf32>
    %9 = vector.broadcast %cst_4 : f32 to vector<1x5xf32>
    %10 = arith.select %7, %8, %9 : vector<1x5xi1>, vector<1x5xf32>
    %c0_5 = arith.constant 0 : index
    %c0_6 = arith.constant 0 : index
    %c0_7 = arith.constant 0 : index
    %11 = vector.load %arg4[%c0_5, %c0_6, %c0_7] : memref<2x32x96xf32, #tpu.memory_space<vmem>>, vector<1x32x96xf32>
    %12 = vector.shape_cast %11 : vector<1x32x96xf32> to vector<32x96xf32>
    %c0_8 = arith.constant 0 : index
    %c0_9 = arith.constant 0 : index
    %c0_10 = arith.constant 0 : index
    %13 = vector.load %arg5[%c0_8, %c0_9, %c0_10] : memref<2x1x96xf32, #tpu.memory_space<vmem>>, vector<1x1x96xf32>
    %14 = vector.shape_cast %13 : vector<1x1x96xf32> to vector<1x96xf32>
    %c0_11 = arith.constant 0 : index
    %c0_12 = arith.constant 0 : index
    %c0_13 = arith.constant 0 : index
    %15 = vector.load %arg6[%c0_11, %c0_12, %c0_13] : memref<2x32x32xf32, #tpu.memory_space<vmem>>, vector<1x32x32xf32>
    %16 = vector.shape_cast %15 : vector<1x32x32xf32> to vector<32x32xf32>
    %c0_14 = arith.constant 0 : index
    %c0_15 = arith.constant 0 : index
    %c0_16 = arith.constant 0 : index
    %17 = vector.load %arg7[%c0_14, %c0_15, %c0_16] : memref<2x1x32xf32, #tpu.memory_space<vmem>>, vector<1x1x32xf32>
    %18 = vector.shape_cast %17 : vector<1x1x32xf32> to vector<1x32xf32>
    %c0_17 = arith.constant 0 : index
    %c0_18 = arith.constant 0 : index
    %c0_19 = arith.constant 0 : index
    %19 = vector.load %arg8[%c0_17, %c0_18, %c0_19] : memref<2x32x32xf32, #tpu.memory_space<vmem>>, vector<1x32x32xf32>
    %20 = vector.shape_cast %19 : vector<1x32x32xf32> to vector<32x32xf32>
    %c0_20 = arith.constant 0 : index
    %c0_21 = arith.constant 0 : index
    %c0_22 = arith.constant 0 : index
    %21 = vector.load %arg9[%c0_20, %c0_21, %c0_22] : memref<2x1x32xf32, #tpu.memory_space<vmem>>, vector<1x1x32xf32>
    %22 = vector.shape_cast %21 : vector<1x1x32xf32> to vector<1x32xf32>
    %c0_23 = arith.constant 0 : index
    %c0_24 = arith.constant 0 : index
    %c0_25 = arith.constant 0 : index
    %23 = vector.load %arg10[%c0_23, %c0_24, %c0_25] : memref<2x32x64xf32, #tpu.memory_space<vmem>>, vector<1x32x64xf32>
    %24 = vector.shape_cast %23 : vector<1x32x64xf32> to vector<32x64xf32>
    %c0_26 = arith.constant 0 : index
    %c0_27 = arith.constant 0 : index
    %c0_28 = arith.constant 0 : index
    %25 = vector.load %arg11[%c0_26, %c0_27, %c0_28] : memref<2x1x64xf32, #tpu.memory_space<vmem>>, vector<1x1x64xf32>
    %26 = vector.shape_cast %25 : vector<1x1x64xf32> to vector<1x64xf32>
    %c0_29 = arith.constant 0 : index
    %c0_30 = arith.constant 0 : index
    %c0_31 = arith.constant 0 : index
    %27 = vector.load %arg12[%c0_29, %c0_30, %c0_31] : memref<2x32x32xf32, #tpu.memory_space<vmem>>, vector<1x32x32xf32>
    %28 = vector.shape_cast %27 : vector<1x32x32xf32> to vector<32x32xf32>
    %c0_32 = arith.constant 0 : index
    %c0_33 = arith.constant 0 : index
    %c0_34 = arith.constant 0 : index
    %29 = vector.load %arg13[%c0_32, %c0_33, %c0_34] : memref<2x1x32xf32, #tpu.memory_space<vmem>>, vector<1x1x32xf32>
    %30 = vector.shape_cast %29 : vector<1x1x32xf32> to vector<1x32xf32>
    %c0_35 = arith.constant 0 : index
    %c0_36 = arith.constant 0 : index
    %c0_37 = arith.constant 0 : index
    %31 = vector.load %arg14[%c0_35, %c0_36, %c0_37] : memref<2x1x32xf32, #tpu.memory_space<vmem>>, vector<1x1x32xf32>
    %32 = vector.shape_cast %31 : vector<1x1x32xf32> to vector<1x32xf32>
    %c0_38 = arith.constant 0 : index
    %c0_39 = arith.constant 0 : index
    %c0_40 = arith.constant 0 : index
    %33 = vector.load %arg15[%c0_38, %c0_39, %c0_40] : memref<2x1x32xf32, #tpu.memory_space<vmem>>, vector<1x1x32xf32>
    %34 = vector.shape_cast %33 : vector<1x1x32xf32> to vector<1x32xf32>
    %c0_41 = arith.constant 0 : index
    %c0_42 = arith.constant 0 : index
    %c0_43 = arith.constant 0 : index
    %35 = vector.load %arg16[%c0_41, %c0_42, %c0_43] : memref<2x1x32xf32, #tpu.memory_space<vmem>>, vector<1x1x32xf32>
    %36 = vector.shape_cast %35 : vector<1x1x32xf32> to vector<1x32xf32>
    %c0_44 = arith.constant 0 : index
    %c0_45 = arith.constant 0 : index
    %c0_46 = arith.constant 0 : index
    %37 = vector.load %arg17[%c0_44, %c0_45, %c0_46] : memref<2x1x32xf32, #tpu.memory_space<vmem>>, vector<1x1x32xf32>
    %38 = vector.shape_cast %37 : vector<1x1x32xf32> to vector<1x32xf32>
    %c0_47 = arith.constant 0 : index
    %c0_48 = arith.constant 0 : index
    %c0_49 = arith.constant 0 : index
    %39 = vector.load %arg18[%c0_47, %c0_48, %c0_49] : memref<2x1x32xf32, #tpu.memory_space<vmem>>, vector<1x1x32xf32>
    %40 = vector.shape_cast %39 : vector<1x1x32xf32> to vector<1x32xf32>
    %c0_50 = arith.constant 0 : index
    %c0_51 = arith.constant 0 : index
    %c0_52 = arith.constant 0 : index
    %41 = vector.load %arg19[%c0_50, %c0_51, %c0_52] : memref<2x1x32xf32, #tpu.memory_space<vmem>>, vector<1x1x32xf32>
    %42 = vector.shape_cast %41 : vector<1x1x32xf32> to vector<1x32xf32>
    %c0_53 = arith.constant 0 : index
    %c0_54 = arith.constant 0 : index
    %c0_55 = arith.constant 0 : index
    %43 = vector.load %arg20[%c0_53, %c0_54, %c0_55] : memref<2x32x64xf32, #tpu.memory_space<vmem>>, vector<1x32x64xf32>
    %44 = vector.shape_cast %43 : vector<1x32x64xf32> to vector<32x64xf32>
    %c0_56 = arith.constant 0 : index
    %c0_57 = arith.constant 0 : index
    %c0_58 = arith.constant 0 : index
    %45 = vector.load %arg21[%c0_56, %c0_57, %c0_58] : memref<2x1x64xf32, #tpu.memory_space<vmem>>, vector<1x1x64xf32>
    %46 = vector.shape_cast %45 : vector<1x1x64xf32> to vector<1x64xf32>
    %c0_59 = arith.constant 0 : index
    %c0_60 = arith.constant 0 : index
    %c0_61 = arith.constant 0 : index
    %47 = vector.load %arg22[%c0_59, %c0_60, %c0_61] : memref<2x64x32xf32, #tpu.memory_space<vmem>>, vector<1x64x32xf32>
    %48 = vector.shape_cast %47 : vector<1x64x32xf32> to vector<64x32xf32>
    %c0_62 = arith.constant 0 : index
    %c0_63 = arith.constant 0 : index
    %c0_64 = arith.constant 0 : index
    %49 = vector.load %arg23[%c0_62, %c0_63, %c0_64] : memref<2x1x32xf32, #tpu.memory_space<vmem>>, vector<1x1x32xf32>
    %50 = vector.shape_cast %49 : vector<1x1x32xf32> to vector<1x32xf32>
    %cst_65 = arith.constant dense<0.000000e+00> : vector<5x96xf32>
    %51 = tpu.matmul %4, %12, %cst_65 {dimension_numbers = #tpu.dot_dimension_numbers<[1], [0], [0], [1], [0, 0, 1, 1], [], []>} : vector<5x32xf32>, vector<32x96xf32>, vector<5x96xf32> -> vector<5x96xf32>
    %52 = vector.broadcast %14 : vector<1x96xf32> to vector<5x96xf32>
    %53 = arith.addf %51, %52 : vector<5x96xf32>
    %54 = vector.extract_strided_slice %53 {offsets = [0, 0], sizes = [5, 32], strides = [1, 1]} : vector<5x96xf32> to vector<5x32xf32>
    %55 = vector.extract_strided_slice %53 {offsets = [0, 32], sizes = [5, 32], strides = [1, 1]} : vector<5x96xf32> to vector<5x32xf32>
    %56 = vector.extract_strided_slice %53 {offsets = [0, 64], sizes = [5, 32], strides = [1, 1]} : vector<5x96xf32> to vector<5x32xf32>
    %57 = vector.extract_strided_slice %54 {offsets = [0, 0], sizes = [5, 8], strides = [1, 1]} : vector<5x32xf32> to vector<5x8xf32>
    %58 = vector.extract_strided_slice %55 {offsets = [0, 0], sizes = [5, 8], strides = [1, 1]} : vector<5x32xf32> to vector<5x8xf32>
    %59 = vector.extract_strided_slice %56 {offsets = [0, 0], sizes = [5, 8], strides = [1, 1]} : vector<5x32xf32> to vector<5x8xf32>
    %cst_66 = arith.constant dense<0.000000e+00> : vector<5x5xf32>
    %60 = tpu.matmul %57, %58, %cst_66 {dimension_numbers = #tpu.dot_dimension_numbers<[1], [1], [0], [0], [0, 0, 1, 0], [], []>} : vector<5x8xf32>, vector<5x8xf32>, vector<5x5xf32> -> vector<5x5xf32>
    %cst_67 = arith.constant 0.353553385 : f32
    %61 = vector.broadcast %cst_67 : f32 to vector<5x5xf32>
    %62 = arith.mulf %60, %61 : vector<5x5xf32>
    %63 = vector.broadcast %10 : vector<1x5xf32> to vector<5x5xf32>
    %64 = arith.addf %62, %63 : vector<5x5xf32>
    %cst_68 = arith.constant dense<0xFF800000> : vector<5xf32>
    %65 = vector.multi_reduction <maximumf>, %64, %cst_68 [1] : vector<5x5xf32> to vector<5xf32>
    %66 = vector.shape_cast %65 : vector<5xf32> to vector<5x1xf32>
    %67 = vector.broadcast %66 : vector<5x1xf32> to vector<5x5xf32>
    %68 = arith.subf %64, %67 : vector<5x5xf32>
    %69 = math.exp %68 : vector<5x5xf32>
    %cst_69 = arith.constant dense<0.000000e+00> : vector<5xf32>
    %70 = vector.multi_reduction <add>, %69, %cst_69 [1] : vector<5x5xf32> to vector<5xf32>
    %71 = vector.shape_cast %70 : vector<5xf32> to vector<5x1xf32>
    %72 = tpu.reciprocal %71 {approx = true} : vector<5x1xf32> -> vector<5x1xf32>
    %73 = vector.broadcast %72 : vector<5x1xf32> to vector<5x5xf32>
    %74 = arith.mulf %69, %73 : vector<5x5xf32>
    %cst_70 = arith.constant dense<0.000000e+00> : vector<5x8xf32>
    %75 = tpu.matmul %74, %59, %cst_70 {dimension_numbers = #tpu.dot_dimension_numbers<[1], [0], [0], [1], [0, 0, 1, 1], [], []>} : vector<5x5xf32>, vector<5x8xf32>, vector<5x8xf32> -> vector<5x8xf32>
    %76 = vector.extract_strided_slice %16 {offsets = [0, 0], sizes = [8, 32], strides = [1, 1]} : vector<32x32xf32> to vector<8x32xf32>
    %cst_71 = arith.constant dense<0.000000e+00> : vector<5x32xf32>
    %77 = tpu.matmul %75, %76, %cst_71 {dimension_numbers = #tpu.dot_dimension_numbers<[1], [0], [0], [1], [0, 0, 1, 1], [], []>} : vector<5x8xf32>, vector<8x32xf32>, vector<5x32xf32> -> vector<5x32xf32>
    %78 = vector.extract_strided_slice %54 {offsets = [0, 8], sizes = [5, 8], strides = [1, 1]} : vector<5x32xf32> to vector<5x8xf32>
    %79 = vector.extract_strided_slice %55 {offsets = [0, 8], sizes = [5, 8], strides = [1, 1]} : vector<5x32xf32> to vector<5x8xf32>
    %80 = vector.extract_strided_slice %56 {offsets = [0, 8], sizes = [5, 8], strides = [1, 1]} : vector<5x32xf32> to vector<5x8xf32>
    %cst_72 = arith.constant dense<0.000000e+00> : vector<5x5xf32>
    %81 = tpu.matmul %78, %79, %cst_72 {dimension_numbers = #tpu.dot_dimension_numbers<[1], [1], [0], [0], [0, 0, 1, 0], [], []>} : vector<5x8xf32>, vector<5x8xf32>, vector<5x5xf32> -> vector<5x5xf32>
    %cst_73 = arith.constant 0.353553385 : f32
    %82 = vector.broadcast %cst_73 : f32 to vector<5x5xf32>
    %83 = arith.mulf %81, %82 : vector<5x5xf32>
    %84 = vector.broadcast %10 : vector<1x5xf32> to vector<5x5xf32>
    %85 = arith.addf %83, %84 : vector<5x5xf32>
    %cst_74 = arith.constant dense<0xFF800000> : vector<5xf32>
    %86 = vector.multi_reduction <maximumf>, %85, %cst_74 [1] : vector<5x5xf32> to vector<5xf32>
    %87 = vector.shape_cast %86 : vector<5xf32> to vector<5x1xf32>
    %88 = vector.broadcast %87 : vector<5x1xf32> to vector<5x5xf32>
    %89 = arith.subf %85, %88 : vector<5x5xf32>
    %90 = math.exp %89 : vector<5x5xf32>
    %cst_75 = arith.constant dense<0.000000e+00> : vector<5xf32>
    %91 = vector.multi_reduction <add>, %90, %cst_75 [1] : vector<5x5xf32> to vector<5xf32>
    %92 = vector.shape_cast %91 : vector<5xf32> to vector<5x1xf32>
    %93 = tpu.reciprocal %92 {approx = true} : vector<5x1xf32> -> vector<5x1xf32>
    %94 = vector.broadcast %93 : vector<5x1xf32> to vector<5x5xf32>
    %95 = arith.mulf %90, %94 : vector<5x5xf32>
    %cst_76 = arith.constant dense<0.000000e+00> : vector<5x8xf32>
    %96 = tpu.matmul %95, %80, %cst_76 {dimension_numbers = #tpu.dot_dimension_numbers<[1], [0], [0], [1], [0, 0, 1, 1], [], []>} : vector<5x5xf32>, vector<5x8xf32>, vector<5x8xf32> -> vector<5x8xf32>
    %97 = vector.extract_strided_slice %16 {offsets = [8, 0], sizes = [8, 32], strides = [1, 1]} : vector<32x32xf32> to vector<8x32xf32>
    %cst_77 = arith.constant dense<0.000000e+00> : vector<5x32xf32>
    %98 = tpu.matmul %96, %97, %cst_77 {dimension_numbers = #tpu.dot_dimension_numbers<[1], [0], [0], [1], [0, 0, 1, 1], [], []>} : vector<5x8xf32>, vector<8x32xf32>, vector<5x32xf32> -> vector<5x32xf32>
    %99 = arith.addf %77, %98 : vector<5x32xf32>
    %100 = vector.extract_strided_slice %54 {offsets = [0, 16], sizes = [5, 8], strides = [1, 1]} : vector<5x32xf32> to vector<5x8xf32>
    %101 = vector.extract_strided_slice %55 {offsets = [0, 16], sizes = [5, 8], strides = [1, 1]} : vector<5x32xf32> to vector<5x8xf32>
    %102 = vector.extract_strided_slice %56 {offsets = [0, 16], sizes = [5, 8], strides = [1, 1]} : vector<5x32xf32> to vector<5x8xf32>
    %cst_78 = arith.constant dense<0.000000e+00> : vector<5x5xf32>
    %103 = tpu.matmul %100, %101, %cst_78 {dimension_numbers = #tpu.dot_dimension_numbers<[1], [1], [0], [0], [0, 0, 1, 0], [], []>} : vector<5x8xf32>, vector<5x8xf32>, vector<5x5xf32> -> vector<5x5xf32>
    %cst_79 = arith.constant 0.353553385 : f32
    %104 = vector.broadcast %cst_79 : f32 to vector<5x5xf32>
    %105 = arith.mulf %103, %104 : vector<5x5xf32>
    %106 = vector.broadcast %10 : vector<1x5xf32> to vector<5x5xf32>
    %107 = arith.addf %105, %106 : vector<5x5xf32>
    %cst_80 = arith.constant dense<0xFF800000> : vector<5xf32>
    %108 = vector.multi_reduction <maximumf>, %107, %cst_80 [1] : vector<5x5xf32> to vector<5xf32>
    %109 = vector.shape_cast %108 : vector<5xf32> to vector<5x1xf32>
    %110 = vector.broadcast %109 : vector<5x1xf32> to vector<5x5xf32>
    %111 = arith.subf %107, %110 : vector<5x5xf32>
    %112 = math.exp %111 : vector<5x5xf32>
    %cst_81 = arith.constant dense<0.000000e+00> : vector<5xf32>
    %113 = vector.multi_reduction <add>, %112, %cst_81 [1] : vector<5x5xf32> to vector<5xf32>
    %114 = vector.shape_cast %113 : vector<5xf32> to vector<5x1xf32>
    %115 = tpu.reciprocal %114 {approx = true} : vector<5x1xf32> -> vector<5x1xf32>
    %116 = vector.broadcast %115 : vector<5x1xf32> to vector<5x5xf32>
    %117 = arith.mulf %112, %116 : vector<5x5xf32>
    %cst_82 = arith.constant dense<0.000000e+00> : vector<5x8xf32>
    %118 = tpu.matmul %117, %102, %cst_82 {dimension_numbers = #tpu.dot_dimension_numbers<[1], [0], [0], [1], [0, 0, 1, 1], [], []>} : vector<5x5xf32>, vector<5x8xf32>, vector<5x8xf32> -> vector<5x8xf32>
    %119 = vector.extract_strided_slice %16 {offsets = [16, 0], sizes = [8, 32], strides = [1, 1]} : vector<32x32xf32> to vector<8x32xf32>
    %cst_83 = arith.constant dense<0.000000e+00> : vector<5x32xf32>
    %120 = tpu.matmul %118, %119, %cst_83 {dimension_numbers = #tpu.dot_dimension_numbers<[1], [0], [0], [1], [0, 0, 1, 1], [], []>} : vector<5x8xf32>, vector<8x32xf32>, vector<5x32xf32> -> vector<5x32xf32>
    %121 = arith.addf %99, %120 : vector<5x32xf32>
    %122 = vector.extract_strided_slice %54 {offsets = [0, 24], sizes = [5, 8], strides = [1, 1]} : vector<5x32xf32> to vector<5x8xf32>
    %123 = vector.extract_strided_slice %55 {offsets = [0, 24], sizes = [5, 8], strides = [1, 1]} : vector<5x32xf32> to vector<5x8xf32>
    %124 = vector.extract_strided_slice %56 {offsets = [0, 24], sizes = [5, 8], strides = [1, 1]} : vector<5x32xf32> to vector<5x8xf32>
    %cst_84 = arith.constant dense<0.000000e+00> : vector<5x5xf32>
    %125 = tpu.matmul %122, %123, %cst_84 {dimension_numbers = #tpu.dot_dimension_numbers<[1], [1], [0], [0], [0, 0, 1, 0], [], []>} : vector<5x8xf32>, vector<5x8xf32>, vector<5x5xf32> -> vector<5x5xf32>
    %cst_85 = arith.constant 0.353553385 : f32
    %126 = vector.broadcast %cst_85 : f32 to vector<5x5xf32>
    %127 = arith.mulf %125, %126 : vector<5x5xf32>
    %128 = vector.broadcast %10 : vector<1x5xf32> to vector<5x5xf32>
    %129 = arith.addf %127, %128 : vector<5x5xf32>
    %cst_86 = arith.constant dense<0xFF800000> : vector<5xf32>
    %130 = vector.multi_reduction <maximumf>, %129, %cst_86 [1] : vector<5x5xf32> to vector<5xf32>
    %131 = vector.shape_cast %130 : vector<5xf32> to vector<5x1xf32>
    %132 = vector.broadcast %131 : vector<5x1xf32> to vector<5x5xf32>
    %133 = arith.subf %129, %132 : vector<5x5xf32>
    %134 = math.exp %133 : vector<5x5xf32>
    %cst_87 = arith.constant dense<0.000000e+00> : vector<5xf32>
    %135 = vector.multi_reduction <add>, %134, %cst_87 [1] : vector<5x5xf32> to vector<5xf32>
    %136 = vector.shape_cast %135 : vector<5xf32> to vector<5x1xf32>
    %137 = tpu.reciprocal %136 {approx = true} : vector<5x1xf32> -> vector<5x1xf32>
    %138 = vector.broadcast %137 : vector<5x1xf32> to vector<5x5xf32>
    %139 = arith.mulf %134, %138 : vector<5x5xf32>
    %cst_88 = arith.constant dense<0.000000e+00> : vector<5x8xf32>
    %140 = tpu.matmul %139, %124, %cst_88 {dimension_numbers = #tpu.dot_dimension_numbers<[1], [0], [0], [1], [0, 0, 1, 1], [], []>} : vector<5x5xf32>, vector<5x8xf32>, vector<5x8xf32> -> vector<5x8xf32>
    %141 = vector.extract_strided_slice %16 {offsets = [24, 0], sizes = [8, 32], strides = [1, 1]} : vector<32x32xf32> to vector<8x32xf32>
    %cst_89 = arith.constant dense<0.000000e+00> : vector<5x32xf32>
    %142 = tpu.matmul %140, %141, %cst_89 {dimension_numbers = #tpu.dot_dimension_numbers<[1], [0], [0], [1], [0, 0, 1, 1], [], []>} : vector<5x8xf32>, vector<8x32xf32>, vector<5x32xf32> -> vector<5x32xf32>
    %143 = arith.addf %121, %142 : vector<5x32xf32>
    %144 = vector.broadcast %18 : vector<1x32xf32> to vector<5x32xf32>
    %145 = arith.addf %143, %144 : vector<5x32xf32>
    %146 = arith.addf %4, %145 : vector<5x32xf32>
    %cst_90 = arith.constant dense<0.000000e+00> : vector<5xf32>
    %147 = vector.multi_reduction <add>, %146, %cst_90 [1] : vector<5x32xf32> to vector<5xf32>
    %148 = vector.shape_cast %147 : vector<5xf32> to vector<5x1xf32>
    %cst_91 = arith.constant 3.200000e+01 : f32
    %149 = vector.broadcast %cst_91 : f32 to vector<5x1xf32>
    %150 = arith.divf %148, %149 : vector<5x1xf32>
    %151 = vector.broadcast %150 : vector<5x1xf32> to vector<5x32xf32>
    %152 = arith.subf %146, %151 : vector<5x32xf32>
    %153 = arith.mulf %152, %152 : vector<5x32xf32>
    %cst_92 = arith.constant dense<0.000000e+00> : vector<5xf32>
    %154 = vector.multi_reduction <add>, %153, %cst_92 [1] : vector<5x32xf32> to vector<5xf32>
    %155 = vector.shape_cast %154 : vector<5xf32> to vector<5x1xf32>
    %cst_93 = arith.constant 3.200000e+01 : f32
    %156 = vector.broadcast %cst_93 : f32 to vector<5x1xf32>
    %157 = arith.divf %155, %156 : vector<5x1xf32>
    %158 = vector.broadcast %150 : vector<5x1xf32> to vector<5x32xf32>
    %159 = arith.subf %146, %158 : vector<5x32xf32>
    %cst_94 = arith.constant 9.99999974E-6 : f32
    %160 = vector.broadcast %cst_94 : f32 to vector<5x1xf32>
    %161 = arith.addf %157, %160 : vector<5x1xf32>
    %162 = math.rsqrt %161 : vector<5x1xf32>
    %163 = vector.broadcast %162 : vector<5x1xf32> to vector<5x32xf32>
    %164 = arith.mulf %159, %163 : vector<5x32xf32>
    %165 = vector.broadcast %32 : vector<1x32xf32> to vector<5x32xf32>
    %166 = arith.mulf %164, %165 : vector<5x32xf32>
    %167 = vector.broadcast %34 : vector<1x32xf32> to vector<5x32xf32>
    %168 = arith.addf %166, %167 : vector<5x32xf32>
    %cst_95 = arith.constant dense<0.000000e+00> : vector<5x32xf32>
    %169 = tpu.matmul %168, %20, %cst_95 {dimension_numbers = #tpu.dot_dimension_numbers<[1], [0], [0], [1], [0, 0, 1, 1], [], []>} : vector<5x32xf32>, vector<32x32xf32>, vector<5x32xf32> -> vector<5x32xf32>
    %170 = vector.broadcast %22 : vector<1x32xf32> to vector<5x32xf32>
    %171 = arith.addf %169, %170 : vector<5x32xf32>
    %cst_96 = arith.constant dense<0.000000e+00> : vector<2x64xf32>
    %172 = tpu.matmul %3, %24, %cst_96 {dimension_numbers = #tpu.dot_dimension_numbers<[1], [0], [0], [1], [0, 0, 1, 1], [], []>} : vector<2x32xf32>, vector<32x64xf32>, vector<2x64xf32> -> vector<2x64xf32>
    %173 = vector.broadcast %26 : vector<1x64xf32> to vector<2x64xf32>
    %174 = arith.addf %172, %173 : vector<2x64xf32>
    %175 = vector.extract_strided_slice %174 {offsets = [0, 0], sizes = [2, 32], strides = [1, 1]} : vector<2x64xf32> to vector<2x32xf32>
    %176 = vector.extract_strided_slice %174 {offsets = [0, 32], sizes = [2, 32], strides = [1, 1]} : vector<2x64xf32> to vector<2x32xf32>
    %177 = vector.extract_strided_slice %171 {offsets = [0, 0], sizes = [5, 8], strides = [1, 1]} : vector<5x32xf32> to vector<5x8xf32>
    %178 = vector.extract_strided_slice %175 {offsets = [0, 0], sizes = [2, 8], strides = [1, 1]} : vector<2x32xf32> to vector<2x8xf32>
    %179 = vector.extract_strided_slice %176 {offsets = [0, 0], sizes = [2, 8], strides = [1, 1]} : vector<2x32xf32> to vector<2x8xf32>
    %cst_97 = arith.constant dense<0.000000e+00> : vector<5x2xf32>
    %180 = tpu.matmul %177, %178, %cst_97 {dimension_numbers = #tpu.dot_dimension_numbers<[1], [1], [0], [0], [0, 0, 1, 0], [], []>} : vector<5x8xf32>, vector<2x8xf32>, vector<5x2xf32> -> vector<5x2xf32>
    %cst_98 = arith.constant 0.353553385 : f32
    %181 = vector.broadcast %cst_98 : f32 to vector<5x2xf32>
    %182 = arith.mulf %180, %181 : vector<5x2xf32>
    %cst_99 = arith.constant dense<0xFF800000> : vector<5xf32>
    %183 = vector.multi_reduction <maximumf>, %182, %cst_99 [1] : vector<5x2xf32> to vector<5xf32>
    %184 = vector.shape_cast %183 : vector<5xf32> to vector<5x1xf32>
    %185 = vector.broadcast %184 : vector<5x1xf32> to vector<5x2xf32>
    %186 = arith.subf %182, %185 : vector<5x2xf32>
    %187 = math.exp %186 : vector<5x2xf32>
    %cst_100 = arith.constant dense<0.000000e+00> : vector<5xf32>
    %188 = vector.multi_reduction <add>, %187, %cst_100 [1] : vector<5x2xf32> to vector<5xf32>
    %189 = vector.shape_cast %188 : vector<5xf32> to vector<5x1xf32>
    %190 = tpu.reciprocal %189 {approx = true} : vector<5x1xf32> -> vector<5x1xf32>
    %191 = vector.broadcast %190 : vector<5x1xf32> to vector<5x2xf32>
    %192 = arith.mulf %187, %191 : vector<5x2xf32>
    %cst_101 = arith.constant dense<0.000000e+00> : vector<5x8xf32>
    %193 = tpu.matmul %192, %179, %cst_101 {dimension_numbers = #tpu.dot_dimension_numbers<[1], [0], [0], [1], [0, 0, 1, 1], [], []>} : vector<5x2xf32>, vector<2x8xf32>, vector<5x8xf32> -> vector<5x8xf32>
    %194 = vector.extract_strided_slice %28 {offsets = [0, 0], sizes = [8, 32], strides = [1, 1]} : vector<32x32xf32> to vector<8x32xf32>
    %cst_102 = arith.constant dense<0.000000e+00> : vector<5x32xf32>
    %195 = tpu.matmul %193, %194, %cst_102 {dimension_numbers = #tpu.dot_dimension_numbers<[1], [0], [0], [1], [0, 0, 1, 1], [], []>} : vector<5x8xf32>, vector<8x32xf32>, vector<5x32xf32> -> vector<5x32xf32>
    %196 = vector.extract_strided_slice %171 {offsets = [0, 8], sizes = [5, 8], strides = [1, 1]} : vector<5x32xf32> to vector<5x8xf32>
    %197 = vector.extract_strided_slice %175 {offsets = [0, 8], sizes = [2, 8], strides = [1, 1]} : vector<2x32xf32> to vector<2x8xf32>
    %198 = vector.extract_strided_slice %176 {offsets = [0, 8], sizes = [2, 8], strides = [1, 1]} : vector<2x32xf32> to vector<2x8xf32>
    %cst_103 = arith.constant dense<0.000000e+00> : vector<5x2xf32>
    %199 = tpu.matmul %196, %197, %cst_103 {dimension_numbers = #tpu.dot_dimension_numbers<[1], [1], [0], [0], [0, 0, 1, 0], [], []>} : vector<5x8xf32>, vector<2x8xf32>, vector<5x2xf32> -> vector<5x2xf32>
    %cst_104 = arith.constant 0.353553385 : f32
    %200 = vector.broadcast %cst_104 : f32 to vector<5x2xf32>
    %201 = arith.mulf %199, %200 : vector<5x2xf32>
    %cst_105 = arith.constant dense<0xFF800000> : vector<5xf32>
    %202 = vector.multi_reduction <maximumf>, %201, %cst_105 [1] : vector<5x2xf32> to vector<5xf32>
    %203 = vector.shape_cast %202 : vector<5xf32> to vector<5x1xf32>
    %204 = vector.broadcast %203 : vector<5x1xf32> to vector<5x2xf32>
    %205 = arith.subf %201, %204 : vector<5x2xf32>
    %206 = math.exp %205 : vector<5x2xf32>
    %cst_106 = arith.constant dense<0.000000e+00> : vector<5xf32>
    %207 = vector.multi_reduction <add>, %206, %cst_106 [1] : vector<5x2xf32> to vector<5xf32>
    %208 = vector.shape_cast %207 : vector<5xf32> to vector<5x1xf32>
    %209 = tpu.reciprocal %208 {approx = true} : vector<5x1xf32> -> vector<5x1xf32>
    %210 = vector.broadcast %209 : vector<5x1xf32> to vector<5x2xf32>
    %211 = arith.mulf %206, %210 : vector<5x2xf32>
    %cst_107 = arith.constant dense<0.000000e+00> : vector<5x8xf32>
    %212 = tpu.matmul %211, %198, %cst_107 {dimension_numbers = #tpu.dot_dimension_numbers<[1], [0], [0], [1], [0, 0, 1, 1], [], []>} : vector<5x2xf32>, vector<2x8xf32>, vector<5x8xf32> -> vector<5x8xf32>
    %213 = vector.extract_strided_slice %28 {offsets = [8, 0], sizes = [8, 32], strides = [1, 1]} : vector<32x32xf32> to vector<8x32xf32>
    %cst_108 = arith.constant dense<0.000000e+00> : vector<5x32xf32>
    %214 = tpu.matmul %212, %213, %cst_108 {dimension_numbers = #tpu.dot_dimension_numbers<[1], [0], [0], [1], [0, 0, 1, 1], [], []>} : vector<5x8xf32>, vector<8x32xf32>, vector<5x32xf32> -> vector<5x32xf32>
    %215 = arith.addf %195, %214 : vector<5x32xf32>
    %216 = vector.extract_strided_slice %171 {offsets = [0, 16], sizes = [5, 8], strides = [1, 1]} : vector<5x32xf32> to vector<5x8xf32>
    %217 = vector.extract_strided_slice %175 {offsets = [0, 16], sizes = [2, 8], strides = [1, 1]} : vector<2x32xf32> to vector<2x8xf32>
    %218 = vector.extract_strided_slice %176 {offsets = [0, 16], sizes = [2, 8], strides = [1, 1]} : vector<2x32xf32> to vector<2x8xf32>
    %cst_109 = arith.constant dense<0.000000e+00> : vector<5x2xf32>
    %219 = tpu.matmul %216, %217, %cst_109 {dimension_numbers = #tpu.dot_dimension_numbers<[1], [1], [0], [0], [0, 0, 1, 0], [], []>} : vector<5x8xf32>, vector<2x8xf32>, vector<5x2xf32> -> vector<5x2xf32>
    %cst_110 = arith.constant 0.353553385 : f32
    %220 = vector.broadcast %cst_110 : f32 to vector<5x2xf32>
    %221 = arith.mulf %219, %220 : vector<5x2xf32>
    %cst_111 = arith.constant dense<0xFF800000> : vector<5xf32>
    %222 = vector.multi_reduction <maximumf>, %221, %cst_111 [1] : vector<5x2xf32> to vector<5xf32>
    %223 = vector.shape_cast %222 : vector<5xf32> to vector<5x1xf32>
    %224 = vector.broadcast %223 : vector<5x1xf32> to vector<5x2xf32>
    %225 = arith.subf %221, %224 : vector<5x2xf32>
    %226 = math.exp %225 : vector<5x2xf32>
    %cst_112 = arith.constant dense<0.000000e+00> : vector<5xf32>
    %227 = vector.multi_reduction <add>, %226, %cst_112 [1] : vector<5x2xf32> to vector<5xf32>
    %228 = vector.shape_cast %227 : vector<5xf32> to vector<5x1xf32>
    %229 = tpu.reciprocal %228 {approx = true} : vector<5x1xf32> -> vector<5x1xf32>
    %230 = vector.broadcast %229 : vector<5x1xf32> to vector<5x2xf32>
    %231 = arith.mulf %226, %230 : vector<5x2xf32>
    %cst_113 = arith.constant dense<0.000000e+00> : vector<5x8xf32>
    %232 = tpu.matmul %231, %218, %cst_113 {dimension_numbers = #tpu.dot_dimension_numbers<[1], [0], [0], [1], [0, 0, 1, 1], [], []>} : vector<5x2xf32>, vector<2x8xf32>, vector<5x8xf32> -> vector<5x8xf32>
    %233 = vector.extract_strided_slice %28 {offsets = [16, 0], sizes = [8, 32], strides = [1, 1]} : vector<32x32xf32> to vector<8x32xf32>
    %cst_114 = arith.constant dense<0.000000e+00> : vector<5x32xf32>
    %234 = tpu.matmul %232, %233, %cst_114 {dimension_numbers = #tpu.dot_dimension_numbers<[1], [0], [0], [1], [0, 0, 1, 1], [], []>} : vector<5x8xf32>, vector<8x32xf32>, vector<5x32xf32> -> vector<5x32xf32>
    %235 = arith.addf %215, %234 : vector<5x32xf32>
    %236 = vector.extract_strided_slice %171 {offsets = [0, 24], sizes = [5, 8], strides = [1, 1]} : vector<5x32xf32> to vector<5x8xf32>
    %237 = vector.extract_strided_slice %175 {offsets = [0, 24], sizes = [2, 8], strides = [1, 1]} : vector<2x32xf32> to vector<2x8xf32>
    %238 = vector.extract_strided_slice %176 {offsets = [0, 24], sizes = [2, 8], strides = [1, 1]} : vector<2x32xf32> to vector<2x8xf32>
    %cst_115 = arith.constant dense<0.000000e+00> : vector<5x2xf32>
    %239 = tpu.matmul %236, %237, %cst_115 {dimension_numbers = #tpu.dot_dimension_numbers<[1], [1], [0], [0], [0, 0, 1, 0], [], []>} : vector<5x8xf32>, vector<2x8xf32>, vector<5x2xf32> -> vector<5x2xf32>
    %cst_116 = arith.constant 0.353553385 : f32
    %240 = vector.broadcast %cst_116 : f32 to vector<5x2xf32>
    %241 = arith.mulf %239, %240 : vector<5x2xf32>
    %cst_117 = arith.constant dense<0xFF800000> : vector<5xf32>
    %242 = vector.multi_reduction <maximumf>, %241, %cst_117 [1] : vector<5x2xf32> to vector<5xf32>
    %243 = vector.shape_cast %242 : vector<5xf32> to vector<5x1xf32>
    %244 = vector.broadcast %243 : vector<5x1xf32> to vector<5x2xf32>
    %245 = arith.subf %241, %244 : vector<5x2xf32>
    %246 = math.exp %245 : vector<5x2xf32>
    %cst_118 = arith.constant dense<0.000000e+00> : vector<5xf32>
    %247 = vector.multi_reduction <add>, %246, %cst_118 [1] : vector<5x2xf32> to vector<5xf32>
    %248 = vector.shape_cast %247 : vector<5xf32> to vector<5x1xf32>
    %249 = tpu.reciprocal %248 {approx = true} : vector<5x1xf32> -> vector<5x1xf32>
    %250 = vector.broadcast %249 : vector<5x1xf32> to vector<5x2xf32>
    %251 = arith.mulf %246, %250 : vector<5x2xf32>
    %cst_119 = arith.constant dense<0.000000e+00> : vector<5x8xf32>
    %252 = tpu.matmul %251, %238, %cst_119 {dimension_numbers = #tpu.dot_dimension_numbers<[1], [0], [0], [1], [0, 0, 1, 1], [], []>} : vector<5x2xf32>, vector<2x8xf32>, vector<5x8xf32> -> vector<5x8xf32>
    %253 = vector.extract_strided_slice %28 {offsets = [24, 0], sizes = [8, 32], strides = [1, 1]} : vector<32x32xf32> to vector<8x32xf32>
    %cst_120 = arith.constant dense<0.000000e+00> : vector<5x32xf32>
    %254 = tpu.matmul %252, %253, %cst_120 {dimension_numbers = #tpu.dot_dimension_numbers<[1], [0], [0], [1], [0, 0, 1, 1], [], []>} : vector<5x8xf32>, vector<8x32xf32>, vector<5x32xf32> -> vector<5x32xf32>
    %255 = arith.addf %235, %254 : vector<5x32xf32>
    %256 = vector.broadcast %30 : vector<1x32xf32> to vector<5x32xf32>
    %257 = arith.addf %255, %256 : vector<5x32xf32>
    %258 = arith.addf %168, %257 : vector<5x32xf32>
    %cst_121 = arith.constant dense<0.000000e+00> : vector<5xf32>
    %259 = vector.multi_reduction <add>, %258, %cst_121 [1] : vector<5x32xf32> to vector<5xf32>
    %260 = vector.shape_cast %259 : vector<5xf32> to vector<5x1xf32>
    %cst_122 = arith.constant 3.200000e+01 : f32
    %261 = vector.broadcast %cst_122 : f32 to vector<5x1xf32>
    %262 = arith.divf %260, %261 : vector<5x1xf32>
    %263 = vector.broadcast %262 : vector<5x1xf32> to vector<5x32xf32>
    %264 = arith.subf %258, %263 : vector<5x32xf32>
    %265 = arith.mulf %264, %264 : vector<5x32xf32>
    %cst_123 = arith.constant dense<0.000000e+00> : vector<5xf32>
    %266 = vector.multi_reduction <add>, %265, %cst_123 [1] : vector<5x32xf32> to vector<5xf32>
    %267 = vector.shape_cast %266 : vector<5xf32> to vector<5x1xf32>
    %cst_124 = arith.constant 3.200000e+01 : f32
    %268 = vector.broadcast %cst_124 : f32 to vector<5x1xf32>
    %269 = arith.divf %267, %268 : vector<5x1xf32>
    %270 = vector.broadcast %262 : vector<5x1xf32> to vector<5x32xf32>
    %271 = arith.subf %258, %270 : vector<5x32xf32>
    %cst_125 = arith.constant 9.99999974E-6 : f32
    %272 = vector.broadcast %cst_125 : f32 to vector<5x1xf32>
    %273 = arith.addf %269, %272 : vector<5x1xf32>
    %274 = math.rsqrt %273 : vector<5x1xf32>
    %275 = vector.broadcast %274 : vector<5x1xf32> to vector<5x32xf32>
    %276 = arith.mulf %271, %275 : vector<5x32xf32>
    %277 = vector.broadcast %36 : vector<1x32xf32> to vector<5x32xf32>
    %278 = arith.mulf %276, %277 : vector<5x32xf32>
    %279 = vector.broadcast %38 : vector<1x32xf32> to vector<5x32xf32>
    %280 = arith.addf %278, %279 : vector<5x32xf32>
    %cst_126 = arith.constant dense<0.000000e+00> : vector<5x64xf32>
    %281 = tpu.matmul %280, %44, %cst_126 {dimension_numbers = #tpu.dot_dimension_numbers<[1], [0], [0], [1], [0, 0, 1, 1], [], []>} : vector<5x32xf32>, vector<32x64xf32>, vector<5x64xf32> -> vector<5x64xf32>
    %282 = vector.broadcast %46 : vector<1x64xf32> to vector<5x64xf32>
    %283 = arith.addf %281, %282 : vector<5x64xf32>
    %cst_127 = arith.constant 0.000000e+00 : f32
    %284 = vector.broadcast %cst_127 : f32 to vector<5x64xf32>
    %285 = arith.maximumf %283, %284 : vector<5x64xf32>
    %cst_128 = arith.constant dense<0.000000e+00> : vector<5x32xf32>
    %286 = tpu.matmul %285, %48, %cst_128 {dimension_numbers = #tpu.dot_dimension_numbers<[1], [0], [0], [1], [0, 0, 1, 1], [], []>} : vector<5x64xf32>, vector<64x32xf32>, vector<5x32xf32> -> vector<5x32xf32>
    %287 = vector.broadcast %50 : vector<1x32xf32> to vector<5x32xf32>
    %288 = arith.addf %286, %287 : vector<5x32xf32>
    %289 = arith.addf %280, %288 : vector<5x32xf32>
    %cst_129 = arith.constant dense<0.000000e+00> : vector<5xf32>
    %290 = vector.multi_reduction <add>, %289, %cst_129 [1] : vector<5x32xf32> to vector<5xf32>
    %291 = vector.shape_cast %290 : vector<5xf32> to vector<5x1xf32>
    %cst_130 = arith.constant 3.200000e+01 : f32
    %292 = vector.broadcast %cst_130 : f32 to vector<5x1xf32>
    %293 = arith.divf %291, %292 : vector<5x1xf32>
    %294 = vector.broadcast %293 : vector<5x1xf32> to vector<5x32xf32>
    %295 = arith.subf %289, %294 : vector<5x32xf32>
    %296 = arith.mulf %295, %295 : vector<5x32xf32>
    %cst_131 = arith.constant dense<0.000000e+00> : vector<5xf32>
    %297 = vector.multi_reduction <add>, %296, %cst_131 [1] : vector<5x32xf32> to vector<5xf32>
    %298 = vector.shape_cast %297 : vector<5xf32> to vector<5x1xf32>
    %cst_132 = arith.constant 3.200000e+01 : f32
    %299 = vector.broadcast %cst_132 : f32 to vector<5x1xf32>
    %300 = arith.divf %298, %299 : vector<5x1xf32>
    %301 = vector.broadcast %293 : vector<5x1xf32> to vector<5x32xf32>
    %302 = arith.subf %289, %301 : vector<5x32xf32>
    %cst_133 = arith.constant 9.99999974E-6 : f32
    %303 = vector.broadcast %cst_133 : f32 to vector<5x1xf32>
    %304 = arith.addf %300, %303 : vector<5x1xf32>
    %305 = math.rsqrt %304 : vector<5x1xf32>
    %306 = vector.broadcast %305 : vector<5x1xf32> to vector<5x32xf32>
    %307 = arith.mulf %302, %306 : vector<5x32xf32>
    %308 = vector.broadcast %40 : vector<1x32xf32> to vector<5x32xf32>
    %309 = arith.mulf %307, %308 : vector<5x32xf32>
    %310 = vector.broadcast %42 : vector<1x32xf32> to vector<5x32xf32>
    %311 = arith.addf %309, %310 : vector<5x32xf32>
    %c1 = arith.constant 1 : index
    %c0_134 = arith.constant 0 : index
    %c0_135 = arith.constant 0 : index
    %312 = vector.load %arg4[%c1, %c0_134, %c0_135] : memref<2x32x96xf32, #tpu.memory_space<vmem>>, vector<1x32x96xf32>
    %313 = vector.shape_cast %312 : vector<1x32x96xf32> to vector<32x96xf32>
    %c1_136 = arith.constant 1 : index
    %c0_137 = arith.constant 0 : index
    %c0_138 = arith.constant 0 : index
    %314 = vector.load %arg5[%c1_136, %c0_137, %c0_138] : memref<2x1x96xf32, #tpu.memory_space<vmem>>, vector<1x1x96xf32>
    %315 = vector.shape_cast %314 : vector<1x1x96xf32> to vector<1x96xf32>
    %c1_139 = arith.constant 1 : index
    %c0_140 = arith.constant 0 : index
    %c0_141 = arith.constant 0 : index
    %316 = vector.load %arg6[%c1_139, %c0_140, %c0_141] : memref<2x32x32xf32, #tpu.memory_space<vmem>>, vector<1x32x32xf32>
    %317 = vector.shape_cast %316 : vector<1x32x32xf32> to vector<32x32xf32>
    %c1_142 = arith.constant 1 : index
    %c0_143 = arith.constant 0 : index
    %c0_144 = arith.constant 0 : index
    %318 = vector.load %arg7[%c1_142, %c0_143, %c0_144] : memref<2x1x32xf32, #tpu.memory_space<vmem>>, vector<1x1x32xf32>
    %319 = vector.shape_cast %318 : vector<1x1x32xf32> to vector<1x32xf32>
    %c1_145 = arith.constant 1 : index
    %c0_146 = arith.constant 0 : index
    %c0_147 = arith.constant 0 : index
    %320 = vector.load %arg8[%c1_145, %c0_146, %c0_147] : memref<2x32x32xf32, #tpu.memory_space<vmem>>, vector<1x32x32xf32>
    %321 = vector.shape_cast %320 : vector<1x32x32xf32> to vector<32x32xf32>
    %c1_148 = arith.constant 1 : index
    %c0_149 = arith.constant 0 : index
    %c0_150 = arith.constant 0 : index
    %322 = vector.load %arg9[%c1_148, %c0_149, %c0_150] : memref<2x1x32xf32, #tpu.memory_space<vmem>>, vector<1x1x32xf32>
    %323 = vector.shape_cast %322 : vector<1x1x32xf32> to vector<1x32xf32>
    %c1_151 = arith.constant 1 : index
    %c0_152 = arith.constant 0 : index
    %c0_153 = arith.constant 0 : index
    %324 = vector.load %arg10[%c1_151, %c0_152, %c0_153] : memref<2x32x64xf32, #tpu.memory_space<vmem>>, vector<1x32x64xf32>
    %325 = vector.shape_cast %324 : vector<1x32x64xf32> to vector<32x64xf32>
    %c1_154 = arith.constant 1 : index
    %c0_155 = arith.constant 0 : index
    %c0_156 = arith.constant 0 : index
    %326 = vector.load %arg11[%c1_154, %c0_155, %c0_156] : memref<2x1x64xf32, #tpu.memory_space<vmem>>, vector<1x1x64xf32>
    %327 = vector.shape_cast %326 : vector<1x1x64xf32> to vector<1x64xf32>
    %c1_157 = arith.constant 1 : index
    %c0_158 = arith.constant 0 : index
    %c0_159 = arith.constant 0 : index
    %328 = vector.load %arg12[%c1_157, %c0_158, %c0_159] : memref<2x32x32xf32, #tpu.memory_space<vmem>>, vector<1x32x32xf32>
    %329 = vector.shape_cast %328 : vector<1x32x32xf32> to vector<32x32xf32>
    %c1_160 = arith.constant 1 : index
    %c0_161 = arith.constant 0 : index
    %c0_162 = arith.constant 0 : index
    %330 = vector.load %arg13[%c1_160, %c0_161, %c0_162] : memref<2x1x32xf32, #tpu.memory_space<vmem>>, vector<1x1x32xf32>
    %331 = vector.shape_cast %330 : vector<1x1x32xf32> to vector<1x32xf32>
    %c1_163 = arith.constant 1 : index
    %c0_164 = arith.constant 0 : index
    %c0_165 = arith.constant 0 : index
    %332 = vector.load %arg14[%c1_163, %c0_164, %c0_165] : memref<2x1x32xf32, #tpu.memory_space<vmem>>, vector<1x1x32xf32>
    %333 = vector.shape_cast %332 : vector<1x1x32xf32> to vector<1x32xf32>
    %c1_166 = arith.constant 1 : index
    %c0_167 = arith.constant 0 : index
    %c0_168 = arith.constant 0 : index
    %334 = vector.load %arg15[%c1_166, %c0_167, %c0_168] : memref<2x1x32xf32, #tpu.memory_space<vmem>>, vector<1x1x32xf32>
    %335 = vector.shape_cast %334 : vector<1x1x32xf32> to vector<1x32xf32>
    %c1_169 = arith.constant 1 : index
    %c0_170 = arith.constant 0 : index
    %c0_171 = arith.constant 0 : index
    %336 = vector.load %arg16[%c1_169, %c0_170, %c0_171] : memref<2x1x32xf32, #tpu.memory_space<vmem>>, vector<1x1x32xf32>
    %337 = vector.shape_cast %336 : vector<1x1x32xf32> to vector<1x32xf32>
    %c1_172 = arith.constant 1 : index
    %c0_173 = arith.constant 0 : index
    %c0_174 = arith.constant 0 : index
    %338 = vector.load %arg17[%c1_172, %c0_173, %c0_174] : memref<2x1x32xf32, #tpu.memory_space<vmem>>, vector<1x1x32xf32>
    %339 = vector.shape_cast %338 : vector<1x1x32xf32> to vector<1x32xf32>
    %c1_175 = arith.constant 1 : index
    %c0_176 = arith.constant 0 : index
    %c0_177 = arith.constant 0 : index
    %340 = vector.load %arg18[%c1_175, %c0_176, %c0_177] : memref<2x1x32xf32, #tpu.memory_space<vmem>>, vector<1x1x32xf32>
    %341 = vector.shape_cast %340 : vector<1x1x32xf32> to vector<1x32xf32>
    %c1_178 = arith.constant 1 : index
    %c0_179 = arith.constant 0 : index
    %c0_180 = arith.constant 0 : index
    %342 = vector.load %arg19[%c1_178, %c0_179, %c0_180] : memref<2x1x32xf32, #tpu.memory_space<vmem>>, vector<1x1x32xf32>
    %343 = vector.shape_cast %342 : vector<1x1x32xf32> to vector<1x32xf32>
    %c1_181 = arith.constant 1 : index
    %c0_182 = arith.constant 0 : index
    %c0_183 = arith.constant 0 : index
    %344 = vector.load %arg20[%c1_181, %c0_182, %c0_183] : memref<2x32x64xf32, #tpu.memory_space<vmem>>, vector<1x32x64xf32>
    %345 = vector.shape_cast %344 : vector<1x32x64xf32> to vector<32x64xf32>
    %c1_184 = arith.constant 1 : index
    %c0_185 = arith.constant 0 : index
    %c0_186 = arith.constant 0 : index
    %346 = vector.load %arg21[%c1_184, %c0_185, %c0_186] : memref<2x1x64xf32, #tpu.memory_space<vmem>>, vector<1x1x64xf32>
    %347 = vector.shape_cast %346 : vector<1x1x64xf32> to vector<1x64xf32>
    %c1_187 = arith.constant 1 : index
    %c0_188 = arith.constant 0 : index
    %c0_189 = arith.constant 0 : index
    %348 = vector.load %arg22[%c1_187, %c0_188, %c0_189] : memref<2x64x32xf32, #tpu.memory_space<vmem>>, vector<1x64x32xf32>
    %349 = vector.shape_cast %348 : vector<1x64x32xf32> to vector<64x32xf32>
    %c1_190 = arith.constant 1 : index
    %c0_191 = arith.constant 0 : index
    %c0_192 = arith.constant 0 : index
    %350 = vector.load %arg23[%c1_190, %c0_191, %c0_192] : memref<2x1x32xf32, #tpu.memory_space<vmem>>, vector<1x1x32xf32>
    %351 = vector.shape_cast %350 : vector<1x1x32xf32> to vector<1x32xf32>
    %cst_193 = arith.constant dense<0.000000e+00> : vector<5x96xf32>
    %352 = tpu.matmul %311, %313, %cst_193 {dimension_numbers = #tpu.dot_dimension_numbers<[1], [0], [0], [1], [0, 0, 1, 1], [], []>} : vector<5x32xf32>, vector<32x96xf32>, vector<5x96xf32> -> vector<5x96xf32>
    %353 = vector.broadcast %315 : vector<1x96xf32> to vector<5x96xf32>
    %354 = arith.addf %352, %353 : vector<5x96xf32>
    %355 = vector.extract_strided_slice %354 {offsets = [0, 0], sizes = [5, 32], strides = [1, 1]} : vector<5x96xf32> to vector<5x32xf32>
    %356 = vector.extract_strided_slice %354 {offsets = [0, 32], sizes = [5, 32], strides = [1, 1]} : vector<5x96xf32> to vector<5x32xf32>
    %357 = vector.extract_strided_slice %354 {offsets = [0, 64], sizes = [5, 32], strides = [1, 1]} : vector<5x96xf32> to vector<5x32xf32>
    %358 = vector.extract_strided_slice %355 {offsets = [0, 0], sizes = [5, 8], strides = [1, 1]} : vector<5x32xf32> to vector<5x8xf32>
    %359 = vector.extract_strided_slice %356 {offsets = [0, 0], sizes = [5, 8], strides = [1, 1]} : vector<5x32xf32> to vector<5x8xf32>
    %360 = vector.extract_strided_slice %357 {offsets = [0, 0], sizes = [5, 8], strides = [1, 1]} : vector<5x32xf32> to vector<5x8xf32>
    %cst_194 = arith.constant dense<0.000000e+00> : vector<5x5xf32>
    %361 = tpu.matmul %358, %359, %cst_194 {dimension_numbers = #tpu.dot_dimension_numbers<[1], [1], [0], [0], [0, 0, 1, 0], [], []>} : vector<5x8xf32>, vector<5x8xf32>, vector<5x5xf32> -> vector<5x5xf32>
    %cst_195 = arith.constant 0.353553385 : f32
    %362 = vector.broadcast %cst_195 : f32 to vector<5x5xf32>
    %363 = arith.mulf %361, %362 : vector<5x5xf32>
    %364 = vector.broadcast %10 : vector<1x5xf32> to vector<5x5xf32>
    %365 = arith.addf %363, %364 : vector<5x5xf32>
    %cst_196 = arith.constant dense<0xFF800000> : vector<5xf32>
    %366 = vector.multi_reduction <maximumf>, %365, %cst_196 [1] : vector<5x5xf32> to vector<5xf32>
    %367 = vector.shape_cast %366 : vector<5xf32> to vector<5x1xf32>
    %368 = vector.broadcast %367 : vector<5x1xf32> to vector<5x5xf32>
    %369 = arith.subf %365, %368 : vector<5x5xf32>
    %370 = math.exp %369 : vector<5x5xf32>
    %cst_197 = arith.constant dense<0.000000e+00> : vector<5xf32>
    %371 = vector.multi_reduction <add>, %370, %cst_197 [1] : vector<5x5xf32> to vector<5xf32>
    %372 = vector.shape_cast %371 : vector<5xf32> to vector<5x1xf32>
    %373 = tpu.reciprocal %372 {approx = true} : vector<5x1xf32> -> vector<5x1xf32>
    %374 = vector.broadcast %373 : vector<5x1xf32> to vector<5x5xf32>
    %375 = arith.mulf %370, %374 : vector<5x5xf32>
    %cst_198 = arith.constant dense<0.000000e+00> : vector<5x8xf32>
    %376 = tpu.matmul %375, %360, %cst_198 {dimension_numbers = #tpu.dot_dimension_numbers<[1], [0], [0], [1], [0, 0, 1, 1], [], []>} : vector<5x5xf32>, vector<5x8xf32>, vector<5x8xf32> -> vector<5x8xf32>
    %377 = vector.extract_strided_slice %317 {offsets = [0, 0], sizes = [8, 32], strides = [1, 1]} : vector<32x32xf32> to vector<8x32xf32>
    %cst_199 = arith.constant dense<0.000000e+00> : vector<5x32xf32>
    %378 = tpu.matmul %376, %377, %cst_199 {dimension_numbers = #tpu.dot_dimension_numbers<[1], [0], [0], [1], [0, 0, 1, 1], [], []>} : vector<5x8xf32>, vector<8x32xf32>, vector<5x32xf32> -> vector<5x32xf32>
    %379 = vector.extract_strided_slice %355 {offsets = [0, 8], sizes = [5, 8], strides = [1, 1]} : vector<5x32xf32> to vector<5x8xf32>
    %380 = vector.extract_strided_slice %356 {offsets = [0, 8], sizes = [5, 8], strides = [1, 1]} : vector<5x32xf32> to vector<5x8xf32>
    %381 = vector.extract_strided_slice %357 {offsets = [0, 8], sizes = [5, 8], strides = [1, 1]} : vector<5x32xf32> to vector<5x8xf32>
    %cst_200 = arith.constant dense<0.000000e+00> : vector<5x5xf32>
    %382 = tpu.matmul %379, %380, %cst_200 {dimension_numbers = #tpu.dot_dimension_numbers<[1], [1], [0], [0], [0, 0, 1, 0], [], []>} : vector<5x8xf32>, vector<5x8xf32>, vector<5x5xf32> -> vector<5x5xf32>
    %cst_201 = arith.constant 0.353553385 : f32
    %383 = vector.broadcast %cst_201 : f32 to vector<5x5xf32>
    %384 = arith.mulf %382, %383 : vector<5x5xf32>
    %385 = vector.broadcast %10 : vector<1x5xf32> to vector<5x5xf32>
    %386 = arith.addf %384, %385 : vector<5x5xf32>
    %cst_202 = arith.constant dense<0xFF800000> : vector<5xf32>
    %387 = vector.multi_reduction <maximumf>, %386, %cst_202 [1] : vector<5x5xf32> to vector<5xf32>
    %388 = vector.shape_cast %387 : vector<5xf32> to vector<5x1xf32>
    %389 = vector.broadcast %388 : vector<5x1xf32> to vector<5x5xf32>
    %390 = arith.subf %386, %389 : vector<5x5xf32>
    %391 = math.exp %390 : vector<5x5xf32>
    %cst_203 = arith.constant dense<0.000000e+00> : vector<5xf32>
    %392 = vector.multi_reduction <add>, %391, %cst_203 [1] : vector<5x5xf32> to vector<5xf32>
    %393 = vector.shape_cast %392 : vector<5xf32> to vector<5x1xf32>
    %394 = tpu.reciprocal %393 {approx = true} : vector<5x1xf32> -> vector<5x1xf32>
    %395 = vector.broadcast %394 : vector<5x1xf32> to vector<5x5xf32>
    %396 = arith.mulf %391, %395 : vector<5x5xf32>
    %cst_204 = arith.constant dense<0.000000e+00> : vector<5x8xf32>
    %397 = tpu.matmul %396, %381, %cst_204 {dimension_numbers = #tpu.dot_dimension_numbers<[1], [0], [0], [1], [0, 0, 1, 1], [], []>} : vector<5x5xf32>, vector<5x8xf32>, vector<5x8xf32> -> vector<5x8xf32>
    %398 = vector.extract_strided_slice %317 {offsets = [8, 0], sizes = [8, 32], strides = [1, 1]} : vector<32x32xf32> to vector<8x32xf32>
    %cst_205 = arith.constant dense<0.000000e+00> : vector<5x32xf32>
    %399 = tpu.matmul %397, %398, %cst_205 {dimension_numbers = #tpu.dot_dimension_numbers<[1], [0], [0], [1], [0, 0, 1, 1], [], []>} : vector<5x8xf32>, vector<8x32xf32>, vector<5x32xf32> -> vector<5x32xf32>
    %400 = arith.addf %378, %399 : vector<5x32xf32>
    %401 = vector.extract_strided_slice %355 {offsets = [0, 16], sizes = [5, 8], strides = [1, 1]} : vector<5x32xf32> to vector<5x8xf32>
    %402 = vector.extract_strided_slice %356 {offsets = [0, 16], sizes = [5, 8], strides = [1, 1]} : vector<5x32xf32> to vector<5x8xf32>
    %403 = vector.extract_strided_slice %357 {offsets = [0, 16], sizes = [5, 8], strides = [1, 1]} : vector<5x32xf32> to vector<5x8xf32>
    %cst_206 = arith.constant dense<0.000000e+00> : vector<5x5xf32>
    %404 = tpu.matmul %401, %402, %cst_206 {dimension_numbers = #tpu.dot_dimension_numbers<[1], [1], [0], [0], [0, 0, 1, 0], [], []>} : vector<5x8xf32>, vector<5x8xf32>, vector<5x5xf32> -> vector<5x5xf32>
    %cst_207 = arith.constant 0.353553385 : f32
    %405 = vector.broadcast %cst_207 : f32 to vector<5x5xf32>
    %406 = arith.mulf %404, %405 : vector<5x5xf32>
    %407 = vector.broadcast %10 : vector<1x5xf32> to vector<5x5xf32>
    %408 = arith.addf %406, %407 : vector<5x5xf32>
    %cst_208 = arith.constant dense<0xFF800000> : vector<5xf32>
    %409 = vector.multi_reduction <maximumf>, %408, %cst_208 [1] : vector<5x5xf32> to vector<5xf32>
    %410 = vector.shape_cast %409 : vector<5xf32> to vector<5x1xf32>
    %411 = vector.broadcast %410 : vector<5x1xf32> to vector<5x5xf32>
    %412 = arith.subf %408, %411 : vector<5x5xf32>
    %413 = math.exp %412 : vector<5x5xf32>
    %cst_209 = arith.constant dense<0.000000e+00> : vector<5xf32>
    %414 = vector.multi_reduction <add>, %413, %cst_209 [1] : vector<5x5xf32> to vector<5xf32>
    %415 = vector.shape_cast %414 : vector<5xf32> to vector<5x1xf32>
    %416 = tpu.reciprocal %415 {approx = true} : vector<5x1xf32> -> vector<5x1xf32>
    %417 = vector.broadcast %416 : vector<5x1xf32> to vector<5x5xf32>
    %418 = arith.mulf %413, %417 : vector<5x5xf32>
    %cst_210 = arith.constant dense<0.000000e+00> : vector<5x8xf32>
    %419 = tpu.matmul %418, %403, %cst_210 {dimension_numbers = #tpu.dot_dimension_numbers<[1], [0], [0], [1], [0, 0, 1, 1], [], []>} : vector<5x5xf32>, vector<5x8xf32>, vector<5x8xf32> -> vector<5x8xf32>
    %420 = vector.extract_strided_slice %317 {offsets = [16, 0], sizes = [8, 32], strides = [1, 1]} : vector<32x32xf32> to vector<8x32xf32>
    %cst_211 = arith.constant dense<0.000000e+00> : vector<5x32xf32>
    %421 = tpu.matmul %419, %420, %cst_211 {dimension_numbers = #tpu.dot_dimension_numbers<[1], [0], [0], [1], [0, 0, 1, 1], [], []>} : vector<5x8xf32>, vector<8x32xf32>, vector<5x32xf32> -> vector<5x32xf32>
    %422 = arith.addf %400, %421 : vector<5x32xf32>
    %423 = vector.extract_strided_slice %355 {offsets = [0, 24], sizes = [5, 8], strides = [1, 1]} : vector<5x32xf32> to vector<5x8xf32>
    %424 = vector.extract_strided_slice %356 {offsets = [0, 24], sizes = [5, 8], strides = [1, 1]} : vector<5x32xf32> to vector<5x8xf32>
    %425 = vector.extract_strided_slice %357 {offsets = [0, 24], sizes = [5, 8], strides = [1, 1]} : vector<5x32xf32> to vector<5x8xf32>
    %cst_212 = arith.constant dense<0.000000e+00> : vector<5x5xf32>
    %426 = tpu.matmul %423, %424, %cst_212 {dimension_numbers = #tpu.dot_dimension_numbers<[1], [1], [0], [0], [0, 0, 1, 0], [], []>} : vector<5x8xf32>, vector<5x8xf32>, vector<5x5xf32> -> vector<5x5xf32>
    %cst_213 = arith.constant 0.353553385 : f32
    %427 = vector.broadcast %cst_213 : f32 to vector<5x5xf32>
    %428 = arith.mulf %426, %427 : vector<5x5xf32>
    %429 = vector.broadcast %10 : vector<1x5xf32> to vector<5x5xf32>
    %430 = arith.addf %428, %429 : vector<5x5xf32>
    %cst_214 = arith.constant dense<0xFF800000> : vector<5xf32>
    %431 = vector.multi_reduction <maximumf>, %430, %cst_214 [1] : vector<5x5xf32> to vector<5xf32>
    %432 = vector.shape_cast %431 : vector<5xf32> to vector<5x1xf32>
    %433 = vector.broadcast %432 : vector<5x1xf32> to vector<5x5xf32>
    %434 = arith.subf %430, %433 : vector<5x5xf32>
    %435 = math.exp %434 : vector<5x5xf32>
    %cst_215 = arith.constant dense<0.000000e+00> : vector<5xf32>
    %436 = vector.multi_reduction <add>, %435, %cst_215 [1] : vector<5x5xf32> to vector<5xf32>
    %437 = vector.shape_cast %436 : vector<5xf32> to vector<5x1xf32>
    %438 = tpu.reciprocal %437 {approx = true} : vector<5x1xf32> -> vector<5x1xf32>
    %439 = vector.broadcast %438 : vector<5x1xf32> to vector<5x5xf32>
    %440 = arith.mulf %435, %439 : vector<5x5xf32>
    %cst_216 = arith.constant dense<0.000000e+00> : vector<5x8xf32>
    %441 = tpu.matmul %440, %425, %cst_216 {dimension_numbers = #tpu.dot_dimension_numbers<[1], [0], [0], [1], [0, 0, 1, 1], [], []>} : vector<5x5xf32>, vector<5x8xf32>, vector<5x8xf32> -> vector<5x8xf32>
    %442 = vector.extract_strided_slice %317 {offsets = [24, 0], sizes = [8, 32], strides = [1, 1]} : vector<32x32xf32> to vector<8x32xf32>
    %cst_217 = arith.constant dense<0.000000e+00> : vector<5x32xf32>
    %443 = tpu.matmul %441, %442, %cst_217 {dimension_numbers = #tpu.dot_dimension_numbers<[1], [0], [0], [1], [0, 0, 1, 1], [], []>} : vector<5x8xf32>, vector<8x32xf32>, vector<5x32xf32> -> vector<5x32xf32>
    %444 = arith.addf %422, %443 : vector<5x32xf32>
    %445 = vector.broadcast %319 : vector<1x32xf32> to vector<5x32xf32>
    %446 = arith.addf %444, %445 : vector<5x32xf32>
    %447 = arith.addf %311, %446 : vector<5x32xf32>
    %cst_218 = arith.constant dense<0.000000e+00> : vector<5xf32>
    %448 = vector.multi_reduction <add>, %447, %cst_218 [1] : vector<5x32xf32> to vector<5xf32>
    %449 = vector.shape_cast %448 : vector<5xf32> to vector<5x1xf32>
    %cst_219 = arith.constant 3.200000e+01 : f32
    %450 = vector.broadcast %cst_219 : f32 to vector<5x1xf32>
    %451 = arith.divf %449, %450 : vector<5x1xf32>
    %452 = vector.broadcast %451 : vector<5x1xf32> to vector<5x32xf32>
    %453 = arith.subf %447, %452 : vector<5x32xf32>
    %454 = arith.mulf %453, %453 : vector<5x32xf32>
    %cst_220 = arith.constant dense<0.000000e+00> : vector<5xf32>
    %455 = vector.multi_reduction <add>, %454, %cst_220 [1] : vector<5x32xf32> to vector<5xf32>
    %456 = vector.shape_cast %455 : vector<5xf32> to vector<5x1xf32>
    %cst_221 = arith.constant 3.200000e+01 : f32
    %457 = vector.broadcast %cst_221 : f32 to vector<5x1xf32>
    %458 = arith.divf %456, %457 : vector<5x1xf32>
    %459 = vector.broadcast %451 : vector<5x1xf32> to vector<5x32xf32>
    %460 = arith.subf %447, %459 : vector<5x32xf32>
    %cst_222 = arith.constant 9.99999974E-6 : f32
    %461 = vector.broadcast %cst_222 : f32 to vector<5x1xf32>
    %462 = arith.addf %458, %461 : vector<5x1xf32>
    %463 = math.rsqrt %462 : vector<5x1xf32>
    %464 = vector.broadcast %463 : vector<5x1xf32> to vector<5x32xf32>
    %465 = arith.mulf %460, %464 : vector<5x32xf32>
    %466 = vector.broadcast %333 : vector<1x32xf32> to vector<5x32xf32>
    %467 = arith.mulf %465, %466 : vector<5x32xf32>
    %468 = vector.broadcast %335 : vector<1x32xf32> to vector<5x32xf32>
    %469 = arith.addf %467, %468 : vector<5x32xf32>
    %cst_223 = arith.constant dense<0.000000e+00> : vector<5x32xf32>
    %470 = tpu.matmul %469, %321, %cst_223 {dimension_numbers = #tpu.dot_dimension_numbers<[1], [0], [0], [1], [0, 0, 1, 1], [], []>} : vector<5x32xf32>, vector<32x32xf32>, vector<5x32xf32> -> vector<5x32xf32>
    %471 = vector.broadcast %323 : vector<1x32xf32> to vector<5x32xf32>
    %472 = arith.addf %470, %471 : vector<5x32xf32>
    %cst_224 = arith.constant dense<0.000000e+00> : vector<2x64xf32>
    %473 = tpu.matmul %3, %325, %cst_224 {dimension_numbers = #tpu.dot_dimension_numbers<[1], [0], [0], [1], [0, 0, 1, 1], [], []>} : vector<2x32xf32>, vector<32x64xf32>, vector<2x64xf32> -> vector<2x64xf32>
    %474 = vector.broadcast %327 : vector<1x64xf32> to vector<2x64xf32>
    %475 = arith.addf %473, %474 : vector<2x64xf32>
    %476 = vector.extract_strided_slice %475 {offsets = [0, 0], sizes = [2, 32], strides = [1, 1]} : vector<2x64xf32> to vector<2x32xf32>
    %477 = vector.extract_strided_slice %475 {offsets = [0, 32], sizes = [2, 32], strides = [1, 1]} : vector<2x64xf32> to vector<2x32xf32>
    %478 = vector.extract_strided_slice %472 {offsets = [0, 0], sizes = [5, 8], strides = [1, 1]} : vector<5x32xf32> to vector<5x8xf32>
    %479 = vector.extract_strided_slice %476 {offsets = [0, 0], sizes = [2, 8], strides = [1, 1]} : vector<2x32xf32> to vector<2x8xf32>
    %480 = vector.extract_strided_slice %477 {offsets = [0, 0], sizes = [2, 8], strides = [1, 1]} : vector<2x32xf32> to vector<2x8xf32>
    %cst_225 = arith.constant dense<0.000000e+00> : vector<5x2xf32>
    %481 = tpu.matmul %478, %479, %cst_225 {dimension_numbers = #tpu.dot_dimension_numbers<[1], [1], [0], [0], [0, 0, 1, 0], [], []>} : vector<5x8xf32>, vector<2x8xf32>, vector<5x2xf32> -> vector<5x2xf32>
    %cst_226 = arith.constant 0.353553385 : f32
    %482 = vector.broadcast %cst_226 : f32 to vector<5x2xf32>
    %483 = arith.mulf %481, %482 : vector<5x2xf32>
    %cst_227 = arith.constant dense<0xFF800000> : vector<5xf32>
    %484 = vector.multi_reduction <maximumf>, %483, %cst_227 [1] : vector<5x2xf32> to vector<5xf32>
    %485 = vector.shape_cast %484 : vector<5xf32> to vector<5x1xf32>
    %486 = vector.broadcast %485 : vector<5x1xf32> to vector<5x2xf32>
    %487 = arith.subf %483, %486 : vector<5x2xf32>
    %488 = math.exp %487 : vector<5x2xf32>
    %cst_228 = arith.constant dense<0.000000e+00> : vector<5xf32>
    %489 = vector.multi_reduction <add>, %488, %cst_228 [1] : vector<5x2xf32> to vector<5xf32>
    %490 = vector.shape_cast %489 : vector<5xf32> to vector<5x1xf32>
    %491 = tpu.reciprocal %490 {approx = true} : vector<5x1xf32> -> vector<5x1xf32>
    %492 = vector.broadcast %491 : vector<5x1xf32> to vector<5x2xf32>
    %493 = arith.mulf %488, %492 : vector<5x2xf32>
    %cst_229 = arith.constant dense<0.000000e+00> : vector<5x8xf32>
    %494 = tpu.matmul %493, %480, %cst_229 {dimension_numbers = #tpu.dot_dimension_numbers<[1], [0], [0], [1], [0, 0, 1, 1], [], []>} : vector<5x2xf32>, vector<2x8xf32>, vector<5x8xf32> -> vector<5x8xf32>
    %495 = vector.extract_strided_slice %329 {offsets = [0, 0], sizes = [8, 32], strides = [1, 1]} : vector<32x32xf32> to vector<8x32xf32>
    %cst_230 = arith.constant dense<0.000000e+00> : vector<5x32xf32>
    %496 = tpu.matmul %494, %495, %cst_230 {dimension_numbers = #tpu.dot_dimension_numbers<[1], [0], [0], [1], [0, 0, 1, 1], [], []>} : vector<5x8xf32>, vector<8x32xf32>, vector<5x32xf32> -> vector<5x32xf32>
    %497 = vector.extract_strided_slice %472 {offsets = [0, 8], sizes = [5, 8], strides = [1, 1]} : vector<5x32xf32> to vector<5x8xf32>
    %498 = vector.extract_strided_slice %476 {offsets = [0, 8], sizes = [2, 8], strides = [1, 1]} : vector<2x32xf32> to vector<2x8xf32>
    %499 = vector.extract_strided_slice %477 {offsets = [0, 8], sizes = [2, 8], strides = [1, 1]} : vector<2x32xf32> to vector<2x8xf32>
    %cst_231 = arith.constant dense<0.000000e+00> : vector<5x2xf32>
    %500 = tpu.matmul %497, %498, %cst_231 {dimension_numbers = #tpu.dot_dimension_numbers<[1], [1], [0], [0], [0, 0, 1, 0], [], []>} : vector<5x8xf32>, vector<2x8xf32>, vector<5x2xf32> -> vector<5x2xf32>
    %cst_232 = arith.constant 0.353553385 : f32
    %501 = vector.broadcast %cst_232 : f32 to vector<5x2xf32>
    %502 = arith.mulf %500, %501 : vector<5x2xf32>
    %cst_233 = arith.constant dense<0xFF800000> : vector<5xf32>
    %503 = vector.multi_reduction <maximumf>, %502, %cst_233 [1] : vector<5x2xf32> to vector<5xf32>
    %504 = vector.shape_cast %503 : vector<5xf32> to vector<5x1xf32>
    %505 = vector.broadcast %504 : vector<5x1xf32> to vector<5x2xf32>
    %506 = arith.subf %502, %505 : vector<5x2xf32>
    %507 = math.exp %506 : vector<5x2xf32>
    %cst_234 = arith.constant dense<0.000000e+00> : vector<5xf32>
    %508 = vector.multi_reduction <add>, %507, %cst_234 [1] : vector<5x2xf32> to vector<5xf32>
    %509 = vector.shape_cast %508 : vector<5xf32> to vector<5x1xf32>
    %510 = tpu.reciprocal %509 {approx = true} : vector<5x1xf32> -> vector<5x1xf32>
    %511 = vector.broadcast %510 : vector<5x1xf32> to vector<5x2xf32>
    %512 = arith.mulf %507, %511 : vector<5x2xf32>
    %cst_235 = arith.constant dense<0.000000e+00> : vector<5x8xf32>
    %513 = tpu.matmul %512, %499, %cst_235 {dimension_numbers = #tpu.dot_dimension_numbers<[1], [0], [0], [1], [0, 0, 1, 1], [], []>} : vector<5x2xf32>, vector<2x8xf32>, vector<5x8xf32> -> vector<5x8xf32>
    %514 = vector.extract_strided_slice %329 {offsets = [8, 0], sizes = [8, 32], strides = [1, 1]} : vector<32x32xf32> to vector<8x32xf32>
    %cst_236 = arith.constant dense<0.000000e+00> : vector<5x32xf32>
    %515 = tpu.matmul %513, %514, %cst_236 {dimension_numbers = #tpu.dot_dimension_numbers<[1], [0], [0], [1], [0, 0, 1, 1], [], []>} : vector<5x8xf32>, vector<8x32xf32>, vector<5x32xf32> -> vector<5x32xf32>
    %516 = arith.addf %496, %515 : vector<5x32xf32>
    %517 = vector.extract_strided_slice %472 {offsets = [0, 16], sizes = [5, 8], strides = [1, 1]} : vector<5x32xf32> to vector<5x8xf32>
    %518 = vector.extract_strided_slice %476 {offsets = [0, 16], sizes = [2, 8], strides = [1, 1]} : vector<2x32xf32> to vector<2x8xf32>
    %519 = vector.extract_strided_slice %477 {offsets = [0, 16], sizes = [2, 8], strides = [1, 1]} : vector<2x32xf32> to vector<2x8xf32>
    %cst_237 = arith.constant dense<0.000000e+00> : vector<5x2xf32>
    %520 = tpu.matmul %517, %518, %cst_237 {dimension_numbers = #tpu.dot_dimension_numbers<[1], [1], [0], [0], [0, 0, 1, 0], [], []>} : vector<5x8xf32>, vector<2x8xf32>, vector<5x2xf32> -> vector<5x2xf32>
    %cst_238 = arith.constant 0.353553385 : f32
    %521 = vector.broadcast %cst_238 : f32 to vector<5x2xf32>
    %522 = arith.mulf %520, %521 : vector<5x2xf32>
    %cst_239 = arith.constant dense<0xFF800000> : vector<5xf32>
    %523 = vector.multi_reduction <maximumf>, %522, %cst_239 [1] : vector<5x2xf32> to vector<5xf32>
    %524 = vector.shape_cast %523 : vector<5xf32> to vector<5x1xf32>
    %525 = vector.broadcast %524 : vector<5x1xf32> to vector<5x2xf32>
    %526 = arith.subf %522, %525 : vector<5x2xf32>
    %527 = math.exp %526 : vector<5x2xf32>
    %cst_240 = arith.constant dense<0.000000e+00> : vector<5xf32>
    %528 = vector.multi_reduction <add>, %527, %cst_240 [1] : vector<5x2xf32> to vector<5xf32>
    %529 = vector.shape_cast %528 : vector<5xf32> to vector<5x1xf32>
    %530 = tpu.reciprocal %529 {approx = true} : vector<5x1xf32> -> vector<5x1xf32>
    %531 = vector.broadcast %530 : vector<5x1xf32> to vector<5x2xf32>
    %532 = arith.mulf %527, %531 : vector<5x2xf32>
    %cst_241 = arith.constant dense<0.000000e+00> : vector<5x8xf32>
    %533 = tpu.matmul %532, %519, %cst_241 {dimension_numbers = #tpu.dot_dimension_numbers<[1], [0], [0], [1], [0, 0, 1, 1], [], []>} : vector<5x2xf32>, vector<2x8xf32>, vector<5x8xf32> -> vector<5x8xf32>
    %534 = vector.extract_strided_slice %329 {offsets = [16, 0], sizes = [8, 32], strides = [1, 1]} : vector<32x32xf32> to vector<8x32xf32>
    %cst_242 = arith.constant dense<0.000000e+00> : vector<5x32xf32>
    %535 = tpu.matmul %533, %534, %cst_242 {dimension_numbers = #tpu.dot_dimension_numbers<[1], [0], [0], [1], [0, 0, 1, 1], [], []>} : vector<5x8xf32>, vector<8x32xf32>, vector<5x32xf32> -> vector<5x32xf32>
    %536 = arith.addf %516, %535 : vector<5x32xf32>
    %537 = vector.extract_strided_slice %472 {offsets = [0, 24], sizes = [5, 8], strides = [1, 1]} : vector<5x32xf32> to vector<5x8xf32>
    %538 = vector.extract_strided_slice %476 {offsets = [0, 24], sizes = [2, 8], strides = [1, 1]} : vector<2x32xf32> to vector<2x8xf32>
    %539 = vector.extract_strided_slice %477 {offsets = [0, 24], sizes = [2, 8], strides = [1, 1]} : vector<2x32xf32> to vector<2x8xf32>
    %cst_243 = arith.constant dense<0.000000e+00> : vector<5x2xf32>
    %540 = tpu.matmul %537, %538, %cst_243 {dimension_numbers = #tpu.dot_dimension_numbers<[1], [1], [0], [0], [0, 0, 1, 0], [], []>} : vector<5x8xf32>, vector<2x8xf32>, vector<5x2xf32> -> vector<5x2xf32>
    %cst_244 = arith.constant 0.353553385 : f32
    %541 = vector.broadcast %cst_244 : f32 to vector<5x2xf32>
    %542 = arith.mulf %540, %541 : vector<5x2xf32>
    %cst_245 = arith.constant dense<0xFF800000> : vector<5xf32>
    %543 = vector.multi_reduction <maximumf>, %542, %cst_245 [1] : vector<5x2xf32> to vector<5xf32>
    %544 = vector.shape_cast %543 : vector<5xf32> to vector<5x1xf32>
    %545 = vector.broadcast %544 : vector<5x1xf32> to vector<5x2xf32>
    %546 = arith.subf %542, %545 : vector<5x2xf32>
    %547 = math.exp %546 : vector<5x2xf32>
    %cst_246 = arith.constant dense<0.000000e+00> : vector<5xf32>
    %548 = vector.multi_reduction <add>, %547, %cst_246 [1] : vector<5x2xf32> to vector<5xf32>
    %549 = vector.shape_cast %548 : vector<5xf32> to vector<5x1xf32>
    %550 = tpu.reciprocal %549 {approx = true} : vector<5x1xf32> -> vector<5x1xf32>
    %551 = vector.broadcast %550 : vector<5x1xf32> to vector<5x2xf32>
    %552 = arith.mulf %547, %551 : vector<5x2xf32>
    %cst_247 = arith.constant dense<0.000000e+00> : vector<5x8xf32>
    %553 = tpu.matmul %552, %539, %cst_247 {dimension_numbers = #tpu.dot_dimension_numbers<[1], [0], [0], [1], [0, 0, 1, 1], [], []>} : vector<5x2xf32>, vector<2x8xf32>, vector<5x8xf32> -> vector<5x8xf32>
    %554 = vector.extract_strided_slice %329 {offsets = [24, 0], sizes = [8, 32], strides = [1, 1]} : vector<32x32xf32> to vector<8x32xf32>
    %cst_248 = arith.constant dense<0.000000e+00> : vector<5x32xf32>
    %555 = tpu.matmul %553, %554, %cst_248 {dimension_numbers = #tpu.dot_dimension_numbers<[1], [0], [0], [1], [0, 0, 1, 1], [], []>} : vector<5x8xf32>, vector<8x32xf32>, vector<5x32xf32> -> vector<5x32xf32>
    %556 = arith.addf %536, %555 : vector<5x32xf32>
    %557 = vector.broadcast %331 : vector<1x32xf32> to vector<5x32xf32>
    %558 = arith.addf %556, %557 : vector<5x32xf32>
    %559 = arith.addf %469, %558 : vector<5x32xf32>
    %cst_249 = arith.constant dense<0.000000e+00> : vector<5xf32>
    %560 = vector.multi_reduction <add>, %559, %cst_249 [1] : vector<5x32xf32> to vector<5xf32>
    %561 = vector.shape_cast %560 : vector<5xf32> to vector<5x1xf32>
    %cst_250 = arith.constant 3.200000e+01 : f32
    %562 = vector.broadcast %cst_250 : f32 to vector<5x1xf32>
    %563 = arith.divf %561, %562 : vector<5x1xf32>
    %564 = vector.broadcast %563 : vector<5x1xf32> to vector<5x32xf32>
    %565 = arith.subf %559, %564 : vector<5x32xf32>
    %566 = arith.mulf %565, %565 : vector<5x32xf32>
    %cst_251 = arith.constant dense<0.000000e+00> : vector<5xf32>
    %567 = vector.multi_reduction <add>, %566, %cst_251 [1] : vector<5x32xf32> to vector<5xf32>
    %568 = vector.shape_cast %567 : vector<5xf32> to vector<5x1xf32>
    %cst_252 = arith.constant 3.200000e+01 : f32
    %569 = vector.broadcast %cst_252 : f32 to vector<5x1xf32>
    %570 = arith.divf %568, %569 : vector<5x1xf32>
    %571 = vector.broadcast %563 : vector<5x1xf32> to vector<5x32xf32>
    %572 = arith.subf %559, %571 : vector<5x32xf32>
    %cst_253 = arith.constant 9.99999974E-6 : f32
    %573 = vector.broadcast %cst_253 : f32 to vector<5x1xf32>
    %574 = arith.addf %570, %573 : vector<5x1xf32>
    %575 = math.rsqrt %574 : vector<5x1xf32>
    %576 = vector.broadcast %575 : vector<5x1xf32> to vector<5x32xf32>
    %577 = arith.mulf %572, %576 : vector<5x32xf32>
    %578 = vector.broadcast %337 : vector<1x32xf32> to vector<5x32xf32>
    %579 = arith.mulf %577, %578 : vector<5x32xf32>
    %580 = vector.broadcast %339 : vector<1x32xf32> to vector<5x32xf32>
    %581 = arith.addf %579, %580 : vector<5x32xf32>
    %cst_254 = arith.constant dense<0.000000e+00> : vector<5x64xf32>
    %582 = tpu.matmul %581, %345, %cst_254 {dimension_numbers = #tpu.dot_dimension_numbers<[1], [0], [0], [1], [0, 0, 1, 1], [], []>} : vector<5x32xf32>, vector<32x64xf32>, vector<5x64xf32> -> vector<5x64xf32>
    %583 = vector.broadcast %347 : vector<1x64xf32> to vector<5x64xf32>
    %584 = arith.addf %582, %583 : vector<5x64xf32>
    %cst_255 = arith.constant 0.000000e+00 : f32
    %585 = vector.broadcast %cst_255 : f32 to vector<5x64xf32>
    %586 = arith.maximumf %584, %585 : vector<5x64xf32>
    %cst_256 = arith.constant dense<0.000000e+00> : vector<5x32xf32>
    %587 = tpu.matmul %586, %349, %cst_256 {dimension_numbers = #tpu.dot_dimension_numbers<[1], [0], [0], [1], [0, 0, 1, 1], [], []>} : vector<5x64xf32>, vector<64x32xf32>, vector<5x32xf32> -> vector<5x32xf32>
    %588 = vector.broadcast %351 : vector<1x32xf32> to vector<5x32xf32>
    %589 = arith.addf %587, %588 : vector<5x32xf32>
    %590 = arith.addf %581, %589 : vector<5x32xf32>
    %cst_257 = arith.constant dense<0.000000e+00> : vector<5xf32>
    %591 = vector.multi_reduction <add>, %590, %cst_257 [1] : vector<5x32xf32> to vector<5xf32>
    %592 = vector.shape_cast %591 : vector<5xf32> to vector<5x1xf32>
    %cst_258 = arith.constant 3.200000e+01 : f32
    %593 = vector.broadcast %cst_258 : f32 to vector<5x1xf32>
    %594 = arith.divf %592, %593 : vector<5x1xf32>
    %595 = vector.broadcast %594 : vector<5x1xf32> to vector<5x32xf32>
    %596 = arith.subf %590, %595 : vector<5x32xf32>
    %597 = arith.mulf %596, %596 : vector<5x32xf32>
    %cst_259 = arith.constant dense<0.000000e+00> : vector<5xf32>
    %598 = vector.multi_reduction <add>, %597, %cst_259 [1] : vector<5x32xf32> to vector<5xf32>
    %599 = vector.shape_cast %598 : vector<5xf32> to vector<5x1xf32>
    %cst_260 = arith.constant 3.200000e+01 : f32
    %600 = vector.broadcast %cst_260 : f32 to vector<5x1xf32>
    %601 = arith.divf %599, %600 : vector<5x1xf32>
    %602 = vector.broadcast %594 : vector<5x1xf32> to vector<5x32xf32>
    %603 = arith.subf %590, %602 : vector<5x32xf32>
    %cst_261 = arith.constant 9.99999974E-6 : f32
    %604 = vector.broadcast %cst_261 : f32 to vector<5x1xf32>
    %605 = arith.addf %601, %604 : vector<5x1xf32>
    %606 = math.rsqrt %605 : vector<5x1xf32>
    %607 = vector.broadcast %606 : vector<5x1xf32> to vector<5x32xf32>
    %608 = arith.mulf %603, %607 : vector<5x32xf32>
    %609 = vector.broadcast %341 : vector<1x32xf32> to vector<5x32xf32>
    %610 = arith.mulf %608, %609 : vector<5x32xf32>
    %611 = vector.broadcast %343 : vector<1x32xf32> to vector<5x32xf32>
    %612 = arith.addf %610, %611 : vector<5x32xf32>
    %c0_262 = arith.constant 0 : index
    %c0_263 = arith.constant 0 : index
    %613 = vector.load %arg24[%c0_262, %c0_263] : memref<32x16xf32, #tpu.memory_space<vmem>>, vector<32x16xf32>
    %cst_264 = arith.constant dense<0.000000e+00> : vector<5x16xf32>
    %614 = tpu.matmul %612, %613, %cst_264 {dimension_numbers = #tpu.dot_dimension_numbers<[1], [0], [0], [1], [0, 0, 1, 1], [], []>} : vector<5x32xf32>, vector<32x16xf32>, vector<5x16xf32> -> vector<5x16xf32>
    %c0_265 = arith.constant 0 : index
    %c0_266 = arith.constant 0 : index
    %615 = vector.load %arg25[%c0_265, %c0_266] : memref<1x16xf32, #tpu.memory_space<vmem>>, vector<1x16xf32>
    %616 = vector.broadcast %615 : vector<1x16xf32> to vector<5x16xf32>
    %617 = arith.addf %614, %616 : vector<5x16xf32>
    %618 = tpu.iota {dimensions = array<i32: 0>} : vector<5x16xi32>
    %619 = vector.broadcast %1 : i32 to vector<5x16xi32>
    %620 = arith.cmpi sge, %618, %619 : vector<5x16xi32>
    %cst_267 = arith.constant 0.000000e+00 : f32
    %621 = vector.broadcast %cst_267 : f32 to vector<5x16xf32>
    %622 = arith.select %620, %621, %617 : vector<5x16xi1>, vector<5x16xf32>
    %c0_268 = arith.constant 0 : index
    %c0_269 = arith.constant 0 : index
    %c0_270 = arith.constant 0 : index
    %623 = vector.load %arg26[%c0_268, %c0_269, %c0_270] : memref<1x5x16xf32, #tpu.memory_space<vmem>>, vector<1x5x16xf32>
    %624 = vector.shape_cast %623 : vector<1x5x16xf32> to vector<5x16xf32>
    %625 = vector.shape_cast %622 : vector<5x16xf32> to vector<1x5x16xf32>
    tpu.vector_store %arg26[%c0_268, %c0_269, %c0_270], %625 {strides = array<i32>} : memref<1x5x16xf32, #tpu.memory_space<vmem>>, vector<1x5x16xf32>,
    return
  }
  func.func @transform_0(%arg0: i32, %arg1: memref<2xi32, #tpu.memory_space<smem>>) -> (i32, i32, i32) {
    %c0_i32 = arith.constant 0 : i32
    %c0_i32_0 = arith.constant 0 : i32
    %c0_i32_1 = arith.constant 0 : i32
    return %arg0, %c0_i32, %c0_i32_0 : i32, i32, i32
  }
  func.func @transform_1(%arg0: i32, %arg1: memref<2xi32, #tpu.memory_space<smem>>) -> (i32, i32) {
    %c0_i32 = arith.constant 0 : i32
    %c0_i32_0 = arith.constant 0 : i32
    %c0_i32_1 = arith.constant 0 : i32
    return %c0_i32, %c0_i32_0 : i32, i32
  }
  func.func @transform_2(%arg0: i32, %arg1: memref<2xi32, #tpu.memory_space<smem>>) -> (i32, i32, i32) {
    %c0_i32 = arith.constant 0 : i32
    %c0_i32_0 = arith.constant 0 : i32
    %c0_i32_1 = arith.constant 0 : i32
    %c0_i32_2 = arith.constant 0 : i32
    return %c0_i32, %c0_i32_0, %c0_i32_1 : i32, i32, i32
  }
  func.func @transform_3(%arg0: i32, %arg1: memref<2xi32, #tpu.memory_space<smem>>) -> (i32, i32, i32) {
    %c0_i32 = arith.constant 0 : i32
    %c0_i32_0 = arith.constant 0 : i32
    %c0_i32_1 = arith.constant 0 : i32
    %c0_i32_2 = arith.constant 0 : i32
    return %c0_i32, %c0_i32_0, %c0_i32_1 : i32, i32, i32
  }
  func.func @transform_4(%arg0: i32, %arg1: memref<2xi32, #tpu.memory_space<smem>>) -> (i32, i32, i32) {
    %c0_i32 = arith.constant 0 : i32
    %c0_i32_0 = arith.constant 0 : i32
    %c0_i32_1 = arith.constant 0 : i32
    %c0_i32_2 = arith.constant 0 : i32
    return %c0_i32, %c0_i32_0, %c0_i32_1 : i32, i32, i32
  }
  func.func @transform_5(%arg0: i32, %arg1: memref<2xi32, #tpu.memory_space<smem>>) -> (i32, i32, i32) {
    %c0_i32 = arith.constant 0 : i32
    %c0_i32_0 = arith.constant 0 : i32
    %c0_i32_1 = arith.constant 0 : i32
    %c0_i32_2 = arith.constant 0 : i32
    return %c0_i32, %c0_i32_0, %c0_i32_1 : i32, i32, i32
  }
  func.func @transform_6(%arg0: i32, %arg1: memref<2xi32, #tpu.memory_space<smem>>) -> (i32, i32, i32) {
    %c0_i32 = arith.constant 0 : i32
    %c0_i32_0 = arith.constant 0 : i32
    %c0_i32_1 = arith.constant 0 : i32
    %c0_i32_2 = arith.constant 0 : i32
    return %c0_i32, %c0_i32_0, %c0_i32_1 : i32, i32, i32
  }
  func.func @transform_7(%arg0: i32, %arg1: memref<2xi32, #tpu.memory_space<smem>>) -> (i32, i32, i32) {
    %c0_i32 = arith.constant 0 : i32
    %c0_i32_0 = arith.constant 0 : i32
    %c0_i32_1 = arith.constant 0 : i32
    %c0_i32_2 = arith.constant 0 : i32
    return %c0_i32, %c0_i32_0, %c0_i32_1 : i32, i32, i32
  }
  func.func @transform_8(%arg0: i32, %arg1: memref<2xi32, #tpu.memory_space<smem>>) -> (i32, i32, i32) {
    %c0_i32 = arith.constant 0 : i32
    %c0_i32_0 = arith.constant 0 : i32
    %c0_i32_1 = arith.constant 0 : i32
    %c0_i32_2 = arith.constant 0 : i32
    return %c0_i32, %c0_i32_0, %c0_i32_1 : i32, i32, i32
  }
  func.func @transform_9(%arg0: i32, %arg1: memref<2xi32, #tpu.memory_space<smem>>) -> (i32, i32, i32) {
    %c0_i32 = arith.constant 0 : i32
    %c0_i32_0 = arith.constant 0 : i32
    %c0_i32_1 = arith.constant 0 : i32
    %c0_i32_2 = arith.constant 0 : i32
    return %c0_i32, %c0_i32_0, %c0_i32_1 : i32, i32, i32
  }
  func.func @transform_10(%arg0: i32, %arg1: memref<2xi32, #tpu.memory_space<smem>>) -> (i32, i32, i32) {
    %c0_i32 = arith.constant 0 : i32
    %c0_i32_0 = arith.constant 0 : i32
    %c0_i32_1 = arith.constant 0 : i32
    %c0_i32_2 = arith.constant 0 : i32
    return %c0_i32, %c0_i32_0, %c0_i32_1 : i32, i32, i32
  }
  func.func @transform_11(%arg0: i32, %arg1: memref<2xi32, #tpu.memory_space<smem>>) -> (i32, i32, i32) {
    %c0_i32 = arith.constant 0 : i32
    %c0_i32_0 = arith.constant 0 : i32
    %c0_i32_1 = arith.constant 0 : i32
    %c0_i32_2 = arith.constant 0 : i32
    return %c0_i32, %c0_i32_0, %c0_i32_1 : i32, i32, i32
  }
  func.func @transform_12(%arg0: i32, %arg1: memref<2xi32, #tpu.memory_space<smem>>) -> (i32, i32, i32) {
    %c0_i32 = arith.constant 0 : i32
    %c0_i32_0 = arith.constant 0 : i32
    %c0_i32_1 = arith.constant 0 : i32
    %c0_i32_2 = arith.constant 0 : i32
    return %c0_i32, %c0_i32_0, %c0_i32_1 : i32, i32, i32
  }
  func.func @transform_13(%arg0: i32, %arg1: memref<2xi32, #tpu.memory_space<smem>>) -> (i32, i32, i32) {
    %c0_i32 = arith.constant 0 : i32
    %c0_i32_0 = arith.constant 0 : i32
    %c0_i32_1 = arith.constant 0 : i32
    %c0_i32_2 = arith.constant 0 : i32
    return %c0_i32, %c0_i32_0, %c0_i32_1 : i32, i32, i32
  }
  func.func @transform_14(%arg0: i32, %arg1: memref<2xi32, #tpu.memory_space<smem>>) -> (i32, i32, i32) {
    %c0_i32 = arith.constant 0 : i32
    %c0_i32_0 = arith.constant 0 : i32
    %c0_i32_1 = arith.constant 0 : i32
    %c0_i32_2 = arith.constant 0 : i32
    return %c0_i32, %c0_i32_0, %c0_i32_1 : i32, i32, i32
  }
  func.func @transform_15(%arg0: i32, %arg1: memref<2xi32, #tpu.memory_space<smem>>) -> (i32, i32, i32) {
    %c0_i32 = arith.constant 0 : i32
    %c0_i32_0 = arith.constant 0 : i32
    %c0_i32_1 = arith.constant 0 : i32
    %c0_i32_2 = arith.constant 0 : i32
    return %c0_i32, %c0_i32_0, %c0_i32_1 : i32, i32, i32
  }
  func.func @transform_16(%arg0: i32, %arg1: memref<2xi32, #tpu.memory_space<smem>>) -> (i32, i32, i32) {
    %c0_i32 = arith.constant 0 : i32
    %c0_i32_0 = arith.constant 0 : i32
    %c0_i32_1 = arith.constant 0 : i32
    %c0_i32_2 = arith.constant 0 : i32
    return %c0_i32, %c0_i32_0, %c0_i32_1 : i32, i32, i32
  }
  func.func @transform_17(%arg0: i32, %arg1: memref<2xi32, #tpu.memory_space<smem>>) -> (i32, i32, i32) {
    %c0_i32 = arith.constant 0 : i32
    %c0_i32_0 = arith.constant 0 : i32
    %c0_i32_1 = arith.constant 0 : i32
    %c0_i32_2 = arith.constant 0 : i32
    return %c0_i32, %c0_i32_0, %c0_i32_1 : i32, i32, i32
  }
  func.func @transform_18(%arg0: i32, %arg1: memref<2xi32, #tpu.memory_space<smem>>) -> (i32, i32, i32) {
    %c0_i32 = arith.constant 0 : i32
    %c0_i32_0 = arith.constant 0 : i32
    %c0_i32_1 = arith.constant 0 : i32
    %c0_i32_2 = arith.constant 0 : i32
    return %c0_i32, %c0_i32_0, %c0_i32_1 : i32, i32, i32
  }
  func.func @transform_19(%arg0: i32, %arg1: memref<2xi32, #tpu.memory_space<smem>>) -> (i32, i32, i32) {
    %c0_i32 = arith.constant 0 : i32
    %c0_i32_0 = arith.constant 0 : i32
    %c0_i32_1 = arith.constant 0 : i32
    %c0_i32_2 = arith.constant 0 : i32
    return %c0_i32, %c0_i32_0, %c0_i32_1 : i32, i32, i32
  }
  func.func @transform_20(%arg0: i32, %arg1: memref<2xi32, #tpu.memory_space<smem>>) -> (i32, i32, i32) {
    %c0_i32 = arith.constant 0 : i32
    %c0_i32_0 = arith.constant 0 : i32
    %c0_i32_1 = arith.constant 0 : i32
    %c0_i32_2 = arith.constant 0 : i32
    return %c0_i32, %c0_i32_0, %c0_i32_1 : i32, i32, i32
  }
  func.func @transform_21(%arg0: i32, %arg1: memref<2xi32, #tpu.memory_space<smem>>) -> (i32, i32, i32) {
    %c0_i32 = arith.constant 0 : i32
    %c0_i32_0 = arith.constant 0 : i32
    %c0_i32_1 = arith.constant 0 : i32
    %c0_i32_2 = arith.constant 0 : i32
    return %c0_i32, %c0_i32_0, %c0_i32_1 : i32, i32, i32
  }
  func.func @transform_22(%arg0: i32, %arg1: memref<2xi32, #tpu.memory_space<smem>>) -> (i32, i32) {
    %c0_i32 = arith.constant 0 : i32
    %c0_i32_0 = arith.constant 0 : i32
    %c0_i32_1 = arith.constant 0 : i32
    return %c0_i32, %c0_i32_0 : i32, i32
  }
  func.func @transform_23(%arg0: i32, %arg1: memref<2xi32, #tpu.memory_space<smem>>) -> (i32, i32) {
    %c0_i32 = arith.constant 0 : i32
    %c0_i32_0 = arith.constant 0 : i32
    %c0_i32_1 = arith.constant 0 : i32
    return %c0_i32, %c0_i32_0 : i32, i32
  }
  func.func @transform_24(%arg0: i32, %arg1: memref<2xi32, #tpu.memory_space<smem>>) -> (i32, i32, i32) {
    %c0_i32 = arith.constant 0 : i32
    %c0_i32_0 = arith.constant 0 : i32
    %c0_i32_1 = arith.constant 0 : i32
    return %arg0, %c0_i32, %c0_i32_0 : i32, i32, i32
  }
}

</mosaic_0001>

<llo_original>
// kernel: kfuvae_forward.2
$region0: #{kfuvae_forward.2}
  #allocation0 [shape = 'u32[]', space=smem, size = 0x4, offset = 0x4, fixed_abs, tag = 'smem constant byte address 0x4 - core index']
  #allocation1 [shape = 'u32[72,128]{1,0:T(1,128)}', space=vmem, size = 0x9000, scoped, tag = 'internal scratch']
  #allocation2 [shape = 's32[1]{0}', space=sflag, size = 0x4, scoped, tag = 'scoped memory for kfuvae_forward.2']
  #allocation3 [shape = 'u8[512]{0}', space=smem, size = 0x200, scoped, tag = 'prefetched SMEM operand 0']
  %s0 = inlined_call_operand.vmem [shape: s32[2], index: 0, kind: input, shape index: {}]
  %s1 = inlined_call_operand.vmem [shape: f32[2,9,16], index: 1, kind: input, shape index: {}]
  %s2 = inlined_call_operand.vmem [shape: f32[9,32], index: 2, kind: input, shape index: {}]
  %s3 = inlined_call_operand.vmem [shape: f32[9,32], index: 3, kind: input, shape index: {}]
  %s4 = inlined_call_operand.vmem [shape: f32[16,32], index: 4, kind: input, shape index: {}]
  %s5 = inlined_call_operand.hbm [shape: f32[1,32], index: 5, kind: input, shape index: {}]
  %s6 = inlined_call_operand.vmem [shape: f32[2,32,96], index: 6, kind: input, shape index: {}]
  %s7 = inlined_call_operand.vmem [shape: f32[2,1,96], index: 7, kind: input, shape index: {}]
  %s8 = inlined_call_operand.vmem [shape: f32[2,32,32], index: 8, kind: input, shape index: {}]
  %s9 = inlined_call_operand.vmem [shape: f32[2,1,32], index: 9, kind: input, shape index: {}]
  %s10 = inlined_call_operand.vmem [shape: f32[2,1,32], index: 10, kind: input, shape index: {}]
  %s11 = inlined_call_operand.vmem [shape: f32[2,1,32], index: 11, kind: input, shape index: {}]
  %s12 = inlined_call_operand.vmem [shape: f32[2,1,32], index: 12, kind: input, shape index: {}]
  %s13 = inlined_call_operand.vmem [shape: f32[2,1,32], index: 13, kind: input, shape index: {}]
  %s14 = inlined_call_operand.vmem [shape: f32[2,32,64], index: 14, kind: input, shape index: {}]
  %s15 = inlined_call_operand.vmem [shape: f32[2,1,64], index: 15, kind: input, shape index: {}]
  %s16 = inlined_call_operand.vmem [shape: f32[2,64,32], index: 16, kind: input, shape index: {}]
  %s17 = inlined_call_operand.vmem [shape: f32[2,1,32], index: 17, kind: input, shape index: {}]
  %s18 = inlined_call_operand.vmem [shape: f32[2,4,32], index: 18, kind: output, shape index: {}]
  %s19 = sld [smem:[#allocation0]]
  $region105: #{kfuvae_forward.2} parent=0
    _
  %s21 = ssub.s32 1, %s19
  %s22 = scalar_select 0, %s21, %s19
  %s24 = sshll.u32 %s0, 4
  %s25 = int_to_ptr.vmem [resolvable:$true] %s24
  %27 = dma.vmem_to_smem %s25, 16, [#allocation3], [#allocation2]
  %29 = dma.done [#allocation2], 16
  %30 = sfence
  $region1: #{kfuvae_forward.2} parent=0
    #allocation4 [shape = 'u8[512]{0}', space=vmem, size = 0x400, scoped, tag = 'input window, operand 5, single buffered']
    #allocation5 [shape = 's32[2]{0}', space=sflag, size = 0x8, scoped, tag = 'scoped memory for kfuvae_forward.2']
    %31 = vsyncpa [#allocation5], 0
    loop: start=0, step=1, limit=4
    $region2: #{kfuvae_forward.2} parent=1 // loop_pre_header
      _
    $region3: #{kfuvae_forward.2} parent=1 // loop_header
      %s33 = sphi 0, %s37
      %p34 = scmp.ge.s32.totalorder %s33, 4
      %s43 = sphi 0, %s45
      %s46 = sphi 0, %s43
      %s47 = sphi 0, %s46
      %s63 = sphi 0, %s47
      %s67 = sphi 0, %s67
      %s69 = sphi 0, %s67
      %s70 = sphi 0, %s69
      %s84 = sphi 0, %s70
      %s88 = sphi 0, %s88
      %s90 = sphi 0, %s88
      %s91 = sphi 0, %s90
      %s105 = sphi 0, %s91
      %s109 = sphi 0, %s109
      %s111 = sphi 0, %s109
      %s112 = sphi 0, %s111
      %s126 = sphi 0, %s112
      %s130 = sphi 0, %s130
      %s132 = sphi 0, %s130
      %s133 = sphi 0, %s132
      %s147 = sphi 0, %s133
      %s151 = sphi 0, %s151
      %s153 = sphi 0, %s151
      %s154 = sphi 0, %s153
      %s168 = sphi 0, %s154
      %s172 = sphi 0, %s172
      %s174 = sphi 0, %s172
      %s175 = sphi 0, %s174
      %s189 = sphi 0, %s175
      %s193 = sphi 0, %s193
      %s195 = sphi 0, %s193
      %s196 = sphi 0, %s195
      %s210 = sphi 0, %s196
      %s214 = sphi 0, %s214
      %s216 = sphi 0, %s214
      %s217 = sphi 0, %s216
      %s231 = sphi 0, %s217
      %s235 = sphi 0, %s235
      %s237 = sphi 0, %s235
      %s238 = sphi 0, %s237
      %s252 = sphi 0, %s238
      %s256 = sphi 0, %s256
      %s258 = sphi 0, %s256
      %s259 = sphi 0, %s258
      %s273 = sphi 0, %s259
      %s277 = sphi 0, %s277
      %s279 = sphi 0, %s277
      %s280 = sphi 0, %s279
      %s294 = sphi 0, %s280
      %s298 = sphi 0, %s298
      %s300 = sphi 0, %s298
      %s301 = sphi 0, %s300
      %s315 = sphi 0, %s301
      %s319 = sphi 0, %s319
      %s321 = sphi 0, %s319
      %s322 = sphi 0, %s321
      %s336 = sphi 0, %s322
      %s340 = sphi 0, %s340
      %s342 = sphi 0, %s340
      %s343 = sphi 0, %s342
      %s357 = sphi 0, %s343
      %s361 = sphi 0, %s361
      %s363 = sphi 0, %s361
      %s364 = sphi 0, %s363
      %s378 = sphi 0, %s364
      %s382 = sphi 0, %s382
      %s384 = sphi 0, %s382
      %s385 = sphi 0, %s384
      %s399 = sphi 0, %s385
      %s405 = sphi 0, %s407
      %s408 = sphi 0, %s405
      %s409 = sphi 0, %s408
      %s425 = sphi 0, %s409
    $region4: #{kfuvae_forward.2} parent=1 // loop_header_branch
      %36 = sbr.rel (%p34) target = $region8
    $region5: #{kfuvae_forward.2} parent=1 // loop_body
      %s38 = ssub.s32 %s33, 1
      %s39 = ssub.s32 %s33, 2
      %s40 = sadd.s32 %s33, 1
      %s41 = ssub.s32 %s33, %s40
      %p42 = scmp.eq.s32.totalorder %s41, 0
      %s44 = sadd.s32 %s43, 1
      %s45 = scalar_select %p42, %s43, %s44
      %p48 = pneg %p42
      %p49 = scmp.eq.s32.totalorder %s33, 1
      %p50 = por %p48, %p49
      %p51 = scmp.ne.s32.totalorder %s43, %s46
      %p52 = scmp.eq.s32.totalorder %s33, 0
      %p53 = por %p51, %p52
      %p54 = scmp.ne.s32.totalorder %s43, %s46
      %p55 = scmp.eq.s32.totalorder %s38, 1
      %p56 = por %p54, %p55
      %p57 = scmp.ne.s32.totalorder %s46, %s47
      %p58 = scmp.eq.s32.totalorder %s38, 0
      %p59 = por %p57, %p58
      %p60 = scmp.ne.s32.totalorder %s46, %s47
      %p61 = scmp.eq.s32.totalorder %s39, 1
      %p62 = por %p60, %p61
      %p64 = scmp.ne.s32.totalorder %s47, %s63
      %p65 = scmp.eq.s32.totalorder %s39, 0
      %p66 = por %p64, %p65
      %s68 = sadd.s32 %s67, 1
      %p71 = scmp.eq.s32.totalorder %s33, 1
      %p72 = scmp.ne.s32.totalorder %s67, %s69
      %p73 = scmp.eq.s32.totalorder %s33, 0
      %p74 = por %p72, %p73
      %p75 = scmp.ne.s32.totalorder %s67, %s69
      %p76 = scmp.eq.s32.totalorder %s38, 1
      %p77 = por %p75, %p76
      %p78 = scmp.ne.s32.totalorder %s69, %s70
      %p79 = scmp.eq.s32.totalorder %s38, 0
      %p80 = por %p78, %p79
      %p81 = scmp.ne.s32.totalorder %s69, %s70
      %p82 = scmp.eq.s32.totalorder %s39, 1
      %p83 = por %p81, %p82
      %p85 = scmp.ne.s32.totalorder %s70, %s84
      %p86 = scmp.eq.s32.totalorder %s39, 0
      %p87 = por %p85, %p86
      %s89 = sadd.s32 %s88, 1
      %p92 = scmp.eq.s32.totalorder %s33, 1
      %p93 = scmp.ne.s32.totalorder %s88, %s90
      %p94 = scmp.eq.s32.totalorder %s33, 0
      %p95 = por %p93, %p94
      %p96 = scmp.ne.s32.totalorder %s88, %s90
      %p97 = scmp.eq.s32.totalorder %s38, 1
      %p98 = por %p96, %p97
      %p99 = scmp.ne.s32.totalorder %s90, %s91
      %p100 = scmp.eq.s32.totalorder %s38, 0
      %p101 = por %p99, %p100
      %p102 = scmp.ne.s32.totalorder %s90, %s91
      %p103 = scmp.eq.s32.totalorder %s39, 1
      %p104 = por %p102, %p103
      %p106 = scmp.ne.s32.totalorder %s91, %s105
      %p107 = scmp.eq.s32.totalorder %s39, 0
      %p108 = por %p106, %p107
      %s110 = sadd.s32 %s109, 1
      %p113 = scmp.eq.s32.totalorder %s33, 1
      %p114 = scmp.ne.s32.totalorder %s109, %s111
      %p115 = scmp.eq.s32.totalorder %s33, 0
      %p116 = por %p114, %p115
      %p117 = scmp.ne.s32.totalorder %s109, %s111
      %p118 = scmp.eq.s32.totalorder %s38, 1
      %p119 = por %p117, %p118
      %p120 = scmp.ne.s32.totalorder %s111, %s112
      %p121 = scmp.eq.s32.totalorder %s38, 0
      %p122 = por %p120, %p121
      %p123 = scmp.ne.s32.totalorder %s111, %s112
      %p124 = scmp.eq.s32.totalorder %s39, 1
      %p125 = por %p123, %p124
      %p127 = scmp.ne.s32.totalorder %s112, %s126
      %p128 = scmp.eq.s32.totalorder %s39, 0
      %p129 = por %p127, %p128
      %s131 = sadd.s32 %s130, 1
      %p134 = scmp.eq.s32.totalorder %s33, 1
      %p135 = scmp.ne.s32.totalorder %s130, %s132
      %p136 = scmp.eq.s32.totalorder %s33, 0
      %p137 = por %p135, %p136
      %p138 = scmp.ne.s32.totalorder %s130, %s132
      %p139 = scmp.eq.s32.totalorder %s38, 1
      %p140 = por %p138, %p139
      %p141 = scmp.ne.s32.totalorder %s132, %s133
      %p142 = scmp.eq.s32.totalorder %s38, 0
      %p143 = por %p141, %p142
      %p144 = scmp.ne.s32.totalorder %s132, %s133
      %p145 = scmp.eq.s32.totalorder %s39, 1
      %p146 = por %p144, %p145
      %p148 = scmp.ne.s32.totalorder %s133, %s147
      %p149 = scmp.eq.s32.totalorder %s39, 0
      %p150 = por %p148, %p149
      %s152 = sadd.s32 %s151, 1
      %p155 = scmp.eq.s32.totalorder %s33, 1
      %p156 = scmp.ne.s32.totalorder %s151, %s153
      %p157 = scmp.eq.s32.totalorder %s33, 0
      %p158 = por %p156, %p157
      %p159 = scmp.ne.s32.totalorder %s151, %s153
      %p160 = scmp.eq.s32.totalorder %s38, 1
      %p161 = por %p159, %p160
      %p162 = scmp.ne.s32.totalorder %s153, %s154
      %p163 = scmp.eq.s32.totalorder %s38, 0
      %p164 = por %p162, %p163
      %p165 = scmp.ne.s32.totalorder %s153, %s154
      %p166 = scmp.eq.s32.totalorder %s39, 1
      %p167 = por %p165, %p166
      %p169 = scmp.ne.s32.totalorder %s154, %s168
      %p170 = scmp.eq.s32.totalorder %s39, 0
      %p171 = por %p169, %p170
      %s173 = sadd.s32 %s172, 1
      %p176 = scmp.eq.s32.totalorder %s33, 1
      %p177 = scmp.ne.s32.totalorder %s172, %s174
      %p178 = scmp.eq.s32.totalorder %s33, 0
      %p179 = por %p177, %p178
      %p180 = scmp.ne.s32.totalorder %s172, %s174
      %p181 = scmp.eq.s32.totalorder %s38, 1
      %p182 = por %p180, %p181
      %p183 = scmp.ne.s32.totalorder %s174, %s175
      %p184 = scmp.eq.s32.totalorder %s38, 0
      %p185 = por %p183, %p184
      %p186 = scmp.ne.s32.totalorder %s174, %s175
      %p187 = scmp.eq.s32.totalorder %s39, 1
      %p188 = por %p186, %p187
      %p190 = scmp.ne.s32.totalorder %s175, %s189
      %p191 = scmp.eq.s32.totalorder %s39, 0
      %p192 = por %p190, %p191
      %s194 = sadd.s32 %s193, 1
      %p197 = scmp.eq.s32.totalorder %s33, 1
      %p198 = scmp.ne.s32.totalorder %s193, %s195
      %p199 = scmp.eq.s32.totalorder %s33, 0
      %p200 = por %p198, %p199
      %p201 = scmp.ne.s32.totalorder %s193, %s195
      %p202 = scmp.eq.s32.totalorder %s38, 1
      %p203 = por %p201, %p202
      %p204 = scmp.ne.s32.totalorder %s195, %s196
      %p205 = scmp.eq.s32.totalorder %s38, 0
      %p206 = por %p204, %p205
      %p207 = scmp.ne.s32.totalorder %s195, %s196
      %p208 = scmp.eq.s32.totalorder %s39, 1
      %p209 = por %p207, %p208
      %p211 = scmp.ne.s32.totalorder %s196, %s210
      %p212 = scmp.eq.s32.totalorder %s39, 0
      %p213 = por %p211, %p212
      %s215 = sadd.s32 %s214, 1
      %p218 = scmp.eq.s32.totalorder %s33, 1
      %p219 = scmp.ne.s32.totalorder %s214, %s216
      %p220 = scmp.eq.s32.totalorder %s33, 0
      %p221 = por %p219, %p220
      %p222 = scmp.ne.s32.totalorder %s214, %s216
      %p223 = scmp.eq.s32.totalorder %s38, 1
      %p224 = por %p222, %p223
      %p225 = scmp.ne.s32.totalorder %s216, %s217
      %p226 = scmp.eq.s32.totalorder %s38, 0
      %p227 = por %p225, %p226
      %p228 = scmp.ne.s32.totalorder %s216, %s217
      %p229 = scmp.eq.s32.totalorder %s39, 1
      %p230 = por %p228, %p229
      %p232 = scmp.ne.s32.totalorder %s217, %s231
      %p233 = scmp.eq.s32.totalorder %s39, 0
      %p234 = por %p232, %p233
      %s236 = sadd.s32 %s235, 1
      %p239 = scmp.eq.s32.totalorder %s33, 1
      %p240 = scmp.ne.s32.totalorder %s235, %s237
      %p241 = scmp.eq.s32.totalorder %s33, 0
      %p242 = por %p240, %p241
      %p243 = scmp.ne.s32.totalorder %s235, %s237
      %p244 = scmp.eq.s32.totalorder %s38, 1
      %p245 = por %p243, %p244
      %p246 = scmp.ne.s32.totalorder %s237, %s238
      %p247 = scmp.eq.s32.totalorder %s38, 0
      %p248 = por %p246, %p247
      %p249 = scmp.ne.s32.totalorder %s237, %s238
      %p250 = scmp.eq.s32.totalorder %s39, 1
      %p251 = por %p249, %p250
      %p253 = scmp.ne.s32.totalorder %s238, %s252
      %p254 = scmp.eq.s32.totalorder %s39, 0
      %p255 = por %p253, %p254
      %s257 = sadd.s32 %s256, 1
      %p260 = scmp.eq.s32.totalorder %s33, 1
      %p261 = scmp.ne.s32.totalorder %s256, %s258
      %p262 = scmp.eq.s32.totalorder %s33, 0
      %p263 = por %p261, %p262
      %p264 = scmp.ne.s32.totalorder %s256, %s258
      %p265 = scmp.eq.s32.totalorder %s38, 1
      %p266 = por %p264, %p265
      %p267 = scmp.ne.s32.totalorder %s258, %s259
      %p268 = scmp.eq.s32.totalorder %s38, 0
      %p269 = por %p267, %p268
      %p270 = scmp.ne.s32.totalorder %s258, %s259
      %p271 = scmp.eq.s32.totalorder %s39, 1
      %p272 = por %p270, %p271
      %p274 = scmp.ne.s32.totalorder %s259, %s273
      %p275 = scmp.eq.s32.totalorder %s39, 0
      %p276 = por %p274, %p275
      %s278 = sadd.s32 %s277, 1
      %p281 = scmp.eq.s32.totalorder %s33, 1
      %p282 = scmp.ne.s32.totalorder %s277, %s279
      %p283 = scmp.eq.s32.totalorder %s33, 0
      %p284 = por %p282, %p283
      %p285 = scmp.ne.s32.totalorder %s277, %s279
      %p286 = scmp.eq.s32.totalorder %s38, 1
      %p287 = por %p285, %p286
      %p288 = scmp.ne.s32.totalorder %s279, %s280
      %p289 = scmp.eq.s32.totalorder %s38, 0
      %p290 = por %p288, %p289
      %p291 = scmp.ne.s32.totalorder %s279, %s280
      %p292 = scmp.eq.s32.totalorder %s39, 1
      %p293 = por %p291, %p292
      %p295 = scmp.ne.s32.totalorder %s280, %s294
      %p296 = scmp.eq.s32.totalorder %s39, 0
      %p297 = por %p295, %p296
      %s299 = sadd.s32 %s298, 1
      %p302 = scmp.eq.s32.totalorder %s33, 1
      %p303 = scmp.ne.s32.totalorder %s298, %s300
      %p304 = scmp.eq.s32.totalorder %s33, 0
      %p305 = por %p303, %p304
      %p306 = scmp.ne.s32.totalorder %s298, %s300
      %p307 = scmp.eq.s32.totalorder %s38, 1
      %p308 = por %p306, %p307
      %p309 = scmp.ne.s32.totalorder %s300, %s301
      %p310 = scmp.eq.s32.totalorder %s38, 0
      %p311 = por %p309, %p310
      %p312 = scmp.ne.s32.totalorder %s300, %s301
      %p313 = scmp.eq.s32.totalorder %s39, 1
      %p314 = por %p312, %p313
      %p316 = scmp.ne.s32.totalorder %s301, %s315
      %p317 = scmp.eq.s32.totalorder %s39, 0
      %p318 = por %p316, %p317
      %s320 = sadd.s32 %s319, 1
      %p323 = scmp.eq.s32.totalorder %s33, 1
      %p324 = scmp.ne.s32.totalorder %s319, %s321
      %p325 = scmp.eq.s32.totalorder %s33, 0
      %p326 = por %p324, %p325
      %p327 = scmp.ne.s32.totalorder %s319, %s321
      %p328 = scmp.eq.s32.totalorder %s38, 1
      %p329 = por %p327, %p328
      %p330 = scmp.ne.s32.totalorder %s321, %s322
      %p331 = scmp.eq.s32.totalorder %s38, 0
      %p332 = por %p330, %p331
      %p333 = scmp.ne.s32.totalorder %s321, %s322
      %p334 = scmp.eq.s32.totalorder %s39, 1
      %p335 = por %p333, %p334
      %p337 = scmp.ne.s32.totalorder %s322, %s336
      %p338 = scmp.eq.s32.totalorder %s39, 0
      %p339 = por %p337, %p338
      %s341 = sadd.s32 %s340, 1
      %p344 = scmp.eq.s32.totalorder %s33, 1
      %p345 = scmp.ne.s32.totalorder %s340, %s342
      %p346 = scmp.eq.s32.totalorder %s33, 0
      %p347 = por %p345, %p346
      %p348 = scmp.ne.s32.totalorder %s340, %s342
      %p349 = scmp.eq.s32.totalorder %s38, 1
      %p350 = por %p348, %p349
      %p351 = scmp.ne.s32.totalorder %s342, %s343
      %p352 = scmp.eq.s32.totalorder %s38, 0
      %p353 = por %p351, %p352
      %p354 = scmp.ne.s32.totalorder %s342, %s343
      %p355 = scmp.eq.s32.totalorder %s39, 1
      %p356 = por %p354, %p355
      %p358 = scmp.ne.s32.totalorder %s343, %s357
      %p359 = scmp.eq.s32.totalorder %s39, 0
      %p360 = por %p358, %p359
      %s362 = sadd.s32 %s361, 1
      %p365 = scmp.eq.s32.totalorder %s33, 1
      %p366 = scmp.ne.s32.totalorder %s361, %s363
      %p367 = scmp.eq.s32.totalorder %s33, 0
      %p368 = por %p366, %p367
      %p369 = scmp.ne.s32.totalorder %s361, %s363
      %p370 = scmp.eq.s32.totalorder %s38, 1
      %p371 = por %p369, %p370
      %p372 = scmp.ne.s32.totalorder %s363, %s364
      %p373 = scmp.eq.s32.totalorder %s38, 0
      %p374 = por %p372, %p373
      %p375 = scmp.ne.s32.totalorder %s363, %s364
      %p376 = scmp.eq.s32.totalorder %s39, 1
      %p377 = por %p375, %p376
      %p379 = scmp.ne.s32.totalorder %s364, %s378
      %p380 = scmp.eq.s32.totalorder %s39, 0
      %p381 = por %p379, %p380
      %s383 = sadd.s32 %s382, 1
      %p386 = scmp.eq.s32.totalorder %s33, 1
      %p387 = scmp.ne.s32.totalorder %s382, %s384
      %p388 = scmp.eq.s32.totalorder %s33, 0
      %p389 = por %p387, %p388
      %p390 = scmp.ne.s32.totalorder %s382, %s384
      %p391 = scmp.eq.s32.totalorder %s38, 1
      %p392 = por %p390, %p391
      %p393 = scmp.ne.s32.totalorder %s384, %s385
      %p394 = scmp.eq.s32.totalorder %s38, 0
      %p395 = por %p393, %p394
      %p396 = scmp.ne.s32.totalorder %s384, %s385
      %p397 = scmp.eq.s32.totalorder %s39, 1
      %p398 = por %p396, %p397
      %p400 = scmp.ne.s32.totalorder %s385, %s399
      %p401 = scmp.eq.s32.totalorder %s39, 0
      %p402 = por %p400, %p401
      %s403 = ssub.s32 %s33, %s40
      %p404 = scmp.eq.s32.totalorder %s403, 0
      %s406 = sadd.s32 %s405, 1
      %s407 = scalar_select %p404, %s405, %s406
      %p410 = pneg %p404
      %p411 = scmp.eq.s32.totalorder %s33, 1
      %p412 = por %p410, %p411
      %p413 = scmp.ne.s32.totalorder %s405, %s408
      %p414 = scmp.eq.s32.totalorder %s33, 0
      %p415 = por %p413, %p414
      %p416 = scmp.ne.s32.totalorder %s405, %s408
      %p417 = scmp.eq.s32.totalorder %s38, 1
      %p418 = por %p416, %p417
      %p419 = scmp.ne.s32.totalorder %s408, %s409
      %p420 = scmp.eq.s32.totalorder %s38, 0
      %p421 = por %p419, %p420
      %p422 = scmp.ne.s32.totalorder %s408, %s409
      %p423 = scmp.eq.s32.totalorder %s39, 1
      %p424 = por %p422, %p423
      %p426 = scmp.ne.s32.totalorder %s409, %s425
      %p427 = scmp.eq.s32.totalorder %s39, 0
      %p428 = por %p426, %p427
      %p429 = scmp.le.s32.totalorder 1, %s33
      %p430 = scmp.lt.s32.totalorder %s33, 3
      %p431 = pnand %p429, %p430
      %p432 = pneg %p431
      // Predicated region
      $region9: #{kfuvae_forward.2} parent=5 // pred_check
        _
      $region10: #{kfuvae_forward.2} parent=5 // pred_check_branch
        %434 = sbr.rel (%p431) target = $region12
      $region11: #{kfuvae_forward.2} parent=5 // pred_region
        %s435 = ssub.s32 %s33, 1
        // Predicated region
        $region13: #{kfuvae_forward.2} parent=11 // pred_check
          %p436 = pneg %p80
        $region14: #{kfuvae_forward.2} parent=11 // pred_check_branch
          %438 = sbr.rel (%p436) target = $region16
        $region15: #{kfuvae_forward.2} parent=11 // pred_region
          _
        $region16: #{kfuvae_forward.2} parent=11 // pred_fallthru
          _
        // Predicated region
        $region17: #{kfuvae_forward.2} parent=11 // pred_check
          %p439 = pneg %p101
        $region18: #{kfuvae_forward.2} parent=11 // pred_check_branch
          %441 = sbr.rel (%p439) target = $region20
        $region19: #{kfuvae_forward.2} parent=11 // pred_region
          _
        $region20: #{kfuvae_forward.2} parent=11 // pred_fallthru
          _
        // Predicated region
        $region21: #{kfuvae_forward.2} parent=11 // pred_check
          %p442 = pneg %p122
        $region22: #{kfuvae_forward.2} parent=11 // pred_check_branch
          %444 = sbr.rel (%p442) target = $region24
        $region23: #{kfuvae_forward.2} parent=11 // pred_region
          _
        $region24: #{kfuvae_forward.2} parent=11 // pred_fallthru
          _
        // Predicated region
        $region25: #{kfuvae_forward.2} parent=11 // pred_check
          %p445 = pneg %p143
        $region26: #{kfuvae_forward.2} parent=11 // pred_check_branch
          %447 = sbr.rel (%p445) target = $region28
        $region27: #{kfuvae_forward.2} parent=11 // pred_region
          %449 = vsyncadd [#allocation5], 0
          %s451 = sshll.u32 %s5, 4
          %s452 = int_to_ptr.hbm [resolvable:$true] %s451
          %s453 = sshll.u32 [#allocation4], 4
          %s454 = int_to_ptr.vmem [resolvable:$true] %s453
          %456 = dma.hbm_to_vmem [thread:$0]  %s452, 16, %s454, [#allocation5]
        $region28: #{kfuvae_forward.2} parent=11 // pred_fallthru
          _
        // Predicated region
        $region29: #{kfuvae_forward.2} parent=11 // pred_check
          %p457 = pneg %p164
        $region30: #{kfuvae_forward.2} parent=11 // pred_check_branch
          %459 = sbr.rel (%p457) target = $region32
        $region31: #{kfuvae_forward.2} parent=11 // pred_region
          _
        $region32: #{kfuvae_forward.2} parent=11 // pred_fallthru
          _
        // Predicated region
        $region33: #{kfuvae_forward.2} parent=11 // pred_check
          %p460 = pneg %p185
        $region34: #{kfuvae_forward.2} parent=11 // pred_check_branch
          %462 = sbr.rel (%p460) target = $region36
        $region35: #{kfuvae_forward.2} parent=11 // pred_region
          _
        $region36: #{kfuvae_forward.2} parent=11 // pred_fallthru
          _
        // Predicated region
        $region37: #{kfuvae_forward.2} parent=11 // pred_check
          %p463 = pneg %p206
        $region38: #{kfuvae_forward.2} parent=11 // pred_check_branch
          %465 = sbr.rel (%p463) target = $region40
        $region39: #{kfuvae_forward.2} parent=11 // pred_region
          _
        $region40: #{kfuvae_forward.2} parent=11 // pred_fallthru
          _
        // Predicated region
        $region41: #{kfuvae_forward.2} parent=11 // pred_check
          %p466 = pneg %p227
        $region42: #{kfuvae_forward.2} parent=11 // pred_check_branch
          %468 = sbr.rel (%p466) target = $region44
        $region43: #{kfuvae_forward.2} parent=11 // pred_region
          _
        $region44: #{kfuvae_forward.2} parent=11 // pred_fallthru
          _
        // Predicated region
        $region45: #{kfuvae_forward.2} parent=11 // pred_check
          %p469 = pneg %p248
        $region46: #{kfuvae_forward.2} parent=11 // pred_check_branch
          %471 = sbr.rel (%p469) target = $region48
        $region47: #{kfuvae_forward.2} parent=11 // pred_region
          _
        $region48: #{kfuvae_forward.2} parent=11 // pred_fallthru
          _
        // Predicated region
        $region49: #{kfuvae_forward.2} parent=11 // pred_check
          %p472 = pneg %p269
        $region50: #{kfuvae_forward.2} parent=11 // pred_check_branch
          %474 = sbr.rel (%p472) target = $region52
        $region51: #{kfuvae_forward.2} parent=11 // pred_region
          _
        $region52: #{kfuvae_forward.2} parent=11 // pred_fallthru
          _
        // Predicated region
        $region53: #{kfuvae_forward.2} parent=11 // pred_check
          %p475 = pneg %p290
        $region54: #{kfuvae_forward.2} parent=11 // pred_check_branch
          %477 = sbr.rel (%p475) target = $region56
        $region55: #{kfuvae_forward.2} parent=11 // pred_region
          _
        $region56: #{kfuvae_forward.2} parent=11 // pred_fallthru
          _
        // Predicated region
        $region57: #{kfuvae_forward.2} parent=11 // pred_check
          %p478 = pneg %p311
        $region58: #{kfuvae_forward.2} parent=11 // pred_check_branch
          %480 = sbr.rel (%p478) target = $region60
        $region59: #{kfuvae_forward.2} parent=11 // pred_region
          _
        $region60: #{kfuvae_forward.2} parent=11 // pred_fallthru
          _
        // Predicated region
        $region61: #{kfuvae_forward.2} parent=11 // pred_check
          %p481 = pneg %p332
        $region62: #{kfuvae_forward.2} parent=11 // pred_check_branch
          %483 = sbr.rel (%p481) target = $region64
        $region63: #{kfuvae_forward.2} parent=11 // pred_region
          _
        $region64: #{kfuvae_forward.2} parent=11 // pred_fallthru
          _
        // Predicated region
        $region65: #{kfuvae_forward.2} parent=11 // pred_check
          %p484 = pneg %p353
        $region66: #{kfuvae_forward.2} parent=11 // pred_check_branch
          %486 = sbr.rel (%p484) target = $region68
        $region67: #{kfuvae_forward.2} parent=11 // pred_region
          _
        $region68: #{kfuvae_forward.2} parent=11 // pred_fallthru
          _
        // Predicated region
        $region69: #{kfuvae_forward.2} parent=11 // pred_check
          %p487 = pneg %p374
        $region70: #{kfuvae_forward.2} parent=11 // pred_check_branch
          %489 = sbr.rel (%p487) target = $region72
        $region71: #{kfuvae_forward.2} parent=11 // pred_region
          _
        $region72: #{kfuvae_forward.2} parent=11 // pred_fallthru
          _
        // Predicated region
        $region73: #{kfuvae_forward.2} parent=11 // pred_check
          %p490 = pneg %p395
        $region74: #{kfuvae_forward.2} parent=11 // pred_check_branch
          %492 = sbr.rel (%p490) target = $region76
        $region75: #{kfuvae_forward.2} parent=11 // pred_region
          _
        $region76: #{kfuvae_forward.2} parent=11 // pred_fallthru
          _
      $region12: #{kfuvae_forward.2} parent=5 // pred_fallthru
        _
      %p493 = scmp.lt.s32.totalorder %s33, 2
      // Predicated region
      $region77: #{kfuvae_forward.2} parent=5 // pred_check
        %p494 = pneg %p493
      $region78: #{kfuvae_forward.2} parent=5 // pred_check_branch
        %496 = sbr.rel (%p494) target = $region80
      $region79: #{kfuvae_forward.2} parent=5 // pred_region
        // Predicated region
        $region81: #{kfuvae_forward.2} parent=79 // pred_check
          %p497 = pneg %p53
        $region82: #{kfuvae_forward.2} parent=79 // pred_check_branch
          %499 = sbr.rel (%p497) target = $region84
        $region83: #{kfuvae_forward.2} parent=79 // pred_region
          %p500 = scmp.lt.s32.totalorder %s33, 1
          %s501 = scalar_select %p500, %s33, 1
          %s502 = smul.addr %s501, 2
          %s503 = smul.addr %s502, 8
          %s504 = scalar_lea.vmem %s1, %s503
        $region84: #{kfuvae_forward.2} parent=79 // pred_fallthru
          _
      $region80: #{kfuvae_forward.2} parent=5 // pred_fallthru
        _
      %p505 = scmp.le.s32.totalorder 1, %s33
      %p506 = scmp.lt.s32.totalorder %s33, 3
      %p507 = pnand %p505, %p506
      %p508 = pneg %p507
      // Predicated region
      $region85: #{kfuvae_forward.2} parent=5 // pred_check
        _
      $region86: #{kfuvae_forward.2} parent=5 // pred_check_branch
        %510 = sbr.rel (%p507) target = $region88
      $region87: #{kfuvae_forward.2} parent=5 // pred_region
        %s511 = ssub.s32 %s33, 1
        // Predicated region
        $region89: #{kfuvae_forward.2} parent=87 // pred_check
          %p512 = pneg %p143
        $region90: #{kfuvae_forward.2} parent=87 // pred_check_branch
          %514 = sbr.rel (%p512) target = $region92
        $region91: #{kfuvae_forward.2} parent=87 // pred_region
          %516 = dma.done [#allocation5], 16
        $region92: #{kfuvae_forward.2} parent=87 // pred_fallthru
          _
        %p517 = scmp.lt.s32.totalorder %s38, 1
        %s518 = scalar_select %p517, %s38, 1
        %s519 = smul.addr %s518, 2
        %s520 = smul.addr %s519, 8
        %s521 = scalar_lea.vmem %s1, %s520
        %p522 = pneg %p59
        %p523 = pneg %p56
        %p524 = pneg %p80
        %p525 = pneg %p77
        %p526 = pneg %p101
        %p527 = pneg %p98
        %p528 = pneg %p122
        %p529 = pneg %p119
        %p530 = pneg %p143
        %p531 = pneg %p140
        %p532 = pneg %p164
        %p533 = pneg %p161
        %p534 = pneg %p185
        %p535 = pneg %p182
        %p536 = pneg %p206
        %p537 = pneg %p203
        %p538 = pneg %p227
        %p539 = pneg %p224
        %p540 = pneg %p248
        %p541 = pneg %p245
        %p542 = pneg %p269
        %p543 = pneg %p266
        %p544 = pneg %p290
        %p545 = pneg %p287
        %p546 = pneg %p311
        %p547 = pneg %p308
        %p548 = pneg %p332
        %p549 = pneg %p329
        %p550 = pneg %p353
        %p551 = pneg %p350
        %p552 = pneg %p374
        %p553 = pneg %p371
        %p554 = pneg %p395
        %p555 = pneg %p392
        %p556 = pneg %p421
        %p557 = pneg %p418
        %p558 = scmp.lt.s32.totalorder %s38, 1
        %s559 = scalar_select %p558, %s38, 1
        %s560 = smul.addr %s559, 4
        %s561 = scalar_lea.vmem %s18, %s560
        %p562 = scmp.lt.s32.totalorder %s38, 1
        %s563 = scalar_select %p562, %s38, 1
        %s564 = smul.addr %s563, 2
        %s565 = smul.addr %s564, 8
        %s566 = scalar_lea.vmem %s1, %s565
        %p567 = scmp.lt.s32.totalorder %s38, 1
        %s568 = scalar_select %p567, %s38, 1
        %s569 = smul.addr %s568, 4
        %s570 = scalar_lea.vmem %s18, %s569
        %s571 = sld [smem:[#allocation3 + %s38]]
        %v572 = vld [vmem:[%s566] sm:$0xff]
        %v573 = vld [vmem:[%s566 + $0x8] sm:$0x1]
        %v574 = vld [vmem:[%s4] sm:$0xff]
        %v575 = vld [vmem:[%s4 + $0x8] sm:$0xff]
        %v576 = vld [vmem:[#allocation4] sm:$0x1]
        %v578 = vperm.slane %v576, 0
        %vm580 = vcmask 130048
        %v582 = vsel %vm580, %v572, 0
        %v585 = vsel %vm580, %v573, 0
        %587 = vmatpush.msra.mxu0 0.0
        %588 = vmatpush.msra.mxu0 0.0
        %589 = vmatpush.msra.mxu0 0.0
        %590 = vmatpush.msra.mxu0 0.0
        %591 = vmatpush.msra.mxu0 0.0
        %592 = vmatpush.msra.mxu0 0.0
        %593 = vmatpush.msra.mxu0 0.0
        %594 = vmatpush.msra.mxu0 0.0
        %595 = vmatpush.msra.mxu0 0.0
        %596 = vmatpush.msra.mxu0 0.0
        %597 = vmatpush.msra.mxu0 0.0
        %598 = vmatpush.msra.mxu0 0.0
        %599 = vmatpush.msra.mxu0 0.0
        %600 = vmatpush.msra.mxu0 0.0
        %601 = vmatpush.msra.mxu0 %v575
        %602 = vmatpush.msra.mxu0 %v574
        %603 = vmatmul.f32.gmra.mxu0 %v582
        %v604 = vpop.f32.mrf.mxu0
        %v605 = vadd.f32 %v578, %v604
        %606 = vmatmul.f32.gmra.mxu0 %v585
        %v607 = vpop.f32.mrf.mxu0
        %v608 = vadd.f32 %v578, %v607
        %609 = vdwg.mxu0
        %v610 = vlaneseq
        %v611 = vshrl.u32 %v610, 7
        %v612 = vadd.s32 %v611, 8
        %vm613 = vcmp.lt.s32.totalorder %v611, 4
        %vm614 = vcmp.lt.s32.totalorder %v612, 4
        %v615 = vld [vmem:[%s2] sm:$0xff]
        %v616 = vld [vmem:[%s2 + $0x8] sm:$0x1]
        %v617 = vsel %vm613, %v615, %v605
        %v618 = vsel %vm614, %v616, %v608
        %v619 = vld [vmem:[%s3] sm:$0xff]
        %v620 = vld [vmem:[%s3 + $0x8] sm:$0x1]
        %v621 = vadd.f32 %v617, %v619
        %v622 = vadd.f32 %v618, %v620
        %v623 = vlaneseq
        %v624 = vand.u32 %v623, 127
        %s625 = sadd.s32 %s571, 4
        %v626 = vstv %s625
        %vm627 = vcmp.ge.s32.totalorder %v624, %v626
        %v628 = vsel %vm627, -1e+09, 0.0
        %v629 = vld [vmem:[%s6] sm:$0xff]
        %v630 = vld [vmem:[%s6 + $0x8] sm:$0xff]
        %v631 = vld [vmem:[%s6 + $0x10] sm:$0xff]
        %v632 = vld [vmem:[%s6 + $0x18] sm:$0xff]
        %v633 = vld [vmem:[%s7] sm:$0x1]
        %v634 = vld [vmem:[%s8] sm:$0xff]
        %v635 = vld [vmem:[%s8 + $0x8] sm:$0xff]
        %v636 = vld [vmem:[%s8 + $0x10] sm:$0xff]
        %v637 = vld [vmem:[%s8 + $0x18] sm:$0xff]
        %v638 = vld [vmem:[%s9] sm:$0x1]
        %v639 = vld [vmem:[%s10] sm:$0x1]
        %v640 = vld [vmem:[%s11] sm:$0x1]
        %v641 = vld [vmem:[%s12] sm:$0x1]
        %v642 = vld [vmem:[%s13] sm:$0x1]
        %v643 = vld [vmem:[%s14] sm:$0xff]
        %v644 = vld [vmem:[%s14 + $0x8] sm:$0xff]
        %v645 = vld [vmem:[%s14 + $0x10] sm:$0xff]
        %v646 = vld [vmem:[%s14 + $0x18] sm:$0xff]
        %v647 = vld [vmem:[%s15] sm:$0x1]
        %v648 = vld [vmem:[%s16] sm:$0xff]
        %v649 = vld [vmem:[%s16 + $0x8] sm:$0xff]
        %v650 = vld [vmem:[%s16 + $0x10] sm:$0xff]
        %v651 = vld [vmem:[%s16 + $0x18] sm:$0xff]
        %v652 = vld [vmem:[%s16 + $0x20] sm:$0xff]
        %v653 = vld [vmem:[%s16 + $0x28] sm:$0xff]
        %v654 = vld [vmem:[%s16 + $0x30] sm:$0xff]
        %v655 = vld [vmem:[%s16 + $0x38] sm:$0xff]
        %v656 = vld [vmem:[%s17] sm:$0x1]
        %v658 = vperm.slane %v633, 0
        %vm660 = vcmask 261120
        %v662 = vsel %vm660, %v621, 0
        %v665 = vsel %vm660, %v622, 0
        %667 = vmatpush.msra.mxu0 0.0
        %668 = vmatpush.msra.mxu0 0.0
        %669 = vmatpush.msra.mxu0 0.0
        %670 = vmatpush.msra.mxu0 0.0
        %671 = vmatpush.msra.mxu0 0.0
        %672 = vmatpush.msra.mxu0 0.0
        %673 = vmatpush.msra.mxu0 0.0
        %674 = vmatpush.msra.mxu0 0.0
        %675 = vmatpush.msra.mxu0 0.0
        %676 = vmatpush.msra.mxu0 0.0
        %677 = vmatpush.msra.mxu0 0.0
        %678 = vmatpush.msra.mxu0 0.0
        %679 = vmatpush.msra.mxu0 %v632
        %680 = vmatpush.msra.mxu0 %v631
        %681 = vmatpush.msra.mxu0 %v630
        %682 = vmatpush.msra.mxu0 %v629
        %683 = vmatmul.f32.gmra.mxu0 %v662
        %v684 = vpop.f32.mrf.mxu0
        %v685 = vadd.f32 %v658, %v684
        %686 = vmatmul.f32.gmra.mxu0 %v665
        %v687 = vpop.f32.mrf.mxu0
        %v688 = vadd.f32 %v658, %v687
        %689 = vdwg.mxu0
        %692 = vrot.lane.b32.xlu0 %v685, 96
        %v693 = vpop.permute.xlu0 %692
        %694 = vrot.lane.b32.xlu0 %v688, 96
        %v695 = vpop.permute.xlu0 %694
        %vm696 = vcmask 64512
        %v697 = vsel %vm696, %v685, 0
        %v699 = vsel %vm696, %v688, 0
        %v701 = vsel %vm696, %v693, 0
        %v703 = vsel %vm696, %v695, 0
        %705 = vmatpush.xpose.msra.mxu0 0.0
        %706 = vmatpush.xpose.msra.mxu0 0.0
        %707 = vmatpush.xpose.msra.mxu0 0.0
        %708 = vmatpush.xpose.msra.mxu0 0.0
        %709 = vmatpush.xpose.msra.mxu0 0.0
        %710 = vmatpush.xpose.msra.mxu0 0.0
        %711 = vmatpush.xpose.msra.mxu0 0.0
        %712 = vmatpush.xpose.msra.mxu0 0.0
        %713 = vmatpush.xpose.msra.mxu0 0.0
        %714 = vmatpush.xpose.msra.mxu0 0.0
        %715 = vmatpush.xpose.msra.mxu0 0.0
        %716 = vmatpush.xpose.msra.mxu0 0.0
        %717 = vmatpush.xpose.msra.mxu0 0.0
        %718 = vmatpush.xpose.msra.mxu0 0.0
        %719 = vmatpush.xpose.msra.mxu0 %v703
        %720 = vmatpush.xpose.msra.mxu0 %v701
        %721 = vmatmul.f32.gmra.mxu0 %v697
        %v722 = vpop.f32.mrf.mxu0
        %v723 = vadd.f32 0.0, %v722
        %724 = vmatmul.f32.gmra.mxu0 %v699
        %v725 = vpop.f32.mrf.mxu0
        %v726 = vadd.f32 0.0, %v725
        %727 = vdwg.mxu0
        %v728 = vmul.f32 %v723, 0.35355338
        %v729 = vmul.f32 %v726, 0.35355338
        %v730 = vadd.f32 %v728, %v628
        %v731 = vadd.f32 %v729, %v628
        %vm732 = vcmask 72704
        %v733 = vsel %vm732, %v730, -inf
        %734 = vmax.xlane.f32.xlu0 %v733
        %v735 = vpop.xlane.xlu0 %734
        %vm736 = vcmask 65536
        %v737 = vsel %vm736, %v731, -inf
        %738 = vmax.xlane.f32.xlu0 %v737
        %v739 = vpop.xlane.xlu0 %738
        %v740 = vsub.f32 %v730, %v735
        %v741 = vsub.f32 %v731, %v739
        %v742 = vmul.f32 %v740, 1.442695
        %v743 = vpow.pop %v742
        %v744 = vmul.f32 %v741, 1.442695
        %v745 = vpow.pop %v744
        %v746 = vsel %vm732, %v743, 0.0
        %747 = vadd.xlane.f32.xlu0 %v746
        %v748 = vpop.xlane.xlu0 %747
        %v749 = vsel %vm736, %v745, 0.0
        %750 = vadd.xlane.f32.xlu0 %v749
        %v751 = vpop.xlane.xlu0 %750
        %v752 = vrcp.pop %v748
        %v753 = vrcp.pop %v751
        %v754 = vmul.f32 %v743, %v752
        %v755 = vmul.f32 %v745, %v753
        %756 = vrot.lane.b32.xlu0 %v685, 64
        %v757 = vpop.permute.xlu0 %756
        %758 = vrot.lane.b32.xlu0 %v688, 64
        %v759 = vpop.permute.xlu0 %758
        %v762 = vsel %vm732, %v754, 0
        %v765 = vsel %vm732, %v755, 0
        %vm767 = vcmask 1040384
        %v768 = vsel %vm767, %v759, 0
        %770 = vmatpush.msra.mxu0 0.0
        %771 = vmatpush.msra.mxu0 0.0
        %772 = vmatpush.msra.mxu0 0.0
        %773 = vmatpush.msra.mxu0 0.0
        %774 = vmatpush.msra.mxu0 0.0
        %775 = vmatpush.msra.mxu0 0.0
        %776 = vmatpush.msra.mxu0 0.0
        %777 = vmatpush.msra.mxu0 0.0
        %778 = vmatpush.msra.mxu0 0.0
        %779 = vmatpush.msra.mxu0 0.0
        %780 = vmatpush.msra.mxu0 0.0
        %781 = vmatpush.msra.mxu0 0.0
        %782 = vmatpush.msra.mxu0 0.0
        %783 = vmatpush.msra.mxu0 0.0
        %784 = vmatpush.msra.mxu0 %v768
        %785 = vmatpush.msra.mxu0 %v757
        %786 = vmatmul.f32.gmra.mxu0 %v762
        %v787 = vpop.f32.mrf.mxu0
        %v788 = vadd.f32 0.0, %v787
        %789 = vmatmul.f32.gmra.mxu0 %v765
        %v790 = vpop.f32.mrf.mxu0
        %v791 = vadd.f32 0.0, %v790
        %792 = vdwg.mxu0
        %793 = vrot.lane.b32.xlu0 %v685, 120
        %v794 = vpop.permute.xlu0 %793
        %795 = vrot.lane.b32.xlu0 %v688, 120
        %v796 = vpop.permute.xlu0 %795
        %797 = vrot.lane.b32.xlu0 %v685, 88
        %v798 = vpop.permute.xlu0 %797
        %799 = vrot.lane.b32.xlu0 %v688, 88
        %v800 = vpop.permute.xlu0 %799
        %v801 = vsel %vm696, %v794, 0
        %v803 = vsel %vm696, %v796, 0
        %v805 = vsel %vm696, %v798, 0
        %v807 = vsel %vm696, %v800, 0
        %809 = vmatpush.xpose.msra.mxu0 0.0
        %810 = vmatpush.xpose.msra.mxu0 0.0
        %811 = vmatpush.xpose.msra.mxu0 0.0
        %812 = vmatpush.xpose.msra.mxu0 0.0
        %813 = vmatpush.xpose.msra.mxu0 0.0
        %814 = vmatpush.xpose.msra.mxu0 0.0
        %815 = vmatpush.xpose.msra.mxu0 0.0
        %816 = vmatpush.xpose.msra.mxu0 0.0
        %817 = vmatpush.xpose.msra.mxu0 0.0
        %818 = vmatpush.xpose.msra.mxu0 0.0
        %819 = vmatpush.xpose.msra.mxu0 0.0
        %820 = vmatpush.xpose.msra.mxu0 0.0
        %821 = vmatpush.xpose.msra.mxu0 0.0
        %822 = vmatpush.xpose.msra.mxu0 0.0
        %823 = vmatpush.xpose.msra.mxu0 %v807
        %824 = vmatpush.xpose.msra.mxu0 %v805
        %825 = vmatmul.f32.gmra.mxu0 %v801
        %v826 = vpop.f32.mrf.mxu0
        %v827 = vadd.f32 0.0, %v826
        %828 = vmatmul.f32.gmra.mxu0 %v803
        %v829 = vpop.f32.mrf.mxu0
        %v830 = vadd.f32 0.0, %v829
        %831 = vdwg.mxu0
        %v832 = vmul.f32 %v827, 0.35355338
        %v833 = vmul.f32 %v830, 0.35355338
        %v834 = vadd.f32 %v832, %v628
        %v835 = vadd.f32 %v833, %v628
        %v836 = vsel %vm732, %v834, -inf
        %837 = vmax.xlane.f32.xlu0 %v836
        %v838 = vpop.xlane.xlu0 %837
        %v839 = vsel %vm736, %v835, -inf
        %840 = vmax.xlane.f32.xlu0 %v839
        %v841 = vpop.xlane.xlu0 %840
        %v842 = vsub.f32 %v834, %v838
        %v843 = vsub.f32 %v835, %v841
        %v844 = vmul.f32 %v842, 1.442695
        %v845 = vpow.pop %v844
        %v846 = vmul.f32 %v843, 1.442695
        %v847 = vpow.pop %v846
        %v848 = vsel %vm732, %v845, 0.0
        %849 = vadd.xlane.f32.xlu0 %v848
        %v850 = vpop.xlane.xlu0 %849
        %v851 = vsel %vm736, %v847, 0.0
        %852 = vadd.xlane.f32.xlu0 %v851
        %v853 = vpop.xlane.xlu0 %852
        %v854 = vrcp.pop %v850
        %v855 = vrcp.pop %v853
        %v856 = vmul.f32 %v845, %v854
        %v857 = vmul.f32 %v847, %v855
        %858 = vrot.lane.b32.xlu0 %v685, 56
        %v859 = vpop.permute.xlu0 %858
        %860 = vrot.lane.b32.xlu0 %v688, 56
        %v861 = vpop.permute.xlu0 %860
        %v864 = vsel %vm732, %v856, 0
        %v867 = vsel %vm732, %v857, 0
        %v869 = vsel %vm767, %v861, 0
        %871 = vmatpush.msra.mxu0 0.0
        %872 = vmatpush.msra.mxu0 0.0
        %873 = vmatpush.msra.mxu0 0.0
        %874 = vmatpush.msra.mxu0 0.0
        %875 = vmatpush.msra.mxu0 0.0
        %876 = vmatpush.msra.mxu0 0.0
        %877 = vmatpush.msra.mxu0 0.0
        %878 = vmatpush.msra.mxu0 0.0
        %879 = vmatpush.msra.mxu0 0.0
        %880 = vmatpush.msra.mxu0 0.0
        %881 = vmatpush.msra.mxu0 0.0
        %882 = vmatpush.msra.mxu0 0.0
        %883 = vmatpush.msra.mxu0 0.0
        %884 = vmatpush.msra.mxu0 0.0
        %885 = vmatpush.msra.mxu0 %v869
        %886 = vmatpush.msra.mxu0 %v859
        %887 = vmatmul.f32.gmra.mxu0 %v864
        %v888 = vpop.f32.mrf.mxu0
        %v889 = vadd.f32 0.0, %v888
        %890 = vmatmul.f32.gmra.mxu0 %v867
        %v891 = vpop.f32.mrf.mxu0
        %v892 = vadd.f32 0.0, %v891
        %893 = vdwg.mxu0
        %v895 = vsel %vm696, %v889, 0
        %v898 = vsel %vm696, %v892, 0
        %900 = vmatpush.msra.mxu0 0.0
        %901 = vmatpush.msra.mxu0 0.0
        %902 = vmatpush.msra.mxu0 0.0
        %903 = vmatpush.msra.mxu0 0.0
        %904 = vmatpush.msra.mxu0 0.0
        %905 = vmatpush.msra.mxu0 0.0
        %906 = vmatpush.msra.mxu0 0.0
        %907 = vmatpush.msra.mxu0 0.0
        %908 = vmatpush.msra.mxu0 0.0
        %909 = vmatpush.msra.mxu0 0.0
        %910 = vmatpush.msra.mxu0 0.0
        %911 = vmatpush.msra.mxu0 0.0
        %912 = vmatpush.msra.mxu0 0.0
        %913 = vmatpush.msra.mxu0 0.0
        %914 = vmatpush.msra.mxu0 0.0
        %915 = vmatpush.msra.mxu0 %v635
        %916 = vmatmul.f32.gmra.mxu0 %v895
        %v917 = vpop.f32.mrf.mxu0
        %v918 = vadd.f32 0.0, %v917
        %919 = vmatmul.f32.gmra.mxu0 %v898
        %v920 = vpop.f32.mrf.mxu0
        %v921 = vadd.f32 0.0, %v920
        %922 = vdwg.mxu0
        %v924 = vsel %vm696, %v788, 0
        %v927 = vsel %vm696, %v791, 0
        %929 = vmatpush.msra.mxu0 0.0
        %930 = vmatpush.msra.mxu0 0.0
        %931 = vmatpush.msra.mxu0 0.0
        %932 = vmatpush.msra.mxu0 0.0
        %933 = vmatpush.msra.mxu0 0.0
        %934 = vmatpush.msra.mxu0 0.0
        %935 = vmatpush.msra.mxu0 0.0
        %936 = vmatpush.msra.mxu0 0.0
        %937 = vmatpush.msra.mxu0 0.0
        %938 = vmatpush.msra.mxu0 0.0
        %939 = vmatpush.msra.mxu0 0.0
        %940 = vmatpush.msra.mxu0 0.0
        %941 = vmatpush.msra.mxu0 0.0
        %942 = vmatpush.msra.mxu0 0.0
        %943 = vmatpush.msra.mxu0 0.0
        %944 = vmatpush.msra.mxu0 %v634
        %945 = vmatmul.f32.gmra.mxu0 %v924
        %v946 = vpop.f32.mrf.mxu0
        %v947 = vadd.f32 %v918, %v946
        %948 = vmatmul.f32.gmra.mxu0 %v927
        %v949 = vpop.f32.mrf.mxu0
        %v950 = vadd.f32 %v921, %v949
        %951 = vdwg.mxu0
        %952 = vrot.lane.b32.xlu0 %v685, 112
        %v953 = vpop.permute.xlu0 %952
        %954 = vrot.lane.b32.xlu0 %v688, 112
        %v955 = vpop.permute.xlu0 %954
        %956 = vrot.lane.b32.xlu0 %v685, 80
        %v957 = vpop.permute.xlu0 %956
        %958 = vrot.lane.b32.xlu0 %v688, 80
        %v959 = vpop.permute.xlu0 %958
        %v960 = vsel %vm696, %v953, 0
        %v962 = vsel %vm696, %v955, 0
        %v964 = vsel %vm696, %v957, 0
        %v966 = vsel %vm696, %v959, 0
        %968 = vmatpush.xpose.msra.mxu0 0.0
        %969 = vmatpush.xpose.msra.mxu0 0.0
        %970 = vmatpush.xpose.msra.mxu0 0.0
        %971 = vmatpush.xpose.msra.mxu0 0.0
        %972 = vmatpush.xpose.msra.mxu0 0.0
        %973 = vmatpush.xpose.msra.mxu0 0.0
        %974 = vmatpush.xpose.msra.mxu0 0.0
        %975 = vmatpush.xpose.msra.mxu0 0.0
        %976 = vmatpush.xpose.msra.mxu0 0.0
        %977 = vmatpush.xpose.msra.mxu0 0.0
        %978 = vmatpush.xpose.msra.mxu0 0.0
        %979 = vmatpush.xpose.msra.mxu0 0.0
        %980 = vmatpush.xpose.msra.mxu0 0.0
        %981 = vmatpush.xpose.msra.mxu0 0.0
        %982 = vmatpush.xpose.msra.mxu0 %v966
        %983 = vmatpush.xpose.msra.mxu0 %v964
        %984 = vmatmul.f32.gmra.mxu0 %v960
        %v985 = vpop.f32.mrf.mxu0
        %v986 = vadd.f32 0.0, %v985
        %987 = vmatmul.f32.gmra.mxu0 %v962
        %v988 = vpop.f32.mrf.mxu0
        %v989 = vadd.f32 0.0, %v988
        %990 = vdwg.mxu0
        %v991 = vmul.f32 %v986, 0.35355338
        %v992 = vmul.f32 %v989, 0.35355338
        %v993 = vadd.f32 %v991, %v628
        %v994 = vadd.f32 %v992, %v628
        %v995 = vsel %vm732, %v993, -inf
        %996 = vmax.xlane.f32.xlu0 %v995
        %v997 = vpop.xlane.xlu0 %996
        %v998 = vsel %vm736, %v994, -inf
        %999 = vmax.xlane.f32.xlu0 %v998
        %v1000 = vpop.xlane.xlu0 %999
        %v1001 = vsub.f32 %v993, %v997
        %v1002 = vsub.f32 %v994, %v1000
        %v1003 = vmul.f32 %v1001, 1.442695
        %v1004 = vpow.pop %v1003
        %v1005 = vmul.f32 %v1002, 1.442695
        %v1006 = vpow.pop %v1005
        %v1007 = vsel %vm732, %v1004, 0.0
        %1008 = vadd.xlane.f32.xlu0 %v1007
        %v1009 = vpop.xlane.xlu0 %1008
        %v1010 = vsel %vm736, %v1006, 0.0
        %1011 = vadd.xlane.f32.xlu0 %v1010
        %v1012 = vpop.xlane.xlu0 %1011
        %v1013 = vrcp.pop %v1009
        %v1014 = vrcp.pop %v1012
        %v1015 = vmul.f32 %v1004, %v1013
        %v1016 = vmul.f32 %v1006, %v1014
        %1017 = vrot.lane.b32.xlu0 %v685, 48
        %v1018 = vpop.permute.xlu0 %1017
        %1019 = vrot.lane.b32.xlu0 %v688, 48
        %v1020 = vpop.permute.xlu0 %1019
        %v1023 = vsel %vm732, %v1015, 0
        %v1026 = vsel %vm732, %v1016, 0
        %v1028 = vsel %vm767, %v1020, 0
        %1030 = vmatpush.msra.mxu0 0.0
        %1031 = vmatpush.msra.mxu0 0.0
        %1032 = vmatpush.msra.mxu0 0.0
        %1033 = vmatpush.msra.mxu0 0.0
        %1034 = vmatpush.msra.mxu0 0.0
        %1035 = vmatpush.msra.mxu0 0.0
        %1036 = vmatpush.msra.mxu0 0.0
        %1037 = vmatpush.msra.mxu0 0.0
        %1038 = vmatpush.msra.mxu0 0.0
        %1039 = vmatpush.msra.mxu0 0.0
        %1040 = vmatpush.msra.mxu0 0.0
        %1041 = vmatpush.msra.mxu0 0.0
        %1042 = vmatpush.msra.mxu0 0.0
        %1043 = vmatpush.msra.mxu0 0.0
        %1044 = vmatpush.msra.mxu0 %v1028
        %1045 = vmatpush.msra.mxu0 %v1018
        %1046 = vmatmul.f32.gmra.mxu0 %v1023
        %v1047 = vpop.f32.mrf.mxu0
        %v1048 = vadd.f32 0.0, %v1047
        %1049 = vmatmul.f32.gmra.mxu0 %v1026
        %v1050 = vpop.f32.mrf.mxu0
        %v1051 = vadd.f32 0.0, %v1050
        %1052 = vdwg.mxu0
        %v1054 = vsel %vm696, %v1048, 0
        %v1057 = vsel %vm696, %v1051, 0
        %1059 = vmatpush.msra.mxu0 0.0
        %1060 = vmatpush.msra.mxu0 0.0
        %1061 = vmatpush.msra.mxu0 0.0
        %1062 = vmatpush.msra.mxu0 0.0
        %1063 = vmatpush.msra.mxu0 0.0
        %1064 = vmatpush.msra.mxu0 0.0
        %1065 = vmatpush.msra.mxu0 0.0
        %1066 = vmatpush.msra.mxu0 0.0
        %1067 = vmatpush.msra.mxu0 0.0
        %1068 = vmatpush.msra.mxu0 0.0
        %1069 = vmatpush.msra.mxu0 0.0
        %1070 = vmatpush.msra.mxu0 0.0
        %1071 = vmatpush.msra.mxu0 0.0
        %1072 = vmatpush.msra.mxu0 0.0
        %1073 = vmatpush.msra.mxu0 0.0
        %1074 = vmatpush.msra.mxu0 %v636
        %1075 = vmatmul.f32.gmra.mxu0 %v1054
        %v1076 = vpop.f32.mrf.mxu0
        %v1077 = vadd.f32 0.0, %v1076
        %1078 = vmatmul.f32.gmra.mxu0 %v1057
        %v1079 = vpop.f32.mrf.mxu0
        %v1080 = vadd.f32 0.0, %v1079
        %1081 = vdwg.mxu0
        %v1082 = vadd.f32 %v947, %v1077
        %v1083 = vadd.f32 %v950, %v1080
        %1084 = vrot.lane.b32.xlu0 %v685, 104
        %v1085 = vpop.permute.xlu0 %1084
        %1086 = vrot.lane.b32.xlu0 %v688, 104
        %v1087 = vpop.permute.xlu0 %1086
        %1088 = vrot.lane.b32.xlu0 %v685, 72
        %v1089 = vpop.permute.xlu0 %1088
        %1090 = vrot.lane.b32.xlu0 %v688, 72
        %v1091 = vpop.permute.xlu0 %1090
        %v1092 = vsel %vm696, %v1085, 0
        %v1094 = vsel %vm696, %v1087, 0
        %v1096 = vsel %vm696, %v1089, 0
        %v1098 = vsel %vm696, %v1091, 0
        %1100 = vmatpush.xpose.msra.mxu0 0.0
        %1101 = vmatpush.xpose.msra.mxu0 0.0
        %1102 = vmatpush.xpose.msra.mxu0 0.0
        %1103 = vmatpush.xpose.msra.mxu0 0.0
        %1104 = vmatpush.xpose.msra.mxu0 0.0
        %1105 = vmatpush.xpose.msra.mxu0 0.0
        %1106 = vmatpush.xpose.msra.mxu0 0.0
        %1107 = vmatpush.xpose.msra.mxu0 0.0
        %1108 = vmatpush.xpose.msra.mxu0 0.0
        %1109 = vmatpush.xpose.msra.mxu0 0.0
        %1110 = vmatpush.xpose.msra.mxu0 0.0
        %1111 = vmatpush.xpose.msra.mxu0 0.0
        %1112 = vmatpush.xpose.msra.mxu0 0.0
        %1113 = vmatpush.xpose.msra.mxu0 0.0
        %1114 = vmatpush.xpose.msra.mxu0 %v1098
        %1115 = vmatpush.xpose.msra.mxu0 %v1096
        %1116 = vmatmul.f32.gmra.mxu0 %v1092
        %v1117 = vpop.f32.mrf.mxu0
        %v1118 = vadd.f32 0.0, %v1117
        %1119 = vmatmul.f32.gmra.mxu0 %v1094
        %v1120 = vpop.f32.mrf.mxu0
        %v1121 = vadd.f32 0.0, %v1120
        %1122 = vdwg.mxu0
        %v1123 = vmul.f32 %v1118, 0.35355338
        %v1124 = vmul.f32 %v1121, 0.35355338
        %v1125 = vadd.f32 %v1123, %v628
        %v1126 = vadd.f32 %v1124, %v628
        %v1127 = vsel %vm732, %v1125, -inf
        %1128 = vmax.xlane.f32.xlu0 %v1127
        %v1129 = vpop.xlane.xlu0 %1128
        %v1130 = vsel %vm736, %v1126, -inf
        %1131 = vmax.xlane.f32.xlu0 %v1130
        %v1132 = vpop.xlane.xlu0 %1131
        %v1133 = vsub.f32 %v1125, %v1129
        %v1134 = vsub.f32 %v1126, %v1132
        %v1135 = vmul.f32 %v1133, 1.442695
        %v1136 = vpow.pop %v1135
        %v1137 = vmul.f32 %v1134, 1.442695
        %v1138 = vpow.pop %v1137
        %v1139 = vsel %vm732, %v1136, 0.0
        %1140 = vadd.xlane.f32.xlu0 %v1139
        %v1141 = vpop.xlane.xlu0 %1140
        %v1142 = vsel %vm736, %v1138, 0.0
        %1143 = vadd.xlane.f32.xlu0 %v1142
        %v1144 = vpop.xlane.xlu0 %1143
        %v1145 = vrcp.pop %v1141
        %v1146 = vrcp.pop %v1144
        %v1147 = vmul.f32 %v1136, %v1145
        %v1148 = vmul.f32 %v1138, %v1146
        %1149 = vrot.lane.b32.xlu0 %v685, 40
        %v1150 = vpop.permute.xlu0 %1149
        %1151 = vrot.lane.b32.xlu0 %v688, 40
        %v1152 = vpop.permute.xlu0 %1151
        %v1155 = vsel %vm732, %v1147, 0
        %v1158 = vsel %vm732, %v1148, 0
        %v1160 = vsel %vm767, %v1152, 0
        %1162 = vmatpush.msra.mxu0 0.0
        %1163 = vmatpush.msra.mxu0 0.0
        %1164 = vmatpush.msra.mxu0 0.0
        %1165 = vmatpush.msra.mxu0 0.0
        %1166 = vmatpush.msra.mxu0 0.0
        %1167 = vmatpush.msra.mxu0 0.0
        %1168 = vmatpush.msra.mxu0 0.0
        %1169 = vmatpush.msra.mxu0 0.0
        %1170 = vmatpush.msra.mxu0 0.0
        %1171 = vmatpush.msra.mxu0 0.0
        %1172 = vmatpush.msra.mxu0 0.0
        %1173 = vmatpush.msra.mxu0 0.0
        %1174 = vmatpush.msra.mxu0 0.0
        %1175 = vmatpush.msra.mxu0 0.0
        %1176 = vmatpush.msra.mxu0 %v1160
        %1177 = vmatpush.msra.mxu0 %v1150
        %1178 = vmatmul.f32.gmra.mxu0 %v1155
        %v1179 = vpop.f32.mrf.mxu0
        %v1180 = vadd.f32 0.0, %v1179
        %1181 = vmatmul.f32.gmra.mxu0 %v1158
        %v1182 = vpop.f32.mrf.mxu0
        %v1183 = vadd.f32 0.0, %v1182
        %1184 = vdwg.mxu0
        %v1186 = vsel %vm696, %v1180, 0
        %v1189 = vsel %vm696, %v1183, 0
        %1191 = vmatpush.msra.mxu0 0.0
        %1192 = vmatpush.msra.mxu0 0.0
        %1193 = vmatpush.msra.mxu0 0.0
        %1194 = vmatpush.msra.mxu0 0.0
        %1195 = vmatpush.msra.mxu0 0.0
        %1196 = vmatpush.msra.mxu0 0.0
        %1197 = vmatpush.msra.mxu0 0.0
        %1198 = vmatpush.msra.mxu0 0.0
        %1199 = vmatpush.msra.mxu0 0.0
        %1200 = vmatpush.msra.mxu0 0.0
        %1201 = vmatpush.msra.mxu0 0.0
        %1202 = vmatpush.msra.mxu0 0.0
        %1203 = vmatpush.msra.mxu0 0.0
        %1204 = vmatpush.msra.mxu0 0.0
        %1205 = vmatpush.msra.mxu0 0.0
        %1206 = vmatpush.msra.mxu0 %v637
        %1207 = vmatmul.f32.gmra.mxu0 %v1186
        %v1208 = vpop.f32.mrf.mxu0
        %v1209 = vadd.f32 0.0, %v1208
        %1210 = vmatmul.f32.gmra.mxu0 %v1189
        %v1211 = vpop.f32.mrf.mxu0
        %v1212 = vadd.f32 0.0, %v1211
        %1213 = vdwg.mxu0
        %v1214 = vadd.f32 %v1082, %v1209
        %v1215 = vadd.f32 %v1083, %v1212
        %v1217 = vperm.slane %v638, 0
        %v1219 = vadd.f32 %v1214, %v1217
        %v1220 = vadd.f32 %v1215, %v1217
        %v1221 = vadd.f32 %v621, %v1219
        %v1222 = vadd.f32 %v622, %v1220
        %v1223 = vsel %vm660, %v1221, 0.0
        %1224 = vadd.xlane.f32.xlu0 %v1223
        %v1225 = vpop.xlane.xlu0 %1224
        %vm1226 = vcmask 253952
        %v1227 = vsel %vm1226, %v1222, 0.0
        %1228 = vadd.xlane.f32.xlu0 %v1227
        %v1229 = vpop.xlane.xlu0 %1228
        %v1230 = vrcp.pop 32.0
        %v1231 = vmul.f32 32.0, %v1230
        %v1232 = vsub.f32 1.0, %v1231
        %v1233 = vmul.f32 %v1230, %v1232
        %v1234 = vadd.f32 %v1230, %v1233
        %vm1235 = vweird.f32 %v1230
        %v1236 = vsel %vm1235, %v1230, %v1234
        %v1237 = vmul.f32 %v1225, %v1236
        %v1238 = vmul.f32 %v1229, %v1236
        %v1239 = vsub.f32 %v1221, %v1237
        %v1240 = vsub.f32 %v1222, %v1238
        %v1241 = vmul.f32 %v1239, %v1239
        %v1242 = vmul.f32 %v1240, %v1240
        %v1243 = vsel %vm660, %v1241, 0.0
        %1244 = vadd.xlane.f32.xlu0 %v1243
        %v1245 = vpop.xlane.xlu0 %1244
        %v1246 = vsel %vm1226, %v1242, 0.0
        %1247 = vadd.xlane.f32.xlu0 %v1246
        %v1248 = vpop.xlane.xlu0 %1247
        %v1249 = vmul.f32 %v1245, %v1236
        %v1250 = vmul.f32 %v1248, %v1236
        %v1251 = vadd.f32 %v1249, 1e-05
        %v1252 = vadd.f32 %v1250, 1e-05
        %v1253 = vrsqrt.pop %v1251
        %v1254 = vmul.f32 %v1253, %v1251
        %v1255 = vmul.f32 %v1254, %v1253
        %v1256 = vmul.f32 0.5, %v1255
        %v1257 = vsub.f32 1.5, %v1256
        %v1258 = vmul.f32 %v1253, %v1257
        %vm1259 = vweird.f32 %v1251
        %vm1260 = vweird.f32 %v1253
        %vm1261 = vmor %vm1259, %vm1260
        %v1262 = vsel %vm1261, %v1253, %v1258
        %v1263 = vrsqrt.pop %v1252
        %v1264 = vmul.f32 %v1263, %v1252
        %v1265 = vmul.f32 %v1264, %v1263
        %v1266 = vmul.f32 0.5, %v1265
        %v1267 = vsub.f32 1.5, %v1266
        %v1268 = vmul.f32 %v1263, %v1267
        %vm1269 = vweird.f32 %v1252
        %vm1270 = vweird.f32 %v1263
        %vm1271 = vmor %vm1269, %vm1270
        %v1272 = vsel %vm1271, %v1263, %v1268
        %v1273 = vmul.f32 %v1239, %v1262
        %v1274 = vmul.f32 %v1240, %v1272
        %v1276 = vperm.slane %v639, 0
        %v1278 = vmul.f32 %v1273, %v1276
        %v1279 = vmul.f32 %v1274, %v1276
        %v1281 = vperm.slane %v640, 0
        %v1283 = vadd.f32 %v1278, %v1281
        %v1284 = vadd.f32 %v1279, %v1281
        %v1286 = vperm.slane %v647, 0
        %v1289 = vsel %vm660, %v1283, 0
        %v1292 = vsel %vm660, %v1284, 0
        %1294 = vmatpush.msra.mxu0 0.0
        %1295 = vmatpush.msra.mxu0 0.0
        %1296 = vmatpush.msra.mxu0 0.0
        %1297 = vmatpush.msra.mxu0 0.0
        %1298 = vmatpush.msra.mxu0 0.0
        %1299 = vmatpush.msra.mxu0 0.0
        %1300 = vmatpush.msra.mxu0 0.0
        %1301 = vmatpush.msra.mxu0 0.0
        %1302 = vmatpush.msra.mxu0 0.0
        %1303 = vmatpush.msra.mxu0 0.0
        %1304 = vmatpush.msra.mxu0 0.0
        %1305 = vmatpush.msra.mxu0 0.0
        %1306 = vmatpush.msra.mxu0 %v646
        %1307 = vmatpush.msra.mxu0 %v645
        %1308 = vmatpush.msra.mxu0 %v644
        %1309 = vmatpush.msra.mxu0 %v643
        %1310 = vmatmul.f32.gmra.mxu0 %v1289
        %v1311 = vpop.f32.mrf.mxu0
        %v1312 = vadd.f32 %v1286, %v1311
        %1313 = vmatmul.f32.gmra.mxu0 %v1292
        %v1314 = vpop.f32.mrf.mxu0
        %v1315 = vadd.f32 %v1286, %v1314
        %1316 = vdwg.mxu0
        %v1317 = vmax.f32 %v1312, 0.0
        %v1318 = vmax.f32 %v1315, 0.0
        %v1320 = vperm.slane %v656, 0
        %vm1322 = vcmask 523264
        %v1324 = vsel %vm1322, %v1317, 0
        %v1327 = vsel %vm1322, %v1318, 0
        %1329 = vmatpush.msra.mxu0 0.0
        %1330 = vmatpush.msra.mxu0 0.0
        %1331 = vmatpush.msra.mxu0 0.0
        %1332 = vmatpush.msra.mxu0 0.0
        %1333 = vmatpush.msra.mxu0 0.0
        %1334 = vmatpush.msra.mxu0 0.0
        %1335 = vmatpush.msra.mxu0 0.0
        %1336 = vmatpush.msra.mxu0 0.0
        %1337 = vmatpush.msra.mxu0 %v655
        %1338 = vmatpush.msra.mxu0 %v654
        %1339 = vmatpush.msra.mxu0 %v653
        %1340 = vmatpush.msra.mxu0 %v652
        %1341 = vmatpush.msra.mxu0 %v651
        %1342 = vmatpush.msra.mxu0 %v650
        %1343 = vmatpush.msra.mxu0 %v649
        %1344 = vmatpush.msra.mxu0 %v648
        %1345 = vmatmul.f32.gmra.mxu0 %v1324
        %v1346 = vpop.f32.mrf.mxu0
        %v1347 = vadd.f32 %v1320, %v1346
        %1348 = vmatmul.f32.gmra.mxu0 %v1327
        %v1349 = vpop.f32.mrf.mxu0
        %v1350 = vadd.f32 %v1320, %v1349
        %1351 = vdwg.mxu0
        %v1352 = vadd.f32 %v1283, %v1347
        %v1353 = vadd.f32 %v1284, %v1350
        %v1354 = vsel %vm660, %v1352, 0.0
        %1355 = vadd.xlane.f32.xlu0 %v1354
        %v1356 = vpop.xlane.xlu0 %1355
        %v1357 = vsel %vm1226, %v1353, 0.0
        %1358 = vadd.xlane.f32.xlu0 %v1357
        %v1359 = vpop.xlane.xlu0 %1358
        %v1360 = vmul.f32 %v1356, %v1236
        %v1361 = vmul.f32 %v1359, %v1236
        %v1362 = vsub.f32 %v1352, %v1360
        %v1363 = vsub.f32 %v1353, %v1361
        %v1364 = vmul.f32 %v1362, %v1362
        %v1365 = vmul.f32 %v1363, %v1363
        %v1366 = vsel %vm660, %v1364, 0.0
        %1367 = vadd.xlane.f32.xlu0 %v1366
        %v1368 = vpop.xlane.xlu0 %1367
        %v1369 = vsel %vm1226, %v1365, 0.0
        %1370 = vadd.xlane.f32.xlu0 %v1369
        %v1371 = vpop.xlane.xlu0 %1370
        %v1372 = vmul.f32 %v1368, %v1236
        %v1373 = vmul.f32 %v1371, %v1236
        %v1374 = vadd.f32 %v1372, 1e-05
        %v1375 = vadd.f32 %v1373, 1e-05
        %v1376 = vrsqrt.pop %v1374
        %v1377 = vmul.f32 %v1376, %v1374
        %v1378 = vmul.f32 %v1377, %v1376
        %v1379 = vmul.f32 0.5, %v1378
        %v1380 = vsub.f32 1.5, %v1379
        %v1381 = vmul.f32 %v1376, %v1380
        %vm1382 = vweird.f32 %v1374
        %vm1383 = vweird.f32 %v1376
        %vm1384 = vmor %vm1382, %vm1383
        %v1385 = vsel %vm1384, %v1376, %v1381
        %v1386 = vrsqrt.pop %v1375
        %v1387 = vmul.f32 %v1386, %v1375
        %v1388 = vmul.f32 %v1387, %v1386
        %v1389 = vmul.f32 0.5, %v1388
        %v1390 = vsub.f32 1.5, %v1389
        %v1391 = vmul.f32 %v1386, %v1390
        %vm1392 = vweird.f32 %v1375
        %vm1393 = vweird.f32 %v1386
        %vm1394 = vmor %vm1392, %vm1393
        %v1395 = vsel %vm1394, %v1386, %v1391
        %v1396 = vmul.f32 %v1362, %v1385
        %v1397 = vmul.f32 %v1363, %v1395
        %v1399 = vperm.slane %v641, 0
        %v1401 = vmul.f32 %v1396, %v1399
        %v1402 = vmul.f32 %v1397, %v1399
        %v1404 = vperm.slane %v642, 0
        %v1406 = vadd.f32 %v1401, %v1404
        %v1407 = vadd.f32 %v1402, %v1404
        %s1408 = scalar_lea.vmem %s6, 32
        %v1409 = vld [vmem:[%s1408] sm:$0xff]
        %v1410 = vld [vmem:[%s1408 + $0x8] sm:$0xff]
        %v1411 = vld [vmem:[%s1408 + $0x10] sm:$0xff]
        %v1412 = vld [vmem:[%s1408 + $0x18] sm:$0xff]
        %s1413 = scalar_lea.vmem %s7, 1
        %v1414 = vld [vmem:[%s1413] sm:$0x1]
        %s1415 = scalar_lea.vmem %s8, 32
        %v1416 = vld [vmem:[%s1415] sm:$0xff]
        %v1417 = vld [vmem:[%s1415 + $0x8] sm:$0xff]
        %v1418 = vld [vmem:[%s1415 + $0x10] sm:$0xff]
        %v1419 = vld [vmem:[%s1415 + $0x18] sm:$0xff]
        %s1420 = scalar_lea.vmem %s9, 1
        %v1421 = vld [vmem:[%s1420] sm:$0x1]
        %s1422 = scalar_lea.vmem %s10, 1
        %v1423 = vld [vmem:[%s1422] sm:$0x1]
        %s1424 = scalar_lea.vmem %s11, 1
        %v1425 = vld [vmem:[%s1424] sm:$0x1]
        %s1426 = scalar_lea.vmem %s12, 1
        %v1427 = vld [vmem:[%s1426] sm:$0x1]
        %s1428 = scalar_lea.vmem %s13, 1
        %v1429 = vld [vmem:[%s1428] sm:$0x1]
        %s1430 = scalar_lea.vmem %s14, 32
        %v1431 = vld [vmem:[%s1430] sm:$0xff]
        %v1432 = vld [vmem:[%s1430 + $0x8] sm:$0xff]
        %v1433 = vld [vmem:[%s1430 + $0x10] sm:$0xff]
        %v1434 = vld [vmem:[%s1430 + $0x18] sm:$0xff]
        %s1435 = scalar_lea.vmem %s15, 1
        %v1436 = vld [vmem:[%s1435] sm:$0x1]
        %s1437 = scalar_lea.vmem %s16, 64
        %v1438 = vld [vmem:[%s1437] sm:$0xff]
        %v1439 = vld [vmem:[%s1437 + $0x8] sm:$0xff]
        %v1440 = vld [vmem:[%s1437 + $0x10] sm:$0xff]
        %v1441 = vld [vmem:[%s1437 + $0x18] sm:$0xff]
        %v1442 = vld [vmem:[%s1437 + $0x20] sm:$0xff]
        %v1443 = vld [vmem:[%s1437 + $0x28] sm:$0xff]
        %v1444 = vld [vmem:[%s1437 + $0x30] sm:$0xff]
        %v1445 = vld [vmem:[%s1437 + $0x38] sm:$0xff]
        %s1446 = scalar_lea.vmem %s17, 1
        %v1447 = vld [vmem:[%s1446] sm:$0x1]
        %v1449 = vperm.slane %v1414, 0
        %v1452 = vsel %vm660, %v1406, 0
        %v1455 = vsel %vm660, %v1407, 0
        %1457 = vmatpush.msra.mxu0 0.0
        %1458 = vmatpush.msra.mxu0 0.0
        %1459 = vmatpush.msra.mxu0 0.0
        %1460 = vmatpush.msra.mxu0 0.0
        %1461 = vmatpush.msra.mxu0 0.0
        %1462 = vmatpush.msra.mxu0 0.0
        %1463 = vmatpush.msra.mxu0 0.0
        %1464 = vmatpush.msra.mxu0 0.0
        %1465 = vmatpush.msra.mxu0 0.0
        %1466 = vmatpush.msra.mxu0 0.0
        %1467 = vmatpush.msra.mxu0 0.0
        %1468 = vmatpush.msra.mxu0 0.0
        %1469 = vmatpush.msra.mxu0 %v1412
        %1470 = vmatpush.msra.mxu0 %v1411
        %1471 = vmatpush.msra.mxu0 %v1410
        %1472 = vmatpush.msra.mxu0 %v1409
        %1473 = vmatmul.f32.gmra.mxu0 %v1452
        %v1474 = vpop.f32.mrf.mxu0
        %v1475 = vadd.f32 %v1449, %v1474
        %1476 = vmatmul.f32.gmra.mxu0 %v1455
        %v1477 = vpop.f32.mrf.mxu0
        %v1478 = vadd.f32 %v1449, %v1477
        %1479 = vdwg.mxu0
        %1482 = vrot.lane.b32.xlu0 %v1475, 96
        %v1483 = vpop.permute.xlu0 %1482
        %1484 = vrot.lane.b32.xlu0 %v1478, 96
        %v1485 = vpop.permute.xlu0 %1484
        %v1486 = vsel %vm696, %v1475, 0
        %v1488 = vsel %vm696, %v1478, 0
        %v1490 = vsel %vm696, %v1483, 0
        %v1492 = vsel %vm696, %v1485, 0
        %1494 = vmatpush.xpose.msra.mxu0 0.0
        %1495 = vmatpush.xpose.msra.mxu0 0.0
        %1496 = vmatpush.xpose.msra.mxu0 0.0
        %1497 = vmatpush.xpose.msra.mxu0 0.0
        %1498 = vmatpush.xpose.msra.mxu0 0.0
        %1499 = vmatpush.xpose.msra.mxu0 0.0
        %1500 = vmatpush.xpose.msra.mxu0 0.0
        %1501 = vmatpush.xpose.msra.mxu0 0.0
        %1502 = vmatpush.xpose.msra.mxu0 0.0
        %1503 = vmatpush.xpose.msra.mxu0 0.0
        %1504 = vmatpush.xpose.msra.mxu0 0.0
        %1505 = vmatpush.xpose.msra.mxu0 0.0
        %1506 = vmatpush.xpose.msra.mxu0 0.0
        %1507 = vmatpush.xpose.msra.mxu0 0.0
        %1508 = vmatpush.xpose.msra.mxu0 %v1492
        %1509 = vmatpush.xpose.msra.mxu0 %v1490
        %1510 = vmatmul.f32.gmra.mxu0 %v1486
        %v1511 = vpop.f32.mrf.mxu0
        %v1512 = vadd.f32 0.0, %v1511
        %1513 = vmatmul.f32.gmra.mxu0 %v1488
        %v1514 = vpop.f32.mrf.mxu0
        %v1515 = vadd.f32 0.0, %v1514
        %1516 = vdwg.mxu0
        %v1517 = vmul.f32 %v1512, 0.35355338
        %v1518 = vmul.f32 %v1515, 0.35355338
        %v1519 = vadd.f32 %v1517, %v628
        %v1520 = vadd.f32 %v1518, %v628
        %v1521 = vsel %vm732, %v1519, -inf
        %1522 = vmax.xlane.f32.xlu0 %v1521
        %v1523 = vpop.xlane.xlu0 %1522
        %v1524 = vsel %vm736, %v1520, -inf
        %1525 = vmax.xlane.f32.xlu0 %v1524
        %v1526 = vpop.xlane.xlu0 %1525
        %v1527 = vsub.f32 %v1519, %v1523
        %v1528 = vsub.f32 %v1520, %v1526
        %v1529 = vmul.f32 %v1527, 1.442695
        %v1530 = vpow.pop %v1529
        %v1531 = vmul.f32 %v1528, 1.442695
        %v1532 = vpow.pop %v1531
        %v1533 = vsel %vm732, %v1530, 0.0
        %1534 = vadd.xlane.f32.xlu0 %v1533
        %v1535 = vpop.xlane.xlu0 %1534
        %v1536 = vsel %vm736, %v1532, 0.0
        %1537 = vadd.xlane.f32.xlu0 %v1536
        %v1538 = vpop.xlane.xlu0 %1537
        %v1539 = vrcp.pop %v1535
        %v1540 = vrcp.pop %v1538
        %v1541 = vmul.f32 %v1530, %v1539
        %v1542 = vmul.f32 %v1532, %v1540
        %1543 = vrot.lane.b32.xlu0 %v1475, 64
        %v1544 = vpop.permute.xlu0 %1543
        %1545 = vrot.lane.b32.xlu0 %v1478, 64
        %v1546 = vpop.permute.xlu0 %1545
        %v1549 = vsel %vm732, %v1541, 0
        %v1552 = vsel %vm732, %v1542, 0
        %v1554 = vsel %vm767, %v1546, 0
        %1556 = vmatpush.msra.mxu0 0.0
        %1557 = vmatpush.msra.mxu0 0.0
        %1558 = vmatpush.msra.mxu0 0.0
        %1559 = vmatpush.msra.mxu0 0.0
        %1560 = vmatpush.msra.mxu0 0.0
        %1561 = vmatpush.msra.mxu0 0.0
        %1562 = vmatpush.msra.mxu0 0.0
        %1563 = vmatpush.msra.mxu0 0.0
        %1564 = vmatpush.msra.mxu0 0.0
        %1565 = vmatpush.msra.mxu0 0.0
        %1566 = vmatpush.msra.mxu0 0.0
        %1567 = vmatpush.msra.mxu0 0.0
        %1568 = vmatpush.msra.mxu0 0.0
        %1569 = vmatpush.msra.mxu0 0.0
        %1570 = vmatpush.msra.mxu0 %v1554
        %1571 = vmatpush.msra.mxu0 %v1544
        %1572 = vmatmul.f32.gmra.mxu0 %v1549
        %v1573 = vpop.f32.mrf.mxu0
        %v1574 = vadd.f32 0.0, %v1573
        %1575 = vmatmul.f32.gmra.mxu0 %v1552
        %v1576 = vpop.f32.mrf.mxu0
        %v1577 = vadd.f32 0.0, %v1576
        %1578 = vdwg.mxu0
        %1579 = vrot.lane.b32.xlu0 %v1475, 120
        %v1580 = vpop.permute.xlu0 %1579
        %1581 = vrot.lane.b32.xlu0 %v1478, 120
        %v1582 = vpop.permute.xlu0 %1581
        %1583 = vrot.lane.b32.xlu0 %v1475, 88
        %v1584 = vpop.permute.xlu0 %1583
        %1585 = vrot.lane.b32.xlu0 %v1478, 88
        %v1586 = vpop.permute.xlu0 %1585
        %v1587 = vsel %vm696, %v1580, 0
        %v1589 = vsel %vm696, %v1582, 0
        %v1591 = vsel %vm696, %v1584, 0
        %v1593 = vsel %vm696, %v1586, 0
        %1595 = vmatpush.xpose.msra.mxu0 0.0
        %1596 = vmatpush.xpose.msra.mxu0 0.0
        %1597 = vmatpush.xpose.msra.mxu0 0.0
        %1598 = vmatpush.xpose.msra.mxu0 0.0
        %1599 = vmatpush.xpose.msra.mxu0 0.0
        %1600 = vmatpush.xpose.msra.mxu0 0.0
        %1601 = vmatpush.xpose.msra.mxu0 0.0
        %1602 = vmatpush.xpose.msra.mxu0 0.0
        %1603 = vmatpush.xpose.msra.mxu0 0.0
        %1604 = vmatpush.xpose.msra.mxu0 0.0
        %1605 = vmatpush.xpose.msra.mxu0 0.0
        %1606 = vmatpush.xpose.msra.mxu0 0.0
        %1607 = vmatpush.xpose.msra.mxu0 0.0
        %1608 = vmatpush.xpose.msra.mxu0 0.0
        %1609 = vmatpush.xpose.msra.mxu0 %v1593
        %1610 = vmatpush.xpose.msra.mxu0 %v1591
        %1611 = vmatmul.f32.gmra.mxu0 %v1587
        %v1612 = vpop.f32.mrf.mxu0
        %v1613 = vadd.f32 0.0, %v1612
        %1614 = vmatmul.f32.gmra.mxu0 %v1589
        %v1615 = vpop.f32.mrf.mxu0
        %v1616 = vadd.f32 0.0, %v1615
        %1617 = vdwg.mxu0
        %v1618 = vmul.f32 %v1613, 0.35355338
        %v1619 = vmul.f32 %v1616, 0.35355338
        %v1620 = vadd.f32 %v1618, %v628
        %v1621 = vadd.f32 %v1619, %v628
        %v1622 = vsel %vm732, %v1620, -inf
        %1623 = vmax.xlane.f32.xlu0 %v1622
        %v1624 = vpop.xlane.xlu0 %1623
        %v1625 = vsel %vm736, %v1621, -inf
        %1626 = vmax.xlane.f32.xlu0 %v1625
        %v1627 = vpop.xlane.xlu0 %1626
        %v1628 = vsub.f32 %v1620, %v1624
        %v1629 = vsub.f32 %v1621, %v1627
        %v1630 = vmul.f32 %v1628, 1.442695
        %v1631 = vpow.pop %v1630
        %v1632 = vmul.f32 %v1629, 1.442695
        %v1633 = vpow.pop %v1632
        %v1634 = vsel %vm732, %v1631, 0.0
        %1635 = vadd.xlane.f32.xlu0 %v1634
        %v1636 = vpop.xlane.xlu0 %1635
        %v1637 = vsel %vm736, %v1633, 0.0
        %1638 = vadd.xlane.f32.xlu0 %v1637
        %v1639 = vpop.xlane.xlu0 %1638
        %v1640 = vrcp.pop %v1636
        %v1641 = vrcp.pop %v1639
        %v1642 = vmul.f32 %v1631, %v1640
        %v1643 = vmul.f32 %v1633, %v1641
        %1644 = vrot.lane.b32.xlu0 %v1475, 56
        %v1645 = vpop.permute.xlu0 %1644
        %1646 = vrot.lane.b32.xlu0 %v1478, 56
        %v1647 = vpop.permute.xlu0 %1646
        %v1650 = vsel %vm732, %v1642, 0
        %v1653 = vsel %vm732, %v1643, 0
        %v1655 = vsel %vm767, %v1647, 0
        %1657 = vmatpush.msra.mxu0 0.0
        %1658 = vmatpush.msra.mxu0 0.0
        %1659 = vmatpush.msra.mxu0 0.0
        %1660 = vmatpush.msra.mxu0 0.0
        %1661 = vmatpush.msra.mxu0 0.0
        %1662 = vmatpush.msra.mxu0 0.0
        %1663 = vmatpush.msra.mxu0 0.0
        %1664 = vmatpush.msra.mxu0 0.0
        %1665 = vmatpush.msra.mxu0 0.0
        %1666 = vmatpush.msra.mxu0 0.0
        %1667 = vmatpush.msra.mxu0 0.0
        %1668 = vmatpush.msra.mxu0 0.0
        %1669 = vmatpush.msra.mxu0 0.0
        %1670 = vmatpush.msra.mxu0 0.0
        %1671 = vmatpush.msra.mxu0 %v1655
        %1672 = vmatpush.msra.mxu0 %v1645
        %1673 = vmatmul.f32.gmra.mxu0 %v1650
        %v1674 = vpop.f32.mrf.mxu0
        %v1675 = vadd.f32 0.0, %v1674
        %1676 = vmatmul.f32.gmra.mxu0 %v1653
        %v1677 = vpop.f32.mrf.mxu0
        %v1678 = vadd.f32 0.0, %v1677
        %1679 = vdwg.mxu0
        %v1681 = vsel %vm696, %v1675, 0
        %v1684 = vsel %vm696, %v1678, 0
        %1686 = vmatpush.msra.mxu0 0.0
        %1687 = vmatpush.msra.mxu0 0.0
        %1688 = vmatpush.msra.mxu0 0.0
        %1689 = vmatpush.msra.mxu0 0.0
        %1690 = vmatpush.msra.mxu0 0.0
        %1691 = vmatpush.msra.mxu0 0.0
        %1692 = vmatpush.msra.mxu0 0.0
        %1693 = vmatpush.msra.mxu0 0.0
        %1694 = vmatpush.msra.mxu0 0.0
        %1695 = vmatpush.msra.mxu0 0.0
        %1696 = vmatpush.msra.mxu0 0.0
        %1697 = vmatpush.msra.mxu0 0.0
        %1698 = vmatpush.msra.mxu0 0.0
        %1699 = vmatpush.msra.mxu0 0.0
        %1700 = vmatpush.msra.mxu0 0.0
        %1701 = vmatpush.msra.mxu0 %v1417
        %1702 = vmatmul.f32.gmra.mxu0 %v1681
        %v1703 = vpop.f32.mrf.mxu0
        %v1704 = vadd.f32 0.0, %v1703
        %1705 = vmatmul.f32.gmra.mxu0 %v1684
        %v1706 = vpop.f32.mrf.mxu0
        %v1707 = vadd.f32 0.0, %v1706
        %1708 = vdwg.mxu0
        %v1710 = vsel %vm696, %v1574, 0
        %v1713 = vsel %vm696, %v1577, 0
        %1715 = vmatpush.msra.mxu0 0.0
        %1716 = vmatpush.msra.mxu0 0.0
        %1717 = vmatpush.msra.mxu0 0.0
        %1718 = vmatpush.msra.mxu0 0.0
        %1719 = vmatpush.msra.mxu0 0.0
        %1720 = vmatpush.msra.mxu0 0.0
        %1721 = vmatpush.msra.mxu0 0.0
        %1722 = vmatpush.msra.mxu0 0.0
        %1723 = vmatpush.msra.mxu0 0.0
        %1724 = vmatpush.msra.mxu0 0.0
        %1725 = vmatpush.msra.mxu0 0.0
        %1726 = vmatpush.msra.mxu0 0.0
        %1727 = vmatpush.msra.mxu0 0.0
        %1728 = vmatpush.msra.mxu0 0.0
        %1729 = vmatpush.msra.mxu0 0.0
        %1730 = vmatpush.msra.mxu0 %v1416
        %1731 = vmatmul.f32.gmra.mxu0 %v1710
        %v1732 = vpop.f32.mrf.mxu0
        %v1733 = vadd.f32 %v1704, %v1732
        %1734 = vmatmul.f32.gmra.mxu0 %v1713
        %v1735 = vpop.f32.mrf.mxu0
        %v1736 = vadd.f32 %v1707, %v1735
        %1737 = vdwg.mxu0
        %1738 = vrot.lane.b32.xlu0 %v1475, 112
        %v1739 = vpop.permute.xlu0 %1738
        %1740 = vrot.lane.b32.xlu0 %v1478, 112
        %v1741 = vpop.permute.xlu0 %1740
        %1742 = vrot.lane.b32.xlu0 %v1475, 80
        %v1743 = vpop.permute.xlu0 %1742
        %1744 = vrot.lane.b32.xlu0 %v1478, 80
        %v1745 = vpop.permute.xlu0 %1744
        %v1746 = vsel %vm696, %v1739, 0
        %v1748 = vsel %vm696, %v1741, 0
        %v1750 = vsel %vm696, %v1743, 0
        %v1752 = vsel %vm696, %v1745, 0
        %1754 = vmatpush.xpose.msra.mxu0 0.0
        %1755 = vmatpush.xpose.msra.mxu0 0.0
        %1756 = vmatpush.xpose.msra.mxu0 0.0
        %1757 = vmatpush.xpose.msra.mxu0 0.0
        %1758 = vmatpush.xpose.msra.mxu0 0.0
        %1759 = vmatpush.xpose.msra.mxu0 0.0
        %1760 = vmatpush.xpose.msra.mxu0 0.0
        %1761 = vmatpush.xpose.msra.mxu0 0.0
        %1762 = vmatpush.xpose.msra.mxu0 0.0
        %1763 = vmatpush.xpose.msra.mxu0 0.0
        %1764 = vmatpush.xpose.msra.mxu0 0.0
        %1765 = vmatpush.xpose.msra.mxu0 0.0
        %1766 = vmatpush.xpose.msra.mxu0 0.0
        %1767 = vmatpush.xpose.msra.mxu0 0.0
        %1768 = vmatpush.xpose.msra.mxu0 %v1752
        %1769 = vmatpush.xpose.msra.mxu0 %v1750
        %1770 = vmatmul.f32.gmra.mxu0 %v1746
        %v1771 = vpop.f32.mrf.mxu0
        %v1772 = vadd.f32 0.0, %v1771
        %1773 = vmatmul.f32.gmra.mxu0 %v1748
        %v1774 = vpop.f32.mrf.mxu0
        %v1775 = vadd.f32 0.0, %v1774
        %1776 = vdwg.mxu0
        %v1777 = vmul.f32 %v1772, 0.35355338
        %v1778 = vmul.f32 %v1775, 0.35355338
        %v1779 = vadd.f32 %v1777, %v628
        %v1780 = vadd.f32 %v1778, %v628
        %v1781 = vsel %vm732, %v1779, -inf
        %1782 = vmax.xlane.f32.xlu0 %v1781
        %v1783 = vpop.xlane.xlu0 %1782
        %v1784 = vsel %vm736, %v1780, -inf
        %1785 = vmax.xlane.f32.xlu0 %v1784
        %v1786 = vpop.xlane.xlu0 %1785
        %v1787 = vsub.f32 %v1779, %v1783
        %v1788 = vsub.f32 %v1780, %v1786
        %v1789 = vmul.f32 %v1787, 1.442695
        %v1790 = vpow.pop %v1789
        %v1791 = vmul.f32 %v1788, 1.442695
        %v1792 = vpow.pop %v1791
        %v1793 = vsel %vm732, %v1790, 0.0
        %1794 = vadd.xlane.f32.xlu0 %v1793
        %v1795 = vpop.xlane.xlu0 %1794
        %v1796 = vsel %vm736, %v1792, 0.0
        %1797 = vadd.xlane.f32.xlu0 %v1796
        %v1798 = vpop.xlane.xlu0 %1797
        %v1799 = vrcp.pop %v1795
        %v1800 = vrcp.pop %v1798
        %v1801 = vmul.f32 %v1790, %v1799
        %v1802 = vmul.f32 %v1792, %v1800
        %1803 = vrot.lane.b32.xlu0 %v1475, 48
        %v1804 = vpop.permute.xlu0 %1803
        %1805 = vrot.lane.b32.xlu0 %v1478, 48
        %v1806 = vpop.permute.xlu0 %1805
        %v1809 = vsel %vm732, %v1801, 0
        %v1812 = vsel %vm732, %v1802, 0
        %v1814 = vsel %vm767, %v1806, 0
        %1816 = vmatpush.msra.mxu0 0.0
        %1817 = vmatpush.msra.mxu0 0.0
        %1818 = vmatpush.msra.mxu0 0.0
        %1819 = vmatpush.msra.mxu0 0.0
        %1820 = vmatpush.msra.mxu0 0.0
        %1821 = vmatpush.msra.mxu0 0.0
        %1822 = vmatpush.msra.mxu0 0.0
        %1823 = vmatpush.msra.mxu0 0.0
        %1824 = vmatpush.msra.mxu0 0.0
        %1825 = vmatpush.msra.mxu0 0.0
        %1826 = vmatpush.msra.mxu0 0.0
        %1827 = vmatpush.msra.mxu0 0.0
        %1828 = vmatpush.msra.mxu0 0.0
        %1829 = vmatpush.msra.mxu0 0.0
        %1830 = vmatpush.msra.mxu0 %v1814
        %1831 = vmatpush.msra.mxu0 %v1804
        %1832 = vmatmul.f32.gmra.mxu0 %v1809
        %v1833 = vpop.f32.mrf.mxu0
        %v1834 = vadd.f32 0.0, %v1833
        %1835 = vmatmul.f32.gmra.mxu0 %v1812
        %v1836 = vpop.f32.mrf.mxu0
        %v1837 = vadd.f32 0.0, %v1836
        %1838 = vdwg.mxu0
        %v1840 = vsel %vm696, %v1834, 0
        %v1843 = vsel %vm696, %v1837, 0
        %1845 = vmatpush.msra.mxu0 0.0
        %1846 = vmatpush.msra.mxu0 0.0
        %1847 = vmatpush.msra.mxu0 0.0
        %1848 = vmatpush.msra.mxu0 0.0
        %1849 = vmatpush.msra.mxu0 0.0
        %1850 = vmatpush.msra.mxu0 0.0
        %1851 = vmatpush.msra.mxu0 0.0
        %1852 = vmatpush.msra.mxu0 0.0
        %1853 = vmatpush.msra.mxu0 0.0
        %1854 = vmatpush.msra.mxu0 0.0
        %1855 = vmatpush.msra.mxu0 0.0
        %1856 = vmatpush.msra.mxu0 0.0
        %1857 = vmatpush.msra.mxu0 0.0
        %1858 = vmatpush.msra.mxu0 0.0
        %1859 = vmatpush.msra.mxu0 0.0
        %1860 = vmatpush.msra.mxu0 %v1418
        %1861 = vmatmul.f32.gmra.mxu0 %v1840
        %v1862 = vpop.f32.mrf.mxu0
        %v1863 = vadd.f32 0.0, %v1862
        %1864 = vmatmul.f32.gmra.mxu0 %v1843
        %v1865 = vpop.f32.mrf.mxu0
        %v1866 = vadd.f32 0.0, %v1865
        %1867 = vdwg.mxu0
        %v1868 = vadd.f32 %v1733, %v1863
        %v1869 = vadd.f32 %v1736, %v1866
        %1870 = vrot.lane.b32.xlu0 %v1475, 104
        %v1871 = vpop.permute.xlu0 %1870
        %1872 = vrot.lane.b32.xlu0 %v1478, 104
        %v1873 = vpop.permute.xlu0 %1872
        %1874 = vrot.lane.b32.xlu0 %v1475, 72
        %v1875 = vpop.permute.xlu0 %1874
        %1876 = vrot.lane.b32.xlu0 %v1478, 72
        %v1877 = vpop.permute.xlu0 %1876
        %v1878 = vsel %vm696, %v1871, 0
        %v1880 = vsel %vm696, %v1873, 0
        %v1882 = vsel %vm696, %v1875, 0
        %v1884 = vsel %vm696, %v1877, 0
        %1886 = vmatpush.xpose.msra.mxu0 0.0
        %1887 = vmatpush.xpose.msra.mxu0 0.0
        %1888 = vmatpush.xpose.msra.mxu0 0.0
        %1889 = vmatpush.xpose.msra.mxu0 0.0
        %1890 = vmatpush.xpose.msra.mxu0 0.0
        %1891 = vmatpush.xpose.msra.mxu0 0.0
        %1892 = vmatpush.xpose.msra.mxu0 0.0
        %1893 = vmatpush.xpose.msra.mxu0 0.0
        %1894 = vmatpush.xpose.msra.mxu0 0.0
        %1895 = vmatpush.xpose.msra.mxu0 0.0
        %1896 = vmatpush.xpose.msra.mxu0 0.0
        %1897 = vmatpush.xpose.msra.mxu0 0.0
        %1898 = vmatpush.xpose.msra.mxu0 0.0
        %1899 = vmatpush.xpose.msra.mxu0 0.0
        %1900 = vmatpush.xpose.msra.mxu0 %v1884
        %1901 = vmatpush.xpose.msra.mxu0 %v1882
        %1902 = vmatmul.f32.gmra.mxu0 %v1878
        %v1903 = vpop.f32.mrf.mxu0
        %v1904 = vadd.f32 0.0, %v1903
        %1905 = vmatmul.f32.gmra.mxu0 %v1880
        %v1906 = vpop.f32.mrf.mxu0
        %v1907 = vadd.f32 0.0, %v1906
        %1908 = vdwg.mxu0
        %v1909 = vmul.f32 %v1904, 0.35355338
        %v1910 = vmul.f32 %v1907, 0.35355338
        %v1911 = vadd.f32 %v1909, %v628
        %v1912 = vadd.f32 %v1910, %v628
        %v1913 = vsel %vm732, %v1911, -inf
        %1914 = vmax.xlane.f32.xlu0 %v1913
        %v1915 = vpop.xlane.xlu0 %1914
        %v1916 = vsel %vm736, %v1912, -inf
        %1917 = vmax.xlane.f32.xlu0 %v1916
        %v1918 = vpop.xlane.xlu0 %1917
        %v1919 = vsub.f32 %v1911, %v1915
        %v1920 = vsub.f32 %v1912, %v1918
        %v1921 = vmul.f32 %v1919, 1.442695
        %v1922 = vpow.pop %v1921
        %v1923 = vmul.f32 %v1920, 1.442695
        %v1924 = vpow.pop %v1923
        %v1925 = vsel %vm732, %v1922, 0.0
        %1926 = vadd.xlane.f32.xlu0 %v1925
        %v1927 = vpop.xlane.xlu0 %1926
        %v1928 = vsel %vm736, %v1924, 0.0
        %1929 = vadd.xlane.f32.xlu0 %v1928
        %v1930 = vpop.xlane.xlu0 %1929
        %v1931 = vrcp.pop %v1927
        %v1932 = vrcp.pop %v1930
        %v1933 = vmul.f32 %v1922, %v1931
        %v1934 = vmul.f32 %v1924, %v1932
        %1935 = vrot.lane.b32.xlu0 %v1475, 40
        %v1936 = vpop.permute.xlu0 %1935
        %1937 = vrot.lane.b32.xlu0 %v1478, 40
        %v1938 = vpop.permute.xlu0 %1937
        %v1941 = vsel %vm732, %v1933, 0
        %v1944 = vsel %vm732, %v1934, 0
        %v1946 = vsel %vm767, %v1938, 0
        %1948 = vmatpush.msra.mxu0 0.0
        %1949 = vmatpush.msra.mxu0 0.0
        %1950 = vmatpush.msra.mxu0 0.0
        %1951 = vmatpush.msra.mxu0 0.0
        %1952 = vmatpush.msra.mxu0 0.0
        %1953 = vmatpush.msra.mxu0 0.0
        %1954 = vmatpush.msra.mxu0 0.0
        %1955 = vmatpush.msra.mxu0 0.0
        %1956 = vmatpush.msra.mxu0 0.0
        %1957 = vmatpush.msra.mxu0 0.0
        %1958 = vmatpush.msra.mxu0 0.0
        %1959 = vmatpush.msra.mxu0 0.0
        %1960 = vmatpush.msra.mxu0 0.0
        %1961 = vmatpush.msra.mxu0 0.0
        %1962 = vmatpush.msra.mxu0 %v1946
        %1963 = vmatpush.msra.mxu0 %v1936
        %1964 = vmatmul.f32.gmra.mxu0 %v1941
        %v1965 = vpop.f32.mrf.mxu0
        %v1966 = vadd.f32 0.0, %v1965
        %1967 = vmatmul.f32.gmra.mxu0 %v1944
        %v1968 = vpop.f32.mrf.mxu0
        %v1969 = vadd.f32 0.0, %v1968
        %1970 = vdwg.mxu0
        %v1972 = vsel %vm696, %v1966, 0
        %v1975 = vsel %vm696, %v1969, 0
        %1977 = vmatpush.msra.mxu0 0.0
        %1978 = vmatpush.msra.mxu0 0.0
        %1979 = vmatpush.msra.mxu0 0.0
        %1980 = vmatpush.msra.mxu0 0.0
        %1981 = vmatpush.msra.mxu0 0.0
        %1982 = vmatpush.msra.mxu0 0.0
        %1983 = vmatpush.msra.mxu0 0.0
        %1984 = vmatpush.msra.mxu0 0.0
        %1985 = vmatpush.msra.mxu0 0.0
        %1986 = vmatpush.msra.mxu0 0.0
        %1987 = vmatpush.msra.mxu0 0.0
        %1988 = vmatpush.msra.mxu0 0.0
        %1989 = vmatpush.msra.mxu0 0.0
        %1990 = vmatpush.msra.mxu0 0.0
        %1991 = vmatpush.msra.mxu0 0.0
        %1992 = vmatpush.msra.mxu0 %v1419
        %1993 = vmatmul.f32.gmra.mxu0 %v1972
        %v1994 = vpop.f32.mrf.mxu0
        %v1995 = vadd.f32 0.0, %v1994
        %1996 = vmatmul.f32.gmra.mxu0 %v1975
        %v1997 = vpop.f32.mrf.mxu0
        %v1998 = vadd.f32 0.0, %v1997
        %1999 = vdwg.mxu0
        %v2000 = vadd.f32 %v1868, %v1995
        %v2001 = vadd.f32 %v1869, %v1998
        %v2003 = vperm.slane %v1421, 0
        %v2005 = vadd.f32 %v2000, %v2003
        %v2006 = vadd.f32 %v2001, %v2003
        %v2007 = vadd.f32 %v1406, %v2005
        %v2008 = vadd.f32 %v1407, %v2006
        %v2009 = vsel %vm660, %v2007, 0.0
        %2010 = vadd.xlane.f32.xlu0 %v2009
        %v2011 = vpop.xlane.xlu0 %2010
        %v2012 = vsel %vm1226, %v2008, 0.0
        %2013 = vadd.xlane.f32.xlu0 %v2012
        %v2014 = vpop.xlane.xlu0 %2013
        %v2015 = vmul.f32 %v2011, %v1236
        %v2016 = vmul.f32 %v2014, %v1236
        %v2017 = vsub.f32 %v2007, %v2015
        %v2018 = vsub.f32 %v2008, %v2016
        %v2019 = vmul.f32 %v2017, %v2017
        %v2020 = vmul.f32 %v2018, %v2018
        %v2021 = vsel %vm660, %v2019, 0.0
        %2022 = vadd.xlane.f32.xlu0 %v2021
        %v2023 = vpop.xlane.xlu0 %2022
        %v2024 = vsel %vm1226, %v2020, 0.0
        %2025 = vadd.xlane.f32.xlu0 %v2024
        %v2026 = vpop.xlane.xlu0 %2025
        %v2027 = vmul.f32 %v2023, %v1236
        %v2028 = vmul.f32 %v2026, %v1236
        %v2029 = vadd.f32 %v2027, 1e-05
        %v2030 = vadd.f32 %v2028, 1e-05
        %v2031 = vrsqrt.pop %v2029
        %v2032 = vmul.f32 %v2031, %v2029
        %v2033 = vmul.f32 %v2032, %v2031
        %v2034 = vmul.f32 0.5, %v2033
        %v2035 = vsub.f32 1.5, %v2034
        %v2036 = vmul.f32 %v2031, %v2035
        %vm2037 = vweird.f32 %v2029
        %vm2038 = vweird.f32 %v2031
        %vm2039 = vmor %vm2037, %vm2038
        %v2040 = vsel %vm2039, %v2031, %v2036
        %v2041 = vrsqrt.pop %v2030
        %v2042 = vmul.f32 %v2041, %v2030
        %v2043 = vmul.f32 %v2042, %v2041
        %v2044 = vmul.f32 0.5, %v2043
        %v2045 = vsub.f32 1.5, %v2044
        %v2046 = vmul.f32 %v2041, %v2045
        %vm2047 = vweird.f32 %v2030
        %vm2048 = vweird.f32 %v2041
        %vm2049 = vmor %vm2047, %vm2048
        %v2050 = vsel %vm2049, %v2041, %v2046
        %v2051 = vmul.f32 %v2017, %v2040
        %v2052 = vmul.f32 %v2018, %v2050
        %v2054 = vperm.slane %v1423, 0
        %v2056 = vmul.f32 %v2051, %v2054
        %v2057 = vmul.f32 %v2052, %v2054
        %v2059 = vperm.slane %v1425, 0
        %v2061 = vadd.f32 %v2056, %v2059
        %v2062 = vadd.f32 %v2057, %v2059
        %v2064 = vperm.slane %v1436, 0
        %v2067 = vsel %vm660, %v2061, 0
        %v2070 = vsel %vm660, %v2062, 0
        %2072 = vmatpush.msra.mxu0 0.0
        %2073 = vmatpush.msra.mxu0 0.0
        %2074 = vmatpush.msra.mxu0 0.0
        %2075 = vmatpush.msra.mxu0 0.0
        %2076 = vmatpush.msra.mxu0 0.0
        %2077 = vmatpush.msra.mxu0 0.0
        %2078 = vmatpush.msra.mxu0 0.0
        %2079 = vmatpush.msra.mxu0 0.0
        %2080 = vmatpush.msra.mxu0 0.0
        %2081 = vmatpush.msra.mxu0 0.0
        %2082 = vmatpush.msra.mxu0 0.0
        %2083 = vmatpush.msra.mxu0 0.0
        %2084 = vmatpush.msra.mxu0 %v1434
        %2085 = vmatpush.msra.mxu0 %v1433
        %2086 = vmatpush.msra.mxu0 %v1432
        %2087 = vmatpush.msra.mxu0 %v1431
        %2088 = vmatmul.f32.gmra.mxu0 %v2067
        %v2089 = vpop.f32.mrf.mxu0
        %v2090 = vadd.f32 %v2064, %v2089
        %2091 = vmatmul.f32.gmra.mxu0 %v2070
        %v2092 = vpop.f32.mrf.mxu0
        %v2093 = vadd.f32 %v2064, %v2092
        %2094 = vdwg.mxu0
        %v2095 = vmax.f32 %v2090, 0.0
        %v2096 = vmax.f32 %v2093, 0.0
        %v2098 = vperm.slane %v1447, 0
        %v2101 = vsel %vm1322, %v2095, 0
        %v2104 = vsel %vm1322, %v2096, 0
        %2106 = vmatpush.msra.mxu0 0.0
        %2107 = vmatpush.msra.mxu0 0.0
        %2108 = vmatpush.msra.mxu0 0.0
        %2109 = vmatpush.msra.mxu0 0.0
        %2110 = vmatpush.msra.mxu0 0.0
        %2111 = vmatpush.msra.mxu0 0.0
        %2112 = vmatpush.msra.mxu0 0.0
        %2113 = vmatpush.msra.mxu0 0.0
        %2114 = vmatpush.msra.mxu0 %v1445
        %2115 = vmatpush.msra.mxu0 %v1444
        %2116 = vmatpush.msra.mxu0 %v1443
        %2117 = vmatpush.msra.mxu0 %v1442
        %2118 = vmatpush.msra.mxu0 %v1441
        %2119 = vmatpush.msra.mxu0 %v1440
        %2120 = vmatpush.msra.mxu0 %v1439
        %2121 = vmatpush.msra.mxu0 %v1438
        %2122 = vmatmul.f32.gmra.mxu0 %v2101
        %v2123 = vpop.f32.mrf.mxu0
        %v2124 = vadd.f32 %v2098, %v2123
        %2125 = vmatmul.f32.gmra.mxu0 %v2104
        %v2126 = vpop.f32.mrf.mxu0
        %2127 = vdwg.mxu0
        %v2128 = vadd.f32 %v2061, %v2124
        %v2129 = vsel %vm660, %v2128, 0.0
        %2130 = vadd.xlane.f32.xlu0 %v2129
        %v2131 = vpop.xlane.xlu0 %2130
        %v2132 = vmul.f32 %v2131, %v1236
        %v2133 = vsub.f32 %v2128, %v2132
        %v2134 = vmul.f32 %v2133, %v2133
        %v2135 = vsel %vm660, %v2134, 0.0
        %2136 = vadd.xlane.f32.xlu0 %v2135
        %v2137 = vpop.xlane.xlu0 %2136
        %v2138 = vmul.f32 %v2137, %v1236
        %v2139 = vadd.f32 %v2138, 1e-05
        %v2140 = vrsqrt.pop %v2139
        %v2141 = vmul.f32 %v2140, %v2139
        %v2142 = vmul.f32 %v2141, %v2140
        %v2143 = vmul.f32 0.5, %v2142
        %v2144 = vsub.f32 1.5, %v2143
        %v2145 = vmul.f32 %v2140, %v2144
        %vm2146 = vweird.f32 %v2139
        %vm2147 = vweird.f32 %v2140
        %vm2148 = vmor %vm2146, %vm2147
        %v2149 = vsel %vm2148, %v2140, %v2145
        %v2150 = vmul.f32 %v2133, %v2149
        %v2152 = vperm.slane %v1427, 0
        %v2154 = vmul.f32 %v2150, %v2152
        %v2156 = vperm.slane %v1429, 0
        %v2158 = vadd.f32 %v2154, %v2156
        %vm2159 = vcmask 257024
        %2160 = vst.msk [vmem:[%s570] sm:$0xf] %vm2159, %v2158
        %p2161 = scmp.lt.s32.totalorder %s38, 1
        %s2162 = scalar_select %p2161, %s38, 1
        %s2163 = smul.addr %s2162, 4
        %s2164 = scalar_lea.vmem %s18, %s2163
        // Predicated region
        $region93: #{kfuvae_forward.2} parent=87 // pred_check
          %p2165 = pneg %p418
        $region94: #{kfuvae_forward.2} parent=87 // pred_check_branch
          %2167 = sbr.rel (%p2165) target = $region96
        $region95: #{kfuvae_forward.2} parent=87 // pred_region
          _
        $region96: #{kfuvae_forward.2} parent=87 // pred_fallthru
          _
      $region88: #{kfuvae_forward.2} parent=5 // pred_fallthru
        _
      %p2168 = scmp.le.s32.totalorder 2, %s33
      // Predicated region
      $region97: #{kfuvae_forward.2} parent=5 // pred_check
        %p2169 = pneg %p2168
      $region98: #{kfuvae_forward.2} parent=5 // pred_check_branch
        %2171 = sbr.rel (%p2169) target = $region100
      $region99: #{kfuvae_forward.2} parent=5 // pred_region
        %s2172 = ssub.s32 %s33, 2
        // Predicated region
        $region101: #{kfuvae_forward.2} parent=99 // pred_check
          %p2173 = pneg %p424
        $region102: #{kfuvae_forward.2} parent=99 // pred_check_branch
          %2175 = sbr.rel (%p2173) target = $region104
        $region103: #{kfuvae_forward.2} parent=99 // pred_region
          %p2176 = scmp.lt.s32.totalorder %s39, 1
          %s2177 = scalar_select %p2176, %s39, 1
          %s2178 = smul.addr %s2177, 4
          %s2179 = scalar_lea.vmem %s18, %s2178
        $region104: #{kfuvae_forward.2} parent=99 // pred_fallthru
          _
      $region100: #{kfuvae_forward.2} parent=5 // pred_fallthru
        _
    $region6: #{kfuvae_forward.2} parent=1 // loop_footer
      %s37 = sadd.s32 1, %s33
    $region7: #{kfuvae_forward.2} parent=1 // loop_footer_branch
      %32 = sbr.rel target = $region3
    $region8: #{kfuvae_forward.2} parent=1 // loop_exit
      _
    %2180 = vsyncpa [#allocation5], 1
    %s2181 = scalar_lea.sflag [#allocation5], 1
    %2182 = vsyncpa %s2181, 1

// kernel: kfuvae_forward.3
$region0: #{kfuvae_forward.3}
  #allocation0 [shape = 'u32[]', space=smem, size = 0x4, offset = 0x4, fixed_abs, tag = 'smem constant byte address 0x4 - core index']
  #allocation1 [shape = 'u32[72,128]{1,0:T(1,128)}', space=vmem, size = 0x9000, scoped, tag = 'internal scratch']
  #allocation2 [shape = 's32[1]{0}', space=sflag, size = 0x4, scoped, tag = 'scoped memory for kfuvae_forward.3']
  #allocation3 [shape = 'u8[512]{0}', space=smem, size = 0x200, scoped, tag = 'prefetched SMEM operand 0']
  %s0 = inlined_call_operand.vmem [shape: s32[2], index: 0, kind: input, shape index: {}]
  %s1 = inlined_call_operand.vmem [shape: f32[2,2,32], index: 1, kind: input, shape index: {}]
  %s2 = inlined_call_operand.vmem [shape: f32[5,32], index: 2, kind: input, shape index: {}]
  %s3 = inlined_call_operand.vmem [shape: f32[2,32,96], index: 3, kind: input, shape index: {}]
  %s4 = inlined_call_operand.vmem [shape: f32[2,1,96], index: 4, kind: input, shape index: {}]
  %s5 = inlined_call_operand.vmem [shape: f32[2,32,32], index: 5, kind: input, shape index: {}]
  %s6 = inlined_call_operand.hbm [shape: f32[2,1,32], index: 6, kind: input, shape index: {}]
  %s7 = inlined_call_operand.vmem [shape: f32[2,32,32], index: 7, kind: input, shape index: {}]
  %s8 = inlined_call_operand.vmem [shape: f32[2,1,32], index: 8, kind: input, shape index: {}]
  %s9 = inlined_call_operand.vmem [shape: f32[2,32,64], index: 9, kind: input, shape index: {}]
  %s10 = inlined_call_operand.vmem [shape: f32[2,1,64], index: 10, kind: input, shape index: {}]
  %s11 = inlined_call_operand.hbm [shape: f32[2,32,32], index: 11, kind: input, shape index: {}]
  %s12 = inlined_call_operand.vmem [shape: f32[2,1,32], index: 12, kind: input, shape index: {}]
  %s13 = inlined_call_operand.hbm [shape: f32[2,1,32], index: 13, kind: input, shape index: {}]
  %s14 = inlined_call_operand.hbm [shape: f32[2,1,32], index: 14, kind: input, shape index: {}]
  %s15 = inlined_call_operand.hbm [shape: f32[2,1,32], index: 15, kind: input, shape index: {}]
  %s16 = inlined_call_operand.hbm [shape: f32[2,1,32], index: 16, kind: input, shape index: {}]
  %s17 = inlined_call_operand.hbm [shape: f32[2,1,32], index: 17, kind: input, shape index: {}]
  %s18 = inlined_call_operand.hbm [shape: f32[2,1,32], index: 18, kind: input, shape index: {}]
  %s19 = inlined_call_operand.hbm [shape: f32[2,32,64], index: 19, kind: input, shape index: {}]
  %s20 = inlined_call_operand.hbm [shape: f32[2,1,64], index: 20, kind: input, shape index: {}]
  %s21 = inlined_call_operand.vmem [shape: f32[2,64,32], index: 21, kind: input, shape index: {}]
  %s22 = inlined_call_operand.hbm [shape: f32[2,1,32], index: 22, kind: input, shape index: {}]
  %s23 = inlined_call_operand.vmem [shape: f32[32,16], index: 23, kind: input, shape index: {}]
  %s24 = inlined_call_operand.hbm [shape: f32[1,16], index: 24, kind: input, shape index: {}]
  %s25 = inlined_call_operand.vmem [shape: f32[2,5,16], index: 25, kind: output, shape index: {}]
  %s26 = sld [smem:[#allocation0]]
  $region177: #{kfuvae_forward.3} parent=0
    _
  %s28 = ssub.s32 1, %s26
  %s29 = scalar_select 0, %s28, %s26
  %s31 = sshll.u32 %s0, 4
  %s32 = int_to_ptr.vmem [resolvable:$true] %s31
  %34 = dma.vmem_to_smem %s32, 16, [#allocation3], [#allocation2]
  %36 = dma.done [#allocation2], 16
  %37 = sfence
  $region1: #{kfuvae_forward.3} parent=0
    #allocation4 [shape = 'u8[1024]{0}', space=vmem, size = 0x400, scoped, tag = 'input window, operand 6, single buffered']
    #allocation5 [shape = 's32[2]{0}', space=sflag, size = 0x8, scoped, tag = 'scoped memory for kfuvae_forward.3']
    #allocation6 [shape = 'u8[32768]{0}', space=vmem, size = 0x8000, scoped, tag = 'input window, operand 11, single buffered']
    #allocation7 [shape = 's32[1]{0}', space=sflag, size = 0x4, scoped, tag = 'scoped memory for kfuvae_forward.3']
    #allocation8 [shape = 'u8[1024]{0}', space=vmem, size = 0x400, scoped, tag = 'input window, operand 13, single buffered']
    #allocation9 [shape = 'u8[1024]{0}', space=vmem, size = 0x400, scoped, tag = 'input window, operand 14, single buffered']
    #allocation10 [shape = 's32[1]{0}', space=sflag, size = 0x4, scoped, tag = 'scoped memory for kfuvae_forward.3']
    #allocation11 [shape = 'u8[1024]{0}', space=vmem, size = 0x400, scoped, tag = 'input window, operand 15, single buffered']
    #allocation12 [shape = 'u8[1024]{0}', space=vmem, size = 0x400, scoped, tag = 'input window, operand 16, single buffered']
    #allocation13 [shape = 's32[1]{0}', space=sflag, size = 0x4, scoped, tag = 'scoped memory for kfuvae_forward.3']
    #allocation14 [shape = 'u8[1024]{0}', space=vmem, size = 0x400, scoped, tag = 'input window, operand 17, single buffered']
    #allocation15 [shape = 'u8[1024]{0}', space=vmem, size = 0x400, scoped, tag = 'input window, operand 18, single buffered']
    #allocation16 [shape = 's32[1]{0}', space=sflag, size = 0x4, scoped, tag = 'scoped memory for kfuvae_forward.3']
    #allocation17 [shape = 'u8[32768]{0}', space=vmem, size = 0x8000, scoped, tag = 'input window, operand 19, single buffered']
    #allocation18 [shape = 'u8[1024]{0}', space=vmem, size = 0x400, scoped, tag = 'input window, operand 20, single buffered']
    #allocation19 [shape = 's32[1]{0}', space=sflag, size = 0x4, scoped, tag = 'scoped memory for kfuvae_forward.3']
    #allocation20 [shape = 'u8[1024]{0}', space=vmem, size = 0x400, scoped, tag = 'input window, operand 22, single buffered']
    #allocation21 [shape = 'u8[512]{0}', space=vmem, size = 0x400, scoped, tag = 'input window, operand 24, single buffered']
    #allocation22 [shape = 's32[1]{0}', space=sflag, size = 0x4, scoped, tag = 'scoped memory for kfuvae_forward.3']
    %38 = vsyncpa [#allocation5], 0
    %39 = vsyncpa [#allocation7], 0
    %40 = vsyncpa [#allocation10], 0
    %41 = vsyncpa [#allocation13], 0
    %42 = vsyncpa [#allocation16], 0
    %43 = vsyncpa [#allocation19], 0
    %44 = vsyncpa [#allocation22], 0
    loop: start=0, step=1, limit=4
    $region2: #{kfuvae_forward.3} parent=1 // loop_pre_header
      _
    $region3: #{kfuvae_forward.3} parent=1 // loop_header
      %s46 = sphi 0, %s50
      %p47 = scmp.ge.s32.totalorder %s46, 4
      %s56 = sphi 0, %s58
      %s59 = sphi 0, %s56
      %s60 = sphi 0, %s59
      %s76 = sphi 0, %s60
      %s80 = sphi 0, %s80
      %s82 = sphi 0, %s80
      %s83 = sphi 0, %s82
      %s97 = sphi 0, %s83
      %s101 = sphi 0, %s101
      %s103 = sphi 0, %s101
      %s104 = sphi 0, %s103
      %s118 = sphi 0, %s104
      %s122 = sphi 0, %s122
      %s124 = sphi 0, %s122
      %s125 = sphi 0, %s124
      %s139 = sphi 0, %s125
      %s143 = sphi 0, %s143
      %s145 = sphi 0, %s143
      %s146 = sphi 0, %s145
      %s160 = sphi 0, %s146
      %s164 = sphi 0, %s164
      %s166 = sphi 0, %s164
      %s167 = sphi 0, %s166
      %s181 = sphi 0, %s167
      %s185 = sphi 0, %s185
      %s187 = sphi 0, %s185
      %s188 = sphi 0, %s187
      %s202 = sphi 0, %s188
      %s206 = sphi 0, %s206
      %s208 = sphi 0, %s206
      %s209 = sphi 0, %s208
      %s223 = sphi 0, %s209
      %s227 = sphi 0, %s227
      %s229 = sphi 0, %s227
      %s230 = sphi 0, %s229
      %s244 = sphi 0, %s230
      %s248 = sphi 0, %s248
      %s250 = sphi 0, %s248
      %s251 = sphi 0, %s250
      %s265 = sphi 0, %s251
      %s269 = sphi 0, %s269
      %s271 = sphi 0, %s269
      %s272 = sphi 0, %s271
      %s286 = sphi 0, %s272
      %s290 = sphi 0, %s290
      %s292 = sphi 0, %s290
      %s293 = sphi 0, %s292
      %s307 = sphi 0, %s293
      %s311 = sphi 0, %s311
      %s313 = sphi 0, %s311
      %s314 = sphi 0, %s313
      %s328 = sphi 0, %s314
      %s332 = sphi 0, %s332
      %s334 = sphi 0, %s332
      %s335 = sphi 0, %s334
      %s349 = sphi 0, %s335
      %s353 = sphi 0, %s353
      %s355 = sphi 0, %s353
      %s356 = sphi 0, %s355
      %s370 = sphi 0, %s356
      %s374 = sphi 0, %s374
      %s376 = sphi 0, %s374
      %s377 = sphi 0, %s376
      %s391 = sphi 0, %s377
      %s395 = sphi 0, %s395
      %s397 = sphi 0, %s395
      %s398 = sphi 0, %s397
      %s412 = sphi 0, %s398
      %s416 = sphi 0, %s416
      %s418 = sphi 0, %s416
      %s419 = sphi 0, %s418
      %s433 = sphi 0, %s419
      %s437 = sphi 0, %s437
      %s439 = sphi 0, %s437
      %s440 = sphi 0, %s439
      %s454 = sphi 0, %s440
      %s458 = sphi 0, %s458
      %s460 = sphi 0, %s458
      %s461 = sphi 0, %s460
      %s475 = sphi 0, %s461
      %s479 = sphi 0, %s479
      %s481 = sphi 0, %s479
      %s482 = sphi 0, %s481
      %s496 = sphi 0, %s482
      %s500 = sphi 0, %s500
      %s502 = sphi 0, %s500
      %s503 = sphi 0, %s502
      %s517 = sphi 0, %s503
      %s521 = sphi 0, %s521
      %s523 = sphi 0, %s521
      %s524 = sphi 0, %s523
      %s538 = sphi 0, %s524
      %s542 = sphi 0, %s542
      %s544 = sphi 0, %s542
      %s545 = sphi 0, %s544
      %s559 = sphi 0, %s545
      %s565 = sphi 0, %s567
      %s568 = sphi 0, %s565
      %s569 = sphi 0, %s568
      %s585 = sphi 0, %s569
    $region4: #{kfuvae_forward.3} parent=1 // loop_header_branch
      %49 = sbr.rel (%p47) target = $region8
    $region5: #{kfuvae_forward.3} parent=1 // loop_body
      %s51 = ssub.s32 %s46, 1
      %s52 = ssub.s32 %s46, 2
      %s53 = sadd.s32 %s46, 1
      %s54 = ssub.s32 %s46, %s53
      %p55 = scmp.eq.s32.totalorder %s54, 0
      %s57 = sadd.s32 %s56, 1
      %s58 = scalar_select %p55, %s56, %s57
      %p61 = pneg %p55
      %p62 = scmp.eq.s32.totalorder %s46, 1
      %p63 = por %p61, %p62
      %p64 = scmp.ne.s32.totalorder %s56, %s59
      %p65 = scmp.eq.s32.totalorder %s46, 0
      %p66 = por %p64, %p65
      %p67 = scmp.ne.s32.totalorder %s56, %s59
      %p68 = scmp.eq.s32.totalorder %s51, 1
      %p69 = por %p67, %p68
      %p70 = scmp.ne.s32.totalorder %s59, %s60
      %p71 = scmp.eq.s32.totalorder %s51, 0
      %p72 = por %p70, %p71
      %p73 = scmp.ne.s32.totalorder %s59, %s60
      %p74 = scmp.eq.s32.totalorder %s52, 1
      %p75 = por %p73, %p74
      %p77 = scmp.ne.s32.totalorder %s60, %s76
      %p78 = scmp.eq.s32.totalorder %s52, 0
      %p79 = por %p77, %p78
      %s81 = sadd.s32 %s80, 1
      %p84 = scmp.eq.s32.totalorder %s46, 1
      %p85 = scmp.ne.s32.totalorder %s80, %s82
      %p86 = scmp.eq.s32.totalorder %s46, 0
      %p87 = por %p85, %p86
      %p88 = scmp.ne.s32.totalorder %s80, %s82
      %p89 = scmp.eq.s32.totalorder %s51, 1
      %p90 = por %p88, %p89
      %p91 = scmp.ne.s32.totalorder %s82, %s83
      %p92 = scmp.eq.s32.totalorder %s51, 0
      %p93 = por %p91, %p92
      %p94 = scmp.ne.s32.totalorder %s82, %s83
      %p95 = scmp.eq.s32.totalorder %s52, 1
      %p96 = por %p94, %p95
      %p98 = scmp.ne.s32.totalorder %s83, %s97
      %p99 = scmp.eq.s32.totalorder %s52, 0
      %p100 = por %p98, %p99
      %s102 = sadd.s32 %s101, 1
      %p105 = scmp.eq.s32.totalorder %s46, 1
      %p106 = scmp.ne.s32.totalorder %s101, %s103
      %p107 = scmp.eq.s32.totalorder %s46, 0
      %p108 = por %p106, %p107
      %p109 = scmp.ne.s32.totalorder %s101, %s103
      %p110 = scmp.eq.s32.totalorder %s51, 1
      %p111 = por %p109, %p110
      %p112 = scmp.ne.s32.totalorder %s103, %s104
      %p113 = scmp.eq.s32.totalorder %s51, 0
      %p114 = por %p112, %p113
      %p115 = scmp.ne.s32.totalorder %s103, %s104
      %p116 = scmp.eq.s32.totalorder %s52, 1
      %p117 = por %p115, %p116
      %p119 = scmp.ne.s32.totalorder %s104, %s118
      %p120 = scmp.eq.s32.totalorder %s52, 0
      %p121 = por %p119, %p120
      %s123 = sadd.s32 %s122, 1
      %p126 = scmp.eq.s32.totalorder %s46, 1
      %p127 = scmp.ne.s32.totalorder %s122, %s124
      %p128 = scmp.eq.s32.totalorder %s46, 0
      %p129 = por %p127, %p128
      %p130 = scmp.ne.s32.totalorder %s122, %s124
      %p131 = scmp.eq.s32.totalorder %s51, 1
      %p132 = por %p130, %p131
      %p133 = scmp.ne.s32.totalorder %s124, %s125
      %p134 = scmp.eq.s32.totalorder %s51, 0
      %p135 = por %p133, %p134
      %p136 = scmp.ne.s32.totalorder %s124, %s125
      %p137 = scmp.eq.s32.totalorder %s52, 1
      %p138 = por %p136, %p137
      %p140 = scmp.ne.s32.totalorder %s125, %s139
      %p141 = scmp.eq.s32.totalorder %s52, 0
      %p142 = por %p140, %p141
      %s144 = sadd.s32 %s143, 1
      %p147 = scmp.eq.s32.totalorder %s46, 1
      %p148 = scmp.ne.s32.totalorder %s143, %s145
      %p149 = scmp.eq.s32.totalorder %s46, 0
      %p150 = por %p148, %p149
      %p151 = scmp.ne.s32.totalorder %s143, %s145
      %p152 = scmp.eq.s32.totalorder %s51, 1
      %p153 = por %p151, %p152
      %p154 = scmp.ne.s32.totalorder %s145, %s146
      %p155 = scmp.eq.s32.totalorder %s51, 0
      %p156 = por %p154, %p155
      %p157 = scmp.ne.s32.totalorder %s145, %s146
      %p158 = scmp.eq.s32.totalorder %s52, 1
      %p159 = por %p157, %p158
      %p161 = scmp.ne.s32.totalorder %s146, %s160
      %p162 = scmp.eq.s32.totalorder %s52, 0
      %p163 = por %p161, %p162
      %s165 = sadd.s32 %s164, 1
      %p168 = scmp.eq.s32.totalorder %s46, 1
      %p169 = scmp.ne.s32.totalorder %s164, %s166
      %p170 = scmp.eq.s32.totalorder %s46, 0
      %p171 = por %p169, %p170
      %p172 = scmp.ne.s32.totalorder %s164, %s166
      %p173 = scmp.eq.s32.totalorder %s51, 1
      %p174 = por %p172, %p173
      %p175 = scmp.ne.s32.totalorder %s166, %s167
      %p176 = scmp.eq.s32.totalorder %s51, 0
      %p177 = por %p175, %p176
      %p178 = scmp.ne.s32.totalorder %s166, %s167
      %p179 = scmp.eq.s32.totalorder %s52, 1
      %p180 = por %p178, %p179
      %p182 = scmp.ne.s32.totalorder %s167, %s181
      %p183 = scmp.eq.s32.totalorder %s52, 0
      %p184 = por %p182, %p183
      %s186 = sadd.s32 %s185, 1
      %p189 = scmp.eq.s32.totalorder %s46, 1
      %p190 = scmp.ne.s32.totalorder %s185, %s187
      %p191 = scmp.eq.s32.totalorder %s46, 0
      %p192 = por %p190, %p191
      %p193 = scmp.ne.s32.totalorder %s185, %s187
      %p194 = scmp.eq.s32.totalorder %s51, 1
      %p195 = por %p193, %p194
      %p196 = scmp.ne.s32.totalorder %s187, %s188
      %p197 = scmp.eq.s32.totalorder %s51, 0
      %p198 = por %p196, %p197
      %p199 = scmp.ne.s32.totalorder %s187, %s188
      %p200 = scmp.eq.s32.totalorder %s52, 1
      %p201 = por %p199, %p200
      %p203 = scmp.ne.s32.totalorder %s188, %s202
      %p204 = scmp.eq.s32.totalorder %s52, 0
      %p205 = por %p203, %p204
      %s207 = sadd.s32 %s206, 1
      %p210 = scmp.eq.s32.totalorder %s46, 1
      %p211 = scmp.ne.s32.totalorder %s206, %s208
      %p212 = scmp.eq.s32.totalorder %s46, 0
      %p213 = por %p211, %p212
      %p214 = scmp.ne.s32.totalorder %s206, %s208
      %p215 = scmp.eq.s32.totalorder %s51, 1
      %p216 = por %p214, %p215
      %p217 = scmp.ne.s32.totalorder %s208, %s209
      %p218 = scmp.eq.s32.totalorder %s51, 0
      %p219 = por %p217, %p218
      %p220 = scmp.ne.s32.totalorder %s208, %s209
      %p221 = scmp.eq.s32.totalorder %s52, 1
      %p222 = por %p220, %p221
      %p224 = scmp.ne.s32.totalorder %s209, %s223
      %p225 = scmp.eq.s32.totalorder %s52, 0
      %p226 = por %p224, %p225
      %s228 = sadd.s32 %s227, 1
      %p231 = scmp.eq.s32.totalorder %s46, 1
      %p232 = scmp.ne.s32.totalorder %s227, %s229
      %p233 = scmp.eq.s32.totalorder %s46, 0
      %p234 = por %p232, %p233
      %p235 = scmp.ne.s32.totalorder %s227, %s229
      %p236 = scmp.eq.s32.totalorder %s51, 1
      %p237 = por %p235, %p236
      %p238 = scmp.ne.s32.totalorder %s229, %s230
      %p239 = scmp.eq.s32.totalorder %s51, 0
      %p240 = por %p238, %p239
      %p241 = scmp.ne.s32.totalorder %s229, %s230
      %p242 = scmp.eq.s32.totalorder %s52, 1
      %p243 = por %p241, %p242
      %p245 = scmp.ne.s32.totalorder %s230, %s244
      %p246 = scmp.eq.s32.totalorder %s52, 0
      %p247 = por %p245, %p246
      %s249 = sadd.s32 %s248, 1
      %p252 = scmp.eq.s32.totalorder %s46, 1
      %p253 = scmp.ne.s32.totalorder %s248, %s250
      %p254 = scmp.eq.s32.totalorder %s46, 0
      %p255 = por %p253, %p254
      %p256 = scmp.ne.s32.totalorder %s248, %s250
      %p257 = scmp.eq.s32.totalorder %s51, 1
      %p258 = por %p256, %p257
      %p259 = scmp.ne.s32.totalorder %s250, %s251
      %p260 = scmp.eq.s32.totalorder %s51, 0
      %p261 = por %p259, %p260
      %p262 = scmp.ne.s32.totalorder %s250, %s251
      %p263 = scmp.eq.s32.totalorder %s52, 1
      %p264 = por %p262, %p263
      %p266 = scmp.ne.s32.totalorder %s251, %s265
      %p267 = scmp.eq.s32.totalorder %s52, 0
      %p268 = por %p266, %p267
      %s270 = sadd.s32 %s269, 1
      %p273 = scmp.eq.s32.totalorder %s46, 1
      %p274 = scmp.ne.s32.totalorder %s269, %s271
      %p275 = scmp.eq.s32.totalorder %s46, 0
      %p276 = por %p274, %p275
      %p277 = scmp.ne.s32.totalorder %s269, %s271
      %p278 = scmp.eq.s32.totalorder %s51, 1
      %p279 = por %p277, %p278
      %p280 = scmp.ne.s32.totalorder %s271, %s272
      %p281 = scmp.eq.s32.totalorder %s51, 0
      %p282 = por %p280, %p281
      %p283 = scmp.ne.s32.totalorder %s271, %s272
      %p284 = scmp.eq.s32.totalorder %s52, 1
      %p285 = por %p283, %p284
      %p287 = scmp.ne.s32.totalorder %s272, %s286
      %p288 = scmp.eq.s32.totalorder %s52, 0
      %p289 = por %p287, %p288
      %s291 = sadd.s32 %s290, 1
      %p294 = scmp.eq.s32.totalorder %s46, 1
      %p295 = scmp.ne.s32.totalorder %s290, %s292
      %p296 = scmp.eq.s32.totalorder %s46, 0
      %p297 = por %p295, %p296
      %p298 = scmp.ne.s32.totalorder %s290, %s292
      %p299 = scmp.eq.s32.totalorder %s51, 1
      %p300 = por %p298, %p299
      %p301 = scmp.ne.s32.totalorder %s292, %s293
      %p302 = scmp.eq.s32.totalorder %s51, 0
      %p303 = por %p301, %p302
      %p304 = scmp.ne.s32.totalorder %s292, %s293
      %p305 = scmp.eq.s32.totalorder %s52, 1
      %p306 = por %p304, %p305
      %p308 = scmp.ne.s32.totalorder %s293, %s307
      %p309 = scmp.eq.s32.totalorder %s52, 0
      %p310 = por %p308, %p309
      %s312 = sadd.s32 %s311, 1
      %p315 = scmp.eq.s32.totalorder %s46, 1
      %p316 = scmp.ne.s32.totalorder %s311, %s313
      %p317 = scmp.eq.s32.totalorder %s46, 0
      %p318 = por %p316, %p317
      %p319 = scmp.ne.s32.totalorder %s311, %s313
      %p320 = scmp.eq.s32.totalorder %s51, 1
      %p321 = por %p319, %p320
      %p322 = scmp.ne.s32.totalorder %s313, %s314
      %p323 = scmp.eq.s32.totalorder %s51, 0
      %p324 = por %p322, %p323
      %p325 = scmp.ne.s32.totalorder %s313, %s314
      %p326 = scmp.eq.s32.totalorder %s52, 1
      %p327 = por %p325, %p326
      %p329 = scmp.ne.s32.totalorder %s314, %s328
      %p330 = scmp.eq.s32.totalorder %s52, 0
      %p331 = por %p329, %p330
      %s333 = sadd.s32 %s332, 1
      %p336 = scmp.eq.s32.totalorder %s46, 1
      %p337 = scmp.ne.s32.totalorder %s332, %s334
      %p338 = scmp.eq.s32.totalorder %s46, 0
      %p339 = por %p337, %p338
      %p340 = scmp.ne.s32.totalorder %s332, %s334
      %p341 = scmp.eq.s32.totalorder %s51, 1
      %p342 = por %p340, %p341
      %p343 = scmp.ne.s32.totalorder %s334, %s335
      %p344 = scmp.eq.s32.totalorder %s51, 0
      %p345 = por %p343, %p344
      %p346 = scmp.ne.s32.totalorder %s334, %s335
      %p347 = scmp.eq.s32.totalorder %s52, 1
      %p348 = por %p346, %p347
      %p350 = scmp.ne.s32.totalorder %s335, %s349
      %p351 = scmp.eq.s32.totalorder %s52, 0
      %p352 = por %p350, %p351
      %s354 = sadd.s32 %s353, 1
      %p357 = scmp.eq.s32.totalorder %s46, 1
      %p358 = scmp.ne.s32.totalorder %s353, %s355
      %p359 = scmp.eq.s32.totalorder %s46, 0
      %p360 = por %p358, %p359
      %p361 = scmp.ne.s32.totalorder %s353, %s355
      %p362 = scmp.eq.s32.totalorder %s51, 1
      %p363 = por %p361, %p362
      %p364 = scmp.ne.s32.totalorder %s355, %s356
      %p365 = scmp.eq.s32.totalorder %s51, 0
      %p366 = por %p364, %p365
      %p367 = scmp.ne.s32.totalorder %s355, %s356
      %p368 = scmp.eq.s32.totalorder %s52, 1
      %p369 = por %p367, %p368
      %p371 = scmp.ne.s32.totalorder %s356, %s370
      %p372 = scmp.eq.s32.totalorder %s52, 0
      %p373 = por %p371, %p372
      %s375 = sadd.s32 %s374, 1
      %p378 = scmp.eq.s32.totalorder %s46, 1
      %p379 = scmp.ne.s32.totalorder %s374, %s376
      %p380 = scmp.eq.s32.totalorder %s46, 0
      %p381 = por %p379, %p380
      %p382 = scmp.ne.s32.totalorder %s374, %s376
      %p383 = scmp.eq.s32.totalorder %s51, 1
      %p384 = por %p382, %p383
      %p385 = scmp.ne.s32.totalorder %s376, %s377
      %p386 = scmp.eq.s32.totalorder %s51, 0
      %p387 = por %p385, %p386
      %p388 = scmp.ne.s32.totalorder %s376, %s377
      %p389 = scmp.eq.s32.totalorder %s52, 1
      %p390 = por %p388, %p389
      %p392 = scmp.ne.s32.totalorder %s377, %s391
      %p393 = scmp.eq.s32.totalorder %s52, 0
      %p394 = por %p392, %p393
      %s396 = sadd.s32 %s395, 1
      %p399 = scmp.eq.s32.totalorder %s46, 1
      %p400 = scmp.ne.s32.totalorder %s395, %s397
      %p401 = scmp.eq.s32.totalorder %s46, 0
      %p402 = por %p400, %p401
      %p403 = scmp.ne.s32.totalorder %s395, %s397
      %p404 = scmp.eq.s32.totalorder %s51, 1
      %p405 = por %p403, %p404
      %p406 = scmp.ne.s32.totalorder %s397, %s398
      %p407 = scmp.eq.s32.totalorder %s51, 0
      %p408 = por %p406, %p407
      %p409 = scmp.ne.s32.totalorder %s397, %s398
      %p410 = scmp.eq.s32.totalorder %s52, 1
      %p411 = por %p409, %p410
      %p413 = scmp.ne.s32.totalorder %s398, %s412
      %p414 = scmp.eq.s32.totalorder %s52, 0
      %p415 = por %p413, %p414
      %s417 = sadd.s32 %s416, 1
      %p420 = scmp.eq.s32.totalorder %s46, 1
      %p421 = scmp.ne.s32.totalorder %s416, %s418
      %p422 = scmp.eq.s32.totalorder %s46, 0
      %p423 = por %p421, %p422
      %p424 = scmp.ne.s32.totalorder %s416, %s418
      %p425 = scmp.eq.s32.totalorder %s51, 1
      %p426 = por %p424, %p425
      %p427 = scmp.ne.s32.totalorder %s418, %s419
      %p428 = scmp.eq.s32.totalorder %s51, 0
      %p429 = por %p427, %p428
      %p430 = scmp.ne.s32.totalorder %s418, %s419
      %p431 = scmp.eq.s32.totalorder %s52, 1
      %p432 = por %p430, %p431
      %p434 = scmp.ne.s32.totalorder %s419, %s433
      %p435 = scmp.eq.s32.totalorder %s52, 0
      %p436 = por %p434, %p435
      %s438 = sadd.s32 %s437, 1
      %p441 = scmp.eq.s32.totalorder %s46, 1
      %p442 = scmp.ne.s32.totalorder %s437, %s439
      %p443 = scmp.eq.s32.totalorder %s46, 0
      %p444 = por %p442, %p443
      %p445 = scmp.ne.s32.totalorder %s437, %s439
      %p446 = scmp.eq.s32.totalorder %s51, 1
      %p447 = por %p445, %p446
      %p448 = scmp.ne.s32.totalorder %s439, %s440
      %p449 = scmp.eq.s32.totalorder %s51, 0
      %p450 = por %p448, %p449
      %p451 = scmp.ne.s32.totalorder %s439, %s440
      %p452 = scmp.eq.s32.totalorder %s52, 1
      %p453 = por %p451, %p452
      %p455 = scmp.ne.s32.totalorder %s440, %s454
      %p456 = scmp.eq.s32.totalorder %s52, 0
      %p457 = por %p455, %p456
      %s459 = sadd.s32 %s458, 1
      %p462 = scmp.eq.s32.totalorder %s46, 1
      %p463 = scmp.ne.s32.totalorder %s458, %s460
      %p464 = scmp.eq.s32.totalorder %s46, 0
      %p465 = por %p463, %p464
      %p466 = scmp.ne.s32.totalorder %s458, %s460
      %p467 = scmp.eq.s32.totalorder %s51, 1
      %p468 = por %p466, %p467
      %p469 = scmp.ne.s32.totalorder %s460, %s461
      %p470 = scmp.eq.s32.totalorder %s51, 0
      %p471 = por %p469, %p470
      %p472 = scmp.ne.s32.totalorder %s460, %s461
      %p473 = scmp.eq.s32.totalorder %s52, 1
      %p474 = por %p472, %p473
      %p476 = scmp.ne.s32.totalorder %s461, %s475
      %p477 = scmp.eq.s32.totalorder %s52, 0
      %p478 = por %p476, %p477
      %s480 = sadd.s32 %s479, 1
      %p483 = scmp.eq.s32.totalorder %s46, 1
      %p484 = scmp.ne.s32.totalorder %s479, %s481
      %p485 = scmp.eq.s32.totalorder %s46, 0
      %p486 = por %p484, %p485
      %p487 = scmp.ne.s32.totalorder %s479, %s481
      %p488 = scmp.eq.s32.totalorder %s51, 1
      %p489 = por %p487, %p488
      %p490 = scmp.ne.s32.totalorder %s481, %s482
      %p491 = scmp.eq.s32.totalorder %s51, 0
      %p492 = por %p490, %p491
      %p493 = scmp.ne.s32.totalorder %s481, %s482
      %p494 = scmp.eq.s32.totalorder %s52, 1
      %p495 = por %p493, %p494
      %p497 = scmp.ne.s32.totalorder %s482, %s496
      %p498 = scmp.eq.s32.totalorder %s52, 0
      %p499 = por %p497, %p498
      %s501 = sadd.s32 %s500, 1
      %p504 = scmp.eq.s32.totalorder %s46, 1
      %p505 = scmp.ne.s32.totalorder %s500, %s502
      %p506 = scmp.eq.s32.totalorder %s46, 0
      %p507 = por %p505, %p506
      %p508 = scmp.ne.s32.totalorder %s500, %s502
      %p509 = scmp.eq.s32.totalorder %s51, 1
      %p510 = por %p508, %p509
      %p511 = scmp.ne.s32.totalorder %s502, %s503
      %p512 = scmp.eq.s32.totalorder %s51, 0
      %p513 = por %p511, %p512
      %p514 = scmp.ne.s32.totalorder %s502, %s503
      %p515 = scmp.eq.s32.totalorder %s52, 1
      %p516 = por %p514, %p515
      %p518 = scmp.ne.s32.totalorder %s503, %s517
      %p519 = scmp.eq.s32.totalorder %s52, 0
      %p520 = por %p518, %p519
      %s522 = sadd.s32 %s521, 1
      %p525 = scmp.eq.s32.totalorder %s46, 1
      %p526 = scmp.ne.s32.totalorder %s521, %s523
      %p527 = scmp.eq.s32.totalorder %s46, 0
      %p528 = por %p526, %p527
      %p529 = scmp.ne.s32.totalorder %s521, %s523
      %p530 = scmp.eq.s32.totalorder %s51, 1
      %p531 = por %p529, %p530
      %p532 = scmp.ne.s32.totalorder %s523, %s524
      %p533 = scmp.eq.s32.totalorder %s51, 0
      %p534 = por %p532, %p533
      %p535 = scmp.ne.s32.totalorder %s523, %s524
      %p536 = scmp.eq.s32.totalorder %s52, 1
      %p537 = por %p535, %p536
      %p539 = scmp.ne.s32.totalorder %s524, %s538
      %p540 = scmp.eq.s32.totalorder %s52, 0
      %p541 = por %p539, %p540
      %s543 = sadd.s32 %s542, 1
      %p546 = scmp.eq.s32.totalorder %s46, 1
      %p547 = scmp.ne.s32.totalorder %s542, %s544
      %p548 = scmp.eq.s32.totalorder %s46, 0
      %p549 = por %p547, %p548
      %p550 = scmp.ne.s32.totalorder %s542, %s544
      %p551 = scmp.eq.s32.totalorder %s51, 1
      %p552 = por %p550, %p551
      %p553 = scmp.ne.s32.totalorder %s544, %s545
      %p554 = scmp.eq.s32.totalorder %s51, 0
      %p555 = por %p553, %p554
      %p556 = scmp.ne.s32.totalorder %s544, %s545
      %p557 = scmp.eq.s32.totalorder %s52, 1
      %p558 = por %p556, %p557
      %p560 = scmp.ne.s32.totalorder %s545, %s559
      %p561 = scmp.eq.s32.totalorder %s52, 0
      %p562 = por %p560, %p561
      %s563 = ssub.s32 %s46, %s53
      %p564 = scmp.eq.s32.totalorder %s563, 0
      %s566 = sadd.s32 %s565, 1
      %s567 = scalar_select %p564, %s565, %s566
      %p570 = pneg %p564
      %p571 = scmp.eq.s32.totalorder %s46, 1
      %p572 = por %p570, %p571
      %p573 = scmp.ne.s32.totalorder %s565, %s568
      %p574 = scmp.eq.s32.totalorder %s46, 0
      %p575 = por %p573, %p574
      %p576 = scmp.ne.s32.totalorder %s565, %s568
      %p577 = scmp.eq.s32.totalorder %s51, 1
      %p578 = por %p576, %p577
      %p579 = scmp.ne.s32.totalorder %s568, %s569
      %p580 = scmp.eq.s32.totalorder %s51, 0
      %p581 = por %p579, %p580
      %p582 = scmp.ne.s32.totalorder %s568, %s569
      %p583 = scmp.eq.s32.totalorder %s52, 1
      %p584 = por %p582, %p583
      %p586 = scmp.ne.s32.totalorder %s569, %s585
      %p587 = scmp.eq.s32.totalorder %s52, 0
      %p588 = por %p586, %p587
      %p589 = scmp.le.s32.totalorder 1, %s46
      %p590 = scmp.lt.s32.totalorder %s46, 3
      %p591 = pnand %p589, %p590
      %p592 = pneg %p591
      // Predicated region
      $region9: #{kfuvae_forward.3} parent=5 // pred_check
        _
      $region10: #{kfuvae_forward.3} parent=5 // pred_check_branch
        %594 = sbr.rel (%p591) target = $region12
      $region11: #{kfuvae_forward.3} parent=5 // pred_region
        %s595 = ssub.s32 %s46, 1
        // Predicated region
        $region13: #{kfuvae_forward.3} parent=11 // pred_check
          %p596 = pneg %p93
        $region14: #{kfuvae_forward.3} parent=11 // pred_check_branch
          %598 = sbr.rel (%p596) target = $region16
        $region15: #{kfuvae_forward.3} parent=11 // pred_region
          _
        $region16: #{kfuvae_forward.3} parent=11 // pred_fallthru
          _
        // Predicated region
        $region17: #{kfuvae_forward.3} parent=11 // pred_check
          %p599 = pneg %p114
        $region18: #{kfuvae_forward.3} parent=11 // pred_check_branch
          %601 = sbr.rel (%p599) target = $region20
        $region19: #{kfuvae_forward.3} parent=11 // pred_region
          _
        $region20: #{kfuvae_forward.3} parent=11 // pred_fallthru
          _
        // Predicated region
        $region21: #{kfuvae_forward.3} parent=11 // pred_check
          %p602 = pneg %p135
        $region22: #{kfuvae_forward.3} parent=11 // pred_check_branch
          %604 = sbr.rel (%p602) target = $region24
        $region23: #{kfuvae_forward.3} parent=11 // pred_region
          _
        $region24: #{kfuvae_forward.3} parent=11 // pred_fallthru
          _
        // Predicated region
        $region25: #{kfuvae_forward.3} parent=11 // pred_check
          %p605 = pneg %p156
        $region26: #{kfuvae_forward.3} parent=11 // pred_check_branch
          %607 = sbr.rel (%p605) target = $region28
        $region27: #{kfuvae_forward.3} parent=11 // pred_region
          _
        $region28: #{kfuvae_forward.3} parent=11 // pred_fallthru
          _
        // Predicated region
        $region29: #{kfuvae_forward.3} parent=11 // pred_check
          %p608 = pneg %p177
        $region30: #{kfuvae_forward.3} parent=11 // pred_check_branch
          %610 = sbr.rel (%p608) target = $region32
        $region31: #{kfuvae_forward.3} parent=11 // pred_region
          %612 = vsyncadd [#allocation5], 0
          %s613 = sshll.u32 %s6, 4
          %s614 = int_to_ptr.hbm [resolvable:$true] %s613
          %s615 = sshll.u32 [#allocation4], 4
          %s616 = int_to_ptr.vmem [resolvable:$true] %s615
          %621 = dma.hbm_to_vmem [thread:$0]  %s614, 32, %s616, [#allocation5], 16, 16, 1
        $region32: #{kfuvae_forward.3} parent=11 // pred_fallthru
          _
        // Predicated region
        $region33: #{kfuvae_forward.3} parent=11 // pred_check
          %p622 = pneg %p198
        $region34: #{kfuvae_forward.3} parent=11 // pred_check_branch
          %624 = sbr.rel (%p622) target = $region36
        $region35: #{kfuvae_forward.3} parent=11 // pred_region
          _
        $region36: #{kfuvae_forward.3} parent=11 // pred_fallthru
          _
        // Predicated region
        $region37: #{kfuvae_forward.3} parent=11 // pred_check
          %p625 = pneg %p219
        $region38: #{kfuvae_forward.3} parent=11 // pred_check_branch
          %627 = sbr.rel (%p625) target = $region40
        $region39: #{kfuvae_forward.3} parent=11 // pred_region
          _
        $region40: #{kfuvae_forward.3} parent=11 // pred_fallthru
          _
        // Predicated region
        $region41: #{kfuvae_forward.3} parent=11 // pred_check
          %p628 = pneg %p240
        $region42: #{kfuvae_forward.3} parent=11 // pred_check_branch
          %630 = sbr.rel (%p628) target = $region44
        $region43: #{kfuvae_forward.3} parent=11 // pred_region
          _
        $region44: #{kfuvae_forward.3} parent=11 // pred_fallthru
          _
        // Predicated region
        $region45: #{kfuvae_forward.3} parent=11 // pred_check
          %p631 = pneg %p261
        $region46: #{kfuvae_forward.3} parent=11 // pred_check_branch
          %633 = sbr.rel (%p631) target = $region48
        $region47: #{kfuvae_forward.3} parent=11 // pred_region
          _
        $region48: #{kfuvae_forward.3} parent=11 // pred_fallthru
          _
        // Predicated region
        $region49: #{kfuvae_forward.3} parent=11 // pred_check
          %p634 = pneg %p282
        $region50: #{kfuvae_forward.3} parent=11 // pred_check_branch
          %636 = sbr.rel (%p634) target = $region52
        $region51: #{kfuvae_forward.3} parent=11 // pred_region
          %638 = vsyncadd [#allocation7], 0
          %s639 = sshll.u32 %s11, 4
          %s640 = int_to_ptr.hbm [resolvable:$true] %s639
          %s641 = sshll.u32 [#allocation6], 4
          %s642 = int_to_ptr.vmem [resolvable:$true] %s641
          %647 = dma.hbm_to_vmem [thread:$0]  %s640, 1024, %s642, [#allocation7], 128, 128, 8
        $region52: #{kfuvae_forward.3} parent=11 // pred_fallthru
          _
        // Predicated region
        $region53: #{kfuvae_forward.3} parent=11 // pred_check
          %p648 = pneg %p303
        $region54: #{kfuvae_forward.3} parent=11 // pred_check_branch
          %650 = sbr.rel (%p648) target = $region56
        $region55: #{kfuvae_forward.3} parent=11 // pred_region
          _
        $region56: #{kfuvae_forward.3} parent=11 // pred_fallthru
          _
        // Predicated region
        $region57: #{kfuvae_forward.3} parent=11 // pred_check
          %p651 = pneg %p324
        $region58: #{kfuvae_forward.3} parent=11 // pred_check_branch
          %653 = sbr.rel (%p651) target = $region60
        $region59: #{kfuvae_forward.3} parent=11 // pred_region
          %655 = vsyncadd [#allocation7], 0
          %s656 = sshll.u32 %s13, 4
          %s657 = int_to_ptr.hbm [resolvable:$true] %s656
          %s658 = sshll.u32 [#allocation8], 4
          %s659 = int_to_ptr.vmem [resolvable:$true] %s658
          %664 = dma.hbm_to_vmem [thread:$0]  %s657, 32, %s659, [#allocation7], 16, 16, 1
        $region60: #{kfuvae_forward.3} parent=11 // pred_fallthru
          _
        // Predicated region
        $region61: #{kfuvae_forward.3} parent=11 // pred_check
          %p665 = pneg %p345
        $region62: #{kfuvae_forward.3} parent=11 // pred_check_branch
          %667 = sbr.rel (%p665) target = $region64
        $region63: #{kfuvae_forward.3} parent=11 // pred_region
          %669 = vsyncadd [#allocation10], 0
          %s670 = sshll.u32 %s14, 4
          %s671 = int_to_ptr.hbm [resolvable:$true] %s670
          %s672 = sshll.u32 [#allocation9], 4
          %s673 = int_to_ptr.vmem [resolvable:$true] %s672
          %678 = dma.hbm_to_vmem [thread:$0]  %s671, 32, %s673, [#allocation10], 16, 16, 1
        $region64: #{kfuvae_forward.3} parent=11 // pred_fallthru
          _
        // Predicated region
        $region65: #{kfuvae_forward.3} parent=11 // pred_check
          %p679 = pneg %p366
        $region66: #{kfuvae_forward.3} parent=11 // pred_check_branch
          %681 = sbr.rel (%p679) target = $region68
        $region67: #{kfuvae_forward.3} parent=11 // pred_region
          %683 = vsyncadd [#allocation10], 0
          %s684 = sshll.u32 %s15, 4
          %s685 = int_to_ptr.hbm [resolvable:$true] %s684
          %s686 = sshll.u32 [#allocation11], 4
          %s687 = int_to_ptr.vmem [resolvable:$true] %s686
          %692 = dma.hbm_to_vmem [thread:$0]  %s685, 32, %s687, [#allocation10], 16, 16, 1
        $region68: #{kfuvae_forward.3} parent=11 // pred_fallthru
          _
        // Predicated region
        $region69: #{kfuvae_forward.3} parent=11 // pred_check
          %p693 = pneg %p387
        $region70: #{kfuvae_forward.3} parent=11 // pred_check_branch
          %695 = sbr.rel (%p693) target = $region72
        $region71: #{kfuvae_forward.3} parent=11 // pred_region
          %697 = vsyncadd [#allocation13], 0
          %s698 = sshll.u32 %s16, 4
          %s699 = int_to_ptr.hbm [resolvable:$true] %s698
          %s700 = sshll.u32 [#allocation12], 4
          %s701 = int_to_ptr.vmem [resolvable:$true] %s700
          %706 = dma.hbm_to_vmem [thread:$0]  %s699, 32, %s701, [#allocation13], 16, 16, 1
        $region72: #{kfuvae_forward.3} parent=11 // pred_fallthru
          _
        // Predicated region
        $region73: #{kfuvae_forward.3} parent=11 // pred_check
          %p707 = pneg %p408
        $region74: #{kfuvae_forward.3} parent=11 // pred_check_branch
          %709 = sbr.rel (%p707) target = $region76
        $region75: #{kfuvae_forward.3} parent=11 // pred_region
          %711 = vsyncadd [#allocation13], 0
          %s712 = sshll.u32 %s17, 4
          %s713 = int_to_ptr.hbm [resolvable:$true] %s712
          %s714 = sshll.u32 [#allocation14], 4
          %s715 = int_to_ptr.vmem [resolvable:$true] %s714
          %720 = dma.hbm_to_vmem [thread:$0]  %s713, 32, %s715, [#allocation13], 16, 16, 1
        $region76: #{kfuvae_forward.3} parent=11 // pred_fallthru
          _
        // Predicated region
        $region77: #{kfuvae_forward.3} parent=11 // pred_check
          %p721 = pneg %p429
        $region78: #{kfuvae_forward.3} parent=11 // pred_check_branch
          %723 = sbr.rel (%p721) target = $region80
        $region79: #{kfuvae_forward.3} parent=11 // pred_region
          %725 = vsyncadd [#allocation16], 0
          %s726 = sshll.u32 %s18, 4
          %s727 = int_to_ptr.hbm [resolvable:$true] %s726
          %s728 = sshll.u32 [#allocation15], 4
          %s729 = int_to_ptr.vmem [resolvable:$true] %s728
          %734 = dma.hbm_to_vmem [thread:$0]  %s727, 32, %s729, [#allocation16], 16, 16, 1
        $region80: #{kfuvae_forward.3} parent=11 // pred_fallthru
          _
        // Predicated region
        $region81: #{kfuvae_forward.3} parent=11 // pred_check
          %p735 = pneg %p450
        $region82: #{kfuvae_forward.3} parent=11 // pred_check_branch
          %737 = sbr.rel (%p735) target = $region84
        $region83: #{kfuvae_forward.3} parent=11 // pred_region
          %739 = vsyncadd [#allocation16], 0
          %s740 = sshll.u32 %s19, 4
          %s741 = int_to_ptr.hbm [resolvable:$true] %s740
          %s742 = sshll.u32 [#allocation17], 4
          %s743 = int_to_ptr.vmem [resolvable:$true] %s742
          %748 = dma.hbm_to_vmem [thread:$0]  %s741, 1024, %s743, [#allocation16], 128, 128, 8
        $region84: #{kfuvae_forward.3} parent=11 // pred_fallthru
          _
        // Predicated region
        $region85: #{kfuvae_forward.3} parent=11 // pred_check
          %p749 = pneg %p471
        $region86: #{kfuvae_forward.3} parent=11 // pred_check_branch
          %751 = sbr.rel (%p749) target = $region88
        $region87: #{kfuvae_forward.3} parent=11 // pred_region
          %753 = vsyncadd [#allocation19], 0
          %s754 = sshll.u32 %s20, 4
          %s755 = int_to_ptr.hbm [resolvable:$true] %s754
          %s756 = sshll.u32 [#allocation18], 4
          %s757 = int_to_ptr.vmem [resolvable:$true] %s756
          %762 = dma.hbm_to_vmem [thread:$0]  %s755, 32, %s757, [#allocation19], 16, 16, 1
        $region88: #{kfuvae_forward.3} parent=11 // pred_fallthru
          _
        // Predicated region
        $region89: #{kfuvae_forward.3} parent=11 // pred_check
          %p763 = pneg %p492
        $region90: #{kfuvae_forward.3} parent=11 // pred_check_branch
          %765 = sbr.rel (%p763) target = $region92
        $region91: #{kfuvae_forward.3} parent=11 // pred_region
          _
        $region92: #{kfuvae_forward.3} parent=11 // pred_fallthru
          _
        // Predicated region
        $region93: #{kfuvae_forward.3} parent=11 // pred_check
          %p766 = pneg %p513
        $region94: #{kfuvae_forward.3} parent=11 // pred_check_branch
          %768 = sbr.rel (%p766) target = $region96
        $region95: #{kfuvae_forward.3} parent=11 // pred_region
          %770 = vsyncadd [#allocation19], 0
          %s771 = sshll.u32 %s22, 4
          %s772 = int_to_ptr.hbm [resolvable:$true] %s771
          %s773 = sshll.u32 [#allocation20], 4
          %s774 = int_to_ptr.vmem [resolvable:$true] %s773
          %779 = dma.hbm_to_vmem [thread:$0]  %s772, 32, %s774, [#allocation19], 16, 16, 1
        $region96: #{kfuvae_forward.3} parent=11 // pred_fallthru
          _
        // Predicated region
        $region97: #{kfuvae_forward.3} parent=11 // pred_check
          %p780 = pneg %p534
        $region98: #{kfuvae_forward.3} parent=11 // pred_check_branch
          %782 = sbr.rel (%p780) target = $region100
        $region99: #{kfuvae_forward.3} parent=11 // pred_region
          _
        $region100: #{kfuvae_forward.3} parent=11 // pred_fallthru
          _
        // Predicated region
        $region101: #{kfuvae_forward.3} parent=11 // pred_check
          %p783 = pneg %p555
        $region102: #{kfuvae_forward.3} parent=11 // pred_check_branch
          %785 = sbr.rel (%p783) target = $region104
        $region103: #{kfuvae_forward.3} parent=11 // pred_region
          %787 = vsyncadd [#allocation22], 0
          %s789 = sshll.u32 %s24, 4
          %s790 = int_to_ptr.hbm [resolvable:$true] %s789
          %s791 = sshll.u32 [#allocation21], 4
          %s792 = int_to_ptr.vmem [resolvable:$true] %s791
          %794 = dma.hbm_to_vmem [thread:$0]  %s790, 16, %s792, [#allocation22]
        $region104: #{kfuvae_forward.3} parent=11 // pred_fallthru
          _
      $region12: #{kfuvae_forward.3} parent=5 // pred_fallthru
        _
      %p795 = scmp.lt.s32.totalorder %s46, 2
      // Predicated region
      $region105: #{kfuvae_forward.3} parent=5 // pred_check
        %p796 = pneg %p795
      $region106: #{kfuvae_forward.3} parent=5 // pred_check_branch
        %798 = sbr.rel (%p796) target = $region108
      $region107: #{kfuvae_forward.3} parent=5 // pred_region
        // Predicated region
        $region109: #{kfuvae_forward.3} parent=107 // pred_check
          %p799 = pneg %p66
        $region110: #{kfuvae_forward.3} parent=107 // pred_check_branch
          %801 = sbr.rel (%p799) target = $region112
        $region111: #{kfuvae_forward.3} parent=107 // pred_region
          %p802 = scmp.lt.s32.totalorder %s46, 1
          %s803 = scalar_select %p802, %s46, 1
          %s804 = smul.addr %s803, 2
          %s805 = scalar_lea.vmem %s1, %s804
        $region112: #{kfuvae_forward.3} parent=107 // pred_fallthru
          _
      $region108: #{kfuvae_forward.3} parent=5 // pred_fallthru
        _
      %p806 = scmp.le.s32.totalorder 1, %s46
      %p807 = scmp.lt.s32.totalorder %s46, 3
      %p808 = pnand %p806, %p807
      %p809 = pneg %p808
      // Predicated region
      $region113: #{kfuvae_forward.3} parent=5 // pred_check
        _
      $region114: #{kfuvae_forward.3} parent=5 // pred_check_branch
        %811 = sbr.rel (%p808) target = $region116
      $region115: #{kfuvae_forward.3} parent=5 // pred_region
        %s812 = ssub.s32 %s46, 1
        // Predicated region
        $region117: #{kfuvae_forward.3} parent=115 // pred_check
          %p813 = pneg %p177
        $region118: #{kfuvae_forward.3} parent=115 // pred_check_branch
          %815 = sbr.rel (%p813) target = $region120
        $region119: #{kfuvae_forward.3} parent=115 // pred_region
          %817 = dma.done [#allocation5], 32
        $region120: #{kfuvae_forward.3} parent=115 // pred_fallthru
          _
        // Predicated region
        $region121: #{kfuvae_forward.3} parent=115 // pred_check
          %p818 = pneg %p282
        $region122: #{kfuvae_forward.3} parent=115 // pred_check_branch
          %820 = sbr.rel (%p818) target = $region124
        $region123: #{kfuvae_forward.3} parent=115 // pred_region
          %822 = dma.done [#allocation7], 1024
        $region124: #{kfuvae_forward.3} parent=115 // pred_fallthru
          _
        // Predicated region
        $region125: #{kfuvae_forward.3} parent=115 // pred_check
          %p823 = pneg %p324
        $region126: #{kfuvae_forward.3} parent=115 // pred_check_branch
          %825 = sbr.rel (%p823) target = $region128
        $region127: #{kfuvae_forward.3} parent=115 // pred_region
          %827 = dma.done [#allocation7], 32
        $region128: #{kfuvae_forward.3} parent=115 // pred_fallthru
          _
        // Predicated region
        $region129: #{kfuvae_forward.3} parent=115 // pred_check
          %p828 = pneg %p345
        $region130: #{kfuvae_forward.3} parent=115 // pred_check_branch
          %830 = sbr.rel (%p828) target = $region132
        $region131: #{kfuvae_forward.3} parent=115 // pred_region
          %832 = dma.done [#allocation10], 32
        $region132: #{kfuvae_forward.3} parent=115 // pred_fallthru
          _
        // Predicated region
        $region133: #{kfuvae_forward.3} parent=115 // pred_check
          %p833 = pneg %p366
        $region134: #{kfuvae_forward.3} parent=115 // pred_check_branch
          %835 = sbr.rel (%p833) target = $region136
        $region135: #{kfuvae_forward.3} parent=115 // pred_region
          %837 = dma.done [#allocation10], 32
        $region136: #{kfuvae_forward.3} parent=115 // pred_fallthru
          _
        // Predicated region
        $region137: #{kfuvae_forward.3} parent=115 // pred_check
          %p838 = pneg %p387
        $region138: #{kfuvae_forward.3} parent=115 // pred_check_branch
          %840 = sbr.rel (%p838) target = $region140
        $region139: #{kfuvae_forward.3} parent=115 // pred_region
          %842 = dma.done [#allocation13], 32
        $region140: #{kfuvae_forward.3} parent=115 // pred_fallthru
          _
        // Predicated region
        $region141: #{kfuvae_forward.3} parent=115 // pred_check
          %p843 = pneg %p408
        $region142: #{kfuvae_forward.3} parent=115 // pred_check_branch
          %845 = sbr.rel (%p843) target = $region144
        $region143: #{kfuvae_forward.3} parent=115 // pred_region
          %847 = dma.done [#allocation13], 32
        $region144: #{kfuvae_forward.3} parent=115 // pred_fallthru
          _
        // Predicated region
        $region145: #{kfuvae_forward.3} parent=115 // pred_check
          %p848 = pneg %p429
        $region146: #{kfuvae_forward.3} parent=115 // pred_check_branch
          %850 = sbr.rel (%p848) target = $region148
        $region147: #{kfuvae_forward.3} parent=115 // pred_region
          %852 = dma.done [#allocation16], 32
        $region148: #{kfuvae_forward.3} parent=115 // pred_fallthru
          _
        // Predicated region
        $region149: #{kfuvae_forward.3} parent=115 // pred_check
          %p853 = pneg %p450
        $region150: #{kfuvae_forward.3} parent=115 // pred_check_branch
          %855 = sbr.rel (%p853) target = $region152
        $region151: #{kfuvae_forward.3} parent=115 // pred_region
          %857 = dma.done [#allocation16], 1024
        $region152: #{kfuvae_forward.3} parent=115 // pred_fallthru
          _
        // Predicated region
        $region153: #{kfuvae_forward.3} parent=115 // pred_check
          %p858 = pneg %p471
        $region154: #{kfuvae_forward.3} parent=115 // pred_check_branch
          %860 = sbr.rel (%p858) target = $region156
        $region155: #{kfuvae_forward.3} parent=115 // pred_region
          %862 = dma.done [#allocation19], 32
        $region156: #{kfuvae_forward.3} parent=115 // pred_fallthru
          _
        // Predicated region
        $region157: #{kfuvae_forward.3} parent=115 // pred_check
          %p863 = pneg %p513
        $region158: #{kfuvae_forward.3} parent=115 // pred_check_branch
          %865 = sbr.rel (%p863) target = $region160
        $region159: #{kfuvae_forward.3} parent=115 // pred_region
          %867 = dma.done [#allocation19], 32
        $region160: #{kfuvae_forward.3} parent=115 // pred_fallthru
          _
        // Predicated region
        $region161: #{kfuvae_forward.3} parent=115 // pred_check
          %p868 = pneg %p555
        $region162: #{kfuvae_forward.3} parent=115 // pred_check_branch
          %870 = sbr.rel (%p868) target = $region164
        $region163: #{kfuvae_forward.3} parent=115 // pred_region
          %872 = dma.done [#allocation22], 16
        $region164: #{kfuvae_forward.3} parent=115 // pred_fallthru
          _
        %p873 = scmp.lt.s32.totalorder %s51, 1
        %s874 = scalar_select %p873, %s51, 1
        %s875 = smul.addr %s874, 2
        %s876 = scalar_lea.vmem %s1, %s875
        %p877 = pneg %p72
        %p878 = pneg %p69
        %p879 = pneg %p93
        %p880 = pneg %p90
        %p881 = pneg %p114
        %p882 = pneg %p111
        %p883 = pneg %p135
        %p884 = pneg %p132
        %p885 = pneg %p156
        %p886 = pneg %p153
        %p887 = pneg %p177
        %p888 = pneg %p174
        %p889 = pneg %p198
        %p890 = pneg %p195
        %p891 = pneg %p219
        %p892 = pneg %p216
        %p893 = pneg %p240
        %p894 = pneg %p237
        %p895 = pneg %p261
        %p896 = pneg %p258
        %p897 = pneg %p282
        %p898 = pneg %p279
        %p899 = pneg %p303
        %p900 = pneg %p300
        %p901 = pneg %p324
        %p902 = pneg %p321
        %p903 = pneg %p345
        %p904 = pneg %p342
        %p905 = pneg %p366
        %p906 = pneg %p363
        %p907 = pneg %p387
        %p908 = pneg %p384
        %p909 = pneg %p408
        %p910 = pneg %p405
        %p911 = pneg %p429
        %p912 = pneg %p426
        %p913 = pneg %p450
        %p914 = pneg %p447
        %p915 = pneg %p471
        %p916 = pneg %p468
        %p917 = pneg %p492
        %p918 = pneg %p489
        %p919 = pneg %p513
        %p920 = pneg %p510
        %p921 = pneg %p534
        %p922 = pneg %p531
        %p923 = pneg %p555
        %p924 = pneg %p552
        %p925 = pneg %p581
        %p926 = pneg %p578
        %p927 = scmp.lt.s32.totalorder %s51, 1
        %s928 = scalar_select %p927, %s51, 1
        %s929 = smul.addr %s928, 8
        %s930 = scalar_lea.vmem %s25, %s929
        %p931 = scmp.lt.s32.totalorder %s51, 1
        %s932 = scalar_select %p931, %s51, 1
        %s933 = smul.addr %s932, 2
        %s934 = scalar_lea.vmem %s1, %s933
        %p935 = scmp.lt.s32.totalorder %s51, 1
        %s936 = scalar_select %p935, %s51, 1
        %s937 = smul.addr %s936, 8
        %s938 = scalar_lea.vmem %s25, %s937
        %s939 = sld [smem:[#allocation3 + %s51]]
        %v940 = vld [vmem:[%s934] sm:$0x3]
        %v941 = vld [vmem:[%s2] sm:$0x1f]
        %v942 = vlaneseq
        %v943 = vand.u32 %v942, 127
        %v944 = vstv %s939
        %vm945 = vcmp.ge.s32.totalorder %v943, %v944
        %v946 = vsel %vm945, -1e+09, 0.0
        %v947 = vld [vmem:[%s3] sm:$0xff]
        %v948 = vld [vmem:[%s3 + $0x8] sm:$0xff]
        %v949 = vld [vmem:[%s3 + $0x10] sm:$0xff]
        %v950 = vld [vmem:[%s3 + $0x18] sm:$0xff]
        %v951 = vld [vmem:[%s4] sm:$0x1]
        %v952 = vld [vmem:[%s5] sm:$0xff]
        %v953 = vld [vmem:[%s5 + $0x8] sm:$0xff]
        %v954 = vld [vmem:[%s5 + $0x10] sm:$0xff]
        %v955 = vld [vmem:[%s5 + $0x18] sm:$0xff]
        %v956 = vld [vmem:[#allocation4] sm:$0x1]
        %v957 = vld [vmem:[%s7] sm:$0xff]
        %v958 = vld [vmem:[%s7 + $0x8] sm:$0xff]
        %v959 = vld [vmem:[%s7 + $0x10] sm:$0xff]
        %v960 = vld [vmem:[%s7 + $0x18] sm:$0xff]
        %v961 = vld [vmem:[%s8] sm:$0x1]
        %v962 = vld [vmem:[%s9] sm:$0xff]
        %v963 = vld [vmem:[%s9 + $0x8] sm:$0xff]
        %v964 = vld [vmem:[%s9 + $0x10] sm:$0xff]
        %v965 = vld [vmem:[%s9 + $0x18] sm:$0xff]
        %v966 = vld [vmem:[%s10] sm:$0x1]
        %v967 = vld [vmem:[#allocation6] sm:$0xff]
        %v968 = vld [vmem:[#allocation6 + $0x8] sm:$0xff]
        %v969 = vld [vmem:[#allocation6 + $0x10] sm:$0xff]
        %v970 = vld [vmem:[#allocation6 + $0x18] sm:$0xff]
        %v971 = vld [vmem:[%s12] sm:$0x1]
        %v972 = vld [vmem:[#allocation8] sm:$0x1]
        %v973 = vld [vmem:[#allocation9] sm:$0x1]
        %v974 = vld [vmem:[#allocation11] sm:$0x1]
        %v975 = vld [vmem:[#allocation12] sm:$0x1]
        %v976 = vld [vmem:[#allocation14] sm:$0x1]
        %v977 = vld [vmem:[#allocation15] sm:$0x1]
        %v978 = vld [vmem:[#allocation17] sm:$0xff]
        %v979 = vld [vmem:[#allocation17 + $0x8] sm:$0xff]
        %v980 = vld [vmem:[#allocation17 + $0x10] sm:$0xff]
        %v981 = vld [vmem:[#allocation17 + $0x18] sm:$0xff]
        %v982 = vld [vmem:[#allocation18] sm:$0x1]
        %v983 = vld [vmem:[%s21] sm:$0xff]
        %v984 = vld [vmem:[%s21 + $0x8] sm:$0xff]
        %v985 = vld [vmem:[%s21 + $0x10] sm:$0xff]
        %v986 = vld [vmem:[%s21 + $0x18] sm:$0xff]
        %v987 = vld [vmem:[%s21 + $0x20] sm:$0xff]
        %v988 = vld [vmem:[%s21 + $0x28] sm:$0xff]
        %v989 = vld [vmem:[%s21 + $0x30] sm:$0xff]
        %v990 = vld [vmem:[%s21 + $0x38] sm:$0xff]
        %v991 = vld [vmem:[#allocation20] sm:$0x1]
        %v993 = vperm.slane %v951, 0
        %vm995 = vcmask 261120
        %v997 = vsel %vm995, %v941, 0
        %999 = vmatpush.msra.mxu0 0.0
        %1000 = vmatpush.msra.mxu0 0.0
        %1001 = vmatpush.msra.mxu0 0.0
        %1002 = vmatpush.msra.mxu0 0.0
        %1003 = vmatpush.msra.mxu0 0.0
        %1004 = vmatpush.msra.mxu0 0.0
        %1005 = vmatpush.msra.mxu0 0.0
        %1006 = vmatpush.msra.mxu0 0.0
        %1007 = vmatpush.msra.mxu0 0.0
        %1008 = vmatpush.msra.mxu0 0.0
        %1009 = vmatpush.msra.mxu0 0.0
        %1010 = vmatpush.msra.mxu0 0.0
        %1011 = vmatpush.msra.mxu0 %v950
        %1012 = vmatpush.msra.mxu0 %v949
        %1013 = vmatpush.msra.mxu0 %v948
        %1014 = vmatpush.msra.mxu0 %v947
        %1015 = vmatmul.f32.gmra.mxu0 %v997
        %v1016 = vpop.f32.mrf.mxu0
        %v1017 = vadd.f32 %v993, %v1016
        %1018 = vdwg.mxu0
        %1020 = vrot.lane.b32.xlu0 %v1017, 96
        %v1021 = vpop.permute.xlu0 %1020
        %vm1022 = vcmask 64512
        %v1023 = vsel %vm1022, %v1017, 0
        %v1025 = vsel %vm1022, %v1021, 0
        %1027 = vmatpush.xpose.msra.mxu0 0.0
        %1028 = vmatpush.xpose.msra.mxu0 0.0
        %1029 = vmatpush.xpose.msra.mxu0 0.0
        %1030 = vmatpush.xpose.msra.mxu0 0.0
        %1031 = vmatpush.xpose.msra.mxu0 0.0
        %1032 = vmatpush.xpose.msra.mxu0 0.0
        %1033 = vmatpush.xpose.msra.mxu0 0.0
        %1034 = vmatpush.xpose.msra.mxu0 0.0
        %1035 = vmatpush.xpose.msra.mxu0 0.0
        %1036 = vmatpush.xpose.msra.mxu0 0.0
        %1037 = vmatpush.xpose.msra.mxu0 0.0
        %1038 = vmatpush.xpose.msra.mxu0 0.0
        %1039 = vmatpush.xpose.msra.mxu0 0.0
        %1040 = vmatpush.xpose.msra.mxu0 0.0
        %1041 = vmatpush.xpose.msra.mxu0 0.0
        %1042 = vmatpush.xpose.msra.mxu0 %v1025
        %1043 = vmatmul.f32.gmra.mxu0 %v1023
        %v1044 = vpop.f32.mrf.mxu0
        %v1045 = vadd.f32 0.0, %v1044
        %1046 = vdwg.mxu0
        %v1047 = vmul.f32 %v1045, 0.35355338
        %v1048 = vadd.f32 %v1047, %v946
        %vm1049 = vcmask 36864
        %v1050 = vsel %vm1049, %v1048, -inf
        %1051 = vmax.xlane.f32.xlu0 %v1050
        %v1052 = vpop.xlane.xlu0 %1051
        %v1053 = vsub.f32 %v1048, %v1052
        %v1054 = vmul.f32 %v1053, 1.442695
        %v1055 = vpow.pop %v1054
        %v1056 = vsel %vm1049, %v1055, 0.0
        %1057 = vadd.xlane.f32.xlu0 %v1056
        %v1058 = vpop.xlane.xlu0 %1057
        %v1059 = vrcp.pop %v1058
        %v1060 = vmul.f32 %v1055, %v1059
        %1061 = vrot.lane.b32.xlu0 %v1017, 64
        %v1062 = vpop.permute.xlu0 %1061
        %vm1063 = vcmask 39936
        %v1065 = vsel %vm1063, %v1060, 0
        %vm1067 = vcmask 1044480
        %v1068 = vsel %vm1067, %v1062, 0
        %1070 = vmatpush.msra.mxu0 0.0
        %1071 = vmatpush.msra.mxu0 0.0
        %1072 = vmatpush.msra.mxu0 0.0
        %1073 = vmatpush.msra.mxu0 0.0
        %1074 = vmatpush.msra.mxu0 0.0
        %1075 = vmatpush.msra.mxu0 0.0
        %1076 = vmatpush.msra.mxu0 0.0
        %1077 = vmatpush.msra.mxu0 0.0
        %1078 = vmatpush.msra.mxu0 0.0
        %1079 = vmatpush.msra.mxu0 0.0
        %1080 = vmatpush.msra.mxu0 0.0
        %1081 = vmatpush.msra.mxu0 0.0
        %1082 = vmatpush.msra.mxu0 0.0
        %1083 = vmatpush.msra.mxu0 0.0
        %1084 = vmatpush.msra.mxu0 0.0
        %1085 = vmatpush.msra.mxu0 %v1068
        %1086 = vmatmul.f32.gmra.mxu0 %v1065
        %v1087 = vpop.f32.mrf.mxu0
        %v1088 = vadd.f32 0.0, %v1087
        %1089 = vdwg.mxu0
        %1090 = vrot.lane.b32.xlu0 %v1017, 120
        %v1091 = vpop.permute.xlu0 %1090
        %1092 = vrot.lane.b32.xlu0 %v1017, 88
        %v1093 = vpop.permute.xlu0 %1092
        %v1094 = vsel %vm1022, %v1091, 0
        %v1096 = vsel %vm1022, %v1093, 0
        %1098 = vmatpush.xpose.msra.mxu0 0.0
        %1099 = vmatpush.xpose.msra.mxu0 0.0
        %1100 = vmatpush.xpose.msra.mxu0 0.0
        %1101 = vmatpush.xpose.msra.mxu0 0.0
        %1102 = vmatpush.xpose.msra.mxu0 0.0
        %1103 = vmatpush.xpose.msra.mxu0 0.0
        %1104 = vmatpush.xpose.msra.mxu0 0.0
        %1105 = vmatpush.xpose.msra.mxu0 0.0
        %1106 = vmatpush.xpose.msra.mxu0 0.0
        %1107 = vmatpush.xpose.msra.mxu0 0.0
        %1108 = vmatpush.xpose.msra.mxu0 0.0
        %1109 = vmatpush.xpose.msra.mxu0 0.0
        %1110 = vmatpush.xpose.msra.mxu0 0.0
        %1111 = vmatpush.xpose.msra.mxu0 0.0
        %1112 = vmatpush.xpose.msra.mxu0 0.0
        %1113 = vmatpush.xpose.msra.mxu0 %v1096
        %1114 = vmatmul.f32.gmra.mxu0 %v1094
        %v1115 = vpop.f32.mrf.mxu0
        %v1116 = vadd.f32 0.0, %v1115
        %1117 = vdwg.mxu0
        %v1118 = vmul.f32 %v1116, 0.35355338
        %v1119 = vadd.f32 %v1118, %v946
        %v1120 = vsel %vm1049, %v1119, -inf
        %1121 = vmax.xlane.f32.xlu0 %v1120
        %v1122 = vpop.xlane.xlu0 %1121
        %v1123 = vsub.f32 %v1119, %v1122
        %v1124 = vmul.f32 %v1123, 1.442695
        %v1125 = vpow.pop %v1124
        %v1126 = vsel %vm1049, %v1125, 0.0
        %1127 = vadd.xlane.f32.xlu0 %v1126
        %v1128 = vpop.xlane.xlu0 %1127
        %v1129 = vrcp.pop %v1128
        %v1130 = vmul.f32 %v1125, %v1129
        %1131 = vrot.lane.b32.xlu0 %v1017, 56
        %v1132 = vpop.permute.xlu0 %1131
        %v1134 = vsel %vm1063, %v1130, 0
        %v1136 = vsel %vm1067, %v1132, 0
        %1138 = vmatpush.msra.mxu0 0.0
        %1139 = vmatpush.msra.mxu0 0.0
        %1140 = vmatpush.msra.mxu0 0.0
        %1141 = vmatpush.msra.mxu0 0.0
        %1142 = vmatpush.msra.mxu0 0.0
        %1143 = vmatpush.msra.mxu0 0.0
        %1144 = vmatpush.msra.mxu0 0.0
        %1145 = vmatpush.msra.mxu0 0.0
        %1146 = vmatpush.msra.mxu0 0.0
        %1147 = vmatpush.msra.mxu0 0.0
        %1148 = vmatpush.msra.mxu0 0.0
        %1149 = vmatpush.msra.mxu0 0.0
        %1150 = vmatpush.msra.mxu0 0.0
        %1151 = vmatpush.msra.mxu0 0.0
        %1152 = vmatpush.msra.mxu0 0.0
        %1153 = vmatpush.msra.mxu0 %v1136
        %1154 = vmatmul.f32.gmra.mxu0 %v1134
        %v1155 = vpop.f32.mrf.mxu0
        %v1156 = vadd.f32 0.0, %v1155
        %1157 = vdwg.mxu0
        %v1159 = vsel %vm1022, %v1156, 0
        %1161 = vmatpush.msra.mxu0 0.0
        %1162 = vmatpush.msra.mxu0 0.0
        %1163 = vmatpush.msra.mxu0 0.0
        %1164 = vmatpush.msra.mxu0 0.0
        %1165 = vmatpush.msra.mxu0 0.0
        %1166 = vmatpush.msra.mxu0 0.0
        %1167 = vmatpush.msra.mxu0 0.0
        %1168 = vmatpush.msra.mxu0 0.0
        %1169 = vmatpush.msra.mxu0 0.0
        %1170 = vmatpush.msra.mxu0 0.0
        %1171 = vmatpush.msra.mxu0 0.0
        %1172 = vmatpush.msra.mxu0 0.0
        %1173 = vmatpush.msra.mxu0 0.0
        %1174 = vmatpush.msra.mxu0 0.0
        %1175 = vmatpush.msra.mxu0 0.0
        %1176 = vmatpush.msra.mxu0 %v953
        %1177 = vmatmul.f32.gmra.mxu0 %v1159
        %v1178 = vpop.f32.mrf.mxu0
        %v1179 = vadd.f32 0.0, %v1178
        %1180 = vdwg.mxu0
        %v1182 = vsel %vm1022, %v1088, 0
        %1184 = vmatpush.msra.mxu0 0.0
        %1185 = vmatpush.msra.mxu0 0.0
        %1186 = vmatpush.msra.mxu0 0.0
        %1187 = vmatpush.msra.mxu0 0.0
        %1188 = vmatpush.msra.mxu0 0.0
        %1189 = vmatpush.msra.mxu0 0.0
        %1190 = vmatpush.msra.mxu0 0.0
        %1191 = vmatpush.msra.mxu0 0.0
        %1192 = vmatpush.msra.mxu0 0.0
        %1193 = vmatpush.msra.mxu0 0.0
        %1194 = vmatpush.msra.mxu0 0.0
        %1195 = vmatpush.msra.mxu0 0.0
        %1196 = vmatpush.msra.mxu0 0.0
        %1197 = vmatpush.msra.mxu0 0.0
        %1198 = vmatpush.msra.mxu0 0.0
        %1199 = vmatpush.msra.mxu0 %v952
        %1200 = vmatmul.f32.gmra.mxu0 %v1182
        %v1201 = vpop.f32.mrf.mxu0
        %v1202 = vadd.f32 %v1179, %v1201
        %1203 = vdwg.mxu0
        %1204 = vrot.lane.b32.xlu0 %v1017, 112
        %v1205 = vpop.permute.xlu0 %1204
        %1206 = vrot.lane.b32.xlu0 %v1017, 80
        %v1207 = vpop.permute.xlu0 %1206
        %v1208 = vsel %vm1022, %v1205, 0
        %v1210 = vsel %vm1022, %v1207, 0
        %1212 = vmatpush.xpose.msra.mxu0 0.0
        %1213 = vmatpush.xpose.msra.mxu0 0.0
        %1214 = vmatpush.xpose.msra.mxu0 0.0
        %1215 = vmatpush.xpose.msra.mxu0 0.0
        %1216 = vmatpush.xpose.msra.mxu0 0.0
        %1217 = vmatpush.xpose.msra.mxu0 0.0
        %1218 = vmatpush.xpose.msra.mxu0 0.0
        %1219 = vmatpush.xpose.msra.mxu0 0.0
        %1220 = vmatpush.xpose.msra.mxu0 0.0
        %1221 = vmatpush.xpose.msra.mxu0 0.0
        %1222 = vmatpush.xpose.msra.mxu0 0.0
        %1223 = vmatpush.xpose.msra.mxu0 0.0
        %1224 = vmatpush.xpose.msra.mxu0 0.0
        %1225 = vmatpush.xpose.msra.mxu0 0.0
        %1226 = vmatpush.xpose.msra.mxu0 0.0
        %1227 = vmatpush.xpose.msra.mxu0 %v1210
        %1228 = vmatmul.f32.gmra.mxu0 %v1208
        %v1229 = vpop.f32.mrf.mxu0
        %v1230 = vadd.f32 0.0, %v1229
        %1231 = vdwg.mxu0
        %v1232 = vmul.f32 %v1230, 0.35355338
        %v1233 = vadd.f32 %v1232, %v946
        %v1234 = vsel %vm1049, %v1233, -inf
        %1235 = vmax.xlane.f32.xlu0 %v1234
        %v1236 = vpop.xlane.xlu0 %1235
        %v1237 = vsub.f32 %v1233, %v1236
        %v1238 = vmul.f32 %v1237, 1.442695
        %v1239 = vpow.pop %v1238
        %v1240 = vsel %vm1049, %v1239, 0.0
        %1241 = vadd.xlane.f32.xlu0 %v1240
        %v1242 = vpop.xlane.xlu0 %1241
        %v1243 = vrcp.pop %v1242
        %v1244 = vmul.f32 %v1239, %v1243
        %1245 = vrot.lane.b32.xlu0 %v1017, 48
        %v1246 = vpop.permute.xlu0 %1245
        %v1248 = vsel %vm1063, %v1244, 0
        %v1250 = vsel %vm1067, %v1246, 0
        %1252 = vmatpush.msra.mxu0 0.0
        %1253 = vmatpush.msra.mxu0 0.0
        %1254 = vmatpush.msra.mxu0 0.0
        %1255 = vmatpush.msra.mxu0 0.0
        %1256 = vmatpush.msra.mxu0 0.0
        %1257 = vmatpush.msra.mxu0 0.0
        %1258 = vmatpush.msra.mxu0 0.0
        %1259 = vmatpush.msra.mxu0 0.0
        %1260 = vmatpush.msra.mxu0 0.0
        %1261 = vmatpush.msra.mxu0 0.0
        %1262 = vmatpush.msra.mxu0 0.0
        %1263 = vmatpush.msra.mxu0 0.0
        %1264 = vmatpush.msra.mxu0 0.0
        %1265 = vmatpush.msra.mxu0 0.0
        %1266 = vmatpush.msra.mxu0 0.0
        %1267 = vmatpush.msra.mxu0 %v1250
        %1268 = vmatmul.f32.gmra.mxu0 %v1248
        %v1269 = vpop.f32.mrf.mxu0
        %v1270 = vadd.f32 0.0, %v1269
        %1271 = vdwg.mxu0
        %v1273 = vsel %vm1022, %v1270, 0
        %1275 = vmatpush.msra.mxu0 0.0
        %1276 = vmatpush.msra.mxu0 0.0
        %1277 = vmatpush.msra.mxu0 0.0
        %1278 = vmatpush.msra.mxu0 0.0
        %1279 = vmatpush.msra.mxu0 0.0
        %1280 = vmatpush.msra.mxu0 0.0
        %1281 = vmatpush.msra.mxu0 0.0
        %1282 = vmatpush.msra.mxu0 0.0
        %1283 = vmatpush.msra.mxu0 0.0
        %1284 = vmatpush.msra.mxu0 0.0
        %1285 = vmatpush.msra.mxu0 0.0
        %1286 = vmatpush.msra.mxu0 0.0
        %1287 = vmatpush.msra.mxu0 0.0
        %1288 = vmatpush.msra.mxu0 0.0
        %1289 = vmatpush.msra.mxu0 0.0
        %1290 = vmatpush.msra.mxu0 %v954
        %1291 = vmatmul.f32.gmra.mxu0 %v1273
        %v1292 = vpop.f32.mrf.mxu0
        %v1293 = vadd.f32 0.0, %v1292
        %1294 = vdwg.mxu0
        %v1295 = vadd.f32 %v1202, %v1293
        %1296 = vrot.lane.b32.xlu0 %v1017, 104
        %v1297 = vpop.permute.xlu0 %1296
        %1298 = vrot.lane.b32.xlu0 %v1017, 72
        %v1299 = vpop.permute.xlu0 %1298
        %v1300 = vsel %vm1022, %v1297, 0
        %v1302 = vsel %vm1022, %v1299, 0
        %1304 = vmatpush.xpose.msra.mxu0 0.0
        %1305 = vmatpush.xpose.msra.mxu0 0.0
        %1306 = vmatpush.xpose.msra.mxu0 0.0
        %1307 = vmatpush.xpose.msra.mxu0 0.0
        %1308 = vmatpush.xpose.msra.mxu0 0.0
        %1309 = vmatpush.xpose.msra.mxu0 0.0
        %1310 = vmatpush.xpose.msra.mxu0 0.0
        %1311 = vmatpush.xpose.msra.mxu0 0.0
        %1312 = vmatpush.xpose.msra.mxu0 0.0
        %1313 = vmatpush.xpose.msra.mxu0 0.0
        %1314 = vmatpush.xpose.msra.mxu0 0.0
        %1315 = vmatpush.xpose.msra.mxu0 0.0
        %1316 = vmatpush.xpose.msra.mxu0 0.0
        %1317 = vmatpush.xpose.msra.mxu0 0.0
        %1318 = vmatpush.xpose.msra.mxu0 0.0
        %1319 = vmatpush.xpose.msra.mxu0 %v1302
        %1320 = vmatmul.f32.gmra.mxu0 %v1300
        %v1321 = vpop.f32.mrf.mxu0
        %v1322 = vadd.f32 0.0, %v1321
        %1323 = vdwg.mxu0
        %v1324 = vmul.f32 %v1322, 0.35355338
        %v1325 = vadd.f32 %v1324, %v946
        %v1326 = vsel %vm1049, %v1325, -inf
        %1327 = vmax.xlane.f32.xlu0 %v1326
        %v1328 = vpop.xlane.xlu0 %1327
        %v1329 = vsub.f32 %v1325, %v1328
        %v1330 = vmul.f32 %v1329, 1.442695
        %v1331 = vpow.pop %v1330
        %v1332 = vsel %vm1049, %v1331, 0.0
        %1333 = vadd.xlane.f32.xlu0 %v1332
        %v1334 = vpop.xlane.xlu0 %1333
        %v1335 = vrcp.pop %v1334
        %v1336 = vmul.f32 %v1331, %v1335
        %1337 = vrot.lane.b32.xlu0 %v1017, 40
        %v1338 = vpop.permute.xlu0 %1337
        %v1340 = vsel %vm1063, %v1336, 0
        %v1342 = vsel %vm1067, %v1338, 0
        %1344 = vmatpush.msra.mxu0 0.0
        %1345 = vmatpush.msra.mxu0 0.0
        %1346 = vmatpush.msra.mxu0 0.0
        %1347 = vmatpush.msra.mxu0 0.0
        %1348 = vmatpush.msra.mxu0 0.0
        %1349 = vmatpush.msra.mxu0 0.0
        %1350 = vmatpush.msra.mxu0 0.0
        %1351 = vmatpush.msra.mxu0 0.0
        %1352 = vmatpush.msra.mxu0 0.0
        %1353 = vmatpush.msra.mxu0 0.0
        %1354 = vmatpush.msra.mxu0 0.0
        %1355 = vmatpush.msra.mxu0 0.0
        %1356 = vmatpush.msra.mxu0 0.0
        %1357 = vmatpush.msra.mxu0 0.0
        %1358 = vmatpush.msra.mxu0 0.0
        %1359 = vmatpush.msra.mxu0 %v1342
        %1360 = vmatmul.f32.gmra.mxu0 %v1340
        %v1361 = vpop.f32.mrf.mxu0
        %v1362 = vadd.f32 0.0, %v1361
        %1363 = vdwg.mxu0
        %v1365 = vsel %vm1022, %v1362, 0
        %1367 = vmatpush.msra.mxu0 0.0
        %1368 = vmatpush.msra.mxu0 0.0
        %1369 = vmatpush.msra.mxu0 0.0
        %1370 = vmatpush.msra.mxu0 0.0
        %1371 = vmatpush.msra.mxu0 0.0
        %1372 = vmatpush.msra.mxu0 0.0
        %1373 = vmatpush.msra.mxu0 0.0
        %1374 = vmatpush.msra.mxu0 0.0
        %1375 = vmatpush.msra.mxu0 0.0
        %1376 = vmatpush.msra.mxu0 0.0
        %1377 = vmatpush.msra.mxu0 0.0
        %1378 = vmatpush.msra.mxu0 0.0
        %1379 = vmatpush.msra.mxu0 0.0
        %1380 = vmatpush.msra.mxu0 0.0
        %1381 = vmatpush.msra.mxu0 0.0
        %1382 = vmatpush.msra.mxu0 %v955
        %1383 = vmatmul.f32.gmra.mxu0 %v1365
        %v1384 = vpop.f32.mrf.mxu0
        %v1385 = vadd.f32 0.0, %v1384
        %1386 = vdwg.mxu0
        %v1387 = vadd.f32 %v1295, %v1385
        %v1389 = vperm.slane %v956, 0
        %v1391 = vadd.f32 %v1387, %v1389
        %v1392 = vadd.f32 %v941, %v1391
        %vm1393 = vcmask 258048
        %v1394 = vsel %vm1393, %v1392, 0.0
        %1395 = vadd.xlane.f32.xlu0 %v1394
        %v1396 = vpop.xlane.xlu0 %1395
        %v1397 = vrcp.pop 32.0
        %v1398 = vmul.f32 32.0, %v1397
        %v1399 = vsub.f32 1.0, %v1398
        %v1400 = vmul.f32 %v1397, %v1399
        %v1401 = vadd.f32 %v1397, %v1400
        %vm1402 = vweird.f32 %v1397
        %v1403 = vsel %vm1402, %v1397, %v1401
        %v1404 = vmul.f32 %v1396, %v1403
        %v1405 = vsub.f32 %v1392, %v1404
        %v1406 = vmul.f32 %v1405, %v1405
        %v1407 = vsel %vm1393, %v1406, 0.0
        %1408 = vadd.xlane.f32.xlu0 %v1407
        %v1409 = vpop.xlane.xlu0 %1408
        %v1410 = vmul.f32 %v1409, %v1403
        %v1411 = vadd.f32 %v1410, 1e-05
        %v1412 = vrsqrt.pop %v1411
        %v1413 = vmul.f32 %v1412, %v1411
        %v1414 = vmul.f32 %v1413, %v1412
        %v1415 = vmul.f32 0.5, %v1414
        %v1416 = vsub.f32 1.5, %v1415
        %v1417 = vmul.f32 %v1412, %v1416
        %vm1418 = vweird.f32 %v1411
        %vm1419 = vweird.f32 %v1412
        %vm1420 = vmor %vm1418, %vm1419
        %v1421 = vsel %vm1420, %v1412, %v1417
        %v1422 = vmul.f32 %v1405, %v1421
        %v1424 = vperm.slane %v972, 0
        %v1426 = vmul.f32 %v1422, %v1424
        %v1428 = vperm.slane %v973, 0
        %v1430 = vadd.f32 %v1426, %v1428
        %v1432 = vperm.slane %v961, 0
        %v1435 = vsel %vm995, %v1430, 0
        %1437 = vmatpush.msra.mxu0 0.0
        %1438 = vmatpush.msra.mxu0 0.0
        %1439 = vmatpush.msra.mxu0 0.0
        %1440 = vmatpush.msra.mxu0 0.0
        %1441 = vmatpush.msra.mxu0 0.0
        %1442 = vmatpush.msra.mxu0 0.0
        %1443 = vmatpush.msra.mxu0 0.0
        %1444 = vmatpush.msra.mxu0 0.0
        %1445 = vmatpush.msra.mxu0 0.0
        %1446 = vmatpush.msra.mxu0 0.0
        %1447 = vmatpush.msra.mxu0 0.0
        %1448 = vmatpush.msra.mxu0 0.0
        %1449 = vmatpush.msra.mxu0 %v960
        %1450 = vmatpush.msra.mxu0 %v959
        %1451 = vmatpush.msra.mxu0 %v958
        %1452 = vmatpush.msra.mxu0 %v957
        %1453 = vmatmul.f32.gmra.mxu0 %v1435
        %v1454 = vpop.f32.mrf.mxu0
        %v1455 = vadd.f32 %v1432, %v1454
        %1456 = vdwg.mxu0
        %v1458 = vperm.slane %v966, 0
        %v1461 = vsel %vm995, %v940, 0
        %1463 = vmatpush.msra.mxu0 0.0
        %1464 = vmatpush.msra.mxu0 0.0
        %1465 = vmatpush.msra.mxu0 0.0
        %1466 = vmatpush.msra.mxu0 0.0
        %1467 = vmatpush.msra.mxu0 0.0
        %1468 = vmatpush.msra.mxu0 0.0
        %1469 = vmatpush.msra.mxu0 0.0
        %1470 = vmatpush.msra.mxu0 0.0
        %1471 = vmatpush.msra.mxu0 0.0
        %1472 = vmatpush.msra.mxu0 0.0
        %1473 = vmatpush.msra.mxu0 0.0
        %1474 = vmatpush.msra.mxu0 0.0
        %1475 = vmatpush.msra.mxu0 %v965
        %1476 = vmatpush.msra.mxu0 %v964
        %1477 = vmatpush.msra.mxu0 %v963
        %1478 = vmatpush.msra.mxu0 %v962
        %1479 = vmatmul.f32.gmra.mxu0 %v1461
        %v1480 = vpop.f32.mrf.mxu0
        %v1481 = vadd.f32 %v1458, %v1480
        %1482 = vdwg.mxu0
        %v1484 = vsel %vm1022, %v1455, 0
        %v1487 = vsel %vm1022, %v1481, 0
        %1489 = vmatpush.xpose.msra.mxu0 0.0
        %1490 = vmatpush.xpose.msra.mxu0 0.0
        %1491 = vmatpush.xpose.msra.mxu0 0.0
        %1492 = vmatpush.xpose.msra.mxu0 0.0
        %1493 = vmatpush.xpose.msra.mxu0 0.0
        %1494 = vmatpush.xpose.msra.mxu0 0.0
        %1495 = vmatpush.xpose.msra.mxu0 0.0
        %1496 = vmatpush.xpose.msra.mxu0 0.0
        %1497 = vmatpush.xpose.msra.mxu0 0.0
        %1498 = vmatpush.xpose.msra.mxu0 0.0
        %1499 = vmatpush.xpose.msra.mxu0 0.0
        %1500 = vmatpush.xpose.msra.mxu0 0.0
        %1501 = vmatpush.xpose.msra.mxu0 0.0
        %1502 = vmatpush.xpose.msra.mxu0 0.0
        %1503 = vmatpush.xpose.msra.mxu0 0.0
        %1504 = vmatpush.xpose.msra.mxu0 %v1487
        %1505 = vmatmul.f32.gmra.mxu0 %v1484
        %v1506 = vpop.f32.mrf.mxu0
        %v1507 = vadd.f32 0.0, %v1506
        %1508 = vdwg.mxu0
        %v1509 = vmul.f32 %v1507, 0.35355338
        %vm1510 = vcmask 12288
        %v1511 = vsel %vm1510, %v1509, -inf
        %1512 = vmax.xlane.f32.xlu0 %v1511
        %v1513 = vpop.xlane.xlu0 %1512
        %v1514 = vsub.f32 %v1509, %v1513
        %v1515 = vmul.f32 %v1514, 1.442695
        %v1516 = vpow.pop %v1515
        %v1517 = vsel %vm1510, %v1516, 0.0
        %1518 = vadd.xlane.f32.xlu0 %v1517
        %v1519 = vpop.xlane.xlu0 %1518
        %v1520 = vrcp.pop %v1519
        %v1521 = vmul.f32 %v1516, %v1520
        %1522 = vrot.lane.b32.xlu0 %v1481, 96
        %v1523 = vpop.permute.xlu0 %1522
        %vm1524 = vcmask 15360
        %v1526 = vsel %vm1524, %v1521, 0
        %vm1528 = vcmask 1041408
        %v1529 = vsel %vm1528, %v1523, 0
        %1531 = vmatpush.msra.mxu0 0.0
        %1532 = vmatpush.msra.mxu0 0.0
        %1533 = vmatpush.msra.mxu0 0.0
        %1534 = vmatpush.msra.mxu0 0.0
        %1535 = vmatpush.msra.mxu0 0.0
        %1536 = vmatpush.msra.mxu0 0.0
        %1537 = vmatpush.msra.mxu0 0.0
        %1538 = vmatpush.msra.mxu0 0.0
        %1539 = vmatpush.msra.mxu0 0.0
        %1540 = vmatpush.msra.mxu0 0.0
        %1541 = vmatpush.msra.mxu0 0.0
        %1542 = vmatpush.msra.mxu0 0.0
        %1543 = vmatpush.msra.mxu0 0.0
        %1544 = vmatpush.msra.mxu0 0.0
        %1545 = vmatpush.msra.mxu0 0.0
        %1546 = vmatpush.msra.mxu0 %v1529
        %1547 = vmatmul.f32.gmra.mxu0 %v1526
        %v1548 = vpop.f32.mrf.mxu0
        %v1549 = vadd.f32 0.0, %v1548
        %1550 = vdwg.mxu0
        %1551 = vrot.lane.b32.xlu0 %v1455, 120
        %v1552 = vpop.permute.xlu0 %1551
        %1553 = vrot.lane.b32.xlu0 %v1481, 120
        %v1554 = vpop.permute.xlu0 %1553
        %v1555 = vsel %vm1022, %v1552, 0
        %v1557 = vsel %vm1022, %v1554, 0
        %1559 = vmatpush.xpose.msra.mxu0 0.0
        %1560 = vmatpush.xpose.msra.mxu0 0.0
        %1561 = vmatpush.xpose.msra.mxu0 0.0
        %1562 = vmatpush.xpose.msra.mxu0 0.0
        %1563 = vmatpush.xpose.msra.mxu0 0.0
        %1564 = vmatpush.xpose.msra.mxu0 0.0
        %1565 = vmatpush.xpose.msra.mxu0 0.0
        %1566 = vmatpush.xpose.msra.mxu0 0.0
        %1567 = vmatpush.xpose.msra.mxu0 0.0
        %1568 = vmatpush.xpose.msra.mxu0 0.0
        %1569 = vmatpush.xpose.msra.mxu0 0.0
        %1570 = vmatpush.xpose.msra.mxu0 0.0
        %1571 = vmatpush.xpose.msra.mxu0 0.0
        %1572 = vmatpush.xpose.msra.mxu0 0.0
        %1573 = vmatpush.xpose.msra.mxu0 0.0
        %1574 = vmatpush.xpose.msra.mxu0 %v1557
        %1575 = vmatmul.f32.gmra.mxu0 %v1555
        %v1576 = vpop.f32.mrf.mxu0
        %v1577 = vadd.f32 0.0, %v1576
        %1578 = vdwg.mxu0
        %v1579 = vmul.f32 %v1577, 0.35355338
        %v1580 = vsel %vm1510, %v1579, -inf
        %1581 = vmax.xlane.f32.xlu0 %v1580
        %v1582 = vpop.xlane.xlu0 %1581
        %v1583 = vsub.f32 %v1579, %v1582
        %v1584 = vmul.f32 %v1583, 1.442695
        %v1585 = vpow.pop %v1584
        %v1586 = vsel %vm1510, %v1585, 0.0
        %1587 = vadd.xlane.f32.xlu0 %v1586
        %v1588 = vpop.xlane.xlu0 %1587
        %v1589 = vrcp.pop %v1588
        %v1590 = vmul.f32 %v1585, %v1589
        %1591 = vrot.lane.b32.xlu0 %v1481, 88
        %v1592 = vpop.permute.xlu0 %1591
        %v1594 = vsel %vm1524, %v1590, 0
        %v1596 = vsel %vm1528, %v1592, 0
        %1598 = vmatpush.msra.mxu0 0.0
        %1599 = vmatpush.msra.mxu0 0.0
        %1600 = vmatpush.msra.mxu0 0.0
        %1601 = vmatpush.msra.mxu0 0.0
        %1602 = vmatpush.msra.mxu0 0.0
        %1603 = vmatpush.msra.mxu0 0.0
        %1604 = vmatpush.msra.mxu0 0.0
        %1605 = vmatpush.msra.mxu0 0.0
        %1606 = vmatpush.msra.mxu0 0.0
        %1607 = vmatpush.msra.mxu0 0.0
        %1608 = vmatpush.msra.mxu0 0.0
        %1609 = vmatpush.msra.mxu0 0.0
        %1610 = vmatpush.msra.mxu0 0.0
        %1611 = vmatpush.msra.mxu0 0.0
        %1612 = vmatpush.msra.mxu0 0.0
        %1613 = vmatpush.msra.mxu0 %v1596
        %1614 = vmatmul.f32.gmra.mxu0 %v1594
        %v1615 = vpop.f32.mrf.mxu0
        %v1616 = vadd.f32 0.0, %v1615
        %1617 = vdwg.mxu0
        %v1619 = vsel %vm1022, %v1616, 0
        %1621 = vmatpush.msra.mxu0 0.0
        %1622 = vmatpush.msra.mxu0 0.0
        %1623 = vmatpush.msra.mxu0 0.0
        %1624 = vmatpush.msra.mxu0 0.0
        %1625 = vmatpush.msra.mxu0 0.0
        %1626 = vmatpush.msra.mxu0 0.0
        %1627 = vmatpush.msra.mxu0 0.0
        %1628 = vmatpush.msra.mxu0 0.0
        %1629 = vmatpush.msra.mxu0 0.0
        %1630 = vmatpush.msra.mxu0 0.0
        %1631 = vmatpush.msra.mxu0 0.0
        %1632 = vmatpush.msra.mxu0 0.0
        %1633 = vmatpush.msra.mxu0 0.0
        %1634 = vmatpush.msra.mxu0 0.0
        %1635 = vmatpush.msra.mxu0 0.0
        %1636 = vmatpush.msra.mxu0 %v968
        %1637 = vmatmul.f32.gmra.mxu0 %v1619
        %v1638 = vpop.f32.mrf.mxu0
        %v1639 = vadd.f32 0.0, %v1638
        %1640 = vdwg.mxu0
        %v1642 = vsel %vm1022, %v1549, 0
        %1644 = vmatpush.msra.mxu0 0.0
        %1645 = vmatpush.msra.mxu0 0.0
        %1646 = vmatpush.msra.mxu0 0.0
        %1647 = vmatpush.msra.mxu0 0.0
        %1648 = vmatpush.msra.mxu0 0.0
        %1649 = vmatpush.msra.mxu0 0.0
        %1650 = vmatpush.msra.mxu0 0.0
        %1651 = vmatpush.msra.mxu0 0.0
        %1652 = vmatpush.msra.mxu0 0.0
        %1653 = vmatpush.msra.mxu0 0.0
        %1654 = vmatpush.msra.mxu0 0.0
        %1655 = vmatpush.msra.mxu0 0.0
        %1656 = vmatpush.msra.mxu0 0.0
        %1657 = vmatpush.msra.mxu0 0.0
        %1658 = vmatpush.msra.mxu0 0.0
        %1659 = vmatpush.msra.mxu0 %v967
        %1660 = vmatmul.f32.gmra.mxu0 %v1642
        %v1661 = vpop.f32.mrf.mxu0
        %v1662 = vadd.f32 %v1639, %v1661
        %1663 = vdwg.mxu0
        %1664 = vrot.lane.b32.xlu0 %v1455, 112
        %v1665 = vpop.permute.xlu0 %1664
        %1666 = vrot.lane.b32.xlu0 %v1481, 112
        %v1667 = vpop.permute.xlu0 %1666
        %v1668 = vsel %vm1022, %v1665, 0
        %v1670 = vsel %vm1022, %v1667, 0
        %1672 = vmatpush.xpose.msra.mxu0 0.0
        %1673 = vmatpush.xpose.msra.mxu0 0.0
        %1674 = vmatpush.xpose.msra.mxu0 0.0
        %1675 = vmatpush.xpose.msra.mxu0 0.0
        %1676 = vmatpush.xpose.msra.mxu0 0.0
        %1677 = vmatpush.xpose.msra.mxu0 0.0
        %1678 = vmatpush.xpose.msra.mxu0 0.0
        %1679 = vmatpush.xpose.msra.mxu0 0.0
        %1680 = vmatpush.xpose.msra.mxu0 0.0
        %1681 = vmatpush.xpose.msra.mxu0 0.0
        %1682 = vmatpush.xpose.msra.mxu0 0.0
        %1683 = vmatpush.xpose.msra.mxu0 0.0
        %1684 = vmatpush.xpose.msra.mxu0 0.0
        %1685 = vmatpush.xpose.msra.mxu0 0.0
        %1686 = vmatpush.xpose.msra.mxu0 0.0
        %1687 = vmatpush.xpose.msra.mxu0 %v1670
        %1688 = vmatmul.f32.gmra.mxu0 %v1668
        %v1689 = vpop.f32.mrf.mxu0
        %v1690 = vadd.f32 0.0, %v1689
        %1691 = vdwg.mxu0
        %v1692 = vmul.f32 %v1690, 0.35355338
        %v1693 = vsel %vm1510, %v1692, -inf
        %1694 = vmax.xlane.f32.xlu0 %v1693
        %v1695 = vpop.xlane.xlu0 %1694
        %v1696 = vsub.f32 %v1692, %v1695
        %v1697 = vmul.f32 %v1696, 1.442695
        %v1698 = vpow.pop %v1697
        %v1699 = vsel %vm1510, %v1698, 0.0
        %1700 = vadd.xlane.f32.xlu0 %v1699
        %v1701 = vpop.xlane.xlu0 %1700
        %v1702 = vrcp.pop %v1701
        %v1703 = vmul.f32 %v1698, %v1702
        %1704 = vrot.lane.b32.xlu0 %v1481, 80
        %v1705 = vpop.permute.xlu0 %1704
        %v1707 = vsel %vm1524, %v1703, 0
        %v1709 = vsel %vm1528, %v1705, 0
        %1711 = vmatpush.msra.mxu0 0.0
        %1712 = vmatpush.msra.mxu0 0.0
        %1713 = vmatpush.msra.mxu0 0.0
        %1714 = vmatpush.msra.mxu0 0.0
        %1715 = vmatpush.msra.mxu0 0.0
        %1716 = vmatpush.msra.mxu0 0.0
        %1717 = vmatpush.msra.mxu0 0.0
        %1718 = vmatpush.msra.mxu0 0.0
        %1719 = vmatpush.msra.mxu0 0.0
        %1720 = vmatpush.msra.mxu0 0.0
        %1721 = vmatpush.msra.mxu0 0.0
        %1722 = vmatpush.msra.mxu0 0.0
        %1723 = vmatpush.msra.mxu0 0.0
        %1724 = vmatpush.msra.mxu0 0.0
        %1725 = vmatpush.msra.mxu0 0.0
        %1726 = vmatpush.msra.mxu0 %v1709
        %1727 = vmatmul.f32.gmra.mxu0 %v1707
        %v1728 = vpop.f32.mrf.mxu0
        %v1729 = vadd.f32 0.0, %v1728
        %1730 = vdwg.mxu0
        %v1732 = vsel %vm1022, %v1729, 0
        %1734 = vmatpush.msra.mxu0 0.0
        %1735 = vmatpush.msra.mxu0 0.0
        %1736 = vmatpush.msra.mxu0 0.0
        %1737 = vmatpush.msra.mxu0 0.0
        %1738 = vmatpush.msra.mxu0 0.0
        %1739 = vmatpush.msra.mxu0 0.0
        %1740 = vmatpush.msra.mxu0 0.0
        %1741 = vmatpush.msra.mxu0 0.0
        %1742 = vmatpush.msra.mxu0 0.0
        %1743 = vmatpush.msra.mxu0 0.0
        %1744 = vmatpush.msra.mxu0 0.0
        %1745 = vmatpush.msra.mxu0 0.0
        %1746 = vmatpush.msra.mxu0 0.0
        %1747 = vmatpush.msra.mxu0 0.0
        %1748 = vmatpush.msra.mxu0 0.0
        %1749 = vmatpush.msra.mxu0 %v969
        %1750 = vmatmul.f32.gmra.mxu0 %v1732
        %v1751 = vpop.f32.mrf.mxu0
        %v1752 = vadd.f32 0.0, %v1751
        %1753 = vdwg.mxu0
        %v1754 = vadd.f32 %v1662, %v1752
        %1755 = vrot.lane.b32.xlu0 %v1455, 104
        %v1756 = vpop.permute.xlu0 %1755
        %1757 = vrot.lane.b32.xlu0 %v1481, 104
        %v1758 = vpop.permute.xlu0 %1757
        %v1759 = vsel %vm1022, %v1756, 0
        %v1761 = vsel %vm1022, %v1758, 0
        %1763 = vmatpush.xpose.msra.mxu0 0.0
        %1764 = vmatpush.xpose.msra.mxu0 0.0
        %1765 = vmatpush.xpose.msra.mxu0 0.0
        %1766 = vmatpush.xpose.msra.mxu0 0.0
        %1767 = vmatpush.xpose.msra.mxu0 0.0
        %1768 = vmatpush.xpose.msra.mxu0 0.0
        %1769 = vmatpush.xpose.msra.mxu0 0.0
        %1770 = vmatpush.xpose.msra.mxu0 0.0
        %1771 = vmatpush.xpose.msra.mxu0 0.0
        %1772 = vmatpush.xpose.msra.mxu0 0.0
        %1773 = vmatpush.xpose.msra.mxu0 0.0
        %1774 = vmatpush.xpose.msra.mxu0 0.0
        %1775 = vmatpush.xpose.msra.mxu0 0.0
        %1776 = vmatpush.xpose.msra.mxu0 0.0
        %1777 = vmatpush.xpose.msra.mxu0 0.0
        %1778 = vmatpush.xpose.msra.mxu0 %v1761
        %1779 = vmatmul.f32.gmra.mxu0 %v1759
        %v1780 = vpop.f32.mrf.mxu0
        %v1781 = vadd.f32 0.0, %v1780
        %1782 = vdwg.mxu0
        %v1783 = vmul.f32 %v1781, 0.35355338
        %v1784 = vsel %vm1510, %v1783, -inf
        %1785 = vmax.xlane.f32.xlu0 %v1784
        %v1786 = vpop.xlane.xlu0 %1785
        %v1787 = vsub.f32 %v1783, %v1786
        %v1788 = vmul.f32 %v1787, 1.442695
        %v1789 = vpow.pop %v1788
        %v1790 = vsel %vm1510, %v1789, 0.0
        %1791 = vadd.xlane.f32.xlu0 %v1790
        %v1792 = vpop.xlane.xlu0 %1791
        %v1793 = vrcp.pop %v1792
        %v1794 = vmul.f32 %v1789, %v1793
        %1795 = vrot.lane.b32.xlu0 %v1481, 72
        %v1796 = vpop.permute.xlu0 %1795
        %v1798 = vsel %vm1524, %v1794, 0
        %v1800 = vsel %vm1528, %v1796, 0
        %1802 = vmatpush.msra.mxu0 0.0
        %1803 = vmatpush.msra.mxu0 0.0
        %1804 = vmatpush.msra.mxu0 0.0
        %1805 = vmatpush.msra.mxu0 0.0
        %1806 = vmatpush.msra.mxu0 0.0
        %1807 = vmatpush.msra.mxu0 0.0
        %1808 = vmatpush.msra.mxu0 0.0
        %1809 = vmatpush.msra.mxu0 0.0
        %1810 = vmatpush.msra.mxu0 0.0
        %1811 = vmatpush.msra.mxu0 0.0
        %1812 = vmatpush.msra.mxu0 0.0
        %1813 = vmatpush.msra.mxu0 0.0
        %1814 = vmatpush.msra.mxu0 0.0
        %1815 = vmatpush.msra.mxu0 0.0
        %1816 = vmatpush.msra.mxu0 0.0
        %1817 = vmatpush.msra.mxu0 %v1800
        %1818 = vmatmul.f32.gmra.mxu0 %v1798
        %v1819 = vpop.f32.mrf.mxu0
        %v1820 = vadd.f32 0.0, %v1819
        %1821 = vdwg.mxu0
        %v1823 = vsel %vm1022, %v1820, 0
        %1825 = vmatpush.msra.mxu0 0.0
        %1826 = vmatpush.msra.mxu0 0.0
        %1827 = vmatpush.msra.mxu0 0.0
        %1828 = vmatpush.msra.mxu0 0.0
        %1829 = vmatpush.msra.mxu0 0.0
        %1830 = vmatpush.msra.mxu0 0.0
        %1831 = vmatpush.msra.mxu0 0.0
        %1832 = vmatpush.msra.mxu0 0.0
        %1833 = vmatpush.msra.mxu0 0.0
        %1834 = vmatpush.msra.mxu0 0.0
        %1835 = vmatpush.msra.mxu0 0.0
        %1836 = vmatpush.msra.mxu0 0.0
        %1837 = vmatpush.msra.mxu0 0.0
        %1838 = vmatpush.msra.mxu0 0.0
        %1839 = vmatpush.msra.mxu0 0.0
        %1840 = vmatpush.msra.mxu0 %v970
        %1841 = vmatmul.f32.gmra.mxu0 %v1823
        %v1842 = vpop.f32.mrf.mxu0
        %v1843 = vadd.f32 0.0, %v1842
        %1844 = vdwg.mxu0
        %v1845 = vadd.f32 %v1754, %v1843
        %v1847 = vperm.slane %v971, 0
        %v1849 = vadd.f32 %v1845, %v1847
        %v1850 = vadd.f32 %v1430, %v1849
        %v1851 = vsel %vm1393, %v1850, 0.0
        %1852 = vadd.xlane.f32.xlu0 %v1851
        %v1853 = vpop.xlane.xlu0 %1852
        %v1854 = vmul.f32 %v1853, %v1403
        %v1855 = vsub.f32 %v1850, %v1854
        %v1856 = vmul.f32 %v1855, %v1855
        %v1857 = vsel %vm1393, %v1856, 0.0
        %1858 = vadd.xlane.f32.xlu0 %v1857
        %v1859 = vpop.xlane.xlu0 %1858
        %v1860 = vmul.f32 %v1859, %v1403
        %v1861 = vadd.f32 %v1860, 1e-05
        %v1862 = vrsqrt.pop %v1861
        %v1863 = vmul.f32 %v1862, %v1861
        %v1864 = vmul.f32 %v1863, %v1862
        %v1865 = vmul.f32 0.5, %v1864
        %v1866 = vsub.f32 1.5, %v1865
        %v1867 = vmul.f32 %v1862, %v1866
        %vm1868 = vweird.f32 %v1861
        %vm1869 = vweird.f32 %v1862
        %vm1870 = vmor %vm1868, %vm1869
        %v1871 = vsel %vm1870, %v1862, %v1867
        %v1872 = vmul.f32 %v1855, %v1871
        %v1874 = vperm.slane %v974, 0
        %v1876 = vmul.f32 %v1872, %v1874
        %v1878 = vperm.slane %v975, 0
        %v1880 = vadd.f32 %v1876, %v1878
        %v1882 = vperm.slane %v982, 0
        %v1885 = vsel %vm995, %v1880, 0
        %1887 = vmatpush.msra.mxu0 0.0
        %1888 = vmatpush.msra.mxu0 0.0
        %1889 = vmatpush.msra.mxu0 0.0
        %1890 = vmatpush.msra.mxu0 0.0
        %1891 = vmatpush.msra.mxu0 0.0
        %1892 = vmatpush.msra.mxu0 0.0
        %1893 = vmatpush.msra.mxu0 0.0
        %1894 = vmatpush.msra.mxu0 0.0
        %1895 = vmatpush.msra.mxu0 0.0
        %1896 = vmatpush.msra.mxu0 0.0
        %1897 = vmatpush.msra.mxu0 0.0
        %1898 = vmatpush.msra.mxu0 0.0
        %1899 = vmatpush.msra.mxu0 %v981
        %1900 = vmatpush.msra.mxu0 %v980
        %1901 = vmatpush.msra.mxu0 %v979
        %1902 = vmatpush.msra.mxu0 %v978
        %1903 = vmatmul.f32.gmra.mxu0 %v1885
        %v1904 = vpop.f32.mrf.mxu0
        %v1905 = vadd.f32 %v1882, %v1904
        %1906 = vdwg.mxu0
        %v1907 = vmax.f32 %v1905, 0.0
        %v1909 = vperm.slane %v991, 0
        %vm1911 = vcmask 523264
        %v1913 = vsel %vm1911, %v1907, 0
        %1915 = vmatpush.msra.mxu0 0.0
        %1916 = vmatpush.msra.mxu0 0.0
        %1917 = vmatpush.msra.mxu0 0.0
        %1918 = vmatpush.msra.mxu0 0.0
        %1919 = vmatpush.msra.mxu0 0.0
        %1920 = vmatpush.msra.mxu0 0.0
        %1921 = vmatpush.msra.mxu0 0.0
        %1922 = vmatpush.msra.mxu0 0.0
        %1923 = vmatpush.msra.mxu0 %v990
        %1924 = vmatpush.msra.mxu0 %v989
        %1925 = vmatpush.msra.mxu0 %v988
        %1926 = vmatpush.msra.mxu0 %v987
        %1927 = vmatpush.msra.mxu0 %v986
        %1928 = vmatpush.msra.mxu0 %v985
        %1929 = vmatpush.msra.mxu0 %v984
        %1930 = vmatpush.msra.mxu0 %v983
        %1931 = vmatmul.f32.gmra.mxu0 %v1913
        %v1932 = vpop.f32.mrf.mxu0
        %v1933 = vadd.f32 %v1909, %v1932
        %1934 = vdwg.mxu0
        %v1935 = vadd.f32 %v1880, %v1933
        %v1936 = vsel %vm1393, %v1935, 0.0
        %1937 = vadd.xlane.f32.xlu0 %v1936
        %v1938 = vpop.xlane.xlu0 %1937
        %v1939 = vmul.f32 %v1938, %v1403
        %v1940 = vsub.f32 %v1935, %v1939
        %v1941 = vmul.f32 %v1940, %v1940
        %v1942 = vsel %vm1393, %v1941, 0.0
        %1943 = vadd.xlane.f32.xlu0 %v1942
        %v1944 = vpop.xlane.xlu0 %1943
        %v1945 = vmul.f32 %v1944, %v1403
        %v1946 = vadd.f32 %v1945, 1e-05
        %v1947 = vrsqrt.pop %v1946
        %v1948 = vmul.f32 %v1947, %v1946
        %v1949 = vmul.f32 %v1948, %v1947
        %v1950 = vmul.f32 0.5, %v1949
        %v1951 = vsub.f32 1.5, %v1950
        %v1952 = vmul.f32 %v1947, %v1951
        %vm1953 = vweird.f32 %v1946
        %vm1954 = vweird.f32 %v1947
        %vm1955 = vmor %vm1953, %vm1954
        %v1956 = vsel %vm1955, %v1947, %v1952
        %v1957 = vmul.f32 %v1940, %v1956
        %v1959 = vperm.slane %v976, 0
        %v1961 = vmul.f32 %v1957, %v1959
        %v1963 = vperm.slane %v977, 0
        %v1965 = vadd.f32 %v1961, %v1963
        %s1966 = scalar_lea.vmem %s3, 32
        %v1967 = vld [vmem:[%s1966] sm:$0xff]
        %v1968 = vld [vmem:[%s1966 + $0x8] sm:$0xff]
        %v1969 = vld [vmem:[%s1966 + $0x10] sm:$0xff]
        %v1970 = vld [vmem:[%s1966 + $0x18] sm:$0xff]
        %s1971 = scalar_lea.vmem %s4, 1
        %v1972 = vld [vmem:[%s1971] sm:$0x1]
        %s1973 = scalar_lea.vmem %s5, 32
        %v1974 = vld [vmem:[%s1973] sm:$0xff]
        %v1975 = vld [vmem:[%s1973 + $0x8] sm:$0xff]
        %v1976 = vld [vmem:[%s1973 + $0x10] sm:$0xff]
        %v1977 = vld [vmem:[%s1973 + $0x18] sm:$0xff]
        %s1978 = scalar_lea.vmem [#allocation4], 1
        %v1979 = vld [vmem:[%s1978] sm:$0x1]
        %s1980 = scalar_lea.vmem %s7, 32
        %v1981 = vld [vmem:[%s1980] sm:$0xff]
        %v1982 = vld [vmem:[%s1980 + $0x8] sm:$0xff]
        %v1983 = vld [vmem:[%s1980 + $0x10] sm:$0xff]
        %v1984 = vld [vmem:[%s1980 + $0x18] sm:$0xff]
        %s1985 = scalar_lea.vmem %s8, 1
        %v1986 = vld [vmem:[%s1985] sm:$0x1]
        %s1987 = scalar_lea.vmem %s9, 32
        %v1988 = vld [vmem:[%s1987] sm:$0xff]
        %v1989 = vld [vmem:[%s1987 + $0x8] sm:$0xff]
        %v1990 = vld [vmem:[%s1987 + $0x10] sm:$0xff]
        %v1991 = vld [vmem:[%s1987 + $0x18] sm:$0xff]
        %s1992 = scalar_lea.vmem %s10, 1
        %v1993 = vld [vmem:[%s1992] sm:$0x1]
        %s1994 = scalar_lea.vmem [#allocation6], 32
        %v1995 = vld [vmem:[%s1994] sm:$0xff]
        %v1996 = vld [vmem:[%s1994 + $0x8] sm:$0xff]
        %v1997 = vld [vmem:[%s1994 + $0x10] sm:$0xff]
        %v1998 = vld [vmem:[%s1994 + $0x18] sm:$0xff]
        %s1999 = scalar_lea.vmem %s12, 1
        %v2000 = vld [vmem:[%s1999] sm:$0x1]
        %s2001 = scalar_lea.vmem [#allocation8], 1
        %v2002 = vld [vmem:[%s2001] sm:$0x1]
        %s2003 = scalar_lea.vmem [#allocation9], 1
        %v2004 = vld [vmem:[%s2003] sm:$0x1]
        %s2005 = scalar_lea.vmem [#allocation11], 1
        %v2006 = vld [vmem:[%s2005] sm:$0x1]
        %s2007 = scalar_lea.vmem [#allocation12], 1
        %v2008 = vld [vmem:[%s2007] sm:$0x1]
        %s2009 = scalar_lea.vmem [#allocation14], 1
        %v2010 = vld [vmem:[%s2009] sm:$0x1]
        %s2011 = scalar_lea.vmem [#allocation15], 1
        %v2012 = vld [vmem:[%s2011] sm:$0x1]
        %s2013 = scalar_lea.vmem [#allocation17], 32
        %v2014 = vld [vmem:[%s2013] sm:$0xff]
        %v2015 = vld [vmem:[%s2013 + $0x8] sm:$0xff]
        %v2016 = vld [vmem:[%s2013 + $0x10] sm:$0xff]
        %v2017 = vld [vmem:[%s2013 + $0x18] sm:$0xff]
        %s2018 = scalar_lea.vmem [#allocation18], 1
        %v2019 = vld [vmem:[%s2018] sm:$0x1]
        %s2020 = scalar_lea.vmem %s21, 64
        %v2021 = vld [vmem:[%s2020] sm:$0xff]
        %v2022 = vld [vmem:[%s2020 + $0x8] sm:$0xff]
        %v2023 = vld [vmem:[%s2020 + $0x10] sm:$0xff]
        %v2024 = vld [vmem:[%s2020 + $0x18] sm:$0xff]
        %v2025 = vld [vmem:[%s2020 + $0x20] sm:$0xff]
        %v2026 = vld [vmem:[%s2020 + $0x28] sm:$0xff]
        %v2027 = vld [vmem:[%s2020 + $0x30] sm:$0xff]
        %v2028 = vld [vmem:[%s2020 + $0x38] sm:$0xff]
        %s2029 = scalar_lea.vmem [#allocation20], 1
        %v2030 = vld [vmem:[%s2029] sm:$0x1]
        %v2032 = vperm.slane %v1972, 0
        %v2035 = vsel %vm995, %v1965, 0
        %2037 = vmatpush.msra.mxu0 0.0
        %2038 = vmatpush.msra.mxu0 0.0
        %2039 = vmatpush.msra.mxu0 0.0
        %2040 = vmatpush.msra.mxu0 0.0
        %2041 = vmatpush.msra.mxu0 0.0
        %2042 = vmatpush.msra.mxu0 0.0
        %2043 = vmatpush.msra.mxu0 0.0
        %2044 = vmatpush.msra.mxu0 0.0
        %2045 = vmatpush.msra.mxu0 0.0
        %2046 = vmatpush.msra.mxu0 0.0
        %2047 = vmatpush.msra.mxu0 0.0
        %2048 = vmatpush.msra.mxu0 0.0
        %2049 = vmatpush.msra.mxu0 %v1970
        %2050 = vmatpush.msra.mxu0 %v1969
        %2051 = vmatpush.msra.mxu0 %v1968
        %2052 = vmatpush.msra.mxu0 %v1967
        %2053 = vmatmul.f32.gmra.mxu0 %v2035
        %v2054 = vpop.f32.mrf.mxu0
        %v2055 = vadd.f32 %v2032, %v2054
        %2056 = vdwg.mxu0
        %2058 = vrot.lane.b32.xlu0 %v2055, 96
        %v2059 = vpop.permute.xlu0 %2058
        %v2060 = vsel %vm1022, %v2055, 0
        %v2062 = vsel %vm1022, %v2059, 0
        %2064 = vmatpush.xpose.msra.mxu0 0.0
        %2065 = vmatpush.xpose.msra.mxu0 0.0
        %2066 = vmatpush.xpose.msra.mxu0 0.0
        %2067 = vmatpush.xpose.msra.mxu0 0.0
        %2068 = vmatpush.xpose.msra.mxu0 0.0
        %2069 = vmatpush.xpose.msra.mxu0 0.0
        %2070 = vmatpush.xpose.msra.mxu0 0.0
        %2071 = vmatpush.xpose.msra.mxu0 0.0
        %2072 = vmatpush.xpose.msra.mxu0 0.0
        %2073 = vmatpush.xpose.msra.mxu0 0.0
        %2074 = vmatpush.xpose.msra.mxu0 0.0
        %2075 = vmatpush.xpose.msra.mxu0 0.0
        %2076 = vmatpush.xpose.msra.mxu0 0.0
        %2077 = vmatpush.xpose.msra.mxu0 0.0
        %2078 = vmatpush.xpose.msra.mxu0 0.0
        %2079 = vmatpush.xpose.msra.mxu0 %v2062
        %2080 = vmatmul.f32.gmra.mxu0 %v2060
        %v2081 = vpop.f32.mrf.mxu0
        %v2082 = vadd.f32 0.0, %v2081
        %2083 = vdwg.mxu0
        %v2084 = vmul.f32 %v2082, 0.35355338
        %v2085 = vadd.f32 %v2084, %v946
        %v2086 = vsel %vm1049, %v2085, -inf
        %2087 = vmax.xlane.f32.xlu0 %v2086
        %v2088 = vpop.xlane.xlu0 %2087
        %v2089 = vsub.f32 %v2085, %v2088
        %v2090 = vmul.f32 %v2089, 1.442695
        %v2091 = vpow.pop %v2090
        %v2092 = vsel %vm1049, %v2091, 0.0
        %2093 = vadd.xlane.f32.xlu0 %v2092
        %v2094 = vpop.xlane.xlu0 %2093
        %v2095 = vrcp.pop %v2094
        %v2096 = vmul.f32 %v2091, %v2095
        %2097 = vrot.lane.b32.xlu0 %v2055, 64
        %v2098 = vpop.permute.xlu0 %2097
        %v2100 = vsel %vm1063, %v2096, 0
        %v2102 = vsel %vm1067, %v2098, 0
        %2104 = vmatpush.msra.mxu0 0.0
        %2105 = vmatpush.msra.mxu0 0.0
        %2106 = vmatpush.msra.mxu0 0.0
        %2107 = vmatpush.msra.mxu0 0.0
        %2108 = vmatpush.msra.mxu0 0.0
        %2109 = vmatpush.msra.mxu0 0.0
        %2110 = vmatpush.msra.mxu0 0.0
        %2111 = vmatpush.msra.mxu0 0.0
        %2112 = vmatpush.msra.mxu0 0.0
        %2113 = vmatpush.msra.mxu0 0.0
        %2114 = vmatpush.msra.mxu0 0.0
        %2115 = vmatpush.msra.mxu0 0.0
        %2116 = vmatpush.msra.mxu0 0.0
        %2117 = vmatpush.msra.mxu0 0.0
        %2118 = vmatpush.msra.mxu0 0.0
        %2119 = vmatpush.msra.mxu0 %v2102
        %2120 = vmatmul.f32.gmra.mxu0 %v2100
        %v2121 = vpop.f32.mrf.mxu0
        %v2122 = vadd.f32 0.0, %v2121
        %2123 = vdwg.mxu0
        %2124 = vrot.lane.b32.xlu0 %v2055, 120
        %v2125 = vpop.permute.xlu0 %2124
        %2126 = vrot.lane.b32.xlu0 %v2055, 88
        %v2127 = vpop.permute.xlu0 %2126
        %v2128 = vsel %vm1022, %v2125, 0
        %v2130 = vsel %vm1022, %v2127, 0
        %2132 = vmatpush.xpose.msra.mxu0 0.0
        %2133 = vmatpush.xpose.msra.mxu0 0.0
        %2134 = vmatpush.xpose.msra.mxu0 0.0
        %2135 = vmatpush.xpose.msra.mxu0 0.0
        %2136 = vmatpush.xpose.msra.mxu0 0.0
        %2137 = vmatpush.xpose.msra.mxu0 0.0
        %2138 = vmatpush.xpose.msra.mxu0 0.0
        %2139 = vmatpush.xpose.msra.mxu0 0.0
        %2140 = vmatpush.xpose.msra.mxu0 0.0
        %2141 = vmatpush.xpose.msra.mxu0 0.0
        %2142 = vmatpush.xpose.msra.mxu0 0.0
        %2143 = vmatpush.xpose.msra.mxu0 0.0
        %2144 = vmatpush.xpose.msra.mxu0 0.0
        %2145 = vmatpush.xpose.msra.mxu0 0.0
        %2146 = vmatpush.xpose.msra.mxu0 0.0
        %2147 = vmatpush.xpose.msra.mxu0 %v2130
        %2148 = vmatmul.f32.gmra.mxu0 %v2128
        %v2149 = vpop.f32.mrf.mxu0
        %v2150 = vadd.f32 0.0, %v2149
        %2151 = vdwg.mxu0
        %v2152 = vmul.f32 %v2150, 0.35355338
        %v2153 = vadd.f32 %v2152, %v946
        %v2154 = vsel %vm1049, %v2153, -inf
        %2155 = vmax.xlane.f32.xlu0 %v2154
        %v2156 = vpop.xlane.xlu0 %2155
        %v2157 = vsub.f32 %v2153, %v2156
        %v2158 = vmul.f32 %v2157, 1.442695
        %v2159 = vpow.pop %v2158
        %v2160 = vsel %vm1049, %v2159, 0.0
        %2161 = vadd.xlane.f32.xlu0 %v2160
        %v2162 = vpop.xlane.xlu0 %2161
        %v2163 = vrcp.pop %v2162
        %v2164 = vmul.f32 %v2159, %v2163
        %2165 = vrot.lane.b32.xlu0 %v2055, 56
        %v2166 = vpop.permute.xlu0 %2165
        %v2168 = vsel %vm1063, %v2164, 0
        %v2170 = vsel %vm1067, %v2166, 0
        %2172 = vmatpush.msra.mxu0 0.0
        %2173 = vmatpush.msra.mxu0 0.0
        %2174 = vmatpush.msra.mxu0 0.0
        %2175 = vmatpush.msra.mxu0 0.0
        %2176 = vmatpush.msra.mxu0 0.0
        %2177 = vmatpush.msra.mxu0 0.0
        %2178 = vmatpush.msra.mxu0 0.0
        %2179 = vmatpush.msra.mxu0 0.0
        %2180 = vmatpush.msra.mxu0 0.0
        %2181 = vmatpush.msra.mxu0 0.0
        %2182 = vmatpush.msra.mxu0 0.0
        %2183 = vmatpush.msra.mxu0 0.0
        %2184 = vmatpush.msra.mxu0 0.0
        %2185 = vmatpush.msra.mxu0 0.0
        %2186 = vmatpush.msra.mxu0 0.0
        %2187 = vmatpush.msra.mxu0 %v2170
        %2188 = vmatmul.f32.gmra.mxu0 %v2168
        %v2189 = vpop.f32.mrf.mxu0
        %v2190 = vadd.f32 0.0, %v2189
        %2191 = vdwg.mxu0
        %v2193 = vsel %vm1022, %v2190, 0
        %2195 = vmatpush.msra.mxu0 0.0
        %2196 = vmatpush.msra.mxu0 0.0
        %2197 = vmatpush.msra.mxu0 0.0
        %2198 = vmatpush.msra.mxu0 0.0
        %2199 = vmatpush.msra.mxu0 0.0
        %2200 = vmatpush.msra.mxu0 0.0
        %2201 = vmatpush.msra.mxu0 0.0
        %2202 = vmatpush.msra.mxu0 0.0
        %2203 = vmatpush.msra.mxu0 0.0
        %2204 = vmatpush.msra.mxu0 0.0
        %2205 = vmatpush.msra.mxu0 0.0
        %2206 = vmatpush.msra.mxu0 0.0
        %2207 = vmatpush.msra.mxu0 0.0
        %2208 = vmatpush.msra.mxu0 0.0
        %2209 = vmatpush.msra.mxu0 0.0
        %2210 = vmatpush.msra.mxu0 %v1975
        %2211 = vmatmul.f32.gmra.mxu0 %v2193
        %v2212 = vpop.f32.mrf.mxu0
        %v2213 = vadd.f32 0.0, %v2212
        %2214 = vdwg.mxu0
        %v2216 = vsel %vm1022, %v2122, 0
        %2218 = vmatpush.msra.mxu0 0.0
        %2219 = vmatpush.msra.mxu0 0.0
        %2220 = vmatpush.msra.mxu0 0.0
        %2221 = vmatpush.msra.mxu0 0.0
        %2222 = vmatpush.msra.mxu0 0.0
        %2223 = vmatpush.msra.mxu0 0.0
        %2224 = vmatpush.msra.mxu0 0.0
        %2225 = vmatpush.msra.mxu0 0.0
        %2226 = vmatpush.msra.mxu0 0.0
        %2227 = vmatpush.msra.mxu0 0.0
        %2228 = vmatpush.msra.mxu0 0.0
        %2229 = vmatpush.msra.mxu0 0.0
        %2230 = vmatpush.msra.mxu0 0.0
        %2231 = vmatpush.msra.mxu0 0.0
        %2232 = vmatpush.msra.mxu0 0.0
        %2233 = vmatpush.msra.mxu0 %v1974
        %2234 = vmatmul.f32.gmra.mxu0 %v2216
        %v2235 = vpop.f32.mrf.mxu0
        %v2236 = vadd.f32 %v2213, %v2235
        %2237 = vdwg.mxu0
        %2238 = vrot.lane.b32.xlu0 %v2055, 112
        %v2239 = vpop.permute.xlu0 %2238
        %2240 = vrot.lane.b32.xlu0 %v2055, 80
        %v2241 = vpop.permute.xlu0 %2240
        %v2242 = vsel %vm1022, %v2239, 0
        %v2244 = vsel %vm1022, %v2241, 0
        %2246 = vmatpush.xpose.msra.mxu0 0.0
        %2247 = vmatpush.xpose.msra.mxu0 0.0
        %2248 = vmatpush.xpose.msra.mxu0 0.0
        %2249 = vmatpush.xpose.msra.mxu0 0.0
        %2250 = vmatpush.xpose.msra.mxu0 0.0
        %2251 = vmatpush.xpose.msra.mxu0 0.0
        %2252 = vmatpush.xpose.msra.mxu0 0.0
        %2253 = vmatpush.xpose.msra.mxu0 0.0
        %2254 = vmatpush.xpose.msra.mxu0 0.0
        %2255 = vmatpush.xpose.msra.mxu0 0.0
        %2256 = vmatpush.xpose.msra.mxu0 0.0
        %2257 = vmatpush.xpose.msra.mxu0 0.0
        %2258 = vmatpush.xpose.msra.mxu0 0.0
        %2259 = vmatpush.xpose.msra.mxu0 0.0
        %2260 = vmatpush.xpose.msra.mxu0 0.0
        %2261 = vmatpush.xpose.msra.mxu0 %v2244
        %2262 = vmatmul.f32.gmra.mxu0 %v2242
        %v2263 = vpop.f32.mrf.mxu0
        %v2264 = vadd.f32 0.0, %v2263
        %2265 = vdwg.mxu0
        %v2266 = vmul.f32 %v2264, 0.35355338
        %v2267 = vadd.f32 %v2266, %v946
        %v2268 = vsel %vm1049, %v2267, -inf
        %2269 = vmax.xlane.f32.xlu0 %v2268
        %v2270 = vpop.xlane.xlu0 %2269
        %v2271 = vsub.f32 %v2267, %v2270
        %v2272 = vmul.f32 %v2271, 1.442695
        %v2273 = vpow.pop %v2272
        %v2274 = vsel %vm1049, %v2273, 0.0
        %2275 = vadd.xlane.f32.xlu0 %v2274
        %v2276 = vpop.xlane.xlu0 %2275
        %v2277 = vrcp.pop %v2276
        %v2278 = vmul.f32 %v2273, %v2277
        %2279 = vrot.lane.b32.xlu0 %v2055, 48
        %v2280 = vpop.permute.xlu0 %2279
        %v2282 = vsel %vm1063, %v2278, 0
        %v2284 = vsel %vm1067, %v2280, 0
        %2286 = vmatpush.msra.mxu0 0.0
        %2287 = vmatpush.msra.mxu0 0.0
        %2288 = vmatpush.msra.mxu0 0.0
        %2289 = vmatpush.msra.mxu0 0.0
        %2290 = vmatpush.msra.mxu0 0.0
        %2291 = vmatpush.msra.mxu0 0.0
        %2292 = vmatpush.msra.mxu0 0.0
        %2293 = vmatpush.msra.mxu0 0.0
        %2294 = vmatpush.msra.mxu0 0.0
        %2295 = vmatpush.msra.mxu0 0.0
        %2296 = vmatpush.msra.mxu0 0.0
        %2297 = vmatpush.msra.mxu0 0.0
        %2298 = vmatpush.msra.mxu0 0.0
        %2299 = vmatpush.msra.mxu0 0.0
        %2300 = vmatpush.msra.mxu0 0.0
        %2301 = vmatpush.msra.mxu0 %v2284
        %2302 = vmatmul.f32.gmra.mxu0 %v2282
        %v2303 = vpop.f32.mrf.mxu0
        %v2304 = vadd.f32 0.0, %v2303
        %2305 = vdwg.mxu0
        %v2307 = vsel %vm1022, %v2304, 0
        %2309 = vmatpush.msra.mxu0 0.0
        %2310 = vmatpush.msra.mxu0 0.0
        %2311 = vmatpush.msra.mxu0 0.0
        %2312 = vmatpush.msra.mxu0 0.0
        %2313 = vmatpush.msra.mxu0 0.0
        %2314 = vmatpush.msra.mxu0 0.0
        %2315 = vmatpush.msra.mxu0 0.0
        %2316 = vmatpush.msra.mxu0 0.0
        %2317 = vmatpush.msra.mxu0 0.0
        %2318 = vmatpush.msra.mxu0 0.0
        %2319 = vmatpush.msra.mxu0 0.0
        %2320 = vmatpush.msra.mxu0 0.0
        %2321 = vmatpush.msra.mxu0 0.0
        %2322 = vmatpush.msra.mxu0 0.0
        %2323 = vmatpush.msra.mxu0 0.0
        %2324 = vmatpush.msra.mxu0 %v1976
        %2325 = vmatmul.f32.gmra.mxu0 %v2307
        %v2326 = vpop.f32.mrf.mxu0
        %v2327 = vadd.f32 0.0, %v2326
        %2328 = vdwg.mxu0
        %v2329 = vadd.f32 %v2236, %v2327
        %2330 = vrot.lane.b32.xlu0 %v2055, 104
        %v2331 = vpop.permute.xlu0 %2330
        %2332 = vrot.lane.b32.xlu0 %v2055, 72
        %v2333 = vpop.permute.xlu0 %2332
        %v2334 = vsel %vm1022, %v2331, 0
        %v2336 = vsel %vm1022, %v2333, 0
        %2338 = vmatpush.xpose.msra.mxu0 0.0
        %2339 = vmatpush.xpose.msra.mxu0 0.0
        %2340 = vmatpush.xpose.msra.mxu0 0.0
        %2341 = vmatpush.xpose.msra.mxu0 0.0
        %2342 = vmatpush.xpose.msra.mxu0 0.0
        %2343 = vmatpush.xpose.msra.mxu0 0.0
        %2344 = vmatpush.xpose.msra.mxu0 0.0
        %2345 = vmatpush.xpose.msra.mxu0 0.0
        %2346 = vmatpush.xpose.msra.mxu0 0.0
        %2347 = vmatpush.xpose.msra.mxu0 0.0
        %2348 = vmatpush.xpose.msra.mxu0 0.0
        %2349 = vmatpush.xpose.msra.mxu0 0.0
        %2350 = vmatpush.xpose.msra.mxu0 0.0
        %2351 = vmatpush.xpose.msra.mxu0 0.0
        %2352 = vmatpush.xpose.msra.mxu0 0.0
        %2353 = vmatpush.xpose.msra.mxu0 %v2336
        %2354 = vmatmul.f32.gmra.mxu0 %v2334
        %v2355 = vpop.f32.mrf.mxu0
        %v2356 = vadd.f32 0.0, %v2355
        %2357 = vdwg.mxu0
        %v2358 = vmul.f32 %v2356, 0.35355338
        %v2359 = vadd.f32 %v2358, %v946
        %v2360 = vsel %vm1049, %v2359, -inf
        %2361 = vmax.xlane.f32.xlu0 %v2360
        %v2362 = vpop.xlane.xlu0 %2361
        %v2363 = vsub.f32 %v2359, %v2362
        %v2364 = vmul.f32 %v2363, 1.442695
        %v2365 = vpow.pop %v2364
        %v2366 = vsel %vm1049, %v2365, 0.0
        %2367 = vadd.xlane.f32.xlu0 %v2366
        %v2368 = vpop.xlane.xlu0 %2367
        %v2369 = vrcp.pop %v2368
        %v2370 = vmul.f32 %v2365, %v2369
        %2371 = vrot.lane.b32.xlu0 %v2055, 40
        %v2372 = vpop.permute.xlu0 %2371
        %v2374 = vsel %vm1063, %v2370, 0
        %v2376 = vsel %vm1067, %v2372, 0
        %2378 = vmatpush.msra.mxu0 0.0
        %2379 = vmatpush.msra.mxu0 0.0
        %2380 = vmatpush.msra.mxu0 0.0
        %2381 = vmatpush.msra.mxu0 0.0
        %2382 = vmatpush.msra.mxu0 0.0
        %2383 = vmatpush.msra.mxu0 0.0
        %2384 = vmatpush.msra.mxu0 0.0
        %2385 = vmatpush.msra.mxu0 0.0
        %2386 = vmatpush.msra.mxu0 0.0
        %2387 = vmatpush.msra.mxu0 0.0
        %2388 = vmatpush.msra.mxu0 0.0
        %2389 = vmatpush.msra.mxu0 0.0
        %2390 = vmatpush.msra.mxu0 0.0
        %2391 = vmatpush.msra.mxu0 0.0
        %2392 = vmatpush.msra.mxu0 0.0
        %2393 = vmatpush.msra.mxu0 %v2376
        %2394 = vmatmul.f32.gmra.mxu0 %v2374
        %v2395 = vpop.f32.mrf.mxu0
        %v2396 = vadd.f32 0.0, %v2395
        %2397 = vdwg.mxu0
        %v2399 = vsel %vm1022, %v2396, 0
        %2401 = vmatpush.msra.mxu0 0.0
        %2402 = vmatpush.msra.mxu0 0.0
        %2403 = vmatpush.msra.mxu0 0.0
        %2404 = vmatpush.msra.mxu0 0.0
        %2405 = vmatpush.msra.mxu0 0.0
        %2406 = vmatpush.msra.mxu0 0.0
        %2407 = vmatpush.msra.mxu0 0.0
        %2408 = vmatpush.msra.mxu0 0.0
        %2409 = vmatpush.msra.mxu0 0.0
        %2410 = vmatpush.msra.mxu0 0.0
        %2411 = vmatpush.msra.mxu0 0.0
        %2412 = vmatpush.msra.mxu0 0.0
        %2413 = vmatpush.msra.mxu0 0.0
        %2414 = vmatpush.msra.mxu0 0.0
        %2415 = vmatpush.msra.mxu0 0.0
        %2416 = vmatpush.msra.mxu0 %v1977
        %2417 = vmatmul.f32.gmra.mxu0 %v2399
        %v2418 = vpop.f32.mrf.mxu0
        %v2419 = vadd.f32 0.0, %v2418
        %2420 = vdwg.mxu0
        %v2421 = vadd.f32 %v2329, %v2419
        %v2423 = vperm.slane %v1979, 0
        %v2425 = vadd.f32 %v2421, %v2423
        %v2426 = vadd.f32 %v1965, %v2425
        %v2427 = vsel %vm1393, %v2426, 0.0
        %2428 = vadd.xlane.f32.xlu0 %v2427
        %v2429 = vpop.xlane.xlu0 %2428
        %v2430 = vmul.f32 %v2429, %v1403
        %v2431 = vsub.f32 %v2426, %v2430
        %v2432 = vmul.f32 %v2431, %v2431
        %v2433 = vsel %vm1393, %v2432, 0.0
        %2434 = vadd.xlane.f32.xlu0 %v2433
        %v2435 = vpop.xlane.xlu0 %2434
        %v2436 = vmul.f32 %v2435, %v1403
        %v2437 = vadd.f32 %v2436, 1e-05
        %v2438 = vrsqrt.pop %v2437
        %v2439 = vmul.f32 %v2438, %v2437
        %v2440 = vmul.f32 %v2439, %v2438
        %v2441 = vmul.f32 0.5, %v2440
        %v2442 = vsub.f32 1.5, %v2441
        %v2443 = vmul.f32 %v2438, %v2442
        %vm2444 = vweird.f32 %v2437
        %vm2445 = vweird.f32 %v2438
        %vm2446 = vmor %vm2444, %vm2445
        %v2447 = vsel %vm2446, %v2438, %v2443
        %v2448 = vmul.f32 %v2431, %v2447
        %v2450 = vperm.slane %v2002, 0
        %v2452 = vmul.f32 %v2448, %v2450
        %v2454 = vperm.slane %v2004, 0
        %v2456 = vadd.f32 %v2452, %v2454
        %v2458 = vperm.slane %v1986, 0
        %v2461 = vsel %vm995, %v2456, 0
        %2463 = vmatpush.msra.mxu0 0.0
        %2464 = vmatpush.msra.mxu0 0.0
        %2465 = vmatpush.msra.mxu0 0.0
        %2466 = vmatpush.msra.mxu0 0.0
        %2467 = vmatpush.msra.mxu0 0.0
        %2468 = vmatpush.msra.mxu0 0.0
        %2469 = vmatpush.msra.mxu0 0.0
        %2470 = vmatpush.msra.mxu0 0.0
        %2471 = vmatpush.msra.mxu0 0.0
        %2472 = vmatpush.msra.mxu0 0.0
        %2473 = vmatpush.msra.mxu0 0.0
        %2474 = vmatpush.msra.mxu0 0.0
        %2475 = vmatpush.msra.mxu0 %v1984
        %2476 = vmatpush.msra.mxu0 %v1983
        %2477 = vmatpush.msra.mxu0 %v1982
        %2478 = vmatpush.msra.mxu0 %v1981
        %2479 = vmatmul.f32.gmra.mxu0 %v2461
        %v2480 = vpop.f32.mrf.mxu0
        %v2481 = vadd.f32 %v2458, %v2480
        %2482 = vdwg.mxu0
        %v2484 = vperm.slane %v1993, 0
        %2486 = vmatpush.msra.mxu0 0.0
        %2487 = vmatpush.msra.mxu0 0.0
        %2488 = vmatpush.msra.mxu0 0.0
        %2489 = vmatpush.msra.mxu0 0.0
        %2490 = vmatpush.msra.mxu0 0.0
        %2491 = vmatpush.msra.mxu0 0.0
        %2492 = vmatpush.msra.mxu0 0.0
        %2493 = vmatpush.msra.mxu0 0.0
        %2494 = vmatpush.msra.mxu0 0.0
        %2495 = vmatpush.msra.mxu0 0.0
        %2496 = vmatpush.msra.mxu0 0.0
        %2497 = vmatpush.msra.mxu0 0.0
        %2498 = vmatpush.msra.mxu0 %v1991
        %2499 = vmatpush.msra.mxu0 %v1990
        %2500 = vmatpush.msra.mxu0 %v1989
        %2501 = vmatpush.msra.mxu0 %v1988
        %2502 = vmatmul.f32.gmra.mxu0 %v1461
        %v2503 = vpop.f32.mrf.mxu0
        %v2504 = vadd.f32 %v2484, %v2503
        %2505 = vdwg.mxu0
        %v2507 = vsel %vm1022, %v2481, 0
        %v2510 = vsel %vm1022, %v2504, 0
        %2512 = vmatpush.xpose.msra.mxu0 0.0
        %2513 = vmatpush.xpose.msra.mxu0 0.0
        %2514 = vmatpush.xpose.msra.mxu0 0.0
        %2515 = vmatpush.xpose.msra.mxu0 0.0
        %2516 = vmatpush.xpose.msra.mxu0 0.0
        %2517 = vmatpush.xpose.msra.mxu0 0.0
        %2518 = vmatpush.xpose.msra.mxu0 0.0
        %2519 = vmatpush.xpose.msra.mxu0 0.0
        %2520 = vmatpush.xpose.msra.mxu0 0.0
        %2521 = vmatpush.xpose.msra.mxu0 0.0
        %2522 = vmatpush.xpose.msra.mxu0 0.0
        %2523 = vmatpush.xpose.msra.mxu0 0.0
        %2524 = vmatpush.xpose.msra.mxu0 0.0
        %2525 = vmatpush.xpose.msra.mxu0 0.0
        %2526 = vmatpush.xpose.msra.mxu0 0.0
        %2527 = vmatpush.xpose.msra.mxu0 %v2510
        %2528 = vmatmul.f32.gmra.mxu0 %v2507
        %v2529 = vpop.f32.mrf.mxu0
        %v2530 = vadd.f32 0.0, %v2529
        %2531 = vdwg.mxu0
        %v2532 = vmul.f32 %v2530, 0.35355338
        %v2533 = vsel %vm1510, %v2532, -inf
        %2534 = vmax.xlane.f32.xlu0 %v2533
        %v2535 = vpop.xlane.xlu0 %2534
        %v2536 = vsub.f32 %v2532, %v2535
        %v2537 = vmul.f32 %v2536, 1.442695
        %v2538 = vpow.pop %v2537
        %v2539 = vsel %vm1510, %v2538, 0.0
        %2540 = vadd.xlane.f32.xlu0 %v2539
        %v2541 = vpop.xlane.xlu0 %2540
        %v2542 = vrcp.pop %v2541
        %v2543 = vmul.f32 %v2538, %v2542
        %2544 = vrot.lane.b32.xlu0 %v2504, 96
        %v2545 = vpop.permute.xlu0 %2544
        %v2547 = vsel %vm1524, %v2543, 0
        %v2549 = vsel %vm1528, %v2545, 0
        %2551 = vmatpush.msra.mxu0 0.0
        %2552 = vmatpush.msra.mxu0 0.0
        %2553 = vmatpush.msra.mxu0 0.0
        %2554 = vmatpush.msra.mxu0 0.0
        %2555 = vmatpush.msra.mxu0 0.0
        %2556 = vmatpush.msra.mxu0 0.0
        %2557 = vmatpush.msra.mxu0 0.0
        %2558 = vmatpush.msra.mxu0 0.0
        %2559 = vmatpush.msra.mxu0 0.0
        %2560 = vmatpush.msra.mxu0 0.0
        %2561 = vmatpush.msra.mxu0 0.0
        %2562 = vmatpush.msra.mxu0 0.0
        %2563 = vmatpush.msra.mxu0 0.0
        %2564 = vmatpush.msra.mxu0 0.0
        %2565 = vmatpush.msra.mxu0 0.0
        %2566 = vmatpush.msra.mxu0 %v2549
        %2567 = vmatmul.f32.gmra.mxu0 %v2547
        %v2568 = vpop.f32.mrf.mxu0
        %v2569 = vadd.f32 0.0, %v2568
        %2570 = vdwg.mxu0
        %2571 = vrot.lane.b32.xlu0 %v2481, 120
        %v2572 = vpop.permute.xlu0 %2571
        %2573 = vrot.lane.b32.xlu0 %v2504, 120
        %v2574 = vpop.permute.xlu0 %2573
        %v2575 = vsel %vm1022, %v2572, 0
        %v2577 = vsel %vm1022, %v2574, 0
        %2579 = vmatpush.xpose.msra.mxu0 0.0
        %2580 = vmatpush.xpose.msra.mxu0 0.0
        %2581 = vmatpush.xpose.msra.mxu0 0.0
        %2582 = vmatpush.xpose.msra.mxu0 0.0
        %2583 = vmatpush.xpose.msra.mxu0 0.0
        %2584 = vmatpush.xpose.msra.mxu0 0.0
        %2585 = vmatpush.xpose.msra.mxu0 0.0
        %2586 = vmatpush.xpose.msra.mxu0 0.0
        %2587 = vmatpush.xpose.msra.mxu0 0.0
        %2588 = vmatpush.xpose.msra.mxu0 0.0
        %2589 = vmatpush.xpose.msra.mxu0 0.0
        %2590 = vmatpush.xpose.msra.mxu0 0.0
        %2591 = vmatpush.xpose.msra.mxu0 0.0
        %2592 = vmatpush.xpose.msra.mxu0 0.0
        %2593 = vmatpush.xpose.msra.mxu0 0.0
        %2594 = vmatpush.xpose.msra.mxu0 %v2577
        %2595 = vmatmul.f32.gmra.mxu0 %v2575
        %v2596 = vpop.f32.mrf.mxu0
        %v2597 = vadd.f32 0.0, %v2596
        %2598 = vdwg.mxu0
        %v2599 = vmul.f32 %v2597, 0.35355338
        %v2600 = vsel %vm1510, %v2599, -inf
        %2601 = vmax.xlane.f32.xlu0 %v2600
        %v2602 = vpop.xlane.xlu0 %2601
        %v2603 = vsub.f32 %v2599, %v2602
        %v2604 = vmul.f32 %v2603, 1.442695
        %v2605 = vpow.pop %v2604
        %v2606 = vsel %vm1510, %v2605, 0.0
        %2607 = vadd.xlane.f32.xlu0 %v2606
        %v2608 = vpop.xlane.xlu0 %2607
        %v2609 = vrcp.pop %v2608
        %v2610 = vmul.f32 %v2605, %v2609
        %2611 = vrot.lane.b32.xlu0 %v2504, 88
        %v2612 = vpop.permute.xlu0 %2611
        %v2614 = vsel %vm1524, %v2610, 0
        %v2616 = vsel %vm1528, %v2612, 0
        %2618 = vmatpush.msra.mxu0 0.0
        %2619 = vmatpush.msra.mxu0 0.0
        %2620 = vmatpush.msra.mxu0 0.0
        %2621 = vmatpush.msra.mxu0 0.0
        %2622 = vmatpush.msra.mxu0 0.0
        %2623 = vmatpush.msra.mxu0 0.0
        %2624 = vmatpush.msra.mxu0 0.0
        %2625 = vmatpush.msra.mxu0 0.0
        %2626 = vmatpush.msra.mxu0 0.0
        %2627 = vmatpush.msra.mxu0 0.0
        %2628 = vmatpush.msra.mxu0 0.0
        %2629 = vmatpush.msra.mxu0 0.0
        %2630 = vmatpush.msra.mxu0 0.0
        %2631 = vmatpush.msra.mxu0 0.0
        %2632 = vmatpush.msra.mxu0 0.0
        %2633 = vmatpush.msra.mxu0 %v2616
        %2634 = vmatmul.f32.gmra.mxu0 %v2614
        %v2635 = vpop.f32.mrf.mxu0
        %v2636 = vadd.f32 0.0, %v2635
        %2637 = vdwg.mxu0
        %v2639 = vsel %vm1022, %v2636, 0
        %2641 = vmatpush.msra.mxu0 0.0
        %2642 = vmatpush.msra.mxu0 0.0
        %2643 = vmatpush.msra.mxu0 0.0
        %2644 = vmatpush.msra.mxu0 0.0
        %2645 = vmatpush.msra.mxu0 0.0
        %2646 = vmatpush.msra.mxu0 0.0
        %2647 = vmatpush.msra.mxu0 0.0
        %2648 = vmatpush.msra.mxu0 0.0
        %2649 = vmatpush.msra.mxu0 0.0
        %2650 = vmatpush.msra.mxu0 0.0
        %2651 = vmatpush.msra.mxu0 0.0
        %2652 = vmatpush.msra.mxu0 0.0
        %2653 = vmatpush.msra.mxu0 0.0
        %2654 = vmatpush.msra.mxu0 0.0
        %2655 = vmatpush.msra.mxu0 0.0
        %2656 = vmatpush.msra.mxu0 %v1996
        %2657 = vmatmul.f32.gmra.mxu0 %v2639
        %v2658 = vpop.f32.mrf.mxu0
        %v2659 = vadd.f32 0.0, %v2658
        %2660 = vdwg.mxu0
        %v2662 = vsel %vm1022, %v2569, 0
        %2664 = vmatpush.msra.mxu0 0.0
        %2665 = vmatpush.msra.mxu0 0.0
        %2666 = vmatpush.msra.mxu0 0.0
        %2667 = vmatpush.msra.mxu0 0.0
        %2668 = vmatpush.msra.mxu0 0.0
        %2669 = vmatpush.msra.mxu0 0.0
        %2670 = vmatpush.msra.mxu0 0.0
        %2671 = vmatpush.msra.mxu0 0.0
        %2672 = vmatpush.msra.mxu0 0.0
        %2673 = vmatpush.msra.mxu0 0.0
        %2674 = vmatpush.msra.mxu0 0.0
        %2675 = vmatpush.msra.mxu0 0.0
        %2676 = vmatpush.msra.mxu0 0.0
        %2677 = vmatpush.msra.mxu0 0.0
        %2678 = vmatpush.msra.mxu0 0.0
        %2679 = vmatpush.msra.mxu0 %v1995
        %2680 = vmatmul.f32.gmra.mxu0 %v2662
        %v2681 = vpop.f32.mrf.mxu0
        %v2682 = vadd.f32 %v2659, %v2681
        %2683 = vdwg.mxu0
        %2684 = vrot.lane.b32.xlu0 %v2481, 112
        %v2685 = vpop.permute.xlu0 %2684
        %2686 = vrot.lane.b32.xlu0 %v2504, 112
        %v2687 = vpop.permute.xlu0 %2686
        %v2688 = vsel %vm1022, %v2685, 0
        %v2690 = vsel %vm1022, %v2687, 0
        %2692 = vmatpush.xpose.msra.mxu0 0.0
        %2693 = vmatpush.xpose.msra.mxu0 0.0
        %2694 = vmatpush.xpose.msra.mxu0 0.0
        %2695 = vmatpush.xpose.msra.mxu0 0.0
        %2696 = vmatpush.xpose.msra.mxu0 0.0
        %2697 = vmatpush.xpose.msra.mxu0 0.0
        %2698 = vmatpush.xpose.msra.mxu0 0.0
        %2699 = vmatpush.xpose.msra.mxu0 0.0
        %2700 = vmatpush.xpose.msra.mxu0 0.0
        %2701 = vmatpush.xpose.msra.mxu0 0.0
        %2702 = vmatpush.xpose.msra.mxu0 0.0
        %2703 = vmatpush.xpose.msra.mxu0 0.0
        %2704 = vmatpush.xpose.msra.mxu0 0.0
        %2705 = vmatpush.xpose.msra.mxu0 0.0
        %2706 = vmatpush.xpose.msra.mxu0 0.0
        %2707 = vmatpush.xpose.msra.mxu0 %v2690
        %2708 = vmatmul.f32.gmra.mxu0 %v2688
        %v2709 = vpop.f32.mrf.mxu0
        %v2710 = vadd.f32 0.0, %v2709
        %2711 = vdwg.mxu0
        %v2712 = vmul.f32 %v2710, 0.35355338
        %v2713 = vsel %vm1510, %v2712, -inf
        %2714 = vmax.xlane.f32.xlu0 %v2713
        %v2715 = vpop.xlane.xlu0 %2714
        %v2716 = vsub.f32 %v2712, %v2715
        %v2717 = vmul.f32 %v2716, 1.442695
        %v2718 = vpow.pop %v2717
        %v2719 = vsel %vm1510, %v2718, 0.0
        %2720 = vadd.xlane.f32.xlu0 %v2719
        %v2721 = vpop.xlane.xlu0 %2720
        %v2722 = vrcp.pop %v2721
        %v2723 = vmul.f32 %v2718, %v2722
        %2724 = vrot.lane.b32.xlu0 %v2504, 80
        %v2725 = vpop.permute.xlu0 %2724
        %v2727 = vsel %vm1524, %v2723, 0
        %v2729 = vsel %vm1528, %v2725, 0
        %2731 = vmatpush.msra.mxu0 0.0
        %2732 = vmatpush.msra.mxu0 0.0
        %2733 = vmatpush.msra.mxu0 0.0
        %2734 = vmatpush.msra.mxu0 0.0
        %2735 = vmatpush.msra.mxu0 0.0
        %2736 = vmatpush.msra.mxu0 0.0
        %2737 = vmatpush.msra.mxu0 0.0
        %2738 = vmatpush.msra.mxu0 0.0
        %2739 = vmatpush.msra.mxu0 0.0
        %2740 = vmatpush.msra.mxu0 0.0
        %2741 = vmatpush.msra.mxu0 0.0
        %2742 = vmatpush.msra.mxu0 0.0
        %2743 = vmatpush.msra.mxu0 0.0
        %2744 = vmatpush.msra.mxu0 0.0
        %2745 = vmatpush.msra.mxu0 0.0
        %2746 = vmatpush.msra.mxu0 %v2729
        %2747 = vmatmul.f32.gmra.mxu0 %v2727
        %v2748 = vpop.f32.mrf.mxu0
        %v2749 = vadd.f32 0.0, %v2748
        %2750 = vdwg.mxu0
        %v2752 = vsel %vm1022, %v2749, 0
        %2754 = vmatpush.msra.mxu0 0.0
        %2755 = vmatpush.msra.mxu0 0.0
        %2756 = vmatpush.msra.mxu0 0.0
        %2757 = vmatpush.msra.mxu0 0.0
        %2758 = vmatpush.msra.mxu0 0.0
        %2759 = vmatpush.msra.mxu0 0.0
        %2760 = vmatpush.msra.mxu0 0.0
        %2761 = vmatpush.msra.mxu0 0.0
        %2762 = vmatpush.msra.mxu0 0.0
        %2763 = vmatpush.msra.mxu0 0.0
        %2764 = vmatpush.msra.mxu0 0.0
        %2765 = vmatpush.msra.mxu0 0.0
        %2766 = vmatpush.msra.mxu0 0.0
        %2767 = vmatpush.msra.mxu0 0.0
        %2768 = vmatpush.msra.mxu0 0.0
        %2769 = vmatpush.msra.mxu0 %v1997
        %2770 = vmatmul.f32.gmra.mxu0 %v2752
        %v2771 = vpop.f32.mrf.mxu0
        %v2772 = vadd.f32 0.0, %v2771
        %2773 = vdwg.mxu0
        %v2774 = vadd.f32 %v2682, %v2772
        %2775 = vrot.lane.b32.xlu0 %v2481, 104
        %v2776 = vpop.permute.xlu0 %2775
        %2777 = vrot.lane.b32.xlu0 %v2504, 104
        %v2778 = vpop.permute.xlu0 %2777
        %v2779 = vsel %vm1022, %v2776, 0
        %v2781 = vsel %vm1022, %v2778, 0
        %2783 = vmatpush.xpose.msra.mxu0 0.0
        %2784 = vmatpush.xpose.msra.mxu0 0.0
        %2785 = vmatpush.xpose.msra.mxu0 0.0
        %2786 = vmatpush.xpose.msra.mxu0 0.0
        %2787 = vmatpush.xpose.msra.mxu0 0.0
        %2788 = vmatpush.xpose.msra.mxu0 0.0
        %2789 = vmatpush.xpose.msra.mxu0 0.0
        %2790 = vmatpush.xpose.msra.mxu0 0.0
        %2791 = vmatpush.xpose.msra.mxu0 0.0
        %2792 = vmatpush.xpose.msra.mxu0 0.0
        %2793 = vmatpush.xpose.msra.mxu0 0.0
        %2794 = vmatpush.xpose.msra.mxu0 0.0
        %2795 = vmatpush.xpose.msra.mxu0 0.0
        %2796 = vmatpush.xpose.msra.mxu0 0.0
        %2797 = vmatpush.xpose.msra.mxu0 0.0
        %2798 = vmatpush.xpose.msra.mxu0 %v2781
        %2799 = vmatmul.f32.gmra.mxu0 %v2779
        %v2800 = vpop.f32.mrf.mxu0
        %v2801 = vadd.f32 0.0, %v2800
        %2802 = vdwg.mxu0
        %v2803 = vmul.f32 %v2801, 0.35355338
        %v2804 = vsel %vm1510, %v2803, -inf
        %2805 = vmax.xlane.f32.xlu0 %v2804
        %v2806 = vpop.xlane.xlu0 %2805
        %v2807 = vsub.f32 %v2803, %v2806
        %v2808 = vmul.f32 %v2807, 1.442695
        %v2809 = vpow.pop %v2808
        %v2810 = vsel %vm1510, %v2809, 0.0
        %2811 = vadd.xlane.f32.xlu0 %v2810
        %v2812 = vpop.xlane.xlu0 %2811
        %v2813 = vrcp.pop %v2812
        %v2814 = vmul.f32 %v2809, %v2813
        %2815 = vrot.lane.b32.xlu0 %v2504, 72
        %v2816 = vpop.permute.xlu0 %2815
        %v2818 = vsel %vm1524, %v2814, 0
        %v2820 = vsel %vm1528, %v2816, 0
        %2822 = vmatpush.msra.mxu0 0.0
        %2823 = vmatpush.msra.mxu0 0.0
        %2824 = vmatpush.msra.mxu0 0.0
        %2825 = vmatpush.msra.mxu0 0.0
        %2826 = vmatpush.msra.mxu0 0.0
        %2827 = vmatpush.msra.mxu0 0.0
        %2828 = vmatpush.msra.mxu0 0.0
        %2829 = vmatpush.msra.mxu0 0.0
        %2830 = vmatpush.msra.mxu0 0.0
        %2831 = vmatpush.msra.mxu0 0.0
        %2832 = vmatpush.msra.mxu0 0.0
        %2833 = vmatpush.msra.mxu0 0.0
        %2834 = vmatpush.msra.mxu0 0.0
        %2835 = vmatpush.msra.mxu0 0.0
        %2836 = vmatpush.msra.mxu0 0.0
        %2837 = vmatpush.msra.mxu0 %v2820
        %2838 = vmatmul.f32.gmra.mxu0 %v2818
        %v2839 = vpop.f32.mrf.mxu0
        %v2840 = vadd.f32 0.0, %v2839
        %2841 = vdwg.mxu0
        %v2843 = vsel %vm1022, %v2840, 0
        %2845 = vmatpush.msra.mxu0 0.0
        %2846 = vmatpush.msra.mxu0 0.0
        %2847 = vmatpush.msra.mxu0 0.0
        %2848 = vmatpush.msra.mxu0 0.0
        %2849 = vmatpush.msra.mxu0 0.0
        %2850 = vmatpush.msra.mxu0 0.0
        %2851 = vmatpush.msra.mxu0 0.0
        %2852 = vmatpush.msra.mxu0 0.0
        %2853 = vmatpush.msra.mxu0 0.0
        %2854 = vmatpush.msra.mxu0 0.0
        %2855 = vmatpush.msra.mxu0 0.0
        %2856 = vmatpush.msra.mxu0 0.0
        %2857 = vmatpush.msra.mxu0 0.0
        %2858 = vmatpush.msra.mxu0 0.0
        %2859 = vmatpush.msra.mxu0 0.0
        %2860 = vmatpush.msra.mxu0 %v1998
        %2861 = vmatmul.f32.gmra.mxu0 %v2843
        %v2862 = vpop.f32.mrf.mxu0
        %v2863 = vadd.f32 0.0, %v2862
        %2864 = vdwg.mxu0
        %v2865 = vadd.f32 %v2774, %v2863
        %v2867 = vperm.slane %v2000, 0
        %v2869 = vadd.f32 %v2865, %v2867
        %v2870 = vadd.f32 %v2456, %v2869
        %v2871 = vsel %vm1393, %v2870, 0.0
        %2872 = vadd.xlane.f32.xlu0 %v2871
        %v2873 = vpop.xlane.xlu0 %2872
        %v2874 = vmul.f32 %v2873, %v1403
        %v2875 = vsub.f32 %v2870, %v2874
        %v2876 = vmul.f32 %v2875, %v2875
        %v2877 = vsel %vm1393, %v2876, 0.0
        %2878 = vadd.xlane.f32.xlu0 %v2877
        %v2879 = vpop.xlane.xlu0 %2878
        %v2880 = vmul.f32 %v2879, %v1403
        %v2881 = vadd.f32 %v2880, 1e-05
        %v2882 = vrsqrt.pop %v2881
        %v2883 = vmul.f32 %v2882, %v2881
        %v2884 = vmul.f32 %v2883, %v2882
        %v2885 = vmul.f32 0.5, %v2884
        %v2886 = vsub.f32 1.5, %v2885
        %v2887 = vmul.f32 %v2882, %v2886
        %vm2888 = vweird.f32 %v2881
        %vm2889 = vweird.f32 %v2882
        %vm2890 = vmor %vm2888, %vm2889
        %v2891 = vsel %vm2890, %v2882, %v2887
        %v2892 = vmul.f32 %v2875, %v2891
        %v2894 = vperm.slane %v2006, 0
        %v2896 = vmul.f32 %v2892, %v2894
        %v2898 = vperm.slane %v2008, 0
        %v2900 = vadd.f32 %v2896, %v2898
        %v2902 = vperm.slane %v2019, 0
        %v2905 = vsel %vm995, %v2900, 0
        %2907 = vmatpush.msra.mxu0 0.0
        %2908 = vmatpush.msra.mxu0 0.0
        %2909 = vmatpush.msra.mxu0 0.0
        %2910 = vmatpush.msra.mxu0 0.0
        %2911 = vmatpush.msra.mxu0 0.0
        %2912 = vmatpush.msra.mxu0 0.0
        %2913 = vmatpush.msra.mxu0 0.0
        %2914 = vmatpush.msra.mxu0 0.0
        %2915 = vmatpush.msra.mxu0 0.0
        %2916 = vmatpush.msra.mxu0 0.0
        %2917 = vmatpush.msra.mxu0 0.0
        %2918 = vmatpush.msra.mxu0 0.0
        %2919 = vmatpush.msra.mxu0 %v2017
        %2920 = vmatpush.msra.mxu0 %v2016
        %2921 = vmatpush.msra.mxu0 %v2015
        %2922 = vmatpush.msra.mxu0 %v2014
        %2923 = vmatmul.f32.gmra.mxu0 %v2905
        %v2924 = vpop.f32.mrf.mxu0
        %v2925 = vadd.f32 %v2902, %v2924
        %2926 = vdwg.mxu0
        %v2927 = vmax.f32 %v2925, 0.0
        %v2929 = vperm.slane %v2030, 0
        %v2932 = vsel %vm1911, %v2927, 0
        %2934 = vmatpush.msra.mxu0 0.0
        %2935 = vmatpush.msra.mxu0 0.0
        %2936 = vmatpush.msra.mxu0 0.0
        %2937 = vmatpush.msra.mxu0 0.0
        %2938 = vmatpush.msra.mxu0 0.0
        %2939 = vmatpush.msra.mxu0 0.0
        %2940 = vmatpush.msra.mxu0 0.0
        %2941 = vmatpush.msra.mxu0 0.0
        %2942 = vmatpush.msra.mxu0 %v2028
        %2943 = vmatpush.msra.mxu0 %v2027
        %2944 = vmatpush.msra.mxu0 %v2026
        %2945 = vmatpush.msra.mxu0 %v2025
        %2946 = vmatpush.msra.mxu0 %v2024
        %2947 = vmatpush.msra.mxu0 %v2023
        %2948 = vmatpush.msra.mxu0 %v2022
        %2949 = vmatpush.msra.mxu0 %v2021
        %2950 = vmatmul.f32.gmra.mxu0 %v2932
        %v2951 = vpop.f32.mrf.mxu0
        %v2952 = vadd.f32 %v2929, %v2951
        %2953 = vdwg.mxu0
        %v2954 = vadd.f32 %v2900, %v2952
        %v2955 = vsel %vm1393, %v2954, 0.0
        %2956 = vadd.xlane.f32.xlu0 %v2955
        %v2957 = vpop.xlane.xlu0 %2956
        %v2958 = vmul.f32 %v2957, %v1403
        %v2959 = vsub.f32 %v2954, %v2958
        %v2960 = vmul.f32 %v2959, %v2959
        %v2961 = vsel %vm1393, %v2960, 0.0
        %2962 = vadd.xlane.f32.xlu0 %v2961
        %v2963 = vpop.xlane.xlu0 %2962
        %v2964 = vmul.f32 %v2963, %v1403
        %v2965 = vadd.f32 %v2964, 1e-05
        %v2966 = vrsqrt.pop %v2965
        %v2967 = vmul.f32 %v2966, %v2965
        %v2968 = vmul.f32 %v2967, %v2966
        %v2969 = vmul.f32 0.5, %v2968
        %v2970 = vsub.f32 1.5, %v2969
        %v2971 = vmul.f32 %v2966, %v2970
        %vm2972 = vweird.f32 %v2965
        %vm2973 = vweird.f32 %v2966
        %vm2974 = vmor %vm2972, %vm2973
        %v2975 = vsel %vm2974, %v2966, %v2971
        %v2976 = vmul.f32 %v2959, %v2975
        %v2978 = vperm.slane %v2010, 0
        %v2980 = vmul.f32 %v2976, %v2978
        %v2982 = vperm.slane %v2012, 0
        %v2984 = vadd.f32 %v2980, %v2982
        %v2985 = vld [vmem:[%s23] sm:$0xff]
        %v2986 = vld [vmem:[%s23 + $0x8] sm:$0xff]
        %v2987 = vld [vmem:[%s23 + $0x10] sm:$0xff]
        %v2988 = vld [vmem:[%s23 + $0x18] sm:$0xff]
        %v2989 = vld [vmem:[#allocation21] sm:$0x1]
        %v2991 = vperm.slane %v2989, 0
        %v2994 = vsel %vm995, %v2984, 0
        %2996 = vmatpush.msra.mxu0 0.0
        %2997 = vmatpush.msra.mxu0 0.0
        %2998 = vmatpush.msra.mxu0 0.0
        %2999 = vmatpush.msra.mxu0 0.0
        %3000 = vmatpush.msra.mxu0 0.0
        %3001 = vmatpush.msra.mxu0 0.0
        %3002 = vmatpush.msra.mxu0 0.0
        %3003 = vmatpush.msra.mxu0 0.0
        %3004 = vmatpush.msra.mxu0 0.0
        %3005 = vmatpush.msra.mxu0 0.0
        %3006 = vmatpush.msra.mxu0 0.0
        %3007 = vmatpush.msra.mxu0 0.0
        %3008 = vmatpush.msra.mxu0 %v2988
        %3009 = vmatpush.msra.mxu0 %v2987
        %3010 = vmatpush.msra.mxu0 %v2986
        %3011 = vmatpush.msra.mxu0 %v2985
        %3012 = vmatmul.f32.gmra.mxu0 %v2994
        %v3013 = vpop.f32.mrf.mxu0
        %v3014 = vadd.f32 %v2991, %v3013
        %3015 = vdwg.mxu0
        %v3016 = vlaneseq
        %v3017 = vshrl.u32 %v3016, 7
        %vm3018 = vcmp.ge.s32.totalorder %v3017, %v944
        %v3019 = vsel %vm3018, 0.0, %v3014
        %vm3020 = vcmask 126976
        %3021 = vst.msk [vmem:[%s938] sm:$0x1f] %vm3020, %v3019
        %p3022 = scmp.lt.s32.totalorder %s51, 1
        %s3023 = scalar_select %p3022, %s51, 1
        %s3024 = smul.addr %s3023, 8
        %s3025 = scalar_lea.vmem %s25, %s3024
        // Predicated region
        $region165: #{kfuvae_forward.3} parent=115 // pred_check
          %p3026 = pneg %p578
        $region166: #{kfuvae_forward.3} parent=115 // pred_check_branch
          %3028 = sbr.rel (%p3026) target = $region168
        $region167: #{kfuvae_forward.3} parent=115 // pred_region
          _
        $region168: #{kfuvae_forward.3} parent=115 // pred_fallthru
          _
      $region116: #{kfuvae_forward.3} parent=5 // pred_fallthru
        _
      %p3029 = scmp.le.s32.totalorder 2, %s46
      // Predicated region
      $region169: #{kfuvae_forward.3} parent=5 // pred_check
        %p3030 = pneg %p3029
      $region170: #{kfuvae_forward.3} parent=5 // pred_check_branch
        %3032 = sbr.rel (%p3030) target = $region172
      $region171: #{kfuvae_forward.3} parent=5 // pred_region
        %s3033 = ssub.s32 %s46, 2
        // Predicated region
        $region173: #{kfuvae_forward.3} parent=171 // pred_check
          %p3034 = pneg %p584
        $region174: #{kfuvae_forward.3} parent=171 // pred_check_branch
          %3036 = sbr.rel (%p3034) target = $region176
        $region175: #{kfuvae_forward.3} parent=171 // pred_region
          %p3037 = scmp.lt.s32.totalorder %s52, 1
          %s3038 = scalar_select %p3037, %s52, 1
          %s3039 = smul.addr %s3038, 8
          %s3040 = scalar_lea.vmem %s25, %s3039
        $region176: #{kfuvae_forward.3} parent=171 // pred_fallthru
          _
      $region172: #{kfuvae_forward.3} parent=5 // pred_fallthru
        _
    $region6: #{kfuvae_forward.3} parent=1 // loop_footer
      %s50 = sadd.s32 1, %s46
    $region7: #{kfuvae_forward.3} parent=1 // loop_footer_branch
      %45 = sbr.rel target = $region3
    $region8: #{kfuvae_forward.3} parent=1 // loop_exit
      _
    %3041 = vsyncpa [#allocation5], 1
    %s3042 = scalar_lea.sflag [#allocation5], 1
    %3043 = vsyncpa %s3042, 1
    %3044 = vsyncpa [#allocation7], 1
    %3045 = vsyncpa [#allocation10], 1
    %3046 = vsyncpa [#allocation13], 1
    %3047 = vsyncpa [#allocation16], 1
    %3048 = vsyncpa [#allocation19], 1
    %3049 = vsyncpa [#allocation22], 1

</llo_original>
